<compile_context>
chip_gen: v7x
topology: tpu7x:2x2x1
jax: 0.10.0
libtpu: 0.0.40
codegen_flags: <defaults>
</compile_context>

<pallas_src>
import jax
import jax.numpy as jnp
from jax.experimental import pallas as pl
from jax.experimental.pallas import tpu as pltpu

INPUT_SIZE = 2 * 35 + 3   # 73
OUTPUT_SIZE = 35
HIDDEN_SIZE = 1024
LEAKY_SLOPE = 0.01        # nn.LeakyReLU default negative_slope

IN_PAD = 128              # lane-aligned K for fc1 (zero-padded)
OUT_PAD = 128             # lane-dense output width (zero-padded, sliced in wrapper)


def _round_up(n, m):
    return ((n + m - 1) // m) * m


def _leaky_relu(x):
    return jnp.where(x > 0, x, LEAKY_SLOPE * x)


def mlp_kernel(x_ref, w1_ref, b1_ref, w2_ref, b2_ref, w3_ref, b3_ref, o_ref):
    # fc1 + LeakyReLU: bf16 MXU inputs, f32 accumulate, f32 elementwise.
    h = jnp.dot(x_ref[...], w1_ref[...], preferred_element_type=jnp.float32)
    h = _leaky_relu(h + b1_ref[...])
    # fc2 + LeakyReLU
    h = jnp.dot(h.astype(jnp.bfloat16), w2_ref[...],
                preferred_element_type=jnp.float32)
    h = _leaky_relu(h + b2_ref[...])
    # fc3 (output lanes >= OUTPUT_SIZE are zero-padded weights/bias -> zeros)
    o = jnp.dot(h.astype(jnp.bfloat16), w3_ref[...],
                preferred_element_type=jnp.float32)
    o_ref[...] = (o + b3_ref[...]).astype(o_ref.dtype)


def pack_params(params):
    """Pad to lane-aligned shapes and cast weights to bf16 (done once, kept in HBM)."""
    w1, b1, w2, b2, w3, b3 = params
    w1p = jnp.pad(w1, ((0, IN_PAD - INPUT_SIZE), (0, 0))).astype(jnp.bfloat16)
    w2p = w2.astype(jnp.bfloat16)
    w3p = jnp.pad(w3, ((0, 0), (0, OUT_PAD - OUTPUT_SIZE))).astype(jnp.bfloat16)
    b1p = b1.astype(jnp.float32)
    b2p = b2.astype(jnp.float32)
    b3p = jnp.pad(b3, ((0, 0), (0, OUT_PAD - OUTPUT_SIZE))).astype(jnp.float32)
    return (w1p, b1p, w2p, b2p, w3p, b3p)


def ff_head_forward(x, packed_params, *, block_b=256):
    """x: (B, INPUT_SIZE) float32 -> (B, OUTPUT_SIZE) float32."""
    w1, b1, w2, b2, w3, b3 = packed_params
    B, in_dim = x.shape
    assert in_dim == INPUT_SIZE

    # Batch tile: as large as requested, but never larger than the (8-aligned) batch.
    bb = min(block_b, _round_up(B, 8))
    B_pad = _round_up(B, bb)
    grid = (B_pad // bb,)

    # Zero-pad batch and feature dims; cast matmul LHS to bf16.
    x_p = jnp.pad(x.astype(jnp.bfloat16),
                  ((0, B_pad - B), (0, IN_PAD - INPUT_SIZE)))

    def batch_map(i):
        return (i, 0)

    def full_map(i):
        return (0, 0)

    def const_spec(shape, single_buffer):
        # Constant-index blocks: request single buffering to save VMEM.
        if single_buffer:
            return pl.BlockSpec(shape, full_map, pipeline_mode=pl.Buffered(1))
        return pl.BlockSpec(shape, full_map)

    def run(single_buffer):
        return pl.pallas_call(
            mlp_kernel,
            out_shape=jax.ShapeDtypeStruct((B_pad, OUT_PAD), jnp.float32),
            grid_spec=pltpu.PrefetchScalarGridSpec(
                num_scalar_prefetch=0,
                grid=grid,
                in_specs=[
                    pl.BlockSpec((bb, IN_PAD), batch_map),                  # x tile (bf16)
                    const_spec((IN_PAD, HIDDEN_SIZE), single_buffer),       # w1 (bf16)
                    const_spec((1, HIDDEN_SIZE), single_buffer),            # b1 (f32)
                    const_spec((HIDDEN_SIZE, HIDDEN_SIZE), single_buffer),  # w2 (bf16)
                    const_spec((1, HIDDEN_SIZE), single_buffer),            # b2 (f32)
                    const_spec((HIDDEN_SIZE, OUT_PAD), single_buffer),      # w3 (bf16)
                    const_spec((1, OUT_PAD), single_buffer),                # b3 (f32)
                ],
                out_specs=pl.BlockSpec((bb, OUT_PAD), batch_map),
            ),
            compiler_params=pltpu.CompilerParams(
                dimension_semantics=("parallel",),
                vmem_limit_bytes=32 * 1024 * 1024,
            ),
        )(x_p, w1, b1, w2, b2, w3, b3)

    try:
        out = run(True)
    except Exception:
        # Fallback if this JAX build rejects Buffered(1) on pallas_call BlockSpecs.
        out = run(False)

    return out[:B, :OUTPUT_SIZE]


def init_params(key):
    """Deterministic init mirroring nn.Linear shapes (weights stored (in, out))."""
    ks = jax.random.split(key, 6)

    def linear(kw, kb, fan_in, fan_out):
        # PyTorch nn.Linear default: U(-1/sqrt(fan_in), 1/sqrt(fan_in))
        bound = 1.0 / jnp.sqrt(fan_in)
        w = jax.random.uniform(kw, (fan_in, fan_out), jnp.float32, -bound, bound)
        b = jax.random.uniform(kb, (1, fan_out), jnp.float32, -bound, bound)
        return w, b

    w1, b1 = linear(ks[0], ks[1], INPUT_SIZE, HIDDEN_SIZE)
    w2, b2 = linear(ks[2], ks[3], HIDDEN_SIZE, HIDDEN_SIZE)
    w3, b3 = linear(ks[4], ks[5], HIDDEN_SIZE, OUTPUT_SIZE)
    return (w1, b1, w2, b2, w3, b3)


def reference_forward(x, params):
    """Pure f32 reference matching the PyTorch forward."""
    w1, b1, w2, b2, w3, b3 = params
    h = _leaky_relu(x @ w1 + b1)
    h = _leaky_relu(h @ w2 + b2)
    return h @ w3 + b3


if __name__ == "__main__":
    key = jax.random.PRNGKey(0)
    k_params, k_x = jax.random.split(key)

    params = init_params(k_params)
    packed = pack_params(params)

    B = 16
    x = jax.random.normal(k_x, (B, INPUT_SIZE), jnp.float32)

    out = ff_head_forward(x, packed, block_b=256)
    out = jax.block_until_ready(out)

    ref = reference_forward(x, params)
    assert out.shape == (B, OUTPUT_SIZE)
    # bf16 matmul inputs (f32 accumulation) -> relaxed tolerance vs the f32 reference.
    assert jnp.allclose(out, ref, atol=5e-2, rtol=5e-2), (
        "mismatch vs. reference, max abs diff = %s" % float(jnp.max(jnp.abs(out - ref))))

    print("KERNEL_OK")
</pallas_src>

<mosaic_0001>
module attributes {stable_mosaic.version = 11 : i64} {
  func.func @mlp_kernel(%arg0: i32, %arg1: memref<16x128xbf16, #tpu.memory_space<vmem>>, %arg2: memref<128x1024xbf16, #tpu.memory_space<vmem>>, %arg3: memref<1x1024xf32, #tpu.memory_space<vmem>>, %arg4: memref<1024x1024xbf16, #tpu.memory_space<vmem>>, %arg5: memref<1x1024xf32, #tpu.memory_space<vmem>>, %arg6: memref<1024x128xbf16, #tpu.memory_space<vmem>>, %arg7: memref<1x128xf32, #tpu.memory_space<vmem>>, %arg8: memref<16x128xf32, #tpu.memory_space<vmem>>) attributes {dimension_semantics = [#tpu.dimension_semantics<parallel>], iteration_bounds = array<i64: 1>, scalar_prefetch = 0 : i64, scratch_operands = 0 : i64, tpu.core_type = #tpu.core_type<tc>, window_params = [{transform_indices = @transform_0, window_bounds = array<i64: 16, 128>}, {pipeline_mode = #tpu.pipeline_mode<synchronous>, transform_indices = @transform_1, window_bounds = array<i64: 128, 1024>}, {pipeline_mode = #tpu.pipeline_mode<synchronous>, transform_indices = @transform_2, window_bounds = array<i64: 1, 1024>}, {pipeline_mode = #tpu.pipeline_mode<synchronous>, transform_indices = @transform_3, window_bounds = array<i64: 1024, 1024>}, {pipeline_mode = #tpu.pipeline_mode<synchronous>, transform_indices = @transform_4, window_bounds = array<i64: 1, 1024>}, {pipeline_mode = #tpu.pipeline_mode<synchronous>, transform_indices = @transform_5, window_bounds = array<i64: 1024, 128>}, {pipeline_mode = #tpu.pipeline_mode<synchronous>, transform_indices = @transform_6, window_bounds = array<i64: 1, 128>}, {transform_indices = @transform_7, window_bounds = array<i64: 16, 128>}]} {
    %c0 = arith.constant 0 : index
    %c0_0 = arith.constant 0 : index
    %0 = vector.load %arg1[%c0, %c0_0] : memref<16x128xbf16, #tpu.memory_space<vmem>>, vector<16x128xbf16>
    %c0_1 = arith.constant 0 : index
    %c0_2 = arith.constant 0 : index
    %1 = vector.load %arg2[%c0_1, %c0_2] : memref<128x1024xbf16, #tpu.memory_space<vmem>>, vector<128x1024xbf16>
    %cst = arith.constant dense<0.000000e+00> : vector<16x1024xf32>
    %2 = tpu.matmul %0, %1, %cst {dimension_numbers = #tpu.dot_dimension_numbers<[1], [0], [0], [1], [0, 0, 1, 1], [], []>} : vector<16x128xbf16>, vector<128x1024xbf16>, vector<16x1024xf32> -> vector<16x1024xf32>
    %c0_3 = arith.constant 0 : index
    %c0_4 = arith.constant 0 : index
    %3 = vector.load %arg3[%c0_3, %c0_4] : memref<1x1024xf32, #tpu.memory_space<vmem>>, vector<1x1024xf32>
    %4 = vector.broadcast %3 : vector<1x1024xf32> to vector<16x1024xf32>
    %5 = arith.addf %2, %4 : vector<16x1024xf32>
    %cst_5 = arith.constant 0.000000e+00 : f32
    %6 = vector.broadcast %cst_5 : f32 to vector<16x1024xf32>
    %7 = arith.cmpf ogt, %5, %6 : vector<16x1024xf32>
    %cst_6 = arith.constant 0.00999999977 : f32
    %8 = vector.broadcast %cst_6 : f32 to vector<16x1024xf32>
    %9 = arith.mulf %8, %5 : vector<16x1024xf32>
    %10 = arith.select %7, %5, %9 : vector<16x1024xi1>, vector<16x1024xf32>
    %11 = arith.truncf %10 : vector<16x1024xf32> to vector<16x1024xbf16>
    %c0_7 = arith.constant 0 : index
    %c0_8 = arith.constant 0 : index
    %12 = vector.load %arg4[%c0_7, %c0_8] : memref<1024x1024xbf16, #tpu.memory_space<vmem>>, vector<1024x1024xbf16>
    %cst_9 = arith.constant dense<0.000000e+00> : vector<16x1024xf32>
    %13 = tpu.matmul %11, %12, %cst_9 {dimension_numbers = #tpu.dot_dimension_numbers<[1], [0], [0], [1], [0, 0, 1, 1], [], []>} : vector<16x1024xbf16>, vector<1024x1024xbf16>, vector<16x1024xf32> -> vector<16x1024xf32>
    %c0_10 = arith.constant 0 : index
    %c0_11 = arith.constant 0 : index
    %14 = vector.load %arg5[%c0_10, %c0_11] : memref<1x1024xf32, #tpu.memory_space<vmem>>, vector<1x1024xf32>
    %15 = vector.broadcast %14 : vector<1x1024xf32> to vector<16x1024xf32>
    %16 = arith.addf %13, %15 : vector<16x1024xf32>
    %cst_12 = arith.constant 0.000000e+00 : f32
    %17 = vector.broadcast %cst_12 : f32 to vector<16x1024xf32>
    %18 = arith.cmpf ogt, %16, %17 : vector<16x1024xf32>
    %cst_13 = arith.constant 0.00999999977 : f32
    %19 = vector.broadcast %cst_13 : f32 to vector<16x1024xf32>
    %20 = arith.mulf %19, %16 : vector<16x1024xf32>
    %21 = arith.select %18, %16, %20 : vector<16x1024xi1>, vector<16x1024xf32>
    %22 = arith.truncf %21 : vector<16x1024xf32> to vector<16x1024xbf16>
    %c0_14 = arith.constant 0 : index
    %c0_15 = arith.constant 0 : index
    %23 = vector.load %arg6[%c0_14, %c0_15] : memref<1024x128xbf16, #tpu.memory_space<vmem>>, vector<1024x128xbf16>
    %cst_16 = arith.constant dense<0.000000e+00> : vector<16x128xf32>
    %24 = tpu.matmul %22, %23, %cst_16 {dimension_numbers = #tpu.dot_dimension_numbers<[1], [0], [0], [1], [0, 0, 1, 1], [], []>} : vector<16x1024xbf16>, vector<1024x128xbf16>, vector<16x128xf32> -> vector<16x128xf32>
    %c0_17 = arith.constant 0 : index
    %c0_18 = arith.constant 0 : index
    %25 = vector.load %arg7[%c0_17, %c0_18] : memref<1x128xf32, #tpu.memory_space<vmem>>, vector<1x128xf32>
    %26 = vector.broadcast %25 : vector<1x128xf32> to vector<16x128xf32>
    %27 = arith.addf %24, %26 : vector<16x128xf32>
    %c0_19 = arith.constant 0 : index
    %c0_20 = arith.constant 0 : index
    %28 = vector.load %arg8[%c0_19, %c0_20] : memref<16x128xf32, #tpu.memory_space<vmem>>, vector<16x128xf32>
    tpu.vector_store %arg8[%c0_19, %c0_20], %27 {strides = array<i32>} : memref<16x128xf32, #tpu.memory_space<vmem>>, vector<16x128xf32>,
    return
  }
  func.func @transform_0(%arg0: i32) -> (i32, i32) {
    %c0_i32 = arith.constant 0 : i32
    %c0_i32_0 = arith.constant 0 : i32
    return %arg0, %c0_i32 : i32, i32
  }
  func.func @transform_1(%arg0: i32) -> (i32, i32) {
    %c0_i32 = arith.constant 0 : i32
    %c0_i32_0 = arith.constant 0 : i32
    %c0_i32_1 = arith.constant 0 : i32
    return %c0_i32, %c0_i32_0 : i32, i32
  }
  func.func @transform_2(%arg0: i32) -> (i32, i32) {
    %c0_i32 = arith.constant 0 : i32
    %c0_i32_0 = arith.constant 0 : i32
    %c0_i32_1 = arith.constant 0 : i32
    return %c0_i32, %c0_i32_0 : i32, i32
  }
  func.func @transform_3(%arg0: i32) -> (i32, i32) {
    %c0_i32 = arith.constant 0 : i32
    %c0_i32_0 = arith.constant 0 : i32
    %c0_i32_1 = arith.constant 0 : i32
    return %c0_i32, %c0_i32_0 : i32, i32
  }
  func.func @transform_4(%arg0: i32) -> (i32, i32) {
    %c0_i32 = arith.constant 0 : i32
    %c0_i32_0 = arith.constant 0 : i32
    %c0_i32_1 = arith.constant 0 : i32
    return %c0_i32, %c0_i32_0 : i32, i32
  }
  func.func @transform_5(%arg0: i32) -> (i32, i32) {
    %c0_i32 = arith.constant 0 : i32
    %c0_i32_0 = arith.constant 0 : i32
    %c0_i32_1 = arith.constant 0 : i32
    return %c0_i32, %c0_i32_0 : i32, i32
  }
  func.func @transform_6(%arg0: i32) -> (i32, i32) {
    %c0_i32 = arith.constant 0 : i32
    %c0_i32_0 = arith.constant 0 : i32
    %c0_i32_1 = arith.constant 0 : i32
    return %c0_i32, %c0_i32_0 : i32, i32
  }
  func.func @transform_7(%arg0: i32) -> (i32, i32) {
    %c0_i32 = arith.constant 0 : i32
    %c0_i32_0 = arith.constant 0 : i32
    return %arg0, %c0_i32 : i32, i32
  }
}

module attributes {stable_mosaic.version = 11 : i64} {
  func.func @mlp_kernel(%arg0: i32, %arg1: memref<16x128xbf16, #tpu.memory_space<vmem>>, %arg2: memref<128x1024xbf16, #tpu.memory_space<vmem>>, %arg3: memref<1x1024xf32, #tpu.memory_space<vmem>>, %arg4: memref<1024x1024xbf16, #tpu.memory_space<vmem>>, %arg5: memref<1x1024xf32, #tpu.memory_space<vmem>>, %arg6: memref<1024x128xbf16, #tpu.memory_space<vmem>>, %arg7: memref<1x128xf32, #tpu.memory_space<vmem>>, %arg8: memref<16x128xf32, #tpu.memory_space<vmem>>) attributes {dimension_semantics = [#tpu.dimension_semantics<parallel>], iteration_bounds = array<i64: 1>, scalar_prefetch = 0 : i64, scratch_operands = 0 : i64, tpu.core_type = #tpu.core_type<tc>, window_params = [{transform_indices = @transform_0, window_bounds = array<i64: 16, 128>}, {pipeline_mode = #tpu.pipeline_mode<synchronous>, transform_indices = @transform_1, window_bounds = array<i64: 128, 1024>}, {pipeline_mode = #tpu.pipeline_mode<synchronous>, transform_indices = @transform_2, window_bounds = array<i64: 1, 1024>}, {pipeline_mode = #tpu.pipeline_mode<synchronous>, transform_indices = @transform_3, window_bounds = array<i64: 1024, 1024>}, {pipeline_mode = #tpu.pipeline_mode<synchronous>, transform_indices = @transform_4, window_bounds = array<i64: 1, 1024>}, {pipeline_mode = #tpu.pipeline_mode<synchronous>, transform_indices = @transform_5, window_bounds = array<i64: 1024, 128>}, {pipeline_mode = #tpu.pipeline_mode<synchronous>, transform_indices = @transform_6, window_bounds = array<i64: 1, 128>}, {transform_indices = @transform_7, window_bounds = array<i64: 16, 128>}]} {
    %c0 = arith.constant 0 : index
    %c0_0 = arith.constant 0 : index
    %0 = vector.load %arg1[%c0, %c0_0] : memref<16x128xbf16, #tpu.memory_space<vmem>>, vector<16x128xbf16>
    %c0_1 = arith.constant 0 : index
    %c0_2 = arith.constant 0 : index
    %1 = vector.load %arg2[%c0_1, %c0_2] : memref<128x1024xbf16, #tpu.memory_space<vmem>>, vector<128x1024xbf16>
    %cst = arith.constant dense<0.000000e+00> : vector<16x1024xf32>
    %2 = tpu.matmul %0, %1, %cst {dimension_numbers = #tpu.dot_dimension_numbers<[1], [0], [0], [1], [0, 0, 1, 1], [], []>} : vector<16x128xbf16>, vector<128x1024xbf16>, vector<16x1024xf32> -> vector<16x1024xf32>
    %c0_3 = arith.constant 0 : index
    %c0_4 = arith.constant 0 : index
    %3 = vector.load %arg3[%c0_3, %c0_4] : memref<1x1024xf32, #tpu.memory_space<vmem>>, vector<1x1024xf32>
    %4 = vector.broadcast %3 : vector<1x1024xf32> to vector<16x1024xf32>
    %5 = arith.addf %2, %4 : vector<16x1024xf32>
    %cst_5 = arith.constant 0.000000e+00 : f32
    %6 = vector.broadcast %cst_5 : f32 to vector<16x1024xf32>
    %7 = arith.cmpf ogt, %5, %6 : vector<16x1024xf32>
    %cst_6 = arith.constant 0.00999999977 : f32
    %8 = vector.broadcast %cst_6 : f32 to vector<16x1024xf32>
    %9 = arith.mulf %8, %5 : vector<16x1024xf32>
    %10 = arith.select %7, %5, %9 : vector<16x1024xi1>, vector<16x1024xf32>
    %11 = arith.truncf %10 : vector<16x1024xf32> to vector<16x1024xbf16>
    %c0_7 = arith.constant 0 : index
    %c0_8 = arith.constant 0 : index
    %12 = vector.load %arg4[%c0_7, %c0_8] : memref<1024x1024xbf16, #tpu.memory_space<vmem>>, vector<1024x1024xbf16>
    %cst_9 = arith.constant dense<0.000000e+00> : vector<16x1024xf32>
    %13 = tpu.matmul %11, %12, %cst_9 {dimension_numbers = #tpu.dot_dimension_numbers<[1], [0], [0], [1], [0, 0, 1, 1], [], []>} : vector<16x1024xbf16>, vector<1024x1024xbf16>, vector<16x1024xf32> -> vector<16x1024xf32>
    %c0_10 = arith.constant 0 : index
    %c0_11 = arith.constant 0 : index
    %14 = vector.load %arg5[%c0_10, %c0_11] : memref<1x1024xf32, #tpu.memory_space<vmem>>, vector<1x1024xf32>
    %15 = vector.broadcast %14 : vector<1x1024xf32> to vector<16x1024xf32>
    %16 = arith.addf %13, %15 : vector<16x1024xf32>
    %cst_12 = arith.constant 0.000000e+00 : f32
    %17 = vector.broadcast %cst_12 : f32 to vector<16x1024xf32>
    %18 = arith.cmpf ogt, %16, %17 : vector<16x1024xf32>
    %cst_13 = arith.constant 0.00999999977 : f32
    %19 = vector.broadcast %cst_13 : f32 to vector<16x1024xf32>
    %20 = arith.mulf %19, %16 : vector<16x1024xf32>
    %21 = arith.select %18, %16, %20 : vector<16x1024xi1>, vector<16x1024xf32>
    %22 = arith.truncf %21 : vector<16x1024xf32> to vector<16x1024xbf16>
    %c0_14 = arith.constant 0 : index
    %c0_15 = arith.constant 0 : index
    %23 = vector.load %arg6[%c0_14, %c0_15] : memref<1024x128xbf16, #tpu.memory_space<vmem>>, vector<1024x128xbf16>
    %cst_16 = arith.constant dense<0.000000e+00> : vector<16x128xf32>
    %24 = tpu.matmul %22, %23, %cst_16 {dimension_numbers = #tpu.dot_dimension_numbers<[1], [0], [0], [1], [0, 0, 1, 1], [], []>} : vector<16x1024xbf16>, vector<1024x128xbf16>, vector<16x128xf32> -> vector<16x128xf32>
    %c0_17 = arith.constant 0 : index
    %c0_18 = arith.constant 0 : index
    %25 = vector.load %arg7[%c0_17, %c0_18] : memref<1x128xf32, #tpu.memory_space<vmem>>, vector<1x128xf32>
    %26 = vector.broadcast %25 : vector<1x128xf32> to vector<16x128xf32>
    %27 = arith.addf %24, %26 : vector<16x128xf32>
    %c0_19 = arith.constant 0 : index
    %c0_20 = arith.constant 0 : index
    %28 = vector.load %arg8[%c0_19, %c0_20] : memref<16x128xf32, #tpu.memory_space<vmem>>, vector<16x128xf32>
    tpu.vector_store %arg8[%c0_19, %c0_20], %27 {strides = array<i32>} : memref<16x128xf32, #tpu.memory_space<vmem>>, vector<16x128xf32>,
    return
  }
  func.func @transform_0(%arg0: i32) -> (i32, i32) {
    %c0_i32 = arith.constant 0 : i32
    %c0_i32_0 = arith.constant 0 : i32
    return %arg0, %c0_i32 : i32, i32
  }
  func.func @transform_1(%arg0: i32) -> (i32, i32) {
    %c0_i32 = arith.constant 0 : i32
    %c0_i32_0 = arith.constant 0 : i32
    %c0_i32_1 = arith.constant 0 : i32
    return %c0_i32, %c0_i32_0 : i32, i32
  }
  func.func @transform_2(%arg0: i32) -> (i32, i32) {
    %c0_i32 = arith.constant 0 : i32
    %c0_i32_0 = arith.constant 0 : i32
    %c0_i32_1 = arith.constant 0 : i32
    return %c0_i32, %c0_i32_0 : i32, i32
  }
  func.func @transform_3(%arg0: i32) -> (i32, i32) {
    %c0_i32 = arith.constant 0 : i32
    %c0_i32_0 = arith.constant 0 : i32
    %c0_i32_1 = arith.constant 0 : i32
    return %c0_i32, %c0_i32_0 : i32, i32
  }
  func.func @transform_4(%arg0: i32) -> (i32, i32) {
    %c0_i32 = arith.constant 0 : i32
    %c0_i32_0 = arith.constant 0 : i32
    %c0_i32_1 = arith.constant 0 : i32
    return %c0_i32, %c0_i32_0 : i32, i32
  }
  func.func @transform_5(%arg0: i32) -> (i32, i32) {
    %c0_i32 = arith.constant 0 : i32
    %c0_i32_0 = arith.constant 0 : i32
    %c0_i32_1 = arith.constant 0 : i32
    return %c0_i32, %c0_i32_0 : i32, i32
  }
  func.func @transform_6(%arg0: i32) -> (i32, i32) {
    %c0_i32 = arith.constant 0 : i32
    %c0_i32_0 = arith.constant 0 : i32
    %c0_i32_1 = arith.constant 0 : i32
    return %c0_i32, %c0_i32_0 : i32, i32
  }
  func.func @transform_7(%arg0: i32) -> (i32, i32) {
    %c0_i32 = arith.constant 0 : i32
    %c0_i32_0 = arith.constant 0 : i32
    return %arg0, %c0_i32 : i32, i32
  }
}

</mosaic_0001>

<llo_original>
// kernel: tpu_custom_call.1
$region0: #{tpu_custom_call.1}
  #allocation0 [shape = 'u32[]', space=smem, size = 0x4, offset = 0x4, fixed_abs, tag = 'smem constant byte address 0x4 - core index']
  #allocation1 [shape = 'u32[144,128]{1,0:T(1,128)}', space=vmem, size = 0x12000, scoped, tag = 'internal scratch']
  %s0 = inlined_call_operand.hbm [shape: bf16[16,128], index: 0, kind: input, shape index: {}]
  %s1 = inlined_call_operand.hbm [shape: bf16[128,1024], index: 1, kind: input, shape index: {}]
  %s2 = inlined_call_operand.hbm [shape: f32[1,1024], index: 2, kind: input, shape index: {}]
  %s3 = inlined_call_operand.hbm [shape: bf16[1024,1024], index: 3, kind: input, shape index: {}]
  %s4 = inlined_call_operand.hbm [shape: f32[1,1024], index: 4, kind: input, shape index: {}]
  %s5 = inlined_call_operand.hbm [shape: bf16[1024,128], index: 5, kind: input, shape index: {}]
  %s6 = inlined_call_operand.hbm [shape: f32[1,128], index: 6, kind: input, shape index: {}]
  %s7 = inlined_call_operand.hbm [shape: f32[16,128], index: 7, kind: output, shape index: {}]
  %s8 = sld [smem:[#allocation0]]
  $region66: #{tpu_custom_call.1} parent=0
    _
  %s10 = ssub.s32 1, %s8
  %s11 = scalar_select 0, %s10, %s8
  $region1: #{tpu_custom_call.1} parent=0
    #allocation2 [shape = 'u8[4096]{0}', space=vmem, size = 0x1000, scoped, tag = 'input window, operand 0, single buffered']
    #allocation3 [shape = 's32[1]{0}', space=sflag, size = 0x4, scoped, tag = 'scoped memory for tpu_custom_call.1']
    #allocation4 [shape = 's32[1]{0}', space=sflag, size = 0x4, scoped, tag = 'scoped memory for tpu_custom_call.1']
    #allocation5 [shape = 'u8[262144]{0}', space=vmem, size = 0x40000, scoped, tag = 'input window, operand 1, single buffered']
    #allocation6 [shape = 's32[1]{0}', space=sflag, size = 0x4, scoped, tag = 'scoped memory for tpu_custom_call.1']
    #allocation7 [shape = 'u8[4096]{0}', space=vmem, size = 0x1000, scoped, tag = 'input window, operand 2, single buffered']
    #allocation8 [shape = 'u8[2097152]{0}', space=vmem, size = 0x200000, scoped, tag = 'input window, operand 3, single buffered']
    #allocation9 [shape = 's32[1]{0}', space=sflag, size = 0x4, scoped, tag = 'scoped memory for tpu_custom_call.1']
    #allocation10 [shape = 'u8[4096]{0}', space=vmem, size = 0x1000, scoped, tag = 'input window, operand 4, single buffered']
    #allocation11 [shape = 'u8[262144]{0}', space=vmem, size = 0x40000, scoped, tag = 'input window, operand 5, single buffered']
    #allocation12 [shape = 's32[1]{0}', space=sflag, size = 0x4, scoped, tag = 'scoped memory for tpu_custom_call.1']
    #allocation13 [shape = 'u8[512]{0}', space=vmem, size = 0x400, scoped, tag = 'input window, operand 6, single buffered']
    #allocation14 [shape = 'u8[8192]{0}', space=vmem, size = 0x2000, scoped, tag = 'output window, operand 0, single buffered']
    %12 = vsyncpa [#allocation3], 0
    %13 = vsyncpa [#allocation6], 0
    %14 = vsyncpa [#allocation9], 0
    %15 = vsyncpa [#allocation12], 0
    %16 = vsyncpa [#allocation4], 0
    // Predicated region
    $region2: #{tpu_custom_call.1} parent=1 // pred_check
      _
    $region3: #{tpu_custom_call.1} parent=1 // pred_check_branch
      %18 = sbr.rel (0) target = $region5
    $region4: #{tpu_custom_call.1} parent=1 // pred_region
      %s20 = ssub.s32 128, 128
      %21 = vsyncadd [#allocation3], %s20
      %s22 = sshll.u32 [#allocation2], 4
      %s23 = int_to_ptr.vmem [resolvable:$true] %s22
      %28 = dma.hbm_to_vmem [thread:$0]  %s0, 128, %s23, [#allocation3], 64, 64, 4
    $region5: #{tpu_custom_call.1} parent=1 // pred_fallthru
      _
    // Predicated region
    $region6: #{tpu_custom_call.1} parent=1 // pred_check
      _
    $region7: #{tpu_custom_call.1} parent=1 // pred_check_branch
      %30 = sbr.rel (0) target = $region9
    $region8: #{tpu_custom_call.1} parent=1 // pred_region
      %s32 = ssub.s32 8192, 8192
      %33 = vsyncadd [#allocation6], %s32
      %s34 = sshll.u32 [#allocation5], 4
      %s35 = int_to_ptr.vmem [resolvable:$true] %s34
      %40 = dma.hbm_to_vmem [thread:$0]  %s1, 8192, %s35, [#allocation6], 512, 512, 32
    $region9: #{tpu_custom_call.1} parent=1 // pred_fallthru
      _
    // Predicated region
    $region10: #{tpu_custom_call.1} parent=1 // pred_check
      _
    $region11: #{tpu_custom_call.1} parent=1 // pred_check_branch
      %42 = sbr.rel (0) target = $region13
    $region12: #{tpu_custom_call.1} parent=1 // pred_region
      %s44 = ssub.s32 128, 128
      %45 = vsyncadd [#allocation6], %s44
      %s47 = sshll.u32 [#allocation7], 4
      %s48 = int_to_ptr.vmem [resolvable:$true] %s47
      %50 = dma.hbm_to_vmem [thread:$0]  %s2, 128, %s48, [#allocation6]
    $region13: #{tpu_custom_call.1} parent=1 // pred_fallthru
      _
    // Predicated region
    $region14: #{tpu_custom_call.1} parent=1 // pred_check
      _
    $region15: #{tpu_custom_call.1} parent=1 // pred_check_branch
      %52 = sbr.rel (0) target = $region17
    $region16: #{tpu_custom_call.1} parent=1 // pred_region
      %s54 = ssub.s32 65536, 65536
      %55 = vsyncadd [#allocation9], %s54
      %s56 = sshll.u32 [#allocation8], 4
      %s57 = int_to_ptr.vmem [resolvable:$true] %s56
      %62 = dma.hbm_to_vmem [thread:$0]  %s3, 65536, %s57, [#allocation9], 512, 512, 32
    $region17: #{tpu_custom_call.1} parent=1 // pred_fallthru
      _
    // Predicated region
    $region18: #{tpu_custom_call.1} parent=1 // pred_check
      _
    $region19: #{tpu_custom_call.1} parent=1 // pred_check_branch
      %64 = sbr.rel (0) target = $region21
    $region20: #{tpu_custom_call.1} parent=1 // pred_region
      %s66 = ssub.s32 128, 128
      %67 = vsyncadd [#allocation9], %s66
      %s69 = sshll.u32 [#allocation10], 4
      %s70 = int_to_ptr.vmem [resolvable:$true] %s69
      %72 = dma.hbm_to_vmem [thread:$0]  %s4, 128, %s70, [#allocation9]
    $region21: #{tpu_custom_call.1} parent=1 // pred_fallthru
      _
    // Predicated region
    $region22: #{tpu_custom_call.1} parent=1 // pred_check
      _
    $region23: #{tpu_custom_call.1} parent=1 // pred_check_branch
      %74 = sbr.rel (0) target = $region25
    $region24: #{tpu_custom_call.1} parent=1 // pred_region
      %s76 = ssub.s32 8192, 8192
      %77 = vsyncadd [#allocation12], %s76
      %s78 = sshll.u32 [#allocation11], 4
      %s79 = int_to_ptr.vmem [resolvable:$true] %s78
      %84 = dma.hbm_to_vmem [thread:$0]  %s5, 8192, %s79, [#allocation12], 64, 64, 4
    $region25: #{tpu_custom_call.1} parent=1 // pred_fallthru
      _
    // Predicated region
    $region26: #{tpu_custom_call.1} parent=1 // pred_check
      _
    $region27: #{tpu_custom_call.1} parent=1 // pred_check_branch
      %86 = sbr.rel (0) target = $region29
    $region28: #{tpu_custom_call.1} parent=1 // pred_region
      %s88 = ssub.s32 16, 16
      %89 = vsyncadd [#allocation12], %s88
      %s91 = sshll.u32 [#allocation13], 4
      %s92 = int_to_ptr.vmem [resolvable:$true] %s91
      %94 = dma.hbm_to_vmem [thread:$0]  %s6, 16, %s92, [#allocation12]
    $region29: #{tpu_custom_call.1} parent=1 // pred_fallthru
      _
    // Predicated region
    $region30: #{tpu_custom_call.1} parent=1 // pred_check
      _
    $region31: #{tpu_custom_call.1} parent=1 // pred_check_branch
      %96 = sbr.rel (0) target = $region33
    $region32: #{tpu_custom_call.1} parent=1 // pred_region
      %97 = dma.done [#allocation3], 128
    $region33: #{tpu_custom_call.1} parent=1 // pred_fallthru
      _
    // Predicated region
    $region34: #{tpu_custom_call.1} parent=1 // pred_check
      _
    $region35: #{tpu_custom_call.1} parent=1 // pred_check_branch
      %99 = sbr.rel (0) target = $region37
    $region36: #{tpu_custom_call.1} parent=1 // pred_region
      %100 = dma.done [#allocation6], 8192
    $region37: #{tpu_custom_call.1} parent=1 // pred_fallthru
      _
    // Predicated region
    $region38: #{tpu_custom_call.1} parent=1 // pred_check
      _
    $region39: #{tpu_custom_call.1} parent=1 // pred_check_branch
      %102 = sbr.rel (0) target = $region41
    $region40: #{tpu_custom_call.1} parent=1 // pred_region
      %103 = dma.done [#allocation6], 128
    $region41: #{tpu_custom_call.1} parent=1 // pred_fallthru
      _
    // Predicated region
    $region42: #{tpu_custom_call.1} parent=1 // pred_check
      _
    $region43: #{tpu_custom_call.1} parent=1 // pred_check_branch
      %105 = sbr.rel (0) target = $region45
    $region44: #{tpu_custom_call.1} parent=1 // pred_region
      %106 = dma.done [#allocation9], 65536
    $region45: #{tpu_custom_call.1} parent=1 // pred_fallthru
      _
    // Predicated region
    $region46: #{tpu_custom_call.1} parent=1 // pred_check
      _
    $region47: #{tpu_custom_call.1} parent=1 // pred_check_branch
      %108 = sbr.rel (0) target = $region49
    $region48: #{tpu_custom_call.1} parent=1 // pred_region
      %109 = dma.done [#allocation9], 128
    $region49: #{tpu_custom_call.1} parent=1 // pred_fallthru
      _
    // Predicated region
    $region50: #{tpu_custom_call.1} parent=1 // pred_check
      _
    $region51: #{tpu_custom_call.1} parent=1 // pred_check_branch
      %111 = sbr.rel (0) target = $region53
    $region52: #{tpu_custom_call.1} parent=1 // pred_region
      %112 = dma.done [#allocation12], 8192
    $region53: #{tpu_custom_call.1} parent=1 // pred_fallthru
      _
    // Predicated region
    $region54: #{tpu_custom_call.1} parent=1 // pred_check
      _
    $region55: #{tpu_custom_call.1} parent=1 // pred_check_branch
      %114 = sbr.rel (0) target = $region57
    $region56: #{tpu_custom_call.1} parent=1 // pred_region
      %115 = dma.done [#allocation12], 16
    $region57: #{tpu_custom_call.1} parent=1 // pred_fallthru
      _
    %v117 = vld [vmem:[#allocation2] sm:$0xf]
    %v118 = vld [vmem:[#allocation2 + $0x4] sm:$0xf]
    %v119 = vld [vmem:[#allocation5] sm:$0xff]
    %v120 = vld [vmem:[#allocation5 + $0x8] sm:$0xff]
    %v121 = vld [vmem:[#allocation5 + $0x10] sm:$0xff]
    %v122 = vld [vmem:[#allocation5 + $0x18] sm:$0xff]
    %v123 = vld [vmem:[#allocation5 + $0x20] sm:$0xff]
    %v124 = vld [vmem:[#allocation5 + $0x28] sm:$0xff]
    %v125 = vld [vmem:[#allocation5 + $0x30] sm:$0xff]
    %v126 = vld [vmem:[#allocation5 + $0x38] sm:$0xff]
    %v127 = vld [vmem:[#allocation5 + $0x40] sm:$0xff]
    %v128 = vld [vmem:[#allocation5 + $0x48] sm:$0xff]
    %v129 = vld [vmem:[#allocation5 + $0x50] sm:$0xff]
    %v130 = vld [vmem:[#allocation5 + $0x58] sm:$0xff]
    %v131 = vld [vmem:[#allocation5 + $0x60] sm:$0xff]
    %v132 = vld [vmem:[#allocation5 + $0x68] sm:$0xff]
    %v133 = vld [vmem:[#allocation5 + $0x70] sm:$0xff]
    %v134 = vld [vmem:[#allocation5 + $0x78] sm:$0xff]
    %v135 = vld [vmem:[#allocation5 + $0x80] sm:$0xff]
    %v136 = vld [vmem:[#allocation5 + $0x88] sm:$0xff]
    %v137 = vld [vmem:[#allocation5 + $0x90] sm:$0xff]
    %v138 = vld [vmem:[#allocation5 + $0x98] sm:$0xff]
    %v139 = vld [vmem:[#allocation5 + $0xa0] sm:$0xff]
    %v140 = vld [vmem:[#allocation5 + $0xa8] sm:$0xff]
    %v141 = vld [vmem:[#allocation5 + $0xb0] sm:$0xff]
    %v142 = vld [vmem:[#allocation5 + $0xb8] sm:$0xff]
    %v143 = vld [vmem:[#allocation5 + $0xc0] sm:$0xff]
    %v144 = vld [vmem:[#allocation5 + $0xc8] sm:$0xff]
    %v145 = vld [vmem:[#allocation5 + $0xd0] sm:$0xff]
    %v146 = vld [vmem:[#allocation5 + $0xd8] sm:$0xff]
    %v147 = vld [vmem:[#allocation5 + $0xe0] sm:$0xff]
    %v148 = vld [vmem:[#allocation5 + $0xe8] sm:$0xff]
    %v149 = vld [vmem:[#allocation5 + $0xf0] sm:$0xff]
    %v150 = vld [vmem:[#allocation5 + $0xf8] sm:$0xff]
    %v151 = vld [vmem:[#allocation5 + $0x100] sm:$0xff]
    %v152 = vld [vmem:[#allocation5 + $0x108] sm:$0xff]
    %v153 = vld [vmem:[#allocation5 + $0x110] sm:$0xff]
    %v154 = vld [vmem:[#allocation5 + $0x118] sm:$0xff]
    %v155 = vld [vmem:[#allocation5 + $0x120] sm:$0xff]
    %v156 = vld [vmem:[#allocation5 + $0x128] sm:$0xff]
    %v157 = vld [vmem:[#allocation5 + $0x130] sm:$0xff]
    %v158 = vld [vmem:[#allocation5 + $0x138] sm:$0xff]
    %v159 = vld [vmem:[#allocation5 + $0x140] sm:$0xff]
    %v160 = vld [vmem:[#allocation5 + $0x148] sm:$0xff]
    %v161 = vld [vmem:[#allocation5 + $0x150] sm:$0xff]
    %v162 = vld [vmem:[#allocation5 + $0x158] sm:$0xff]
    %v163 = vld [vmem:[#allocation5 + $0x160] sm:$0xff]
    %v164 = vld [vmem:[#allocation5 + $0x168] sm:$0xff]
    %v165 = vld [vmem:[#allocation5 + $0x170] sm:$0xff]
    %v166 = vld [vmem:[#allocation5 + $0x178] sm:$0xff]
    %v167 = vld [vmem:[#allocation5 + $0x180] sm:$0xff]
    %v168 = vld [vmem:[#allocation5 + $0x188] sm:$0xff]
    %v169 = vld [vmem:[#allocation5 + $0x190] sm:$0xff]
    %v170 = vld [vmem:[#allocation5 + $0x198] sm:$0xff]
    %v171 = vld [vmem:[#allocation5 + $0x1a0] sm:$0xff]
    %v172 = vld [vmem:[#allocation5 + $0x1a8] sm:$0xff]
    %v173 = vld [vmem:[#allocation5 + $0x1b0] sm:$0xff]
    %v174 = vld [vmem:[#allocation5 + $0x1b8] sm:$0xff]
    %v175 = vld [vmem:[#allocation5 + $0x1c0] sm:$0xff]
    %v176 = vld [vmem:[#allocation5 + $0x1c8] sm:$0xff]
    %v177 = vld [vmem:[#allocation5 + $0x1d0] sm:$0xff]
    %v178 = vld [vmem:[#allocation5 + $0x1d8] sm:$0xff]
    %v179 = vld [vmem:[#allocation5 + $0x1e0] sm:$0xff]
    %v180 = vld [vmem:[#allocation5 + $0x1e8] sm:$0xff]
    %v181 = vld [vmem:[#allocation5 + $0x1f0] sm:$0xff]
    %v182 = vld [vmem:[#allocation5 + $0x1f8] sm:$0xff]
    %v183 = vld [vmem:[#allocation7] sm:$0xff]
    %v185 = vlaneseq
    %v186 = vshrl.u32 %v185, 7
    %v187 = vsub.s32 0, %v186
    %v188 = vrot.slane %v183, %v187
    %v189 = vlaneseq
    %v190 = vshrl.u32 %v189, 7
    %v191 = vsub.s32 1, %v190
    %v192 = vrot.slane %v183, %v191
    %v193 = vlaneseq
    %v194 = vshrl.u32 %v193, 7
    %v195 = vsub.s32 2, %v194
    %v196 = vrot.slane %v183, %v195
    %v197 = vlaneseq
    %v198 = vshrl.u32 %v197, 7
    %v199 = vsub.s32 3, %v198
    %v200 = vrot.slane %v183, %v199
    %v201 = vlaneseq
    %v202 = vshrl.u32 %v201, 7
    %v203 = vsub.s32 4, %v202
    %v204 = vrot.slane %v183, %v203
    %v205 = vlaneseq
    %v206 = vshrl.u32 %v205, 7
    %v207 = vsub.s32 5, %v206
    %v208 = vrot.slane %v183, %v207
    %v209 = vlaneseq
    %v210 = vshrl.u32 %v209, 7
    %v211 = vsub.s32 6, %v210
    %v212 = vrot.slane %v183, %v211
    %v213 = vlaneseq
    %v214 = vshrl.u32 %v213, 7
    %v215 = vsub.s32 7, %v214
    %v216 = vrot.slane %v183, %v215
    %v227 = vunpack.c.l.b16 %v117
    %v228 = vunpack.c.l.b16 %v118
    %v229 = vpack.c.b16 %v228, %v227
    %v295 = vunpack.c.l.b16 %v119
    %v296 = vunpack.c.h.b16 %v119
    %v297 = vunpack.c.l.b16 %v120
    %v298 = vunpack.c.h.b16 %v120
    %v299 = vunpack.c.l.b16 %v121
    %v300 = vunpack.c.h.b16 %v121
    %v301 = vunpack.c.l.b16 %v122
    %v302 = vunpack.c.h.b16 %v122
    %v303 = vunpack.c.l.b16 %v123
    %v304 = vunpack.c.h.b16 %v123
    %v305 = vunpack.c.l.b16 %v124
    %v306 = vunpack.c.h.b16 %v124
    %v307 = vunpack.c.l.b16 %v125
    %v308 = vunpack.c.h.b16 %v125
    %v309 = vunpack.c.l.b16 %v126
    %v310 = vunpack.c.h.b16 %v126
    %v311 = vunpack.c.l.b16 %v127
    %v312 = vunpack.c.h.b16 %v127
    %v313 = vunpack.c.l.b16 %v128
    %v314 = vunpack.c.h.b16 %v128
    %v315 = vunpack.c.l.b16 %v129
    %v316 = vunpack.c.h.b16 %v129
    %v317 = vunpack.c.l.b16 %v130
    %v318 = vunpack.c.h.b16 %v130
    %v319 = vunpack.c.l.b16 %v131
    %v320 = vunpack.c.h.b16 %v131
    %v321 = vunpack.c.l.b16 %v132
    %v322 = vunpack.c.h.b16 %v132
    %v323 = vunpack.c.l.b16 %v133
    %v324 = vunpack.c.h.b16 %v133
    %v325 = vunpack.c.l.b16 %v134
    %v326 = vunpack.c.h.b16 %v134
    %v327 = vunpack.c.l.b16 %v135
    %v328 = vunpack.c.h.b16 %v135
    %v329 = vunpack.c.l.b16 %v136
    %v330 = vunpack.c.h.b16 %v136
    %v331 = vunpack.c.l.b16 %v137
    %v332 = vunpack.c.h.b16 %v137
    %v333 = vunpack.c.l.b16 %v138
    %v334 = vunpack.c.h.b16 %v138
    %v335 = vunpack.c.l.b16 %v139
    %v336 = vunpack.c.h.b16 %v139
    %v337 = vunpack.c.l.b16 %v140
    %v338 = vunpack.c.h.b16 %v140
    %v339 = vunpack.c.l.b16 %v141
    %v340 = vunpack.c.h.b16 %v141
    %v341 = vunpack.c.l.b16 %v142
    %v342 = vunpack.c.h.b16 %v142
    %v343 = vunpack.c.l.b16 %v143
    %v344 = vunpack.c.h.b16 %v143
    %v345 = vunpack.c.l.b16 %v144
    %v346 = vunpack.c.h.b16 %v144
    %v347 = vunpack.c.l.b16 %v145
    %v348 = vunpack.c.h.b16 %v145
    %v349 = vunpack.c.l.b16 %v146
    %v350 = vunpack.c.h.b16 %v146
    %v351 = vunpack.c.l.b16 %v147
    %v352 = vunpack.c.h.b16 %v147
    %v353 = vunpack.c.l.b16 %v148
    %v354 = vunpack.c.h.b16 %v148
    %v355 = vunpack.c.l.b16 %v149
    %v356 = vunpack.c.h.b16 %v149
    %v357 = vunpack.c.l.b16 %v150
    %v358 = vunpack.c.h.b16 %v150
    %v359 = vunpack.c.l.b16 %v151
    %v360 = vunpack.c.h.b16 %v151
    %v361 = vunpack.c.l.b16 %v152
    %v362 = vunpack.c.h.b16 %v152
    %v363 = vunpack.c.l.b16 %v153
    %v364 = vunpack.c.h.b16 %v153
    %v365 = vunpack.c.l.b16 %v154
    %v366 = vunpack.c.h.b16 %v154
    %v367 = vunpack.c.l.b16 %v155
    %v368 = vunpack.c.h.b16 %v155
    %v369 = vunpack.c.l.b16 %v156
    %v370 = vunpack.c.h.b16 %v156
    %v371 = vunpack.c.l.b16 %v157
    %v372 = vunpack.c.h.b16 %v157
    %v373 = vunpack.c.l.b16 %v158
    %v374 = vunpack.c.h.b16 %v158
    %v375 = vunpack.c.l.b16 %v159
    %v376 = vunpack.c.h.b16 %v159
    %v377 = vunpack.c.l.b16 %v160
    %v378 = vunpack.c.h.b16 %v160
    %v379 = vunpack.c.l.b16 %v161
    %v380 = vunpack.c.h.b16 %v161
    %v381 = vunpack.c.l.b16 %v162
    %v382 = vunpack.c.h.b16 %v162
    %v383 = vunpack.c.l.b16 %v163
    %v384 = vunpack.c.h.b16 %v163
    %v385 = vunpack.c.l.b16 %v164
    %v386 = vunpack.c.h.b16 %v164
    %v387 = vunpack.c.l.b16 %v165
    %v388 = vunpack.c.h.b16 %v165
    %v389 = vunpack.c.l.b16 %v166
    %v390 = vunpack.c.h.b16 %v166
    %v391 = vunpack.c.l.b16 %v167
    %v392 = vunpack.c.h.b16 %v167
    %v393 = vunpack.c.l.b16 %v168
    %v394 = vunpack.c.h.b16 %v168
    %v395 = vunpack.c.l.b16 %v169
    %v396 = vunpack.c.h.b16 %v169
    %v397 = vunpack.c.l.b16 %v170
    %v398 = vunpack.c.h.b16 %v170
    %v399 = vunpack.c.l.b16 %v171
    %v400 = vunpack.c.h.b16 %v171
    %v401 = vunpack.c.l.b16 %v172
    %v402 = vunpack.c.h.b16 %v172
    %v403 = vunpack.c.l.b16 %v173
    %v404 = vunpack.c.h.b16 %v173
    %v405 = vunpack.c.l.b16 %v174
    %v406 = vunpack.c.h.b16 %v174
    %v407 = vunpack.c.l.b16 %v175
    %v408 = vunpack.c.h.b16 %v175
    %v409 = vunpack.c.l.b16 %v176
    %v410 = vunpack.c.h.b16 %v176
    %v411 = vunpack.c.l.b16 %v177
    %v412 = vunpack.c.h.b16 %v177
    %v413 = vunpack.c.l.b16 %v178
    %v414 = vunpack.c.h.b16 %v178
    %v415 = vunpack.c.l.b16 %v179
    %v416 = vunpack.c.h.b16 %v179
    %v417 = vunpack.c.l.b16 %v180
    %v418 = vunpack.c.h.b16 %v180
    %v419 = vunpack.c.l.b16 %v181
    %v420 = vunpack.c.h.b16 %v181
    %v421 = vunpack.c.l.b16 %v182
    %v422 = vunpack.c.h.b16 %v182
    %v423 = vpack.c.b16 %v303, %v295
    %v424 = vpack.c.b16 %v304, %v296
    %v425 = vpack.c.b16 %v305, %v297
    %v426 = vpack.c.b16 %v306, %v298
    %v427 = vpack.c.b16 %v307, %v299
    %v428 = vpack.c.b16 %v308, %v300
    %v429 = vpack.c.b16 %v309, %v301
    %v430 = vpack.c.b16 %v310, %v302
    %v431 = vpack.c.b16 %v319, %v311
    %v432 = vpack.c.b16 %v320, %v312
    %v433 = vpack.c.b16 %v321, %v313
    %v434 = vpack.c.b16 %v322, %v314
    %v435 = vpack.c.b16 %v323, %v315
    %v436 = vpack.c.b16 %v324, %v316
    %v437 = vpack.c.b16 %v325, %v317
    %v438 = vpack.c.b16 %v326, %v318
    %v439 = vpack.c.b16 %v335, %v327
    %v440 = vpack.c.b16 %v336, %v328
    %v441 = vpack.c.b16 %v337, %v329
    %v442 = vpack.c.b16 %v338, %v330
    %v443 = vpack.c.b16 %v339, %v331
    %v444 = vpack.c.b16 %v340, %v332
    %v445 = vpack.c.b16 %v341, %v333
    %v446 = vpack.c.b16 %v342, %v334
    %v447 = vpack.c.b16 %v351, %v343
    %v448 = vpack.c.b16 %v352, %v344
    %v449 = vpack.c.b16 %v353, %v345
    %v450 = vpack.c.b16 %v354, %v346
    %v451 = vpack.c.b16 %v355, %v347
    %v452 = vpack.c.b16 %v356, %v348
    %v453 = vpack.c.b16 %v357, %v349
    %v454 = vpack.c.b16 %v358, %v350
    %v455 = vpack.c.b16 %v367, %v359
    %v456 = vpack.c.b16 %v368, %v360
    %v457 = vpack.c.b16 %v369, %v361
    %v458 = vpack.c.b16 %v370, %v362
    %v459 = vpack.c.b16 %v371, %v363
    %v460 = vpack.c.b16 %v372, %v364
    %v461 = vpack.c.b16 %v373, %v365
    %v462 = vpack.c.b16 %v374, %v366
    %v463 = vpack.c.b16 %v383, %v375
    %v464 = vpack.c.b16 %v384, %v376
    %v465 = vpack.c.b16 %v385, %v377
    %v466 = vpack.c.b16 %v386, %v378
    %v467 = vpack.c.b16 %v387, %v379
    %v468 = vpack.c.b16 %v388, %v380
    %v469 = vpack.c.b16 %v389, %v381
    %v470 = vpack.c.b16 %v390, %v382
    %v471 = vpack.c.b16 %v399, %v391
    %v472 = vpack.c.b16 %v400, %v392
    %v473 = vpack.c.b16 %v401, %v393
    %v474 = vpack.c.b16 %v402, %v394
    %v475 = vpack.c.b16 %v403, %v395
    %v476 = vpack.c.b16 %v404, %v396
    %v477 = vpack.c.b16 %v405, %v397
    %v478 = vpack.c.b16 %v406, %v398
    %v479 = vpack.c.b16 %v415, %v407
    %v480 = vpack.c.b16 %v416, %v408
    %v481 = vpack.c.b16 %v417, %v409
    %v482 = vpack.c.b16 %v418, %v410
    %v483 = vpack.c.b16 %v419, %v411
    %v484 = vpack.c.b16 %v420, %v412
    %v485 = vpack.c.b16 %v421, %v413
    %v486 = vpack.c.b16 %v422, %v414
    %551 = vmatprep.subr.bf16.mxu0 %v424
    %552 = vmatpush1.bf16.msra.mxu0 %v423
    %553 = vmatprep.subr.bf16.mxu0 %v432
    %554 = vmatpush1.bf16.msra.mxu0 %v431
    %555 = vmatprep.subr.bf16.mxu0 %v440
    %556 = vmatpush1.bf16.msra.mxu0 %v439
    %557 = vmatprep.subr.bf16.mxu0 %v448
    %558 = vmatpush1.bf16.msra.mxu0 %v447
    %559 = vmatprep.subr.bf16.mxu0 %v456
    %560 = vmatpush1.bf16.msra.mxu0 %v455
    %561 = vmatprep.subr.bf16.mxu0 %v464
    %562 = vmatpush1.bf16.msra.mxu0 %v463
    %563 = vmatprep.subr.bf16.mxu0 %v472
    %564 = vmatpush1.bf16.msra.mxu0 %v471
    %565 = vmatprep.subr.bf16.mxu0 %v480
    %566 = vmatpush1.bf16.msra.mxu0 %v479
    %567 = vmatprep.subr.bf16.mxu0 0
    %568 = vmatpush1.bf16.msra.mxu0 0
    %569 = vmatprep.subr.bf16.mxu0 0
    %570 = vmatpush1.bf16.msra.mxu0 0
    %571 = vmatprep.subr.bf16.mxu0 0
    %572 = vmatpush1.bf16.msra.mxu0 0
    %573 = vmatprep.subr.bf16.mxu0 0
    %574 = vmatpush1.bf16.msra.mxu0 0
    %575 = vmatprep.subr.bf16.mxu0 0
    %576 = vmatpush1.bf16.msra.mxu0 0
    %577 = vmatprep.subr.bf16.mxu0 0
    %578 = vmatpush1.bf16.msra.mxu0 0
    %579 = vmatprep.subr.bf16.mxu0 0
    %580 = vmatpush1.bf16.msra.mxu0 0
    %581 = vmatprep.subr.bf16.mxu0 0
    %582 = vmatpush1.bf16.msra.mxu0 0
    %583 = vmatprep.mubr.bf16.mxu0 0
    %584 = vmatmul.mubr.bf16.gmra.mrb[0].mxu0 %v229
    %v585 = vpop.f32.mrb[0].mxu0
    %v586 = vadd.f32 %v188, %v585
    %v587 = vpop.f32.mrb[0].mxu0
    %v588 = vadd.f32 %v192, %v587
    %v589 = vpop.f32.mrb[0].mxu0
    %v590 = vadd.f32 %v188, %v589
    %v591 = vpop.f32.mrb[0].mxu0
    %v592 = vadd.f32 %v192, %v591
    %593 = vdwg.mxu0
    %594 = vmatprep.subr.bf16.mxu0 %v426
    %595 = vmatpush1.bf16.msra.mxu0 %v425
    %596 = vmatprep.subr.bf16.mxu0 %v434
    %597 = vmatpush1.bf16.msra.mxu0 %v433
    %598 = vmatprep.subr.bf16.mxu0 %v442
    %599 = vmatpush1.bf16.msra.mxu0 %v441
    %600 = vmatprep.subr.bf16.mxu0 %v450
    %601 = vmatpush1.bf16.msra.mxu0 %v449
    %602 = vmatprep.subr.bf16.mxu0 %v458
    %603 = vmatpush1.bf16.msra.mxu0 %v457
    %604 = vmatprep.subr.bf16.mxu0 %v466
    %605 = vmatpush1.bf16.msra.mxu0 %v465
    %606 = vmatprep.subr.bf16.mxu0 %v474
    %607 = vmatpush1.bf16.msra.mxu0 %v473
    %608 = vmatprep.subr.bf16.mxu0 %v482
    %609 = vmatpush1.bf16.msra.mxu0 %v481
    %610 = vmatprep.subr.bf16.mxu0 0
    %611 = vmatpush1.bf16.msra.mxu0 0
    %612 = vmatprep.subr.bf16.mxu0 0
    %613 = vmatpush1.bf16.msra.mxu0 0
    %614 = vmatprep.subr.bf16.mxu0 0
    %615 = vmatpush1.bf16.msra.mxu0 0
    %616 = vmatprep.subr.bf16.mxu0 0
    %617 = vmatpush1.bf16.msra.mxu0 0
    %618 = vmatprep.subr.bf16.mxu0 0
    %619 = vmatpush1.bf16.msra.mxu0 0
    %620 = vmatprep.subr.bf16.mxu0 0
    %621 = vmatpush1.bf16.msra.mxu0 0
    %622 = vmatprep.subr.bf16.mxu0 0
    %623 = vmatpush1.bf16.msra.mxu0 0
    %624 = vmatprep.subr.bf16.mxu0 0
    %625 = vmatpush1.bf16.msra.mxu0 0
    %626 = vmatprep.mubr.bf16.mxu0 0
    %627 = vmatmul.mubr.bf16.gmra.mrb[0].mxu0 %v229
    %v628 = vpop.f32.mrb[0].mxu0
    %v629 = vadd.f32 %v196, %v628
    %v630 = vpop.f32.mrb[0].mxu0
    %v631 = vadd.f32 %v200, %v630
    %v632 = vpop.f32.mrb[0].mxu0
    %v633 = vadd.f32 %v196, %v632
    %v634 = vpop.f32.mrb[0].mxu0
    %v635 = vadd.f32 %v200, %v634
    %636 = vdwg.mxu0
    %637 = vmatprep.subr.bf16.mxu0 %v428
    %638 = vmatpush1.bf16.msra.mxu0 %v427
    %639 = vmatprep.subr.bf16.mxu0 %v436
    %640 = vmatpush1.bf16.msra.mxu0 %v435
    %641 = vmatprep.subr.bf16.mxu0 %v444
    %642 = vmatpush1.bf16.msra.mxu0 %v443
    %643 = vmatprep.subr.bf16.mxu0 %v452
    %644 = vmatpush1.bf16.msra.mxu0 %v451
    %645 = vmatprep.subr.bf16.mxu0 %v460
    %646 = vmatpush1.bf16.msra.mxu0 %v459
    %647 = vmatprep.subr.bf16.mxu0 %v468
    %648 = vmatpush1.bf16.msra.mxu0 %v467
    %649 = vmatprep.subr.bf16.mxu0 %v476
    %650 = vmatpush1.bf16.msra.mxu0 %v475
    %651 = vmatprep.subr.bf16.mxu0 %v484
    %652 = vmatpush1.bf16.msra.mxu0 %v483
    %653 = vmatprep.subr.bf16.mxu0 0
    %654 = vmatpush1.bf16.msra.mxu0 0
    %655 = vmatprep.subr.bf16.mxu0 0
    %656 = vmatpush1.bf16.msra.mxu0 0
    %657 = vmatprep.subr.bf16.mxu0 0
    %658 = vmatpush1.bf16.msra.mxu0 0
    %659 = vmatprep.subr.bf16.mxu0 0
    %660 = vmatpush1.bf16.msra.mxu0 0
    %661 = vmatprep.subr.bf16.mxu0 0
    %662 = vmatpush1.bf16.msra.mxu0 0
    %663 = vmatprep.subr.bf16.mxu0 0
    %664 = vmatpush1.bf16.msra.mxu0 0
    %665 = vmatprep.subr.bf16.mxu0 0
    %666 = vmatpush1.bf16.msra.mxu0 0
    %667 = vmatprep.subr.bf16.mxu0 0
    %668 = vmatpush1.bf16.msra.mxu0 0
    %669 = vmatprep.mubr.bf16.mxu0 0
    %670 = vmatmul.mubr.bf16.gmra.mrb[0].mxu0 %v229
    %v671 = vpop.f32.mrb[0].mxu0
    %v672 = vadd.f32 %v204, %v671
    %v673 = vpop.f32.mrb[0].mxu0
    %v674 = vadd.f32 %v208, %v673
    %v675 = vpop.f32.mrb[0].mxu0
    %v676 = vadd.f32 %v204, %v675
    %v677 = vpop.f32.mrb[0].mxu0
    %v678 = vadd.f32 %v208, %v677
    %679 = vdwg.mxu0
    %680 = vmatprep.subr.bf16.mxu0 %v430
    %681 = vmatpush1.bf16.msra.mxu0 %v429
    %682 = vmatprep.subr.bf16.mxu0 %v438
    %683 = vmatpush1.bf16.msra.mxu0 %v437
    %684 = vmatprep.subr.bf16.mxu0 %v446
    %685 = vmatpush1.bf16.msra.mxu0 %v445
    %686 = vmatprep.subr.bf16.mxu0 %v454
    %687 = vmatpush1.bf16.msra.mxu0 %v453
    %688 = vmatprep.subr.bf16.mxu0 %v462
    %689 = vmatpush1.bf16.msra.mxu0 %v461
    %690 = vmatprep.subr.bf16.mxu0 %v470
    %691 = vmatpush1.bf16.msra.mxu0 %v469
    %692 = vmatprep.subr.bf16.mxu0 %v478
    %693 = vmatpush1.bf16.msra.mxu0 %v477
    %694 = vmatprep.subr.bf16.mxu0 %v486
    %695 = vmatpush1.bf16.msra.mxu0 %v485
    %696 = vmatprep.subr.bf16.mxu0 0
    %697 = vmatpush1.bf16.msra.mxu0 0
    %698 = vmatprep.subr.bf16.mxu0 0
    %699 = vmatpush1.bf16.msra.mxu0 0
    %700 = vmatprep.subr.bf16.mxu0 0
    %701 = vmatpush1.bf16.msra.mxu0 0
    %702 = vmatprep.subr.bf16.mxu0 0
    %703 = vmatpush1.bf16.msra.mxu0 0
    %704 = vmatprep.subr.bf16.mxu0 0
    %705 = vmatpush1.bf16.msra.mxu0 0
    %706 = vmatprep.subr.bf16.mxu0 0
    %707 = vmatpush1.bf16.msra.mxu0 0
    %708 = vmatprep.subr.bf16.mxu0 0
    %709 = vmatpush1.bf16.msra.mxu0 0
    %710 = vmatprep.subr.bf16.mxu0 0
    %711 = vmatpush1.bf16.msra.mxu0 0
    %712 = vmatprep.mubr.bf16.mxu0 0
    %713 = vmatmul.mubr.bf16.gmra.mrb[0].mxu0 %v229
    %v714 = vpop.f32.mrb[0].mxu0
    %v715 = vadd.f32 %v212, %v714
    %v716 = vpop.f32.mrb[0].mxu0
    %v717 = vadd.f32 %v216, %v716
    %v718 = vpop.f32.mrb[0].mxu0
    %v719 = vadd.f32 %v212, %v718
    %v720 = vpop.f32.mrb[0].mxu0
    %v721 = vadd.f32 %v216, %v720
    %722 = vdwg.mxu0
    %vm723 = vcmp.gt.f32.partialorder %v586, 0.0
    %vm724 = vcmp.gt.f32.partialorder %v588, 0.0
    %vm725 = vcmp.gt.f32.partialorder %v629, 0.0
    %vm726 = vcmp.gt.f32.partialorder %v631, 0.0
    %vm727 = vcmp.gt.f32.partialorder %v672, 0.0
    %vm728 = vcmp.gt.f32.partialorder %v674, 0.0
    %vm729 = vcmp.gt.f32.partialorder %v715, 0.0
    %vm730 = vcmp.gt.f32.partialorder %v717, 0.0
    %vm731 = vcmp.gt.f32.partialorder %v590, 0.0
    %vm732 = vcmp.gt.f32.partialorder %v592, 0.0
    %vm733 = vcmp.gt.f32.partialorder %v633, 0.0
    %vm734 = vcmp.gt.f32.partialorder %v635, 0.0
    %vm735 = vcmp.gt.f32.partialorder %v676, 0.0
    %vm736 = vcmp.gt.f32.partialorder %v678, 0.0
    %vm737 = vcmp.gt.f32.partialorder %v719, 0.0
    %vm738 = vcmp.gt.f32.partialorder %v721, 0.0
    %v739 = vmul.f32 %v586, 0.01
    %v740 = vmul.f32 %v588, 0.01
    %v741 = vmul.f32 %v629, 0.01
    %v742 = vmul.f32 %v631, 0.01
    %v743 = vmul.f32 %v672, 0.01
    %v744 = vmul.f32 %v674, 0.01
    %v745 = vmul.f32 %v715, 0.01
    %v746 = vmul.f32 %v717, 0.01
    %v747 = vmul.f32 %v590, 0.01
    %v748 = vmul.f32 %v592, 0.01
    %v749 = vmul.f32 %v633, 0.01
    %v750 = vmul.f32 %v635, 0.01
    %v751 = vmul.f32 %v676, 0.01
    %v752 = vmul.f32 %v678, 0.01
    %v753 = vmul.f32 %v719, 0.01
    %v754 = vmul.f32 %v721, 0.01
    %v755 = vsel %vm723, %v586, %v739
    %v756 = vsel %vm724, %v588, %v740
    %v757 = vsel %vm725, %v629, %v741
    %v758 = vsel %vm726, %v631, %v742
    %v759 = vsel %vm727, %v672, %v743
    %v760 = vsel %vm728, %v674, %v744
    %v761 = vsel %vm729, %v715, %v745
    %v762 = vsel %vm730, %v717, %v746
    %v763 = vsel %vm731, %v590, %v747
    %v764 = vsel %vm732, %v592, %v748
    %v765 = vsel %vm733, %v633, %v749
    %v766 = vsel %vm734, %v635, %v750
    %v767 = vsel %vm735, %v676, %v751
    %v768 = vsel %vm736, %v678, %v752
    %v769 = vsel %vm737, %v719, %v753
    %v770 = vsel %vm738, %v721, %v754
    %v771 = vpack.c.bf16 %v763, %v755
    %v772 = vpack.c.bf16 %v764, %v756
    %v773 = vpack.c.bf16 %v765, %v757
    %v774 = vpack.c.bf16 %v766, %v758
    %v775 = vpack.c.bf16 %v767, %v759
    %v776 = vpack.c.bf16 %v768, %v760
    %v777 = vpack.c.bf16 %v769, %v761
    %v778 = vpack.c.bf16 %v770, %v762
    %v779 = vld [vmem:[#allocation8] sm:$0xff]
    %v780 = vld [vmem:[#allocation8 + $0x8] sm:$0xff]
    %v781 = vld [vmem:[#allocation8 + $0x10] sm:$0xff]
    %v782 = vld [vmem:[#allocation8 + $0x18] sm:$0xff]
    %v783 = vld [vmem:[#allocation8 + $0x20] sm:$0xff]
    %v784 = vld [vmem:[#allocation8 + $0x28] sm:$0xff]
    %v785 = vld [vmem:[#allocation8 + $0x30] sm:$0xff]
    %v786 = vld [vmem:[#allocation8 + $0x38] sm:$0xff]
    %v787 = vld [vmem:[#allocation8 + $0x40] sm:$0xff]
    %v788 = vld [vmem:[#allocation8 + $0x48] sm:$0xff]
    %v789 = vld [vmem:[#allocation8 + $0x50] sm:$0xff]
    %v790 = vld [vmem:[#allocation8 + $0x58] sm:$0xff]
    %v791 = vld [vmem:[#allocation8 + $0x60] sm:$0xff]
    %v792 = vld [vmem:[#allocation8 + $0x68] sm:$0xff]
    %v793 = vld [vmem:[#allocation8 + $0x70] sm:$0xff]
    %v794 = vld [vmem:[#allocation8 + $0x78] sm:$0xff]
    %v795 = vld [vmem:[#allocation8 + $0x80] sm:$0xff]
    %v796 = vld [vmem:[#allocation8 + $0x88] sm:$0xff]
    %v797 = vld [vmem:[#allocation8 + $0x90] sm:$0xff]
    %v798 = vld [vmem:[#allocation8 + $0x98] sm:$0xff]
    %v799 = vld [vmem:[#allocation8 + $0xa0] sm:$0xff]
    %v800 = vld [vmem:[#allocation8 + $0xa8] sm:$0xff]
    %v801 = vld [vmem:[#allocation8 + $0xb0] sm:$0xff]
    %v802 = vld [vmem:[#allocation8 + $0xb8] sm:$0xff]
    %v803 = vld [vmem:[#allocation8 + $0xc0] sm:$0xff]
    %v804 = vld [vmem:[#allocation8 + $0xc8] sm:$0xff]
    %v805 = vld [vmem:[#allocation8 + $0xd0] sm:$0xff]
    %v806 = vld [vmem:[#allocation8 + $0xd8] sm:$0xff]
    %v807 = vld [vmem:[#allocation8 + $0xe0] sm:$0xff]
    %v808 = vld [vmem:[#allocation8 + $0xe8] sm:$0xff]
    %v809 = vld [vmem:[#allocation8 + $0xf0] sm:$0xff]
    %v810 = vld [vmem:[#allocation8 + $0xf8] sm:$0xff]
    %v811 = vld [vmem:[#allocation8 + $0x100] sm:$0xff]
    %v812 = vld [vmem:[#allocation8 + $0x108] sm:$0xff]
    %v813 = vld [vmem:[#allocation8 + $0x110] sm:$0xff]
    %v814 = vld [vmem:[#allocation8 + $0x118] sm:$0xff]
    %v815 = vld [vmem:[#allocation8 + $0x120] sm:$0xff]
    %v816 = vld [vmem:[#allocation8 + $0x128] sm:$0xff]
    %v817 = vld [vmem:[#allocation8 + $0x130] sm:$0xff]
    %v818 = vld [vmem:[#allocation8 + $0x138] sm:$0xff]
    %v819 = vld [vmem:[#allocation8 + $0x140] sm:$0xff]
    %v820 = vld [vmem:[#allocation8 + $0x148] sm:$0xff]
    %v821 = vld [vmem:[#allocation8 + $0x150] sm:$0xff]
    %v822 = vld [vmem:[#allocation8 + $0x158] sm:$0xff]
    %v823 = vld [vmem:[#allocation8 + $0x160] sm:$0xff]
    %v824 = vld [vmem:[#allocation8 + $0x168] sm:$0xff]
    %v825 = vld [vmem:[#allocation8 + $0x170] sm:$0xff]
    %v826 = vld [vmem:[#allocation8 + $0x178] sm:$0xff]
    %v827 = vld [vmem:[#allocation8 + $0x180] sm:$0xff]
    %v828 = vld [vmem:[#allocation8 + $0x188] sm:$0xff]
    %v829 = vld [vmem:[#allocation8 + $0x190] sm:$0xff]
    %v830 = vld [vmem:[#allocation8 + $0x198] sm:$0xff]
    %v831 = vld [vmem:[#allocation8 + $0x1a0] sm:$0xff]
    %v832 = vld [vmem:[#allocation8 + $0x1a8] sm:$0xff]
    %v833 = vld [vmem:[#allocation8 + $0x1b0] sm:$0xff]
    %v834 = vld [vmem:[#allocation8 + $0x1b8] sm:$0xff]
    %v835 = vld [vmem:[#allocation8 + $0x1c0] sm:$0xff]
    %v836 = vld [vmem:[#allocation8 + $0x1c8] sm:$0xff]
    %v837 = vld [vmem:[#allocation8 + $0x1d0] sm:$0xff]
    %v838 = vld [vmem:[#allocation8 + $0x1d8] sm:$0xff]
    %v839 = vld [vmem:[#allocation8 + $0x1e0] sm:$0xff]
    %v840 = vld [vmem:[#allocation8 + $0x1e8] sm:$0xff]
    %v841 = vld [vmem:[#allocation8 + $0x1f0] sm:$0xff]
    %v842 = vld [vmem:[#allocation8 + $0x1f8] sm:$0xff]
    %v843 = vld [vmem:[#allocation8 + $0x200] sm:$0xff]
    %v844 = vld [vmem:[#allocation8 + $0x208] sm:$0xff]
    %v845 = vld [vmem:[#allocation8 + $0x210] sm:$0xff]
    %v846 = vld [vmem:[#allocation8 + $0x218] sm:$0xff]
    %v847 = vld [vmem:[#allocation8 + $0x220] sm:$0xff]
    %v848 = vld [vmem:[#allocation8 + $0x228] sm:$0xff]
    %v849 = vld [vmem:[#allocation8 + $0x230] sm:$0xff]
    %v850 = vld [vmem:[#allocation8 + $0x238] sm:$0xff]
    %v851 = vld [vmem:[#allocation8 + $0x240] sm:$0xff]
    %v852 = vld [vmem:[#allocation8 + $0x248] sm:$0xff]
    %v853 = vld [vmem:[#allocation8 + $0x250] sm:$0xff]
    %v854 = vld [vmem:[#allocation8 + $0x258] sm:$0xff]
    %v855 = vld [vmem:[#allocation8 + $0x260] sm:$0xff]
    %v856 = vld [vmem:[#allocation8 + $0x268] sm:$0xff]
    %v857 = vld [vmem:[#allocation8 + $0x270] sm:$0xff]
    %v858 = vld [vmem:[#allocation8 + $0x278] sm:$0xff]
    %v859 = vld [vmem:[#allocation8 + $0x280] sm:$0xff]
    %v860 = vld [vmem:[#allocation8 + $0x288] sm:$0xff]
    %v861 = vld [vmem:[#allocation8 + $0x290] sm:$0xff]
    %v862 = vld [vmem:[#allocation8 + $0x298] sm:$0xff]
    %v863 = vld [vmem:[#allocation8 + $0x2a0] sm:$0xff]
    %v864 = vld [vmem:[#allocation8 + $0x2a8] sm:$0xff]
    %v865 = vld [vmem:[#allocation8 + $0x2b0] sm:$0xff]
    %v866 = vld [vmem:[#allocation8 + $0x2b8] sm:$0xff]
    %v867 = vld [vmem:[#allocation8 + $0x2c0] sm:$0xff]
    %v868 = vld [vmem:[#allocation8 + $0x2c8] sm:$0xff]
    %v869 = vld [vmem:[#allocation8 + $0x2d0] sm:$0xff]
    %v870 = vld [vmem:[#allocation8 + $0x2d8] sm:$0xff]
    %v871 = vld [vmem:[#allocation8 + $0x2e0] sm:$0xff]
    %v872 = vld [vmem:[#allocation8 + $0x2e8] sm:$0xff]
    %v873 = vld [vmem:[#allocation8 + $0x2f0] sm:$0xff]
    %v874 = vld [vmem:[#allocation8 + $0x2f8] sm:$0xff]
    %v875 = vld [vmem:[#allocation8 + $0x300] sm:$0xff]
    %v876 = vld [vmem:[#allocation8 + $0x308] sm:$0xff]
    %v877 = vld [vmem:[#allocation8 + $0x310] sm:$0xff]
    %v878 = vld [vmem:[#allocation8 + $0x318] sm:$0xff]
    %v879 = vld [vmem:[#allocation8 + $0x320] sm:$0xff]
    %v880 = vld [vmem:[#allocation8 + $0x328] sm:$0xff]
    %v881 = vld [vmem:[#allocation8 + $0x330] sm:$0xff]
    %v882 = vld [vmem:[#allocation8 + $0x338] sm:$0xff]
    %v883 = vld [vmem:[#allocation8 + $0x340] sm:$0xff]
    %v884 = vld [vmem:[#allocation8 + $0x348] sm:$0xff]
    %v885 = vld [vmem:[#allocation8 + $0x350] sm:$0xff]
    %v886 = vld [vmem:[#allocation8 + $0x358] sm:$0xff]
    %v887 = vld [vmem:[#allocation8 + $0x360] sm:$0xff]
    %v888 = vld [vmem:[#allocation8 + $0x368] sm:$0xff]
    %v889 = vld [vmem:[#allocation8 + $0x370] sm:$0xff]
    %v890 = vld [vmem:[#allocation8 + $0x378] sm:$0xff]
    %v891 = vld [vmem:[#allocation8 + $0x380] sm:$0xff]
    %v892 = vld [vmem:[#allocation8 + $0x388] sm:$0xff]
    %v893 = vld [vmem:[#allocation8 + $0x390] sm:$0xff]
    %v894 = vld [vmem:[#allocation8 + $0x398] sm:$0xff]
    %v895 = vld [vmem:[#allocation8 + $0x3a0] sm:$0xff]
    %v896 = vld [vmem:[#allocation8 + $0x3a8] sm:$0xff]
    %v897 = vld [vmem:[#allocation8 + $0x3b0] sm:$0xff]
    %v898 = vld [vmem:[#allocation8 + $0x3b8] sm:$0xff]
    %v899 = vld [vmem:[#allocation8 + $0x3c0] sm:$0xff]
    %v900 = vld [vmem:[#allocation8 + $0x3c8] sm:$0xff]
    %v901 = vld [vmem:[#allocation8 + $0x3d0] sm:$0xff]
    %v902 = vld [vmem:[#allocation8 + $0x3d8] sm:$0xff]
    %v903 = vld [vmem:[#allocation8 + $0x3e0] sm:$0xff]
    %v904 = vld [vmem:[#allocation8 + $0x3e8] sm:$0xff]
    %v905 = vld [vmem:[#allocation8 + $0x3f0] sm:$0xff]
    %v906 = vld [vmem:[#allocation8 + $0x3f8] sm:$0xff]
    %v907 = vld [vmem:[#allocation8 + $0x400] sm:$0xff]
    %v908 = vld [vmem:[#allocation8 + $0x408] sm:$0xff]
    %v909 = vld [vmem:[#allocation8 + $0x410] sm:$0xff]
    %v910 = vld [vmem:[#allocation8 + $0x418] sm:$0xff]
    %v911 = vld [vmem:[#allocation8 + $0x420] sm:$0xff]
    %v912 = vld [vmem:[#allocation8 + $0x428] sm:$0xff]
    %v913 = vld [vmem:[#allocation8 + $0x430] sm:$0xff]
    %v914 = vld [vmem:[#allocation8 + $0x438] sm:$0xff]
    %v915 = vld [vmem:[#allocation8 + $0x440] sm:$0xff]
    %v916 = vld [vmem:[#allocation8 + $0x448] sm:$0xff]
    %v917 = vld [vmem:[#allocation8 + $0x450] sm:$0xff]
    %v918 = vld [vmem:[#allocation8 + $0x458] sm:$0xff]
    %v919 = vld [vmem:[#allocation8 + $0x460] sm:$0xff]
    %v920 = vld [vmem:[#allocation8 + $0x468] sm:$0xff]
    %v921 = vld [vmem:[#allocation8 + $0x470] sm:$0xff]
    %v922 = vld [vmem:[#allocation8 + $0x478] sm:$0xff]
    %v923 = vld [vmem:[#allocation8 + $0x480] sm:$0xff]
    %v924 = vld [vmem:[#allocation8 + $0x488] sm:$0xff]
    %v925 = vld [vmem:[#allocation8 + $0x490] sm:$0xff]
    %v926 = vld [vmem:[#allocation8 + $0x498] sm:$0xff]
    %v927 = vld [vmem:[#allocation8 + $0x4a0] sm:$0xff]
    %v928 = vld [vmem:[#allocation8 + $0x4a8] sm:$0xff]
    %v929 = vld [vmem:[#allocation8 + $0x4b0] sm:$0xff]
    %v930 = vld [vmem:[#allocation8 + $0x4b8] sm:$0xff]
    %v931 = vld [vmem:[#allocation8 + $0x4c0] sm:$0xff]
    %v932 = vld [vmem:[#allocation8 + $0x4c8] sm:$0xff]
    %v933 = vld [vmem:[#allocation8 + $0x4d0] sm:$0xff]
    %v934 = vld [vmem:[#allocation8 + $0x4d8] sm:$0xff]
    %v935 = vld [vmem:[#allocation8 + $0x4e0] sm:$0xff]
    %v936 = vld [vmem:[#allocation8 + $0x4e8] sm:$0xff]
    %v937 = vld [vmem:[#allocation8 + $0x4f0] sm:$0xff]
    %v938 = vld [vmem:[#allocation8 + $0x4f8] sm:$0xff]
    %v939 = vld [vmem:[#allocation8 + $0x500] sm:$0xff]
    %v940 = vld [vmem:[#allocation8 + $0x508] sm:$0xff]
    %v941 = vld [vmem:[#allocation8 + $0x510] sm:$0xff]
    %v942 = vld [vmem:[#allocation8 + $0x518] sm:$0xff]
    %v943 = vld [vmem:[#allocation8 + $0x520] sm:$0xff]
    %v944 = vld [vmem:[#allocation8 + $0x528] sm:$0xff]
    %v945 = vld [vmem:[#allocation8 + $0x530] sm:$0xff]
    %v946 = vld [vmem:[#allocation8 + $0x538] sm:$0xff]
    %v947 = vld [vmem:[#allocation8 + $0x540] sm:$0xff]
    %v948 = vld [vmem:[#allocation8 + $0x548] sm:$0xff]
    %v949 = vld [vmem:[#allocation8 + $0x550] sm:$0xff]
    %v950 = vld [vmem:[#allocation8 + $0x558] sm:$0xff]
    %v951 = vld [vmem:[#allocation8 + $0x560] sm:$0xff]
    %v952 = vld [vmem:[#allocation8 + $0x568] sm:$0xff]
    %v953 = vld [vmem:[#allocation8 + $0x570] sm:$0xff]
    %v954 = vld [vmem:[#allocation8 + $0x578] sm:$0xff]
    %v955 = vld [vmem:[#allocation8 + $0x580] sm:$0xff]
    %v956 = vld [vmem:[#allocation8 + $0x588] sm:$0xff]
    %v957 = vld [vmem:[#allocation8 + $0x590] sm:$0xff]
    %v958 = vld [vmem:[#allocation8 + $0x598] sm:$0xff]
    %v959 = vld [vmem:[#allocation8 + $0x5a0] sm:$0xff]
    %v960 = vld [vmem:[#allocation8 + $0x5a8] sm:$0xff]
    %v961 = vld [vmem:[#allocation8 + $0x5b0] sm:$0xff]
    %v962 = vld [vmem:[#allocation8 + $0x5b8] sm:$0xff]
    %v963 = vld [vmem:[#allocation8 + $0x5c0] sm:$0xff]
    %v964 = vld [vmem:[#allocation8 + $0x5c8] sm:$0xff]
    %v965 = vld [vmem:[#allocation8 + $0x5d0] sm:$0xff]
    %v966 = vld [vmem:[#allocation8 + $0x5d8] sm:$0xff]
    %v967 = vld [vmem:[#allocation8 + $0x5e0] sm:$0xff]
    %v968 = vld [vmem:[#allocation8 + $0x5e8] sm:$0xff]
    %v969 = vld [vmem:[#allocation8 + $0x5f0] sm:$0xff]
    %v970 = vld [vmem:[#allocation8 + $0x5f8] sm:$0xff]
    %v971 = vld [vmem:[#allocation8 + $0x600] sm:$0xff]
    %v972 = vld [vmem:[#allocation8 + $0x608] sm:$0xff]
    %v973 = vld [vmem:[#allocation8 + $0x610] sm:$0xff]
    %v974 = vld [vmem:[#allocation8 + $0x618] sm:$0xff]
    %v975 = vld [vmem:[#allocation8 + $0x620] sm:$0xff]
    %v976 = vld [vmem:[#allocation8 + $0x628] sm:$0xff]
    %v977 = vld [vmem:[#allocation8 + $0x630] sm:$0xff]
    %v978 = vld [vmem:[#allocation8 + $0x638] sm:$0xff]
    %v979 = vld [vmem:[#allocation8 + $0x640] sm:$0xff]
    %v980 = vld [vmem:[#allocation8 + $0x648] sm:$0xff]
    %v981 = vld [vmem:[#allocation8 + $0x650] sm:$0xff]
    %v982 = vld [vmem:[#allocation8 + $0x658] sm:$0xff]
    %v983 = vld [vmem:[#allocation8 + $0x660] sm:$0xff]
    %v984 = vld [vmem:[#allocation8 + $0x668] sm:$0xff]
    %v985 = vld [vmem:[#allocation8 + $0x670] sm:$0xff]
    %v986 = vld [vmem:[#allocation8 + $0x678] sm:$0xff]
    %v987 = vld [vmem:[#allocation8 + $0x680] sm:$0xff]
    %v988 = vld [vmem:[#allocation8 + $0x688] sm:$0xff]
    %v989 = vld [vmem:[#allocation8 + $0x690] sm:$0xff]
    %v990 = vld [vmem:[#allocation8 + $0x698] sm:$0xff]
    %v991 = vld [vmem:[#allocation8 + $0x6a0] sm:$0xff]
    %v992 = vld [vmem:[#allocation8 + $0x6a8] sm:$0xff]
    %v993 = vld [vmem:[#allocation8 + $0x6b0] sm:$0xff]
    %v994 = vld [vmem:[#allocation8 + $0x6b8] sm:$0xff]
    %v995 = vld [vmem:[#allocation8 + $0x6c0] sm:$0xff]
    %v996 = vld [vmem:[#allocation8 + $0x6c8] sm:$0xff]
    %v997 = vld [vmem:[#allocation8 + $0x6d0] sm:$0xff]
    %v998 = vld [vmem:[#allocation8 + $0x6d8] sm:$0xff]
    %v999 = vld [vmem:[#allocation8 + $0x6e0] sm:$0xff]
    %v1000 = vld [vmem:[#allocation8 + $0x6e8] sm:$0xff]
    %v1001 = vld [vmem:[#allocation8 + $0x6f0] sm:$0xff]
    %v1002 = vld [vmem:[#allocation8 + $0x6f8] sm:$0xff]
    %v1003 = vld [vmem:[#allocation8 + $0x700] sm:$0xff]
    %v1004 = vld [vmem:[#allocation8 + $0x708] sm:$0xff]
    %v1005 = vld [vmem:[#allocation8 + $0x710] sm:$0xff]
    %v1006 = vld [vmem:[#allocation8 + $0x718] sm:$0xff]
    %v1007 = vld [vmem:[#allocation8 + $0x720] sm:$0xff]
    %v1008 = vld [vmem:[#allocation8 + $0x728] sm:$0xff]
    %v1009 = vld [vmem:[#allocation8 + $0x730] sm:$0xff]
    %v1010 = vld [vmem:[#allocation8 + $0x738] sm:$0xff]
    %v1011 = vld [vmem:[#allocation8 + $0x740] sm:$0xff]
    %v1012 = vld [vmem:[#allocation8 + $0x748] sm:$0xff]
    %v1013 = vld [vmem:[#allocation8 + $0x750] sm:$0xff]
    %v1014 = vld [vmem:[#allocation8 + $0x758] sm:$0xff]
    %v1015 = vld [vmem:[#allocation8 + $0x760] sm:$0xff]
    %v1016 = vld [vmem:[#allocation8 + $0x768] sm:$0xff]
    %v1017 = vld [vmem:[#allocation8 + $0x770] sm:$0xff]
    %v1018 = vld [vmem:[#allocation8 + $0x778] sm:$0xff]
    %v1019 = vld [vmem:[#allocation8 + $0x780] sm:$0xff]
    %v1020 = vld [vmem:[#allocation8 + $0x788] sm:$0xff]
    %v1021 = vld [vmem:[#allocation8 + $0x790] sm:$0xff]
    %v1022 = vld [vmem:[#allocation8 + $0x798] sm:$0xff]
    %v1023 = vld [vmem:[#allocation8 + $0x7a0] sm:$0xff]
    %v1024 = vld [vmem:[#allocation8 + $0x7a8] sm:$0xff]
    %v1025 = vld [vmem:[#allocation8 + $0x7b0] sm:$0xff]
    %v1026 = vld [vmem:[#allocation8 + $0x7b8] sm:$0xff]
    %v1027 = vld [vmem:[#allocation8 + $0x7c0] sm:$0xff]
    %v1028 = vld [vmem:[#allocation8 + $0x7c8] sm:$0xff]
    %v1029 = vld [vmem:[#allocation8 + $0x7d0] sm:$0xff]
    %v1030 = vld [vmem:[#allocation8 + $0x7d8] sm:$0xff]
    %v1031 = vld [vmem:[#allocation8 + $0x7e0] sm:$0xff]
    %v1032 = vld [vmem:[#allocation8 + $0x7e8] sm:$0xff]
    %v1033 = vld [vmem:[#allocation8 + $0x7f0] sm:$0xff]
    %v1034 = vld [vmem:[#allocation8 + $0x7f8] sm:$0xff]
    %v1035 = vld [vmem:[#allocation8 + $0x800] sm:$0xff]
    %v1036 = vld [vmem:[#allocation8 + $0x808] sm:$0xff]
    %v1037 = vld [vmem:[#allocation8 + $0x810] sm:$0xff]
    %v1038 = vld [vmem:[#allocation8 + $0x818] sm:$0xff]
    %v1039 = vld [vmem:[#allocation8 + $0x820] sm:$0xff]
    %v1040 = vld [vmem:[#allocation8 + $0x828] sm:$0xff]
    %v1041 = vld [vmem:[#allocation8 + $0x830] sm:$0xff]
    %v1042 = vld [vmem:[#allocation8 + $0x838] sm:$0xff]
    %v1043 = vld [vmem:[#allocation8 + $0x840] sm:$0xff]
    %v1044 = vld [vmem:[#allocation8 + $0x848] sm:$0xff]
    %v1045 = vld [vmem:[#allocation8 + $0x850] sm:$0xff]
    %v1046 = vld [vmem:[#allocation8 + $0x858] sm:$0xff]
    %v1047 = vld [vmem:[#allocation8 + $0x860] sm:$0xff]
    %v1048 = vld [vmem:[#allocation8 + $0x868] sm:$0xff]
    %v1049 = vld [vmem:[#allocation8 + $0x870] sm:$0xff]
    %v1050 = vld [vmem:[#allocation8 + $0x878] sm:$0xff]
    %v1051 = vld [vmem:[#allocation8 + $0x880] sm:$0xff]
    %v1052 = vld [vmem:[#allocation8 + $0x888] sm:$0xff]
    %v1053 = vld [vmem:[#allocation8 + $0x890] sm:$0xff]
    %v1054 = vld [vmem:[#allocation8 + $0x898] sm:$0xff]
    %v1055 = vld [vmem:[#allocation8 + $0x8a0] sm:$0xff]
    %v1056 = vld [vmem:[#allocation8 + $0x8a8] sm:$0xff]
    %v1057 = vld [vmem:[#allocation8 + $0x8b0] sm:$0xff]
    %v1058 = vld [vmem:[#allocation8 + $0x8b8] sm:$0xff]
    %v1059 = vld [vmem:[#allocation8 + $0x8c0] sm:$0xff]
    %v1060 = vld [vmem:[#allocation8 + $0x8c8] sm:$0xff]
    %v1061 = vld [vmem:[#allocation8 + $0x8d0] sm:$0xff]
    %v1062 = vld [vmem:[#allocation8 + $0x8d8] sm:$0xff]
    %v1063 = vld [vmem:[#allocation8 + $0x8e0] sm:$0xff]
    %v1064 = vld [vmem:[#allocation8 + $0x8e8] sm:$0xff]
    %v1065 = vld [vmem:[#allocation8 + $0x8f0] sm:$0xff]
    %v1066 = vld [vmem:[#allocation8 + $0x8f8] sm:$0xff]
    %v1067 = vld [vmem:[#allocation8 + $0x900] sm:$0xff]
    %v1068 = vld [vmem:[#allocation8 + $0x908] sm:$0xff]
    %v1069 = vld [vmem:[#allocation8 + $0x910] sm:$0xff]
    %v1070 = vld [vmem:[#allocation8 + $0x918] sm:$0xff]
    %v1071 = vld [vmem:[#allocation8 + $0x920] sm:$0xff]
    %v1072 = vld [vmem:[#allocation8 + $0x928] sm:$0xff]
    %v1073 = vld [vmem:[#allocation8 + $0x930] sm:$0xff]
    %v1074 = vld [vmem:[#allocation8 + $0x938] sm:$0xff]
    %v1075 = vld [vmem:[#allocation8 + $0x940] sm:$0xff]
    %v1076 = vld [vmem:[#allocation8 + $0x948] sm:$0xff]
    %v1077 = vld [vmem:[#allocation8 + $0x950] sm:$0xff]
    %v1078 = vld [vmem:[#allocation8 + $0x958] sm:$0xff]
    %v1079 = vld [vmem:[#allocation8 + $0x960] sm:$0xff]
    %v1080 = vld [vmem:[#allocation8 + $0x968] sm:$0xff]
    %v1081 = vld [vmem:[#allocation8 + $0x970] sm:$0xff]
    %v1082 = vld [vmem:[#allocation8 + $0x978] sm:$0xff]
    %v1083 = vld [vmem:[#allocation8 + $0x980] sm:$0xff]
    %v1084 = vld [vmem:[#allocation8 + $0x988] sm:$0xff]
    %v1085 = vld [vmem:[#allocation8 + $0x990] sm:$0xff]
    %v1086 = vld [vmem:[#allocation8 + $0x998] sm:$0xff]
    %v1087 = vld [vmem:[#allocation8 + $0x9a0] sm:$0xff]
    %v1088 = vld [vmem:[#allocation8 + $0x9a8] sm:$0xff]
    %v1089 = vld [vmem:[#allocation8 + $0x9b0] sm:$0xff]
    %v1090 = vld [vmem:[#allocation8 + $0x9b8] sm:$0xff]
    %v1091 = vld [vmem:[#allocation8 + $0x9c0] sm:$0xff]
    %v1092 = vld [vmem:[#allocation8 + $0x9c8] sm:$0xff]
    %v1093 = vld [vmem:[#allocation8 + $0x9d0] sm:$0xff]
    %v1094 = vld [vmem:[#allocation8 + $0x9d8] sm:$0xff]
    %v1095 = vld [vmem:[#allocation8 + $0x9e0] sm:$0xff]
    %v1096 = vld [vmem:[#allocation8 + $0x9e8] sm:$0xff]
    %v1097 = vld [vmem:[#allocation8 + $0x9f0] sm:$0xff]
    %v1098 = vld [vmem:[#allocation8 + $0x9f8] sm:$0xff]
    %v1099 = vld [vmem:[#allocation8 + $0xa00] sm:$0xff]
    %v1100 = vld [vmem:[#allocation8 + $0xa08] sm:$0xff]
    %v1101 = vld [vmem:[#allocation8 + $0xa10] sm:$0xff]
    %v1102 = vld [vmem:[#allocation8 + $0xa18] sm:$0xff]
    %v1103 = vld [vmem:[#allocation8 + $0xa20] sm:$0xff]
    %v1104 = vld [vmem:[#allocation8 + $0xa28] sm:$0xff]
    %v1105 = vld [vmem:[#allocation8 + $0xa30] sm:$0xff]
    %v1106 = vld [vmem:[#allocation8 + $0xa38] sm:$0xff]
    %v1107 = vld [vmem:[#allocation8 + $0xa40] sm:$0xff]
    %v1108 = vld [vmem:[#allocation8 + $0xa48] sm:$0xff]
    %v1109 = vld [vmem:[#allocation8 + $0xa50] sm:$0xff]
    %v1110 = vld [vmem:[#allocation8 + $0xa58] sm:$0xff]
    %v1111 = vld [vmem:[#allocation8 + $0xa60] sm:$0xff]
    %v1112 = vld [vmem:[#allocation8 + $0xa68] sm:$0xff]
    %v1113 = vld [vmem:[#allocation8 + $0xa70] sm:$0xff]
    %v1114 = vld [vmem:[#allocation8 + $0xa78] sm:$0xff]
    %v1115 = vld [vmem:[#allocation8 + $0xa80] sm:$0xff]
    %v1116 = vld [vmem:[#allocation8 + $0xa88] sm:$0xff]
    %v1117 = vld [vmem:[#allocation8 + $0xa90] sm:$0xff]
    %v1118 = vld [vmem:[#allocation8 + $0xa98] sm:$0xff]
    %v1119 = vld [vmem:[#allocation8 + $0xaa0] sm:$0xff]
    %v1120 = vld [vmem:[#allocation8 + $0xaa8] sm:$0xff]
    %v1121 = vld [vmem:[#allocation8 + $0xab0] sm:$0xff]
    %v1122 = vld [vmem:[#allocation8 + $0xab8] sm:$0xff]
    %v1123 = vld [vmem:[#allocation8 + $0xac0] sm:$0xff]
    %v1124 = vld [vmem:[#allocation8 + $0xac8] sm:$0xff]
    %v1125 = vld [vmem:[#allocation8 + $0xad0] sm:$0xff]
    %v1126 = vld [vmem:[#allocation8 + $0xad8] sm:$0xff]
    %v1127 = vld [vmem:[#allocation8 + $0xae0] sm:$0xff]
    %v1128 = vld [vmem:[#allocation8 + $0xae8] sm:$0xff]
    %v1129 = vld [vmem:[#allocation8 + $0xaf0] sm:$0xff]
    %v1130 = vld [vmem:[#allocation8 + $0xaf8] sm:$0xff]
    %v1131 = vld [vmem:[#allocation8 + $0xb00] sm:$0xff]
    %v1132 = vld [vmem:[#allocation8 + $0xb08] sm:$0xff]
    %v1133 = vld [vmem:[#allocation8 + $0xb10] sm:$0xff]
    %v1134 = vld [vmem:[#allocation8 + $0xb18] sm:$0xff]
    %v1135 = vld [vmem:[#allocation8 + $0xb20] sm:$0xff]
    %v1136 = vld [vmem:[#allocation8 + $0xb28] sm:$0xff]
    %v1137 = vld [vmem:[#allocation8 + $0xb30] sm:$0xff]
    %v1138 = vld [vmem:[#allocation8 + $0xb38] sm:$0xff]
    %v1139 = vld [vmem:[#allocation8 + $0xb40] sm:$0xff]
    %v1140 = vld [vmem:[#allocation8 + $0xb48] sm:$0xff]
    %v1141 = vld [vmem:[#allocation8 + $0xb50] sm:$0xff]
    %v1142 = vld [vmem:[#allocation8 + $0xb58] sm:$0xff]
    %v1143 = vld [vmem:[#allocation8 + $0xb60] sm:$0xff]
    %v1144 = vld [vmem:[#allocation8 + $0xb68] sm:$0xff]
    %v1145 = vld [vmem:[#allocation8 + $0xb70] sm:$0xff]
    %v1146 = vld [vmem:[#allocation8 + $0xb78] sm:$0xff]
    %v1147 = vld [vmem:[#allocation8 + $0xb80] sm:$0xff]
    %v1148 = vld [vmem:[#allocation8 + $0xb88] sm:$0xff]
    %v1149 = vld [vmem:[#allocation8 + $0xb90] sm:$0xff]
    %v1150 = vld [vmem:[#allocation8 + $0xb98] sm:$0xff]
    %v1151 = vld [vmem:[#allocation8 + $0xba0] sm:$0xff]
    %v1152 = vld [vmem:[#allocation8 + $0xba8] sm:$0xff]
    %v1153 = vld [vmem:[#allocation8 + $0xbb0] sm:$0xff]
    %v1154 = vld [vmem:[#allocation8 + $0xbb8] sm:$0xff]
    %v1155 = vld [vmem:[#allocation8 + $0xbc0] sm:$0xff]
    %v1156 = vld [vmem:[#allocation8 + $0xbc8] sm:$0xff]
    %v1157 = vld [vmem:[#allocation8 + $0xbd0] sm:$0xff]
    %v1158 = vld [vmem:[#allocation8 + $0xbd8] sm:$0xff]
    %v1159 = vld [vmem:[#allocation8 + $0xbe0] sm:$0xff]
    %v1160 = vld [vmem:[#allocation8 + $0xbe8] sm:$0xff]
    %v1161 = vld [vmem:[#allocation8 + $0xbf0] sm:$0xff]
    %v1162 = vld [vmem:[#allocation8 + $0xbf8] sm:$0xff]
    %v1163 = vld [vmem:[#allocation8 + $0xc00] sm:$0xff]
    %v1164 = vld [vmem:[#allocation8 + $0xc08] sm:$0xff]
    %v1165 = vld [vmem:[#allocation8 + $0xc10] sm:$0xff]
    %v1166 = vld [vmem:[#allocation8 + $0xc18] sm:$0xff]
    %v1167 = vld [vmem:[#allocation8 + $0xc20] sm:$0xff]
    %v1168 = vld [vmem:[#allocation8 + $0xc28] sm:$0xff]
    %v1169 = vld [vmem:[#allocation8 + $0xc30] sm:$0xff]
    %v1170 = vld [vmem:[#allocation8 + $0xc38] sm:$0xff]
    %v1171 = vld [vmem:[#allocation8 + $0xc40] sm:$0xff]
    %v1172 = vld [vmem:[#allocation8 + $0xc48] sm:$0xff]
    %v1173 = vld [vmem:[#allocation8 + $0xc50] sm:$0xff]
    %v1174 = vld [vmem:[#allocation8 + $0xc58] sm:$0xff]
    %v1175 = vld [vmem:[#allocation8 + $0xc60] sm:$0xff]
    %v1176 = vld [vmem:[#allocation8 + $0xc68] sm:$0xff]
    %v1177 = vld [vmem:[#allocation8 + $0xc70] sm:$0xff]
    %v1178 = vld [vmem:[#allocation8 + $0xc78] sm:$0xff]
    %v1179 = vld [vmem:[#allocation8 + $0xc80] sm:$0xff]
    %v1180 = vld [vmem:[#allocation8 + $0xc88] sm:$0xff]
    %v1181 = vld [vmem:[#allocation8 + $0xc90] sm:$0xff]
    %v1182 = vld [vmem:[#allocation8 + $0xc98] sm:$0xff]
    %v1183 = vld [vmem:[#allocation8 + $0xca0] sm:$0xff]
    %v1184 = vld [vmem:[#allocation8 + $0xca8] sm:$0xff]
    %v1185 = vld [vmem:[#allocation8 + $0xcb0] sm:$0xff]
    %v1186 = vld [vmem:[#allocation8 + $0xcb8] sm:$0xff]
    %v1187 = vld [vmem:[#allocation8 + $0xcc0] sm:$0xff]
    %v1188 = vld [vmem:[#allocation8 + $0xcc8] sm:$0xff]
    %v1189 = vld [vmem:[#allocation8 + $0xcd0] sm:$0xff]
    %v1190 = vld [vmem:[#allocation8 + $0xcd8] sm:$0xff]
    %v1191 = vld [vmem:[#allocation8 + $0xce0] sm:$0xff]
    %v1192 = vld [vmem:[#allocation8 + $0xce8] sm:$0xff]
    %v1193 = vld [vmem:[#allocation8 + $0xcf0] sm:$0xff]
    %v1194 = vld [vmem:[#allocation8 + $0xcf8] sm:$0xff]
    %v1195 = vld [vmem:[#allocation8 + $0xd00] sm:$0xff]
    %v1196 = vld [vmem:[#allocation8 + $0xd08] sm:$0xff]
    %v1197 = vld [vmem:[#allocation8 + $0xd10] sm:$0xff]
    %v1198 = vld [vmem:[#allocation8 + $0xd18] sm:$0xff]
    %v1199 = vld [vmem:[#allocation8 + $0xd20] sm:$0xff]
    %v1200 = vld [vmem:[#allocation8 + $0xd28] sm:$0xff]
    %v1201 = vld [vmem:[#allocation8 + $0xd30] sm:$0xff]
    %v1202 = vld [vmem:[#allocation8 + $0xd38] sm:$0xff]
    %v1203 = vld [vmem:[#allocation8 + $0xd40] sm:$0xff]
    %v1204 = vld [vmem:[#allocation8 + $0xd48] sm:$0xff]
    %v1205 = vld [vmem:[#allocation8 + $0xd50] sm:$0xff]
    %v1206 = vld [vmem:[#allocation8 + $0xd58] sm:$0xff]
    %v1207 = vld [vmem:[#allocation8 + $0xd60] sm:$0xff]
    %v1208 = vld [vmem:[#allocation8 + $0xd68] sm:$0xff]
    %v1209 = vld [vmem:[#allocation8 + $0xd70] sm:$0xff]
    %v1210 = vld [vmem:[#allocation8 + $0xd78] sm:$0xff]
    %v1211 = vld [vmem:[#allocation8 + $0xd80] sm:$0xff]
    %v1212 = vld [vmem:[#allocation8 + $0xd88] sm:$0xff]
    %v1213 = vld [vmem:[#allocation8 + $0xd90] sm:$0xff]
    %v1214 = vld [vmem:[#allocation8 + $0xd98] sm:$0xff]
    %v1215 = vld [vmem:[#allocation8 + $0xda0] sm:$0xff]
    %v1216 = vld [vmem:[#allocation8 + $0xda8] sm:$0xff]
    %v1217 = vld [vmem:[#allocation8 + $0xdb0] sm:$0xff]
    %v1218 = vld [vmem:[#allocation8 + $0xdb8] sm:$0xff]
    %v1219 = vld [vmem:[#allocation8 + $0xdc0] sm:$0xff]
    %v1220 = vld [vmem:[#allocation8 + $0xdc8] sm:$0xff]
    %v1221 = vld [vmem:[#allocation8 + $0xdd0] sm:$0xff]
    %v1222 = vld [vmem:[#allocation8 + $0xdd8] sm:$0xff]
    %v1223 = vld [vmem:[#allocation8 + $0xde0] sm:$0xff]
    %v1224 = vld [vmem:[#allocation8 + $0xde8] sm:$0xff]
    %v1225 = vld [vmem:[#allocation8 + $0xdf0] sm:$0xff]
    %v1226 = vld [vmem:[#allocation8 + $0xdf8] sm:$0xff]
    %v1227 = vld [vmem:[#allocation8 + $0xe00] sm:$0xff]
    %v1228 = vld [vmem:[#allocation8 + $0xe08] sm:$0xff]
    %v1229 = vld [vmem:[#allocation8 + $0xe10] sm:$0xff]
    %v1230 = vld [vmem:[#allocation8 + $0xe18] sm:$0xff]
    %v1231 = vld [vmem:[#allocation8 + $0xe20] sm:$0xff]
    %v1232 = vld [vmem:[#allocation8 + $0xe28] sm:$0xff]
    %v1233 = vld [vmem:[#allocation8 + $0xe30] sm:$0xff]
    %v1234 = vld [vmem:[#allocation8 + $0xe38] sm:$0xff]
    %v1235 = vld [vmem:[#allocation8 + $0xe40] sm:$0xff]
    %v1236 = vld [vmem:[#allocation8 + $0xe48] sm:$0xff]
    %v1237 = vld [vmem:[#allocation8 + $0xe50] sm:$0xff]
    %v1238 = vld [vmem:[#allocation8 + $0xe58] sm:$0xff]
    %v1239 = vld [vmem:[#allocation8 + $0xe60] sm:$0xff]
    %v1240 = vld [vmem:[#allocation8 + $0xe68] sm:$0xff]
    %v1241 = vld [vmem:[#allocation8 + $0xe70] sm:$0xff]
    %v1242 = vld [vmem:[#allocation8 + $0xe78] sm:$0xff]
    %v1243 = vld [vmem:[#allocation8 + $0xe80] sm:$0xff]
    %v1244 = vld [vmem:[#allocation8 + $0xe88] sm:$0xff]
    %v1245 = vld [vmem:[#allocation8 + $0xe90] sm:$0xff]
    %v1246 = vld [vmem:[#allocation8 + $0xe98] sm:$0xff]
    %v1247 = vld [vmem:[#allocation8 + $0xea0] sm:$0xff]
    %v1248 = vld [vmem:[#allocation8 + $0xea8] sm:$0xff]
    %v1249 = vld [vmem:[#allocation8 + $0xeb0] sm:$0xff]
    %v1250 = vld [vmem:[#allocation8 + $0xeb8] sm:$0xff]
    %v1251 = vld [vmem:[#allocation8 + $0xec0] sm:$0xff]
    %v1252 = vld [vmem:[#allocation8 + $0xec8] sm:$0xff]
    %v1253 = vld [vmem:[#allocation8 + $0xed0] sm:$0xff]
    %v1254 = vld [vmem:[#allocation8 + $0xed8] sm:$0xff]
    %v1255 = vld [vmem:[#allocation8 + $0xee0] sm:$0xff]
    %v1256 = vld [vmem:[#allocation8 + $0xee8] sm:$0xff]
    %v1257 = vld [vmem:[#allocation8 + $0xef0] sm:$0xff]
    %v1258 = vld [vmem:[#allocation8 + $0xef8] sm:$0xff]
    %v1259 = vld [vmem:[#allocation8 + $0xf00] sm:$0xff]
    %v1260 = vld [vmem:[#allocation8 + $0xf08] sm:$0xff]
    %v1261 = vld [vmem:[#allocation8 + $0xf10] sm:$0xff]
    %v1262 = vld [vmem:[#allocation8 + $0xf18] sm:$0xff]
    %v1263 = vld [vmem:[#allocation8 + $0xf20] sm:$0xff]
    %v1264 = vld [vmem:[#allocation8 + $0xf28] sm:$0xff]
    %v1265 = vld [vmem:[#allocation8 + $0xf30] sm:$0xff]
    %v1266 = vld [vmem:[#allocation8 + $0xf38] sm:$0xff]
    %v1267 = vld [vmem:[#allocation8 + $0xf40] sm:$0xff]
    %v1268 = vld [vmem:[#allocation8 + $0xf48] sm:$0xff]
    %v1269 = vld [vmem:[#allocation8 + $0xf50] sm:$0xff]
    %v1270 = vld [vmem:[#allocation8 + $0xf58] sm:$0xff]
    %v1271 = vld [vmem:[#allocation8 + $0xf60] sm:$0xff]
    %v1272 = vld [vmem:[#allocation8 + $0xf68] sm:$0xff]
    %v1273 = vld [vmem:[#allocation8 + $0xf70] sm:$0xff]
    %v1274 = vld [vmem:[#allocation8 + $0xf78] sm:$0xff]
    %v1275 = vld [vmem:[#allocation8 + $0xf80] sm:$0xff]
    %v1276 = vld [vmem:[#allocation8 + $0xf88] sm:$0xff]
    %v1277 = vld [vmem:[#allocation8 + $0xf90] sm:$0xff]
    %v1278 = vld [vmem:[#allocation8 + $0xf98] sm:$0xff]
    %v1279 = vld [vmem:[#allocation8 + $0xfa0] sm:$0xff]
    %v1280 = vld [vmem:[#allocation8 + $0xfa8] sm:$0xff]
    %v1281 = vld [vmem:[#allocation8 + $0xfb0] sm:$0xff]
    %v1282 = vld [vmem:[#allocation8 + $0xfb8] sm:$0xff]
    %v1283 = vld [vmem:[#allocation8 + $0xfc0] sm:$0xff]
    %v1284 = vld [vmem:[#allocation8 + $0xfc8] sm:$0xff]
    %v1285 = vld [vmem:[#allocation8 + $0xfd0] sm:$0xff]
    %v1286 = vld [vmem:[#allocation8 + $0xfd8] sm:$0xff]
    %v1287 = vld [vmem:[#allocation8 + $0xfe0] sm:$0xff]
    %v1288 = vld [vmem:[#allocation8 + $0xfe8] sm:$0xff]
    %v1289 = vld [vmem:[#allocation8 + $0xff0] sm:$0xff]
    %v1290 = vld [vmem:[#allocation8 + $0xff8] sm:$0xff]
    %v1291 = vld [vmem:[#allocation10] sm:$0xff]
    %v1293 = vlaneseq
    %v1294 = vshrl.u32 %v1293, 7
    %v1295 = vsub.s32 0, %v1294
    %v1296 = vrot.slane %v1291, %v1295
    %v1297 = vlaneseq
    %v1298 = vshrl.u32 %v1297, 7
    %v1299 = vsub.s32 1, %v1298
    %v1300 = vrot.slane %v1291, %v1299
    %v1301 = vlaneseq
    %v1302 = vshrl.u32 %v1301, 7
    %v1303 = vsub.s32 2, %v1302
    %v1304 = vrot.slane %v1291, %v1303
    %v1305 = vlaneseq
    %v1306 = vshrl.u32 %v1305, 7
    %v1307 = vsub.s32 3, %v1306
    %v1308 = vrot.slane %v1291, %v1307
    %v1309 = vlaneseq
    %v1310 = vshrl.u32 %v1309, 7
    %v1311 = vsub.s32 4, %v1310
    %v1312 = vrot.slane %v1291, %v1311
    %v1313 = vlaneseq
    %v1314 = vshrl.u32 %v1313, 7
    %v1315 = vsub.s32 5, %v1314
    %v1316 = vrot.slane %v1291, %v1315
    %v1317 = vlaneseq
    %v1318 = vshrl.u32 %v1317, 7
    %v1319 = vsub.s32 6, %v1318
    %v1320 = vrot.slane %v1291, %v1319
    %v1321 = vlaneseq
    %v1322 = vshrl.u32 %v1321, 7
    %v1323 = vsub.s32 7, %v1322
    %v1324 = vrot.slane %v1291, %v1323
    %v1845 = vunpack.c.l.b16 %v779
    %v1846 = vunpack.c.h.b16 %v779
    %v1847 = vunpack.c.l.b16 %v780
    %v1848 = vunpack.c.h.b16 %v780
    %v1849 = vunpack.c.l.b16 %v781
    %v1850 = vunpack.c.h.b16 %v781
    %v1851 = vunpack.c.l.b16 %v782
    %v1852 = vunpack.c.h.b16 %v782
    %v1853 = vunpack.c.l.b16 %v783
    %v1854 = vunpack.c.h.b16 %v783
    %v1855 = vunpack.c.l.b16 %v784
    %v1856 = vunpack.c.h.b16 %v784
    %v1857 = vunpack.c.l.b16 %v785
    %v1858 = vunpack.c.h.b16 %v785
    %v1859 = vunpack.c.l.b16 %v786
    %v1860 = vunpack.c.h.b16 %v786
    %v1861 = vunpack.c.l.b16 %v787
    %v1862 = vunpack.c.h.b16 %v787
    %v1863 = vunpack.c.l.b16 %v788
    %v1864 = vunpack.c.h.b16 %v788
    %v1865 = vunpack.c.l.b16 %v789
    %v1866 = vunpack.c.h.b16 %v789
    %v1867 = vunpack.c.l.b16 %v790
    %v1868 = vunpack.c.h.b16 %v790
    %v1869 = vunpack.c.l.b16 %v791
    %v1870 = vunpack.c.h.b16 %v791
    %v1871 = vunpack.c.l.b16 %v792
    %v1872 = vunpack.c.h.b16 %v792
    %v1873 = vunpack.c.l.b16 %v793
    %v1874 = vunpack.c.h.b16 %v793
    %v1875 = vunpack.c.l.b16 %v794
    %v1876 = vunpack.c.h.b16 %v794
    %v1877 = vunpack.c.l.b16 %v795
    %v1878 = vunpack.c.h.b16 %v795
    %v1879 = vunpack.c.l.b16 %v796
    %v1880 = vunpack.c.h.b16 %v796
    %v1881 = vunpack.c.l.b16 %v797
    %v1882 = vunpack.c.h.b16 %v797
    %v1883 = vunpack.c.l.b16 %v798
    %v1884 = vunpack.c.h.b16 %v798
    %v1885 = vunpack.c.l.b16 %v799
    %v1886 = vunpack.c.h.b16 %v799
    %v1887 = vunpack.c.l.b16 %v800
    %v1888 = vunpack.c.h.b16 %v800
    %v1889 = vunpack.c.l.b16 %v801
    %v1890 = vunpack.c.h.b16 %v801
    %v1891 = vunpack.c.l.b16 %v802
    %v1892 = vunpack.c.h.b16 %v802
    %v1893 = vunpack.c.l.b16 %v803
    %v1894 = vunpack.c.h.b16 %v803
    %v1895 = vunpack.c.l.b16 %v804
    %v1896 = vunpack.c.h.b16 %v804
    %v1897 = vunpack.c.l.b16 %v805
    %v1898 = vunpack.c.h.b16 %v805
    %v1899 = vunpack.c.l.b16 %v806
    %v1900 = vunpack.c.h.b16 %v806
    %v1901 = vunpack.c.l.b16 %v807
    %v1902 = vunpack.c.h.b16 %v807
    %v1903 = vunpack.c.l.b16 %v808
    %v1904 = vunpack.c.h.b16 %v808
    %v1905 = vunpack.c.l.b16 %v809
    %v1906 = vunpack.c.h.b16 %v809
    %v1907 = vunpack.c.l.b16 %v810
    %v1908 = vunpack.c.h.b16 %v810
    %v1909 = vunpack.c.l.b16 %v811
    %v1910 = vunpack.c.h.b16 %v811
    %v1911 = vunpack.c.l.b16 %v812
    %v1912 = vunpack.c.h.b16 %v812
    %v1913 = vunpack.c.l.b16 %v813
    %v1914 = vunpack.c.h.b16 %v813
    %v1915 = vunpack.c.l.b16 %v814
    %v1916 = vunpack.c.h.b16 %v814
    %v1917 = vunpack.c.l.b16 %v815
    %v1918 = vunpack.c.h.b16 %v815
    %v1919 = vunpack.c.l.b16 %v816
    %v1920 = vunpack.c.h.b16 %v816
    %v1921 = vunpack.c.l.b16 %v817
    %v1922 = vunpack.c.h.b16 %v817
    %v1923 = vunpack.c.l.b16 %v818
    %v1924 = vunpack.c.h.b16 %v818
    %v1925 = vunpack.c.l.b16 %v819
    %v1926 = vunpack.c.h.b16 %v819
    %v1927 = vunpack.c.l.b16 %v820
    %v1928 = vunpack.c.h.b16 %v820
    %v1929 = vunpack.c.l.b16 %v821
    %v1930 = vunpack.c.h.b16 %v821
    %v1931 = vunpack.c.l.b16 %v822
    %v1932 = vunpack.c.h.b16 %v822
    %v1933 = vunpack.c.l.b16 %v823
    %v1934 = vunpack.c.h.b16 %v823
    %v1935 = vunpack.c.l.b16 %v824
    %v1936 = vunpack.c.h.b16 %v824
    %v1937 = vunpack.c.l.b16 %v825
    %v1938 = vunpack.c.h.b16 %v825
    %v1939 = vunpack.c.l.b16 %v826
    %v1940 = vunpack.c.h.b16 %v826
    %v1941 = vunpack.c.l.b16 %v827
    %v1942 = vunpack.c.h.b16 %v827
    %v1943 = vunpack.c.l.b16 %v828
    %v1944 = vunpack.c.h.b16 %v828
    %v1945 = vunpack.c.l.b16 %v829
    %v1946 = vunpack.c.h.b16 %v829
    %v1947 = vunpack.c.l.b16 %v830
    %v1948 = vunpack.c.h.b16 %v830
    %v1949 = vunpack.c.l.b16 %v831
    %v1950 = vunpack.c.h.b16 %v831
    %v1951 = vunpack.c.l.b16 %v832
    %v1952 = vunpack.c.h.b16 %v832
    %v1953 = vunpack.c.l.b16 %v833
    %v1954 = vunpack.c.h.b16 %v833
    %v1955 = vunpack.c.l.b16 %v834
    %v1956 = vunpack.c.h.b16 %v834
    %v1957 = vunpack.c.l.b16 %v835
    %v1958 = vunpack.c.h.b16 %v835
    %v1959 = vunpack.c.l.b16 %v836
    %v1960 = vunpack.c.h.b16 %v836
    %v1961 = vunpack.c.l.b16 %v837
    %v1962 = vunpack.c.h.b16 %v837
    %v1963 = vunpack.c.l.b16 %v838
    %v1964 = vunpack.c.h.b16 %v838
    %v1965 = vunpack.c.l.b16 %v839
    %v1966 = vunpack.c.h.b16 %v839
    %v1967 = vunpack.c.l.b16 %v840
    %v1968 = vunpack.c.h.b16 %v840
    %v1969 = vunpack.c.l.b16 %v841
    %v1970 = vunpack.c.h.b16 %v841
    %v1971 = vunpack.c.l.b16 %v842
    %v1972 = vunpack.c.h.b16 %v842
    %v1973 = vunpack.c.l.b16 %v843
    %v1974 = vunpack.c.h.b16 %v843
    %v1975 = vunpack.c.l.b16 %v844
    %v1976 = vunpack.c.h.b16 %v844
    %v1977 = vunpack.c.l.b16 %v845
    %v1978 = vunpack.c.h.b16 %v845
    %v1979 = vunpack.c.l.b16 %v846
    %v1980 = vunpack.c.h.b16 %v846
    %v1981 = vunpack.c.l.b16 %v847
    %v1982 = vunpack.c.h.b16 %v847
    %v1983 = vunpack.c.l.b16 %v848
    %v1984 = vunpack.c.h.b16 %v848
    %v1985 = vunpack.c.l.b16 %v849
    %v1986 = vunpack.c.h.b16 %v849
    %v1987 = vunpack.c.l.b16 %v850
    %v1988 = vunpack.c.h.b16 %v850
    %v1989 = vunpack.c.l.b16 %v851
    %v1990 = vunpack.c.h.b16 %v851
    %v1991 = vunpack.c.l.b16 %v852
    %v1992 = vunpack.c.h.b16 %v852
    %v1993 = vunpack.c.l.b16 %v853
    %v1994 = vunpack.c.h.b16 %v853
    %v1995 = vunpack.c.l.b16 %v854
    %v1996 = vunpack.c.h.b16 %v854
    %v1997 = vunpack.c.l.b16 %v855
    %v1998 = vunpack.c.h.b16 %v855
    %v1999 = vunpack.c.l.b16 %v856
    %v2000 = vunpack.c.h.b16 %v856
    %v2001 = vunpack.c.l.b16 %v857
    %v2002 = vunpack.c.h.b16 %v857
    %v2003 = vunpack.c.l.b16 %v858
    %v2004 = vunpack.c.h.b16 %v858
    %v2005 = vunpack.c.l.b16 %v859
    %v2006 = vunpack.c.h.b16 %v859
    %v2007 = vunpack.c.l.b16 %v860
    %v2008 = vunpack.c.h.b16 %v860
    %v2009 = vunpack.c.l.b16 %v861
    %v2010 = vunpack.c.h.b16 %v861
    %v2011 = vunpack.c.l.b16 %v862
    %v2012 = vunpack.c.h.b16 %v862
    %v2013 = vunpack.c.l.b16 %v863
    %v2014 = vunpack.c.h.b16 %v863
    %v2015 = vunpack.c.l.b16 %v864
    %v2016 = vunpack.c.h.b16 %v864
    %v2017 = vunpack.c.l.b16 %v865
    %v2018 = vunpack.c.h.b16 %v865
    %v2019 = vunpack.c.l.b16 %v866
    %v2020 = vunpack.c.h.b16 %v866
    %v2021 = vunpack.c.l.b16 %v867
    %v2022 = vunpack.c.h.b16 %v867
    %v2023 = vunpack.c.l.b16 %v868
    %v2024 = vunpack.c.h.b16 %v868
    %v2025 = vunpack.c.l.b16 %v869
    %v2026 = vunpack.c.h.b16 %v869
    %v2027 = vunpack.c.l.b16 %v870
    %v2028 = vunpack.c.h.b16 %v870
    %v2029 = vunpack.c.l.b16 %v871
    %v2030 = vunpack.c.h.b16 %v871
    %v2031 = vunpack.c.l.b16 %v872
    %v2032 = vunpack.c.h.b16 %v872
    %v2033 = vunpack.c.l.b16 %v873
    %v2034 = vunpack.c.h.b16 %v873
    %v2035 = vunpack.c.l.b16 %v874
    %v2036 = vunpack.c.h.b16 %v874
    %v2037 = vunpack.c.l.b16 %v875
    %v2038 = vunpack.c.h.b16 %v875
    %v2039 = vunpack.c.l.b16 %v876
    %v2040 = vunpack.c.h.b16 %v876
    %v2041 = vunpack.c.l.b16 %v877
    %v2042 = vunpack.c.h.b16 %v877
    %v2043 = vunpack.c.l.b16 %v878
    %v2044 = vunpack.c.h.b16 %v878
    %v2045 = vunpack.c.l.b16 %v879
    %v2046 = vunpack.c.h.b16 %v879
    %v2047 = vunpack.c.l.b16 %v880
    %v2048 = vunpack.c.h.b16 %v880
    %v2049 = vunpack.c.l.b16 %v881
    %v2050 = vunpack.c.h.b16 %v881
    %v2051 = vunpack.c.l.b16 %v882
    %v2052 = vunpack.c.h.b16 %v882
    %v2053 = vunpack.c.l.b16 %v883
    %v2054 = vunpack.c.h.b16 %v883
    %v2055 = vunpack.c.l.b16 %v884
    %v2056 = vunpack.c.h.b16 %v884
    %v2057 = vunpack.c.l.b16 %v885
    %v2058 = vunpack.c.h.b16 %v885
    %v2059 = vunpack.c.l.b16 %v886
    %v2060 = vunpack.c.h.b16 %v886
    %v2061 = vunpack.c.l.b16 %v887
    %v2062 = vunpack.c.h.b16 %v887
    %v2063 = vunpack.c.l.b16 %v888
    %v2064 = vunpack.c.h.b16 %v888
    %v2065 = vunpack.c.l.b16 %v889
    %v2066 = vunpack.c.h.b16 %v889
    %v2067 = vunpack.c.l.b16 %v890
    %v2068 = vunpack.c.h.b16 %v890
    %v2069 = vunpack.c.l.b16 %v891
    %v2070 = vunpack.c.h.b16 %v891
    %v2071 = vunpack.c.l.b16 %v892
    %v2072 = vunpack.c.h.b16 %v892
    %v2073 = vunpack.c.l.b16 %v893
    %v2074 = vunpack.c.h.b16 %v893
    %v2075 = vunpack.c.l.b16 %v894
    %v2076 = vunpack.c.h.b16 %v894
    %v2077 = vunpack.c.l.b16 %v895
    %v2078 = vunpack.c.h.b16 %v895
    %v2079 = vunpack.c.l.b16 %v896
    %v2080 = vunpack.c.h.b16 %v896
    %v2081 = vunpack.c.l.b16 %v897
    %v2082 = vunpack.c.h.b16 %v897
    %v2083 = vunpack.c.l.b16 %v898
    %v2084 = vunpack.c.h.b16 %v898
    %v2085 = vunpack.c.l.b16 %v899
    %v2086 = vunpack.c.h.b16 %v899
    %v2087 = vunpack.c.l.b16 %v900
    %v2088 = vunpack.c.h.b16 %v900
    %v2089 = vunpack.c.l.b16 %v901
    %v2090 = vunpack.c.h.b16 %v901
    %v2091 = vunpack.c.l.b16 %v902
    %v2092 = vunpack.c.h.b16 %v902
    %v2093 = vunpack.c.l.b16 %v903
    %v2094 = vunpack.c.h.b16 %v903
    %v2095 = vunpack.c.l.b16 %v904
    %v2096 = vunpack.c.h.b16 %v904
    %v2097 = vunpack.c.l.b16 %v905
    %v2098 = vunpack.c.h.b16 %v905
    %v2099 = vunpack.c.l.b16 %v906
    %v2100 = vunpack.c.h.b16 %v906
    %v2101 = vunpack.c.l.b16 %v907
    %v2102 = vunpack.c.h.b16 %v907
    %v2103 = vunpack.c.l.b16 %v908
    %v2104 = vunpack.c.h.b16 %v908
    %v2105 = vunpack.c.l.b16 %v909
    %v2106 = vunpack.c.h.b16 %v909
    %v2107 = vunpack.c.l.b16 %v910
    %v2108 = vunpack.c.h.b16 %v910
    %v2109 = vunpack.c.l.b16 %v911
    %v2110 = vunpack.c.h.b16 %v911
    %v2111 = vunpack.c.l.b16 %v912
    %v2112 = vunpack.c.h.b16 %v912
    %v2113 = vunpack.c.l.b16 %v913
    %v2114 = vunpack.c.h.b16 %v913
    %v2115 = vunpack.c.l.b16 %v914
    %v2116 = vunpack.c.h.b16 %v914
    %v2117 = vunpack.c.l.b16 %v915
    %v2118 = vunpack.c.h.b16 %v915
    %v2119 = vunpack.c.l.b16 %v916
    %v2120 = vunpack.c.h.b16 %v916
    %v2121 = vunpack.c.l.b16 %v917
    %v2122 = vunpack.c.h.b16 %v917
    %v2123 = vunpack.c.l.b16 %v918
    %v2124 = vunpack.c.h.b16 %v918
    %v2125 = vunpack.c.l.b16 %v919
    %v2126 = vunpack.c.h.b16 %v919
    %v2127 = vunpack.c.l.b16 %v920
    %v2128 = vunpack.c.h.b16 %v920
    %v2129 = vunpack.c.l.b16 %v921
    %v2130 = vunpack.c.h.b16 %v921
    %v2131 = vunpack.c.l.b16 %v922
    %v2132 = vunpack.c.h.b16 %v922
    %v2133 = vunpack.c.l.b16 %v923
    %v2134 = vunpack.c.h.b16 %v923
    %v2135 = vunpack.c.l.b16 %v924
    %v2136 = vunpack.c.h.b16 %v924
    %v2137 = vunpack.c.l.b16 %v925
    %v2138 = vunpack.c.h.b16 %v925
    %v2139 = vunpack.c.l.b16 %v926
    %v2140 = vunpack.c.h.b16 %v926
    %v2141 = vunpack.c.l.b16 %v927
    %v2142 = vunpack.c.h.b16 %v927
    %v2143 = vunpack.c.l.b16 %v928
    %v2144 = vunpack.c.h.b16 %v928
    %v2145 = vunpack.c.l.b16 %v929
    %v2146 = vunpack.c.h.b16 %v929
    %v2147 = vunpack.c.l.b16 %v930
    %v2148 = vunpack.c.h.b16 %v930
    %v2149 = vunpack.c.l.b16 %v931
    %v2150 = vunpack.c.h.b16 %v931
    %v2151 = vunpack.c.l.b16 %v932
    %v2152 = vunpack.c.h.b16 %v932
    %v2153 = vunpack.c.l.b16 %v933
    %v2154 = vunpack.c.h.b16 %v933
    %v2155 = vunpack.c.l.b16 %v934
    %v2156 = vunpack.c.h.b16 %v934
    %v2157 = vunpack.c.l.b16 %v935
    %v2158 = vunpack.c.h.b16 %v935
    %v2159 = vunpack.c.l.b16 %v936
    %v2160 = vunpack.c.h.b16 %v936
    %v2161 = vunpack.c.l.b16 %v937
    %v2162 = vunpack.c.h.b16 %v937
    %v2163 = vunpack.c.l.b16 %v938
    %v2164 = vunpack.c.h.b16 %v938
    %v2165 = vunpack.c.l.b16 %v939
    %v2166 = vunpack.c.h.b16 %v939
    %v2167 = vunpack.c.l.b16 %v940
    %v2168 = vunpack.c.h.b16 %v940
    %v2169 = vunpack.c.l.b16 %v941
    %v2170 = vunpack.c.h.b16 %v941
    %v2171 = vunpack.c.l.b16 %v942
    %v2172 = vunpack.c.h.b16 %v942
    %v2173 = vunpack.c.l.b16 %v943
    %v2174 = vunpack.c.h.b16 %v943
    %v2175 = vunpack.c.l.b16 %v944
    %v2176 = vunpack.c.h.b16 %v944
    %v2177 = vunpack.c.l.b16 %v945
    %v2178 = vunpack.c.h.b16 %v945
    %v2179 = vunpack.c.l.b16 %v946
    %v2180 = vunpack.c.h.b16 %v946
    %v2181 = vunpack.c.l.b16 %v947
    %v2182 = vunpack.c.h.b16 %v947
    %v2183 = vunpack.c.l.b16 %v948
    %v2184 = vunpack.c.h.b16 %v948
    %v2185 = vunpack.c.l.b16 %v949
    %v2186 = vunpack.c.h.b16 %v949
    %v2187 = vunpack.c.l.b16 %v950
    %v2188 = vunpack.c.h.b16 %v950
    %v2189 = vunpack.c.l.b16 %v951
    %v2190 = vunpack.c.h.b16 %v951
    %v2191 = vunpack.c.l.b16 %v952
    %v2192 = vunpack.c.h.b16 %v952
    %v2193 = vunpack.c.l.b16 %v953
    %v2194 = vunpack.c.h.b16 %v953
    %v2195 = vunpack.c.l.b16 %v954
    %v2196 = vunpack.c.h.b16 %v954
    %v2197 = vunpack.c.l.b16 %v955
    %v2198 = vunpack.c.h.b16 %v955
    %v2199 = vunpack.c.l.b16 %v956
    %v2200 = vunpack.c.h.b16 %v956
    %v2201 = vunpack.c.l.b16 %v957
    %v2202 = vunpack.c.h.b16 %v957
    %v2203 = vunpack.c.l.b16 %v958
    %v2204 = vunpack.c.h.b16 %v958
    %v2205 = vunpack.c.l.b16 %v959
    %v2206 = vunpack.c.h.b16 %v959
    %v2207 = vunpack.c.l.b16 %v960
    %v2208 = vunpack.c.h.b16 %v960
    %v2209 = vunpack.c.l.b16 %v961
    %v2210 = vunpack.c.h.b16 %v961
    %v2211 = vunpack.c.l.b16 %v962
    %v2212 = vunpack.c.h.b16 %v962
    %v2213 = vunpack.c.l.b16 %v963
    %v2214 = vunpack.c.h.b16 %v963
    %v2215 = vunpack.c.l.b16 %v964
    %v2216 = vunpack.c.h.b16 %v964
    %v2217 = vunpack.c.l.b16 %v965
    %v2218 = vunpack.c.h.b16 %v965
    %v2219 = vunpack.c.l.b16 %v966
    %v2220 = vunpack.c.h.b16 %v966
    %v2221 = vunpack.c.l.b16 %v967
    %v2222 = vunpack.c.h.b16 %v967
    %v2223 = vunpack.c.l.b16 %v968
    %v2224 = vunpack.c.h.b16 %v968
    %v2225 = vunpack.c.l.b16 %v969
    %v2226 = vunpack.c.h.b16 %v969
    %v2227 = vunpack.c.l.b16 %v970
    %v2228 = vunpack.c.h.b16 %v970
    %v2229 = vunpack.c.l.b16 %v971
    %v2230 = vunpack.c.h.b16 %v971
    %v2231 = vunpack.c.l.b16 %v972
    %v2232 = vunpack.c.h.b16 %v972
    %v2233 = vunpack.c.l.b16 %v973
    %v2234 = vunpack.c.h.b16 %v973
    %v2235 = vunpack.c.l.b16 %v974
    %v2236 = vunpack.c.h.b16 %v974
    %v2237 = vunpack.c.l.b16 %v975
    %v2238 = vunpack.c.h.b16 %v975
    %v2239 = vunpack.c.l.b16 %v976
    %v2240 = vunpack.c.h.b16 %v976
    %v2241 = vunpack.c.l.b16 %v977
    %v2242 = vunpack.c.h.b16 %v977
    %v2243 = vunpack.c.l.b16 %v978
    %v2244 = vunpack.c.h.b16 %v978
    %v2245 = vunpack.c.l.b16 %v979
    %v2246 = vunpack.c.h.b16 %v979
    %v2247 = vunpack.c.l.b16 %v980
    %v2248 = vunpack.c.h.b16 %v980
    %v2249 = vunpack.c.l.b16 %v981
    %v2250 = vunpack.c.h.b16 %v981
    %v2251 = vunpack.c.l.b16 %v982
    %v2252 = vunpack.c.h.b16 %v982
    %v2253 = vunpack.c.l.b16 %v983
    %v2254 = vunpack.c.h.b16 %v983
    %v2255 = vunpack.c.l.b16 %v984
    %v2256 = vunpack.c.h.b16 %v984
    %v2257 = vunpack.c.l.b16 %v985
    %v2258 = vunpack.c.h.b16 %v985
    %v2259 = vunpack.c.l.b16 %v986
    %v2260 = vunpack.c.h.b16 %v986
    %v2261 = vunpack.c.l.b16 %v987
    %v2262 = vunpack.c.h.b16 %v987
    %v2263 = vunpack.c.l.b16 %v988
    %v2264 = vunpack.c.h.b16 %v988
    %v2265 = vunpack.c.l.b16 %v989
    %v2266 = vunpack.c.h.b16 %v989
    %v2267 = vunpack.c.l.b16 %v990
    %v2268 = vunpack.c.h.b16 %v990
    %v2269 = vunpack.c.l.b16 %v991
    %v2270 = vunpack.c.h.b16 %v991
    %v2271 = vunpack.c.l.b16 %v992
    %v2272 = vunpack.c.h.b16 %v992
    %v2273 = vunpack.c.l.b16 %v993
    %v2274 = vunpack.c.h.b16 %v993
    %v2275 = vunpack.c.l.b16 %v994
    %v2276 = vunpack.c.h.b16 %v994
    %v2277 = vunpack.c.l.b16 %v995
    %v2278 = vunpack.c.h.b16 %v995
    %v2279 = vunpack.c.l.b16 %v996
    %v2280 = vunpack.c.h.b16 %v996
    %v2281 = vunpack.c.l.b16 %v997
    %v2282 = vunpack.c.h.b16 %v997
    %v2283 = vunpack.c.l.b16 %v998
    %v2284 = vunpack.c.h.b16 %v998
    %v2285 = vunpack.c.l.b16 %v999
    %v2286 = vunpack.c.h.b16 %v999
    %v2287 = vunpack.c.l.b16 %v1000
    %v2288 = vunpack.c.h.b16 %v1000
    %v2289 = vunpack.c.l.b16 %v1001
    %v2290 = vunpack.c.h.b16 %v1001
    %v2291 = vunpack.c.l.b16 %v1002
    %v2292 = vunpack.c.h.b16 %v1002
    %v2293 = vunpack.c.l.b16 %v1003
    %v2294 = vunpack.c.h.b16 %v1003
    %v2295 = vunpack.c.l.b16 %v1004
    %v2296 = vunpack.c.h.b16 %v1004
    %v2297 = vunpack.c.l.b16 %v1005
    %v2298 = vunpack.c.h.b16 %v1005
    %v2299 = vunpack.c.l.b16 %v1006
    %v2300 = vunpack.c.h.b16 %v1006
    %v2301 = vunpack.c.l.b16 %v1007
    %v2302 = vunpack.c.h.b16 %v1007
    %v2303 = vunpack.c.l.b16 %v1008
    %v2304 = vunpack.c.h.b16 %v1008
    %v2305 = vunpack.c.l.b16 %v1009
    %v2306 = vunpack.c.h.b16 %v1009
    %v2307 = vunpack.c.l.b16 %v1010
    %v2308 = vunpack.c.h.b16 %v1010
    %v2309 = vunpack.c.l.b16 %v1011
    %v2310 = vunpack.c.h.b16 %v1011
    %v2311 = vunpack.c.l.b16 %v1012
    %v2312 = vunpack.c.h.b16 %v1012
    %v2313 = vunpack.c.l.b16 %v1013
    %v2314 = vunpack.c.h.b16 %v1013
    %v2315 = vunpack.c.l.b16 %v1014
    %v2316 = vunpack.c.h.b16 %v1014
    %v2317 = vunpack.c.l.b16 %v1015
    %v2318 = vunpack.c.h.b16 %v1015
    %v2319 = vunpack.c.l.b16 %v1016
    %v2320 = vunpack.c.h.b16 %v1016
    %v2321 = vunpack.c.l.b16 %v1017
    %v2322 = vunpack.c.h.b16 %v1017
    %v2323 = vunpack.c.l.b16 %v1018
    %v2324 = vunpack.c.h.b16 %v1018
    %v2325 = vunpack.c.l.b16 %v1019
    %v2326 = vunpack.c.h.b16 %v1019
    %v2327 = vunpack.c.l.b16 %v1020
    %v2328 = vunpack.c.h.b16 %v1020
    %v2329 = vunpack.c.l.b16 %v1021
    %v2330 = vunpack.c.h.b16 %v1021
    %v2331 = vunpack.c.l.b16 %v1022
    %v2332 = vunpack.c.h.b16 %v1022
    %v2333 = vunpack.c.l.b16 %v1023
    %v2334 = vunpack.c.h.b16 %v1023
    %v2335 = vunpack.c.l.b16 %v1024
    %v2336 = vunpack.c.h.b16 %v1024
    %v2337 = vunpack.c.l.b16 %v1025
    %v2338 = vunpack.c.h.b16 %v1025
    %v2339 = vunpack.c.l.b16 %v1026
    %v2340 = vunpack.c.h.b16 %v1026
    %v2341 = vunpack.c.l.b16 %v1027
    %v2342 = vunpack.c.h.b16 %v1027
    %v2343 = vunpack.c.l.b16 %v1028
    %v2344 = vunpack.c.h.b16 %v1028
    %v2345 = vunpack.c.l.b16 %v1029
    %v2346 = vunpack.c.h.b16 %v1029
    %v2347 = vunpack.c.l.b16 %v1030
    %v2348 = vunpack.c.h.b16 %v1030
    %v2349 = vunpack.c.l.b16 %v1031
    %v2350 = vunpack.c.h.b16 %v1031
    %v2351 = vunpack.c.l.b16 %v1032
    %v2352 = vunpack.c.h.b16 %v1032
    %v2353 = vunpack.c.l.b16 %v1033
    %v2354 = vunpack.c.h.b16 %v1033
    %v2355 = vunpack.c.l.b16 %v1034
    %v2356 = vunpack.c.h.b16 %v1034
    %v2357 = vunpack.c.l.b16 %v1035
    %v2358 = vunpack.c.h.b16 %v1035
    %v2359 = vunpack.c.l.b16 %v1036
    %v2360 = vunpack.c.h.b16 %v1036
    %v2361 = vunpack.c.l.b16 %v1037
    %v2362 = vunpack.c.h.b16 %v1037
    %v2363 = vunpack.c.l.b16 %v1038
    %v2364 = vunpack.c.h.b16 %v1038
    %v2365 = vunpack.c.l.b16 %v1039
    %v2366 = vunpack.c.h.b16 %v1039
    %v2367 = vunpack.c.l.b16 %v1040
    %v2368 = vunpack.c.h.b16 %v1040
    %v2369 = vunpack.c.l.b16 %v1041
    %v2370 = vunpack.c.h.b16 %v1041
    %v2371 = vunpack.c.l.b16 %v1042
    %v2372 = vunpack.c.h.b16 %v1042
    %v2373 = vunpack.c.l.b16 %v1043
    %v2374 = vunpack.c.h.b16 %v1043
    %v2375 = vunpack.c.l.b16 %v1044
    %v2376 = vunpack.c.h.b16 %v1044
    %v2377 = vunpack.c.l.b16 %v1045
    %v2378 = vunpack.c.h.b16 %v1045
    %v2379 = vunpack.c.l.b16 %v1046
    %v2380 = vunpack.c.h.b16 %v1046
    %v2381 = vunpack.c.l.b16 %v1047
    %v2382 = vunpack.c.h.b16 %v1047
    %v2383 = vunpack.c.l.b16 %v1048
    %v2384 = vunpack.c.h.b16 %v1048
    %v2385 = vunpack.c.l.b16 %v1049
    %v2386 = vunpack.c.h.b16 %v1049
    %v2387 = vunpack.c.l.b16 %v1050
    %v2388 = vunpack.c.h.b16 %v1050
    %v2389 = vunpack.c.l.b16 %v1051
    %v2390 = vunpack.c.h.b16 %v1051
    %v2391 = vunpack.c.l.b16 %v1052
    %v2392 = vunpack.c.h.b16 %v1052
    %v2393 = vunpack.c.l.b16 %v1053
    %v2394 = vunpack.c.h.b16 %v1053
    %v2395 = vunpack.c.l.b16 %v1054
    %v2396 = vunpack.c.h.b16 %v1054
    %v2397 = vunpack.c.l.b16 %v1055
    %v2398 = vunpack.c.h.b16 %v1055
    %v2399 = vunpack.c.l.b16 %v1056
    %v2400 = vunpack.c.h.b16 %v1056
    %v2401 = vunpack.c.l.b16 %v1057
    %v2402 = vunpack.c.h.b16 %v1057
    %v2403 = vunpack.c.l.b16 %v1058
    %v2404 = vunpack.c.h.b16 %v1058
    %v2405 = vunpack.c.l.b16 %v1059
    %v2406 = vunpack.c.h.b16 %v1059
    %v2407 = vunpack.c.l.b16 %v1060
    %v2408 = vunpack.c.h.b16 %v1060
    %v2409 = vunpack.c.l.b16 %v1061
    %v2410 = vunpack.c.h.b16 %v1061
    %v2411 = vunpack.c.l.b16 %v1062
    %v2412 = vunpack.c.h.b16 %v1062
    %v2413 = vunpack.c.l.b16 %v1063
    %v2414 = vunpack.c.h.b16 %v1063
    %v2415 = vunpack.c.l.b16 %v1064
    %v2416 = vunpack.c.h.b16 %v1064
    %v2417 = vunpack.c.l.b16 %v1065
    %v2418 = vunpack.c.h.b16 %v1065
    %v2419 = vunpack.c.l.b16 %v1066
    %v2420 = vunpack.c.h.b16 %v1066
    %v2421 = vunpack.c.l.b16 %v1067
    %v2422 = vunpack.c.h.b16 %v1067
    %v2423 = vunpack.c.l.b16 %v1068
    %v2424 = vunpack.c.h.b16 %v1068
    %v2425 = vunpack.c.l.b16 %v1069
    %v2426 = vunpack.c.h.b16 %v1069
    %v2427 = vunpack.c.l.b16 %v1070
    %v2428 = vunpack.c.h.b16 %v1070
    %v2429 = vunpack.c.l.b16 %v1071
    %v2430 = vunpack.c.h.b16 %v1071
    %v2431 = vunpack.c.l.b16 %v1072
    %v2432 = vunpack.c.h.b16 %v1072
    %v2433 = vunpack.c.l.b16 %v1073
    %v2434 = vunpack.c.h.b16 %v1073
    %v2435 = vunpack.c.l.b16 %v1074
    %v2436 = vunpack.c.h.b16 %v1074
    %v2437 = vunpack.c.l.b16 %v1075
    %v2438 = vunpack.c.h.b16 %v1075
    %v2439 = vunpack.c.l.b16 %v1076
    %v2440 = vunpack.c.h.b16 %v1076
    %v2441 = vunpack.c.l.b16 %v1077
    %v2442 = vunpack.c.h.b16 %v1077
    %v2443 = vunpack.c.l.b16 %v1078
    %v2444 = vunpack.c.h.b16 %v1078
    %v2445 = vunpack.c.l.b16 %v1079
    %v2446 = vunpack.c.h.b16 %v1079
    %v2447 = vunpack.c.l.b16 %v1080
    %v2448 = vunpack.c.h.b16 %v1080
    %v2449 = vunpack.c.l.b16 %v1081
    %v2450 = vunpack.c.h.b16 %v1081
    %v2451 = vunpack.c.l.b16 %v1082
    %v2452 = vunpack.c.h.b16 %v1082
    %v2453 = vunpack.c.l.b16 %v1083
    %v2454 = vunpack.c.h.b16 %v1083
    %v2455 = vunpack.c.l.b16 %v1084
    %v2456 = vunpack.c.h.b16 %v1084
    %v2457 = vunpack.c.l.b16 %v1085
    %v2458 = vunpack.c.h.b16 %v1085
    %v2459 = vunpack.c.l.b16 %v1086
    %v2460 = vunpack.c.h.b16 %v1086
    %v2461 = vunpack.c.l.b16 %v1087
    %v2462 = vunpack.c.h.b16 %v1087
    %v2463 = vunpack.c.l.b16 %v1088
    %v2464 = vunpack.c.h.b16 %v1088
    %v2465 = vunpack.c.l.b16 %v1089
    %v2466 = vunpack.c.h.b16 %v1089
    %v2467 = vunpack.c.l.b16 %v1090
    %v2468 = vunpack.c.h.b16 %v1090
    %v2469 = vunpack.c.l.b16 %v1091
    %v2470 = vunpack.c.h.b16 %v1091
    %v2471 = vunpack.c.l.b16 %v1092
    %v2472 = vunpack.c.h.b16 %v1092
    %v2473 = vunpack.c.l.b16 %v1093
    %v2474 = vunpack.c.h.b16 %v1093
    %v2475 = vunpack.c.l.b16 %v1094
    %v2476 = vunpack.c.h.b16 %v1094
    %v2477 = vunpack.c.l.b16 %v1095
    %v2478 = vunpack.c.h.b16 %v1095
    %v2479 = vunpack.c.l.b16 %v1096
    %v2480 = vunpack.c.h.b16 %v1096
    %v2481 = vunpack.c.l.b16 %v1097
    %v2482 = vunpack.c.h.b16 %v1097
    %v2483 = vunpack.c.l.b16 %v1098
    %v2484 = vunpack.c.h.b16 %v1098
    %v2485 = vunpack.c.l.b16 %v1099
    %v2486 = vunpack.c.h.b16 %v1099
    %v2487 = vunpack.c.l.b16 %v1100
    %v2488 = vunpack.c.h.b16 %v1100
    %v2489 = vunpack.c.l.b16 %v1101
    %v2490 = vunpack.c.h.b16 %v1101
    %v2491 = vunpack.c.l.b16 %v1102
    %v2492 = vunpack.c.h.b16 %v1102
    %v2493 = vunpack.c.l.b16 %v1103
    %v2494 = vunpack.c.h.b16 %v1103
    %v2495 = vunpack.c.l.b16 %v1104
    %v2496 = vunpack.c.h.b16 %v1104
    %v2497 = vunpack.c.l.b16 %v1105
    %v2498 = vunpack.c.h.b16 %v1105
    %v2499 = vunpack.c.l.b16 %v1106
    %v2500 = vunpack.c.h.b16 %v1106
    %v2501 = vunpack.c.l.b16 %v1107
    %v2502 = vunpack.c.h.b16 %v1107
    %v2503 = vunpack.c.l.b16 %v1108
    %v2504 = vunpack.c.h.b16 %v1108
    %v2505 = vunpack.c.l.b16 %v1109
    %v2506 = vunpack.c.h.b16 %v1109
    %v2507 = vunpack.c.l.b16 %v1110
    %v2508 = vunpack.c.h.b16 %v1110
    %v2509 = vunpack.c.l.b16 %v1111
    %v2510 = vunpack.c.h.b16 %v1111
    %v2511 = vunpack.c.l.b16 %v1112
    %v2512 = vunpack.c.h.b16 %v1112
    %v2513 = vunpack.c.l.b16 %v1113
    %v2514 = vunpack.c.h.b16 %v1113
    %v2515 = vunpack.c.l.b16 %v1114
    %v2516 = vunpack.c.h.b16 %v1114
    %v2517 = vunpack.c.l.b16 %v1115
    %v2518 = vunpack.c.h.b16 %v1115
    %v2519 = vunpack.c.l.b16 %v1116
    %v2520 = vunpack.c.h.b16 %v1116
    %v2521 = vunpack.c.l.b16 %v1117
    %v2522 = vunpack.c.h.b16 %v1117
    %v2523 = vunpack.c.l.b16 %v1118
    %v2524 = vunpack.c.h.b16 %v1118
    %v2525 = vunpack.c.l.b16 %v1119
    %v2526 = vunpack.c.h.b16 %v1119
    %v2527 = vunpack.c.l.b16 %v1120
    %v2528 = vunpack.c.h.b16 %v1120
    %v2529 = vunpack.c.l.b16 %v1121
    %v2530 = vunpack.c.h.b16 %v1121
    %v2531 = vunpack.c.l.b16 %v1122
    %v2532 = vunpack.c.h.b16 %v1122
    %v2533 = vunpack.c.l.b16 %v1123
    %v2534 = vunpack.c.h.b16 %v1123
    %v2535 = vunpack.c.l.b16 %v1124
    %v2536 = vunpack.c.h.b16 %v1124
    %v2537 = vunpack.c.l.b16 %v1125
    %v2538 = vunpack.c.h.b16 %v1125
    %v2539 = vunpack.c.l.b16 %v1126
    %v2540 = vunpack.c.h.b16 %v1126
    %v2541 = vunpack.c.l.b16 %v1127
    %v2542 = vunpack.c.h.b16 %v1127
    %v2543 = vunpack.c.l.b16 %v1128
    %v2544 = vunpack.c.h.b16 %v1128
    %v2545 = vunpack.c.l.b16 %v1129
    %v2546 = vunpack.c.h.b16 %v1129
    %v2547 = vunpack.c.l.b16 %v1130
    %v2548 = vunpack.c.h.b16 %v1130
    %v2549 = vunpack.c.l.b16 %v1131
    %v2550 = vunpack.c.h.b16 %v1131
    %v2551 = vunpack.c.l.b16 %v1132
    %v2552 = vunpack.c.h.b16 %v1132
    %v2553 = vunpack.c.l.b16 %v1133
    %v2554 = vunpack.c.h.b16 %v1133
    %v2555 = vunpack.c.l.b16 %v1134
    %v2556 = vunpack.c.h.b16 %v1134
    %v2557 = vunpack.c.l.b16 %v1135
    %v2558 = vunpack.c.h.b16 %v1135
    %v2559 = vunpack.c.l.b16 %v1136
    %v2560 = vunpack.c.h.b16 %v1136
    %v2561 = vunpack.c.l.b16 %v1137
    %v2562 = vunpack.c.h.b16 %v1137
    %v2563 = vunpack.c.l.b16 %v1138
    %v2564 = vunpack.c.h.b16 %v1138
    %v2565 = vunpack.c.l.b16 %v1139
    %v2566 = vunpack.c.h.b16 %v1139
    %v2567 = vunpack.c.l.b16 %v1140
    %v2568 = vunpack.c.h.b16 %v1140
    %v2569 = vunpack.c.l.b16 %v1141
    %v2570 = vunpack.c.h.b16 %v1141
    %v2571 = vunpack.c.l.b16 %v1142
    %v2572 = vunpack.c.h.b16 %v1142
    %v2573 = vunpack.c.l.b16 %v1143
    %v2574 = vunpack.c.h.b16 %v1143
    %v2575 = vunpack.c.l.b16 %v1144
    %v2576 = vunpack.c.h.b16 %v1144
    %v2577 = vunpack.c.l.b16 %v1145
    %v2578 = vunpack.c.h.b16 %v1145
    %v2579 = vunpack.c.l.b16 %v1146
    %v2580 = vunpack.c.h.b16 %v1146
    %v2581 = vunpack.c.l.b16 %v1147
    %v2582 = vunpack.c.h.b16 %v1147
    %v2583 = vunpack.c.l.b16 %v1148
    %v2584 = vunpack.c.h.b16 %v1148
    %v2585 = vunpack.c.l.b16 %v1149
    %v2586 = vunpack.c.h.b16 %v1149
    %v2587 = vunpack.c.l.b16 %v1150
    %v2588 = vunpack.c.h.b16 %v1150
    %v2589 = vunpack.c.l.b16 %v1151
    %v2590 = vunpack.c.h.b16 %v1151
    %v2591 = vunpack.c.l.b16 %v1152
    %v2592 = vunpack.c.h.b16 %v1152
    %v2593 = vunpack.c.l.b16 %v1153
    %v2594 = vunpack.c.h.b16 %v1153
    %v2595 = vunpack.c.l.b16 %v1154
    %v2596 = vunpack.c.h.b16 %v1154
    %v2597 = vunpack.c.l.b16 %v1155
    %v2598 = vunpack.c.h.b16 %v1155
    %v2599 = vunpack.c.l.b16 %v1156
    %v2600 = vunpack.c.h.b16 %v1156
    %v2601 = vunpack.c.l.b16 %v1157
    %v2602 = vunpack.c.h.b16 %v1157
    %v2603 = vunpack.c.l.b16 %v1158
    %v2604 = vunpack.c.h.b16 %v1158
    %v2605 = vunpack.c.l.b16 %v1159
    %v2606 = vunpack.c.h.b16 %v1159
    %v2607 = vunpack.c.l.b16 %v1160
    %v2608 = vunpack.c.h.b16 %v1160
    %v2609 = vunpack.c.l.b16 %v1161
    %v2610 = vunpack.c.h.b16 %v1161
    %v2611 = vunpack.c.l.b16 %v1162
    %v2612 = vunpack.c.h.b16 %v1162
    %v2613 = vunpack.c.l.b16 %v1163
    %v2614 = vunpack.c.h.b16 %v1163
    %v2615 = vunpack.c.l.b16 %v1164
    %v2616 = vunpack.c.h.b16 %v1164
    %v2617 = vunpack.c.l.b16 %v1165
    %v2618 = vunpack.c.h.b16 %v1165
    %v2619 = vunpack.c.l.b16 %v1166
    %v2620 = vunpack.c.h.b16 %v1166
    %v2621 = vunpack.c.l.b16 %v1167
    %v2622 = vunpack.c.h.b16 %v1167
    %v2623 = vunpack.c.l.b16 %v1168
    %v2624 = vunpack.c.h.b16 %v1168
    %v2625 = vunpack.c.l.b16 %v1169
    %v2626 = vunpack.c.h.b16 %v1169
    %v2627 = vunpack.c.l.b16 %v1170
    %v2628 = vunpack.c.h.b16 %v1170
    %v2629 = vunpack.c.l.b16 %v1171
    %v2630 = vunpack.c.h.b16 %v1171
    %v2631 = vunpack.c.l.b16 %v1172
    %v2632 = vunpack.c.h.b16 %v1172
    %v2633 = vunpack.c.l.b16 %v1173
    %v2634 = vunpack.c.h.b16 %v1173
    %v2635 = vunpack.c.l.b16 %v1174
    %v2636 = vunpack.c.h.b16 %v1174
    %v2637 = vunpack.c.l.b16 %v1175
    %v2638 = vunpack.c.h.b16 %v1175
    %v2639 = vunpack.c.l.b16 %v1176
    %v2640 = vunpack.c.h.b16 %v1176
    %v2641 = vunpack.c.l.b16 %v1177
    %v2642 = vunpack.c.h.b16 %v1177
    %v2643 = vunpack.c.l.b16 %v1178
    %v2644 = vunpack.c.h.b16 %v1178
    %v2645 = vunpack.c.l.b16 %v1179
    %v2646 = vunpack.c.h.b16 %v1179
    %v2647 = vunpack.c.l.b16 %v1180
    %v2648 = vunpack.c.h.b16 %v1180
    %v2649 = vunpack.c.l.b16 %v1181
    %v2650 = vunpack.c.h.b16 %v1181
    %v2651 = vunpack.c.l.b16 %v1182
    %v2652 = vunpack.c.h.b16 %v1182
    %v2653 = vunpack.c.l.b16 %v1183
    %v2654 = vunpack.c.h.b16 %v1183
    %v2655 = vunpack.c.l.b16 %v1184
    %v2656 = vunpack.c.h.b16 %v1184
    %v2657 = vunpack.c.l.b16 %v1185
    %v2658 = vunpack.c.h.b16 %v1185
    %v2659 = vunpack.c.l.b16 %v1186
    %v2660 = vunpack.c.h.b16 %v1186
    %v2661 = vunpack.c.l.b16 %v1187
    %v2662 = vunpack.c.h.b16 %v1187
    %v2663 = vunpack.c.l.b16 %v1188
    %v2664 = vunpack.c.h.b16 %v1188
    %v2665 = vunpack.c.l.b16 %v1189
    %v2666 = vunpack.c.h.b16 %v1189
    %v2667 = vunpack.c.l.b16 %v1190
    %v2668 = vunpack.c.h.b16 %v1190
    %v2669 = vunpack.c.l.b16 %v1191
    %v2670 = vunpack.c.h.b16 %v1191
    %v2671 = vunpack.c.l.b16 %v1192
    %v2672 = vunpack.c.h.b16 %v1192
    %v2673 = vunpack.c.l.b16 %v1193
    %v2674 = vunpack.c.h.b16 %v1193
    %v2675 = vunpack.c.l.b16 %v1194
    %v2676 = vunpack.c.h.b16 %v1194
    %v2677 = vunpack.c.l.b16 %v1195
    %v2678 = vunpack.c.h.b16 %v1195
    %v2679 = vunpack.c.l.b16 %v1196
    %v2680 = vunpack.c.h.b16 %v1196
    %v2681 = vunpack.c.l.b16 %v1197
    %v2682 = vunpack.c.h.b16 %v1197
    %v2683 = vunpack.c.l.b16 %v1198
    %v2684 = vunpack.c.h.b16 %v1198
    %v2685 = vunpack.c.l.b16 %v1199
    %v2686 = vunpack.c.h.b16 %v1199
    %v2687 = vunpack.c.l.b16 %v1200
    %v2688 = vunpack.c.h.b16 %v1200
    %v2689 = vunpack.c.l.b16 %v1201
    %v2690 = vunpack.c.h.b16 %v1201
    %v2691 = vunpack.c.l.b16 %v1202
    %v2692 = vunpack.c.h.b16 %v1202
    %v2693 = vunpack.c.l.b16 %v1203
    %v2694 = vunpack.c.h.b16 %v1203
    %v2695 = vunpack.c.l.b16 %v1204
    %v2696 = vunpack.c.h.b16 %v1204
    %v2697 = vunpack.c.l.b16 %v1205
    %v2698 = vunpack.c.h.b16 %v1205
    %v2699 = vunpack.c.l.b16 %v1206
    %v2700 = vunpack.c.h.b16 %v1206
    %v2701 = vunpack.c.l.b16 %v1207
    %v2702 = vunpack.c.h.b16 %v1207
    %v2703 = vunpack.c.l.b16 %v1208
    %v2704 = vunpack.c.h.b16 %v1208
    %v2705 = vunpack.c.l.b16 %v1209
    %v2706 = vunpack.c.h.b16 %v1209
    %v2707 = vunpack.c.l.b16 %v1210
    %v2708 = vunpack.c.h.b16 %v1210
    %v2709 = vunpack.c.l.b16 %v1211
    %v2710 = vunpack.c.h.b16 %v1211
    %v2711 = vunpack.c.l.b16 %v1212
    %v2712 = vunpack.c.h.b16 %v1212
    %v2713 = vunpack.c.l.b16 %v1213
    %v2714 = vunpack.c.h.b16 %v1213
    %v2715 = vunpack.c.l.b16 %v1214
    %v2716 = vunpack.c.h.b16 %v1214
    %v2717 = vunpack.c.l.b16 %v1215
    %v2718 = vunpack.c.h.b16 %v1215
    %v2719 = vunpack.c.l.b16 %v1216
    %v2720 = vunpack.c.h.b16 %v1216
    %v2721 = vunpack.c.l.b16 %v1217
    %v2722 = vunpack.c.h.b16 %v1217
    %v2723 = vunpack.c.l.b16 %v1218
    %v2724 = vunpack.c.h.b16 %v1218
    %v2725 = vunpack.c.l.b16 %v1219
    %v2726 = vunpack.c.h.b16 %v1219
    %v2727 = vunpack.c.l.b16 %v1220
    %v2728 = vunpack.c.h.b16 %v1220
    %v2729 = vunpack.c.l.b16 %v1221
    %v2730 = vunpack.c.h.b16 %v1221
    %v2731 = vunpack.c.l.b16 %v1222
    %v2732 = vunpack.c.h.b16 %v1222
    %v2733 = vunpack.c.l.b16 %v1223
    %v2734 = vunpack.c.h.b16 %v1223
    %v2735 = vunpack.c.l.b16 %v1224
    %v2736 = vunpack.c.h.b16 %v1224
    %v2737 = vunpack.c.l.b16 %v1225
    %v2738 = vunpack.c.h.b16 %v1225
    %v2739 = vunpack.c.l.b16 %v1226
    %v2740 = vunpack.c.h.b16 %v1226
    %v2741 = vunpack.c.l.b16 %v1227
    %v2742 = vunpack.c.h.b16 %v1227
    %v2743 = vunpack.c.l.b16 %v1228
    %v2744 = vunpack.c.h.b16 %v1228
    %v2745 = vunpack.c.l.b16 %v1229
    %v2746 = vunpack.c.h.b16 %v1229
    %v2747 = vunpack.c.l.b16 %v1230
    %v2748 = vunpack.c.h.b16 %v1230
    %v2749 = vunpack.c.l.b16 %v1231
    %v2750 = vunpack.c.h.b16 %v1231
    %v2751 = vunpack.c.l.b16 %v1232
    %v2752 = vunpack.c.h.b16 %v1232
    %v2753 = vunpack.c.l.b16 %v1233
    %v2754 = vunpack.c.h.b16 %v1233
    %v2755 = vunpack.c.l.b16 %v1234
    %v2756 = vunpack.c.h.b16 %v1234
    %v2757 = vunpack.c.l.b16 %v1235
    %v2758 = vunpack.c.h.b16 %v1235
    %v2759 = vunpack.c.l.b16 %v1236
    %v2760 = vunpack.c.h.b16 %v1236
    %v2761 = vunpack.c.l.b16 %v1237
    %v2762 = vunpack.c.h.b16 %v1237
    %v2763 = vunpack.c.l.b16 %v1238
    %v2764 = vunpack.c.h.b16 %v1238
    %v2765 = vunpack.c.l.b16 %v1239
    %v2766 = vunpack.c.h.b16 %v1239
    %v2767 = vunpack.c.l.b16 %v1240
    %v2768 = vunpack.c.h.b16 %v1240
    %v2769 = vunpack.c.l.b16 %v1241
    %v2770 = vunpack.c.h.b16 %v1241
    %v2771 = vunpack.c.l.b16 %v1242
    %v2772 = vunpack.c.h.b16 %v1242
    %v2773 = vunpack.c.l.b16 %v1243
    %v2774 = vunpack.c.h.b16 %v1243
    %v2775 = vunpack.c.l.b16 %v1244
    %v2776 = vunpack.c.h.b16 %v1244
    %v2777 = vunpack.c.l.b16 %v1245
    %v2778 = vunpack.c.h.b16 %v1245
    %v2779 = vunpack.c.l.b16 %v1246
    %v2780 = vunpack.c.h.b16 %v1246
    %v2781 = vunpack.c.l.b16 %v1247
    %v2782 = vunpack.c.h.b16 %v1247
    %v2783 = vunpack.c.l.b16 %v1248
    %v2784 = vunpack.c.h.b16 %v1248
    %v2785 = vunpack.c.l.b16 %v1249
    %v2786 = vunpack.c.h.b16 %v1249
    %v2787 = vunpack.c.l.b16 %v1250
    %v2788 = vunpack.c.h.b16 %v1250
    %v2789 = vunpack.c.l.b16 %v1251
    %v2790 = vunpack.c.h.b16 %v1251
    %v2791 = vunpack.c.l.b16 %v1252
    %v2792 = vunpack.c.h.b16 %v1252
    %v2793 = vunpack.c.l.b16 %v1253
    %v2794 = vunpack.c.h.b16 %v1253
    %v2795 = vunpack.c.l.b16 %v1254
    %v2796 = vunpack.c.h.b16 %v1254
    %v2797 = vunpack.c.l.b16 %v1255
    %v2798 = vunpack.c.h.b16 %v1255
    %v2799 = vunpack.c.l.b16 %v1256
    %v2800 = vunpack.c.h.b16 %v1256
    %v2801 = vunpack.c.l.b16 %v1257
    %v2802 = vunpack.c.h.b16 %v1257
    %v2803 = vunpack.c.l.b16 %v1258
    %v2804 = vunpack.c.h.b16 %v1258
    %v2805 = vunpack.c.l.b16 %v1259
    %v2806 = vunpack.c.h.b16 %v1259
    %v2807 = vunpack.c.l.b16 %v1260
    %v2808 = vunpack.c.h.b16 %v1260
    %v2809 = vunpack.c.l.b16 %v1261
    %v2810 = vunpack.c.h.b16 %v1261
    %v2811 = vunpack.c.l.b16 %v1262
    %v2812 = vunpack.c.h.b16 %v1262
    %v2813 = vunpack.c.l.b16 %v1263
    %v2814 = vunpack.c.h.b16 %v1263
    %v2815 = vunpack.c.l.b16 %v1264
    %v2816 = vunpack.c.h.b16 %v1264
    %v2817 = vunpack.c.l.b16 %v1265
    %v2818 = vunpack.c.h.b16 %v1265
    %v2819 = vunpack.c.l.b16 %v1266
    %v2820 = vunpack.c.h.b16 %v1266
    %v2821 = vunpack.c.l.b16 %v1267
    %v2822 = vunpack.c.h.b16 %v1267
    %v2823 = vunpack.c.l.b16 %v1268
    %v2824 = vunpack.c.h.b16 %v1268
    %v2825 = vunpack.c.l.b16 %v1269
    %v2826 = vunpack.c.h.b16 %v1269
    %v2827 = vunpack.c.l.b16 %v1270
    %v2828 = vunpack.c.h.b16 %v1270
    %v2829 = vunpack.c.l.b16 %v1271
    %v2830 = vunpack.c.h.b16 %v1271
    %v2831 = vunpack.c.l.b16 %v1272
    %v2832 = vunpack.c.h.b16 %v1272
    %v2833 = vunpack.c.l.b16 %v1273
    %v2834 = vunpack.c.h.b16 %v1273
    %v2835 = vunpack.c.l.b16 %v1274
    %v2836 = vunpack.c.h.b16 %v1274
    %v2837 = vunpack.c.l.b16 %v1275
    %v2838 = vunpack.c.h.b16 %v1275
    %v2839 = vunpack.c.l.b16 %v1276
    %v2840 = vunpack.c.h.b16 %v1276
    %v2841 = vunpack.c.l.b16 %v1277
    %v2842 = vunpack.c.h.b16 %v1277
    %v2843 = vunpack.c.l.b16 %v1278
    %v2844 = vunpack.c.h.b16 %v1278
    %v2845 = vunpack.c.l.b16 %v1279
    %v2846 = vunpack.c.h.b16 %v1279
    %v2847 = vunpack.c.l.b16 %v1280
    %v2848 = vunpack.c.h.b16 %v1280
    %v2849 = vunpack.c.l.b16 %v1281
    %v2850 = vunpack.c.h.b16 %v1281
    %v2851 = vunpack.c.l.b16 %v1282
    %v2852 = vunpack.c.h.b16 %v1282
    %v2853 = vunpack.c.l.b16 %v1283
    %v2854 = vunpack.c.h.b16 %v1283
    %v2855 = vunpack.c.l.b16 %v1284
    %v2856 = vunpack.c.h.b16 %v1284
    %v2857 = vunpack.c.l.b16 %v1285
    %v2858 = vunpack.c.h.b16 %v1285
    %v2859 = vunpack.c.l.b16 %v1286
    %v2860 = vunpack.c.h.b16 %v1286
    %v2861 = vunpack.c.l.b16 %v1287
    %v2862 = vunpack.c.h.b16 %v1287
    %v2863 = vunpack.c.l.b16 %v1288
    %v2864 = vunpack.c.h.b16 %v1288
    %v2865 = vunpack.c.l.b16 %v1289
    %v2866 = vunpack.c.h.b16 %v1289
    %v2867 = vunpack.c.l.b16 %v1290
    %v2868 = vunpack.c.h.b16 %v1290
    %v2869 = vpack.c.b16 %v1853, %v1845
    %v2870 = vpack.c.b16 %v1854, %v1846
    %v2871 = vpack.c.b16 %v1855, %v1847
    %v2872 = vpack.c.b16 %v1856, %v1848
    %v2873 = vpack.c.b16 %v1857, %v1849
    %v2874 = vpack.c.b16 %v1858, %v1850
    %v2875 = vpack.c.b16 %v1859, %v1851
    %v2876 = vpack.c.b16 %v1860, %v1852
    %v2877 = vpack.c.b16 %v1869, %v1861
    %v2878 = vpack.c.b16 %v1870, %v1862
    %v2879 = vpack.c.b16 %v1871, %v1863
    %v2880 = vpack.c.b16 %v1872, %v1864
    %v2881 = vpack.c.b16 %v1873, %v1865
    %v2882 = vpack.c.b16 %v1874, %v1866
    %v2883 = vpack.c.b16 %v1875, %v1867
    %v2884 = vpack.c.b16 %v1876, %v1868
    %v2885 = vpack.c.b16 %v1885, %v1877
    %v2886 = vpack.c.b16 %v1886, %v1878
    %v2887 = vpack.c.b16 %v1887, %v1879
    %v2888 = vpack.c.b16 %v1888, %v1880
    %v2889 = vpack.c.b16 %v1889, %v1881
    %v2890 = vpack.c.b16 %v1890, %v1882
    %v2891 = vpack.c.b16 %v1891, %v1883
    %v2892 = vpack.c.b16 %v1892, %v1884
    %v2893 = vpack.c.b16 %v1901, %v1893
    %v2894 = vpack.c.b16 %v1902, %v1894
    %v2895 = vpack.c.b16 %v1903, %v1895
    %v2896 = vpack.c.b16 %v1904, %v1896
    %v2897 = vpack.c.b16 %v1905, %v1897
    %v2898 = vpack.c.b16 %v1906, %v1898
    %v2899 = vpack.c.b16 %v1907, %v1899
    %v2900 = vpack.c.b16 %v1908, %v1900
    %v2901 = vpack.c.b16 %v1917, %v1909
    %v2902 = vpack.c.b16 %v1918, %v1910
    %v2903 = vpack.c.b16 %v1919, %v1911
    %v2904 = vpack.c.b16 %v1920, %v1912
    %v2905 = vpack.c.b16 %v1921, %v1913
    %v2906 = vpack.c.b16 %v1922, %v1914
    %v2907 = vpack.c.b16 %v1923, %v1915
    %v2908 = vpack.c.b16 %v1924, %v1916
    %v2909 = vpack.c.b16 %v1933, %v1925
    %v2910 = vpack.c.b16 %v1934, %v1926
    %v2911 = vpack.c.b16 %v1935, %v1927
    %v2912 = vpack.c.b16 %v1936, %v1928
    %v2913 = vpack.c.b16 %v1937, %v1929
    %v2914 = vpack.c.b16 %v1938, %v1930
    %v2915 = vpack.c.b16 %v1939, %v1931
    %v2916 = vpack.c.b16 %v1940, %v1932
    %v2917 = vpack.c.b16 %v1949, %v1941
    %v2918 = vpack.c.b16 %v1950, %v1942
    %v2919 = vpack.c.b16 %v1951, %v1943
    %v2920 = vpack.c.b16 %v1952, %v1944
    %v2921 = vpack.c.b16 %v1953, %v1945
    %v2922 = vpack.c.b16 %v1954, %v1946
    %v2923 = vpack.c.b16 %v1955, %v1947
    %v2924 = vpack.c.b16 %v1956, %v1948
    %v2925 = vpack.c.b16 %v1965, %v1957
    %v2926 = vpack.c.b16 %v1966, %v1958
    %v2927 = vpack.c.b16 %v1967, %v1959
    %v2928 = vpack.c.b16 %v1968, %v1960
    %v2929 = vpack.c.b16 %v1969, %v1961
    %v2930 = vpack.c.b16 %v1970, %v1962
    %v2931 = vpack.c.b16 %v1971, %v1963
    %v2932 = vpack.c.b16 %v1972, %v1964
    %v2933 = vpack.c.b16 %v1981, %v1973
    %v2934 = vpack.c.b16 %v1982, %v1974
    %v2935 = vpack.c.b16 %v1983, %v1975
    %v2936 = vpack.c.b16 %v1984, %v1976
    %v2937 = vpack.c.b16 %v1985, %v1977
    %v2938 = vpack.c.b16 %v1986, %v1978
    %v2939 = vpack.c.b16 %v1987, %v1979
    %v2940 = vpack.c.b16 %v1988, %v1980
    %v2941 = vpack.c.b16 %v1997, %v1989
    %v2942 = vpack.c.b16 %v1998, %v1990
    %v2943 = vpack.c.b16 %v1999, %v1991
    %v2944 = vpack.c.b16 %v2000, %v1992
    %v2945 = vpack.c.b16 %v2001, %v1993
    %v2946 = vpack.c.b16 %v2002, %v1994
    %v2947 = vpack.c.b16 %v2003, %v1995
    %v2948 = vpack.c.b16 %v2004, %v1996
    %v2949 = vpack.c.b16 %v2013, %v2005
    %v2950 = vpack.c.b16 %v2014, %v2006
    %v2951 = vpack.c.b16 %v2015, %v2007
    %v2952 = vpack.c.b16 %v2016, %v2008
    %v2953 = vpack.c.b16 %v2017, %v2009
    %v2954 = vpack.c.b16 %v2018, %v2010
    %v2955 = vpack.c.b16 %v2019, %v2011
    %v2956 = vpack.c.b16 %v2020, %v2012
    %v2957 = vpack.c.b16 %v2029, %v2021
    %v2958 = vpack.c.b16 %v2030, %v2022
    %v2959 = vpack.c.b16 %v2031, %v2023
    %v2960 = vpack.c.b16 %v2032, %v2024
    %v2961 = vpack.c.b16 %v2033, %v2025
    %v2962 = vpack.c.b16 %v2034, %v2026
    %v2963 = vpack.c.b16 %v2035, %v2027
    %v2964 = vpack.c.b16 %v2036, %v2028
    %v2965 = vpack.c.b16 %v2045, %v2037
    %v2966 = vpack.c.b16 %v2046, %v2038
    %v2967 = vpack.c.b16 %v2047, %v2039
    %v2968 = vpack.c.b16 %v2048, %v2040
    %v2969 = vpack.c.b16 %v2049, %v2041
    %v2970 = vpack.c.b16 %v2050, %v2042
    %v2971 = vpack.c.b16 %v2051, %v2043
    %v2972 = vpack.c.b16 %v2052, %v2044
    %v2973 = vpack.c.b16 %v2061, %v2053
    %v2974 = vpack.c.b16 %v2062, %v2054
    %v2975 = vpack.c.b16 %v2063, %v2055
    %v2976 = vpack.c.b16 %v2064, %v2056
    %v2977 = vpack.c.b16 %v2065, %v2057
    %v2978 = vpack.c.b16 %v2066, %v2058
    %v2979 = vpack.c.b16 %v2067, %v2059
    %v2980 = vpack.c.b16 %v2068, %v2060
    %v2981 = vpack.c.b16 %v2077, %v2069
    %v2982 = vpack.c.b16 %v2078, %v2070
    %v2983 = vpack.c.b16 %v2079, %v2071
    %v2984 = vpack.c.b16 %v2080, %v2072
    %v2985 = vpack.c.b16 %v2081, %v2073
    %v2986 = vpack.c.b16 %v2082, %v2074
    %v2987 = vpack.c.b16 %v2083, %v2075
    %v2988 = vpack.c.b16 %v2084, %v2076
    %v2989 = vpack.c.b16 %v2093, %v2085
    %v2990 = vpack.c.b16 %v2094, %v2086
    %v2991 = vpack.c.b16 %v2095, %v2087
    %v2992 = vpack.c.b16 %v2096, %v2088
    %v2993 = vpack.c.b16 %v2097, %v2089
    %v2994 = vpack.c.b16 %v2098, %v2090
    %v2995 = vpack.c.b16 %v2099, %v2091
    %v2996 = vpack.c.b16 %v2100, %v2092
    %v2997 = vpack.c.b16 %v2109, %v2101
    %v2998 = vpack.c.b16 %v2110, %v2102
    %v2999 = vpack.c.b16 %v2111, %v2103
    %v3000 = vpack.c.b16 %v2112, %v2104
    %v3001 = vpack.c.b16 %v2113, %v2105
    %v3002 = vpack.c.b16 %v2114, %v2106
    %v3003 = vpack.c.b16 %v2115, %v2107
    %v3004 = vpack.c.b16 %v2116, %v2108
    %v3005 = vpack.c.b16 %v2125, %v2117
    %v3006 = vpack.c.b16 %v2126, %v2118
    %v3007 = vpack.c.b16 %v2127, %v2119
    %v3008 = vpack.c.b16 %v2128, %v2120
    %v3009 = vpack.c.b16 %v2129, %v2121
    %v3010 = vpack.c.b16 %v2130, %v2122
    %v3011 = vpack.c.b16 %v2131, %v2123
    %v3012 = vpack.c.b16 %v2132, %v2124
    %v3013 = vpack.c.b16 %v2141, %v2133
    %v3014 = vpack.c.b16 %v2142, %v2134
    %v3015 = vpack.c.b16 %v2143, %v2135
    %v3016 = vpack.c.b16 %v2144, %v2136
    %v3017 = vpack.c.b16 %v2145, %v2137
    %v3018 = vpack.c.b16 %v2146, %v2138
    %v3019 = vpack.c.b16 %v2147, %v2139
    %v3020 = vpack.c.b16 %v2148, %v2140
    %v3021 = vpack.c.b16 %v2157, %v2149
    %v3022 = vpack.c.b16 %v2158, %v2150
    %v3023 = vpack.c.b16 %v2159, %v2151
    %v3024 = vpack.c.b16 %v2160, %v2152
    %v3025 = vpack.c.b16 %v2161, %v2153
    %v3026 = vpack.c.b16 %v2162, %v2154
    %v3027 = vpack.c.b16 %v2163, %v2155
    %v3028 = vpack.c.b16 %v2164, %v2156
    %v3029 = vpack.c.b16 %v2173, %v2165
    %v3030 = vpack.c.b16 %v2174, %v2166
    %v3031 = vpack.c.b16 %v2175, %v2167
    %v3032 = vpack.c.b16 %v2176, %v2168
    %v3033 = vpack.c.b16 %v2177, %v2169
    %v3034 = vpack.c.b16 %v2178, %v2170
    %v3035 = vpack.c.b16 %v2179, %v2171
    %v3036 = vpack.c.b16 %v2180, %v2172
    %v3037 = vpack.c.b16 %v2189, %v2181
    %v3038 = vpack.c.b16 %v2190, %v2182
    %v3039 = vpack.c.b16 %v2191, %v2183
    %v3040 = vpack.c.b16 %v2192, %v2184
    %v3041 = vpack.c.b16 %v2193, %v2185
    %v3042 = vpack.c.b16 %v2194, %v2186
    %v3043 = vpack.c.b16 %v2195, %v2187
    %v3044 = vpack.c.b16 %v2196, %v2188
    %v3045 = vpack.c.b16 %v2205, %v2197
    %v3046 = vpack.c.b16 %v2206, %v2198
    %v3047 = vpack.c.b16 %v2207, %v2199
    %v3048 = vpack.c.b16 %v2208, %v2200
    %v3049 = vpack.c.b16 %v2209, %v2201
    %v3050 = vpack.c.b16 %v2210, %v2202
    %v3051 = vpack.c.b16 %v2211, %v2203
    %v3052 = vpack.c.b16 %v2212, %v2204
    %v3053 = vpack.c.b16 %v2221, %v2213
    %v3054 = vpack.c.b16 %v2222, %v2214
    %v3055 = vpack.c.b16 %v2223, %v2215
    %v3056 = vpack.c.b16 %v2224, %v2216
    %v3057 = vpack.c.b16 %v2225, %v2217
    %v3058 = vpack.c.b16 %v2226, %v2218
    %v3059 = vpack.c.b16 %v2227, %v2219
    %v3060 = vpack.c.b16 %v2228, %v2220
    %v3061 = vpack.c.b16 %v2237, %v2229
    %v3062 = vpack.c.b16 %v2238, %v2230
    %v3063 = vpack.c.b16 %v2239, %v2231
    %v3064 = vpack.c.b16 %v2240, %v2232
    %v3065 = vpack.c.b16 %v2241, %v2233
    %v3066 = vpack.c.b16 %v2242, %v2234
    %v3067 = vpack.c.b16 %v2243, %v2235
    %v3068 = vpack.c.b16 %v2244, %v2236
    %v3069 = vpack.c.b16 %v2253, %v2245
    %v3070 = vpack.c.b16 %v2254, %v2246
    %v3071 = vpack.c.b16 %v2255, %v2247
    %v3072 = vpack.c.b16 %v2256, %v2248
    %v3073 = vpack.c.b16 %v2257, %v2249
    %v3074 = vpack.c.b16 %v2258, %v2250
    %v3075 = vpack.c.b16 %v2259, %v2251
    %v3076 = vpack.c.b16 %v2260, %v2252
    %v3077 = vpack.c.b16 %v2269, %v2261
    %v3078 = vpack.c.b16 %v2270, %v2262
    %v3079 = vpack.c.b16 %v2271, %v2263
    %v3080 = vpack.c.b16 %v2272, %v2264
    %v3081 = vpack.c.b16 %v2273, %v2265
    %v3082 = vpack.c.b16 %v2274, %v2266
    %v3083 = vpack.c.b16 %v2275, %v2267
    %v3084 = vpack.c.b16 %v2276, %v2268
    %v3085 = vpack.c.b16 %v2285, %v2277
    %v3086 = vpack.c.b16 %v2286, %v2278
    %v3087 = vpack.c.b16 %v2287, %v2279
    %v3088 = vpack.c.b16 %v2288, %v2280
    %v3089 = vpack.c.b16 %v2289, %v2281
    %v3090 = vpack.c.b16 %v2290, %v2282
    %v3091 = vpack.c.b16 %v2291, %v2283
    %v3092 = vpack.c.b16 %v2292, %v2284
    %v3093 = vpack.c.b16 %v2301, %v2293
    %v3094 = vpack.c.b16 %v2302, %v2294
    %v3095 = vpack.c.b16 %v2303, %v2295
    %v3096 = vpack.c.b16 %v2304, %v2296
    %v3097 = vpack.c.b16 %v2305, %v2297
    %v3098 = vpack.c.b16 %v2306, %v2298
    %v3099 = vpack.c.b16 %v2307, %v2299
    %v3100 = vpack.c.b16 %v2308, %v2300
    %v3101 = vpack.c.b16 %v2317, %v2309
    %v3102 = vpack.c.b16 %v2318, %v2310
    %v3103 = vpack.c.b16 %v2319, %v2311
    %v3104 = vpack.c.b16 %v2320, %v2312
    %v3105 = vpack.c.b16 %v2321, %v2313
    %v3106 = vpack.c.b16 %v2322, %v2314
    %v3107 = vpack.c.b16 %v2323, %v2315
    %v3108 = vpack.c.b16 %v2324, %v2316
    %v3109 = vpack.c.b16 %v2333, %v2325
    %v3110 = vpack.c.b16 %v2334, %v2326
    %v3111 = vpack.c.b16 %v2335, %v2327
    %v3112 = vpack.c.b16 %v2336, %v2328
    %v3113 = vpack.c.b16 %v2337, %v2329
    %v3114 = vpack.c.b16 %v2338, %v2330
    %v3115 = vpack.c.b16 %v2339, %v2331
    %v3116 = vpack.c.b16 %v2340, %v2332
    %v3117 = vpack.c.b16 %v2349, %v2341
    %v3118 = vpack.c.b16 %v2350, %v2342
    %v3119 = vpack.c.b16 %v2351, %v2343
    %v3120 = vpack.c.b16 %v2352, %v2344
    %v3121 = vpack.c.b16 %v2353, %v2345
    %v3122 = vpack.c.b16 %v2354, %v2346
    %v3123 = vpack.c.b16 %v2355, %v2347
    %v3124 = vpack.c.b16 %v2356, %v2348
    %v3125 = vpack.c.b16 %v2365, %v2357
    %v3126 = vpack.c.b16 %v2366, %v2358
    %v3127 = vpack.c.b16 %v2367, %v2359
    %v3128 = vpack.c.b16 %v2368, %v2360
    %v3129 = vpack.c.b16 %v2369, %v2361
    %v3130 = vpack.c.b16 %v2370, %v2362
    %v3131 = vpack.c.b16 %v2371, %v2363
    %v3132 = vpack.c.b16 %v2372, %v2364
    %v3133 = vpack.c.b16 %v2381, %v2373
    %v3134 = vpack.c.b16 %v2382, %v2374
    %v3135 = vpack.c.b16 %v2383, %v2375
    %v3136 = vpack.c.b16 %v2384, %v2376
    %v3137 = vpack.c.b16 %v2385, %v2377
    %v3138 = vpack.c.b16 %v2386, %v2378
    %v3139 = vpack.c.b16 %v2387, %v2379
    %v3140 = vpack.c.b16 %v2388, %v2380
    %v3141 = vpack.c.b16 %v2397, %v2389
    %v3142 = vpack.c.b16 %v2398, %v2390
    %v3143 = vpack.c.b16 %v2399, %v2391
    %v3144 = vpack.c.b16 %v2400, %v2392
    %v3145 = vpack.c.b16 %v2401, %v2393
    %v3146 = vpack.c.b16 %v2402, %v2394
    %v3147 = vpack.c.b16 %v2403, %v2395
    %v3148 = vpack.c.b16 %v2404, %v2396
    %v3149 = vpack.c.b16 %v2413, %v2405
    %v3150 = vpack.c.b16 %v2414, %v2406
    %v3151 = vpack.c.b16 %v2415, %v2407
    %v3152 = vpack.c.b16 %v2416, %v2408
    %v3153 = vpack.c.b16 %v2417, %v2409
    %v3154 = vpack.c.b16 %v2418, %v2410
    %v3155 = vpack.c.b16 %v2419, %v2411
    %v3156 = vpack.c.b16 %v2420, %v2412
    %v3157 = vpack.c.b16 %v2429, %v2421
    %v3158 = vpack.c.b16 %v2430, %v2422
    %v3159 = vpack.c.b16 %v2431, %v2423
    %v3160 = vpack.c.b16 %v2432, %v2424
    %v3161 = vpack.c.b16 %v2433, %v2425
    %v3162 = vpack.c.b16 %v2434, %v2426
    %v3163 = vpack.c.b16 %v2435, %v2427
    %v3164 = vpack.c.b16 %v2436, %v2428
    %v3165 = vpack.c.b16 %v2445, %v2437
    %v3166 = vpack.c.b16 %v2446, %v2438
    %v3167 = vpack.c.b16 %v2447, %v2439
    %v3168 = vpack.c.b16 %v2448, %v2440
    %v3169 = vpack.c.b16 %v2449, %v2441
    %v3170 = vpack.c.b16 %v2450, %v2442
    %v3171 = vpack.c.b16 %v2451, %v2443
    %v3172 = vpack.c.b16 %v2452, %v2444
    %v3173 = vpack.c.b16 %v2461, %v2453
    %v3174 = vpack.c.b16 %v2462, %v2454
    %v3175 = vpack.c.b16 %v2463, %v2455
    %v3176 = vpack.c.b16 %v2464, %v2456
    %v3177 = vpack.c.b16 %v2465, %v2457
    %v3178 = vpack.c.b16 %v2466, %v2458
    %v3179 = vpack.c.b16 %v2467, %v2459
    %v3180 = vpack.c.b16 %v2468, %v2460
    %v3181 = vpack.c.b16 %v2477, %v2469
    %v3182 = vpack.c.b16 %v2478, %v2470
    %v3183 = vpack.c.b16 %v2479, %v2471
    %v3184 = vpack.c.b16 %v2480, %v2472
    %v3185 = vpack.c.b16 %v2481, %v2473
    %v3186 = vpack.c.b16 %v2482, %v2474
    %v3187 = vpack.c.b16 %v2483, %v2475
    %v3188 = vpack.c.b16 %v2484, %v2476
    %v3189 = vpack.c.b16 %v2493, %v2485
    %v3190 = vpack.c.b16 %v2494, %v2486
    %v3191 = vpack.c.b16 %v2495, %v2487
    %v3192 = vpack.c.b16 %v2496, %v2488
    %v3193 = vpack.c.b16 %v2497, %v2489
    %v3194 = vpack.c.b16 %v2498, %v2490
    %v3195 = vpack.c.b16 %v2499, %v2491
    %v3196 = vpack.c.b16 %v2500, %v2492
    %v3197 = vpack.c.b16 %v2509, %v2501
    %v3198 = vpack.c.b16 %v2510, %v2502
    %v3199 = vpack.c.b16 %v2511, %v2503
    %v3200 = vpack.c.b16 %v2512, %v2504
    %v3201 = vpack.c.b16 %v2513, %v2505
    %v3202 = vpack.c.b16 %v2514, %v2506
    %v3203 = vpack.c.b16 %v2515, %v2507
    %v3204 = vpack.c.b16 %v2516, %v2508
    %v3205 = vpack.c.b16 %v2525, %v2517
    %v3206 = vpack.c.b16 %v2526, %v2518
    %v3207 = vpack.c.b16 %v2527, %v2519
    %v3208 = vpack.c.b16 %v2528, %v2520
    %v3209 = vpack.c.b16 %v2529, %v2521
    %v3210 = vpack.c.b16 %v2530, %v2522
    %v3211 = vpack.c.b16 %v2531, %v2523
    %v3212 = vpack.c.b16 %v2532, %v2524
    %v3213 = vpack.c.b16 %v2541, %v2533
    %v3214 = vpack.c.b16 %v2542, %v2534
    %v3215 = vpack.c.b16 %v2543, %v2535
    %v3216 = vpack.c.b16 %v2544, %v2536
    %v3217 = vpack.c.b16 %v2545, %v2537
    %v3218 = vpack.c.b16 %v2546, %v2538
    %v3219 = vpack.c.b16 %v2547, %v2539
    %v3220 = vpack.c.b16 %v2548, %v2540
    %v3221 = vpack.c.b16 %v2557, %v2549
    %v3222 = vpack.c.b16 %v2558, %v2550
    %v3223 = vpack.c.b16 %v2559, %v2551
    %v3224 = vpack.c.b16 %v2560, %v2552
    %v3225 = vpack.c.b16 %v2561, %v2553
    %v3226 = vpack.c.b16 %v2562, %v2554
    %v3227 = vpack.c.b16 %v2563, %v2555
    %v3228 = vpack.c.b16 %v2564, %v2556
    %v3229 = vpack.c.b16 %v2573, %v2565
    %v3230 = vpack.c.b16 %v2574, %v2566
    %v3231 = vpack.c.b16 %v2575, %v2567
    %v3232 = vpack.c.b16 %v2576, %v2568
    %v3233 = vpack.c.b16 %v2577, %v2569
    %v3234 = vpack.c.b16 %v2578, %v2570
    %v3235 = vpack.c.b16 %v2579, %v2571
    %v3236 = vpack.c.b16 %v2580, %v2572
    %v3237 = vpack.c.b16 %v2589, %v2581
    %v3238 = vpack.c.b16 %v2590, %v2582
    %v3239 = vpack.c.b16 %v2591, %v2583
    %v3240 = vpack.c.b16 %v2592, %v2584
    %v3241 = vpack.c.b16 %v2593, %v2585
    %v3242 = vpack.c.b16 %v2594, %v2586
    %v3243 = vpack.c.b16 %v2595, %v2587
    %v3244 = vpack.c.b16 %v2596, %v2588
    %v3245 = vpack.c.b16 %v2605, %v2597
    %v3246 = vpack.c.b16 %v2606, %v2598
    %v3247 = vpack.c.b16 %v2607, %v2599
    %v3248 = vpack.c.b16 %v2608, %v2600
    %v3249 = vpack.c.b16 %v2609, %v2601
    %v3250 = vpack.c.b16 %v2610, %v2602
    %v3251 = vpack.c.b16 %v2611, %v2603
    %v3252 = vpack.c.b16 %v2612, %v2604
    %v3253 = vpack.c.b16 %v2621, %v2613
    %v3254 = vpack.c.b16 %v2622, %v2614
    %v3255 = vpack.c.b16 %v2623, %v2615
    %v3256 = vpack.c.b16 %v2624, %v2616
    %v3257 = vpack.c.b16 %v2625, %v2617
    %v3258 = vpack.c.b16 %v2626, %v2618
    %v3259 = vpack.c.b16 %v2627, %v2619
    %v3260 = vpack.c.b16 %v2628, %v2620
    %v3261 = vpack.c.b16 %v2637, %v2629
    %v3262 = vpack.c.b16 %v2638, %v2630
    %v3263 = vpack.c.b16 %v2639, %v2631
    %v3264 = vpack.c.b16 %v2640, %v2632
    %v3265 = vpack.c.b16 %v2641, %v2633
    %v3266 = vpack.c.b16 %v2642, %v2634
    %v3267 = vpack.c.b16 %v2643, %v2635
    %v3268 = vpack.c.b16 %v2644, %v2636
    %v3269 = vpack.c.b16 %v2653, %v2645
    %v3270 = vpack.c.b16 %v2654, %v2646
    %v3271 = vpack.c.b16 %v2655, %v2647
    %v3272 = vpack.c.b16 %v2656, %v2648
    %v3273 = vpack.c.b16 %v2657, %v2649
    %v3274 = vpack.c.b16 %v2658, %v2650
    %v3275 = vpack.c.b16 %v2659, %v2651
    %v3276 = vpack.c.b16 %v2660, %v2652
    %v3277 = vpack.c.b16 %v2669, %v2661
    %v3278 = vpack.c.b16 %v2670, %v2662
    %v3279 = vpack.c.b16 %v2671, %v2663
    %v3280 = vpack.c.b16 %v2672, %v2664
    %v3281 = vpack.c.b16 %v2673, %v2665
    %v3282 = vpack.c.b16 %v2674, %v2666
    %v3283 = vpack.c.b16 %v2675, %v2667
    %v3284 = vpack.c.b16 %v2676, %v2668
    %v3285 = vpack.c.b16 %v2685, %v2677
    %v3286 = vpack.c.b16 %v2686, %v2678
    %v3287 = vpack.c.b16 %v2687, %v2679
    %v3288 = vpack.c.b16 %v2688, %v2680
    %v3289 = vpack.c.b16 %v2689, %v2681
    %v3290 = vpack.c.b16 %v2690, %v2682
    %v3291 = vpack.c.b16 %v2691, %v2683
    %v3292 = vpack.c.b16 %v2692, %v2684
    %v3293 = vpack.c.b16 %v2701, %v2693
    %v3294 = vpack.c.b16 %v2702, %v2694
    %v3295 = vpack.c.b16 %v2703, %v2695
    %v3296 = vpack.c.b16 %v2704, %v2696
    %v3297 = vpack.c.b16 %v2705, %v2697
    %v3298 = vpack.c.b16 %v2706, %v2698
    %v3299 = vpack.c.b16 %v2707, %v2699
    %v3300 = vpack.c.b16 %v2708, %v2700
    %v3301 = vpack.c.b16 %v2717, %v2709
    %v3302 = vpack.c.b16 %v2718, %v2710
    %v3303 = vpack.c.b16 %v2719, %v2711
    %v3304 = vpack.c.b16 %v2720, %v2712
    %v3305 = vpack.c.b16 %v2721, %v2713
    %v3306 = vpack.c.b16 %v2722, %v2714
    %v3307 = vpack.c.b16 %v2723, %v2715
    %v3308 = vpack.c.b16 %v2724, %v2716
    %v3309 = vpack.c.b16 %v2733, %v2725
    %v3310 = vpack.c.b16 %v2734, %v2726
    %v3311 = vpack.c.b16 %v2735, %v2727
    %v3312 = vpack.c.b16 %v2736, %v2728
    %v3313 = vpack.c.b16 %v2737, %v2729
    %v3314 = vpack.c.b16 %v2738, %v2730
    %v3315 = vpack.c.b16 %v2739, %v2731
    %v3316 = vpack.c.b16 %v2740, %v2732
    %v3317 = vpack.c.b16 %v2749, %v2741
    %v3318 = vpack.c.b16 %v2750, %v2742
    %v3319 = vpack.c.b16 %v2751, %v2743
    %v3320 = vpack.c.b16 %v2752, %v2744
    %v3321 = vpack.c.b16 %v2753, %v2745
    %v3322 = vpack.c.b16 %v2754, %v2746
    %v3323 = vpack.c.b16 %v2755, %v2747
    %v3324 = vpack.c.b16 %v2756, %v2748
    %v3325 = vpack.c.b16 %v2765, %v2757
    %v3326 = vpack.c.b16 %v2766, %v2758
    %v3327 = vpack.c.b16 %v2767, %v2759
    %v3328 = vpack.c.b16 %v2768, %v2760
    %v3329 = vpack.c.b16 %v2769, %v2761
    %v3330 = vpack.c.b16 %v2770, %v2762
    %v3331 = vpack.c.b16 %v2771, %v2763
    %v3332 = vpack.c.b16 %v2772, %v2764
    %v3333 = vpack.c.b16 %v2781, %v2773
    %v3334 = vpack.c.b16 %v2782, %v2774
    %v3335 = vpack.c.b16 %v2783, %v2775
    %v3336 = vpack.c.b16 %v2784, %v2776
    %v3337 = vpack.c.b16 %v2785, %v2777
    %v3338 = vpack.c.b16 %v2786, %v2778
    %v3339 = vpack.c.b16 %v2787, %v2779
    %v3340 = vpack.c.b16 %v2788, %v2780
    %v3341 = vpack.c.b16 %v2797, %v2789
    %v3342 = vpack.c.b16 %v2798, %v2790
    %v3343 = vpack.c.b16 %v2799, %v2791
    %v3344 = vpack.c.b16 %v2800, %v2792
    %v3345 = vpack.c.b16 %v2801, %v2793
    %v3346 = vpack.c.b16 %v2802, %v2794
    %v3347 = vpack.c.b16 %v2803, %v2795
    %v3348 = vpack.c.b16 %v2804, %v2796
    %v3349 = vpack.c.b16 %v2813, %v2805
    %v3350 = vpack.c.b16 %v2814, %v2806
    %v3351 = vpack.c.b16 %v2815, %v2807
    %v3352 = vpack.c.b16 %v2816, %v2808
    %v3353 = vpack.c.b16 %v2817, %v2809
    %v3354 = vpack.c.b16 %v2818, %v2810
    %v3355 = vpack.c.b16 %v2819, %v2811
    %v3356 = vpack.c.b16 %v2820, %v2812
    %v3357 = vpack.c.b16 %v2829, %v2821
    %v3358 = vpack.c.b16 %v2830, %v2822
    %v3359 = vpack.c.b16 %v2831, %v2823
    %v3360 = vpack.c.b16 %v2832, %v2824
    %v3361 = vpack.c.b16 %v2833, %v2825
    %v3362 = vpack.c.b16 %v2834, %v2826
    %v3363 = vpack.c.b16 %v2835, %v2827
    %v3364 = vpack.c.b16 %v2836, %v2828
    %v3365 = vpack.c.b16 %v2845, %v2837
    %v3366 = vpack.c.b16 %v2846, %v2838
    %v3367 = vpack.c.b16 %v2847, %v2839
    %v3368 = vpack.c.b16 %v2848, %v2840
    %v3369 = vpack.c.b16 %v2849, %v2841
    %v3370 = vpack.c.b16 %v2850, %v2842
    %v3371 = vpack.c.b16 %v2851, %v2843
    %v3372 = vpack.c.b16 %v2852, %v2844
    %v3373 = vpack.c.b16 %v2861, %v2853
    %v3374 = vpack.c.b16 %v2862, %v2854
    %v3375 = vpack.c.b16 %v2863, %v2855
    %v3376 = vpack.c.b16 %v2864, %v2856
    %v3377 = vpack.c.b16 %v2865, %v2857
    %v3378 = vpack.c.b16 %v2866, %v2858
    %v3379 = vpack.c.b16 %v2867, %v2859
    %v3380 = vpack.c.b16 %v2868, %v2860
    %3893 = vmatprep.subr.bf16.mxu0 %v2870
    %3894 = vmatpush1.bf16.msra.mxu0 %v2869
    %3895 = vmatprep.subr.bf16.mxu0 %v2878
    %3896 = vmatpush1.bf16.msra.mxu0 %v2877
    %3897 = vmatprep.subr.bf16.mxu0 %v2886
    %3898 = vmatpush1.bf16.msra.mxu0 %v2885
    %3899 = vmatprep.subr.bf16.mxu0 %v2894
    %3900 = vmatpush1.bf16.msra.mxu0 %v2893
    %3901 = vmatprep.subr.bf16.mxu0 %v2902
    %3902 = vmatpush1.bf16.msra.mxu0 %v2901
    %3903 = vmatprep.subr.bf16.mxu0 %v2910
    %3904 = vmatpush1.bf16.msra.mxu0 %v2909
    %3905 = vmatprep.subr.bf16.mxu0 %v2918
    %3906 = vmatpush1.bf16.msra.mxu0 %v2917
    %3907 = vmatprep.subr.bf16.mxu0 %v2926
    %3908 = vmatpush1.bf16.msra.mxu0 %v2925
    %3909 = vmatprep.subr.bf16.mxu0 %v2934
    %3910 = vmatpush1.bf16.msra.mxu0 %v2933
    %3911 = vmatprep.subr.bf16.mxu0 %v2942
    %3912 = vmatpush1.bf16.msra.mxu0 %v2941
    %3913 = vmatprep.subr.bf16.mxu0 %v2950
    %3914 = vmatpush1.bf16.msra.mxu0 %v2949
    %3915 = vmatprep.subr.bf16.mxu0 %v2958
    %3916 = vmatpush1.bf16.msra.mxu0 %v2957
    %3917 = vmatprep.subr.bf16.mxu0 %v2966
    %3918 = vmatpush1.bf16.msra.mxu0 %v2965
    %3919 = vmatprep.subr.bf16.mxu0 %v2974
    %3920 = vmatpush1.bf16.msra.mxu0 %v2973
    %3921 = vmatprep.subr.bf16.mxu0 %v2982
    %3922 = vmatpush1.bf16.msra.mxu0 %v2981
    %3923 = vmatprep.subr.bf16.mxu0 %v2990
    %3924 = vmatpush1.bf16.msra.mxu0 %v2989
    %3925 = vmatprep.mubr.bf16.mxu0 %v772
    %3926 = vmatmul.mubr.bf16.gmra.mrb[0].mxu0 %v771
    %v3927 = vpop.f32.mrb[0].mxu0
    %v3928 = vadd.f32 %v1296, %v3927
    %v3929 = vpop.f32.mrb[0].mxu0
    %v3930 = vadd.f32 %v1300, %v3929
    %v3931 = vpop.f32.mrb[0].mxu0
    %v3932 = vadd.f32 %v1296, %v3931
    %v3933 = vpop.f32.mrb[0].mxu0
    %v3934 = vadd.f32 %v1300, %v3933
    %3935 = vdwg.mxu0
    %3936 = vmatprep.subr.bf16.mxu0 %v2998
    %3937 = vmatpush1.bf16.msra.mxu0 %v2997
    %3938 = vmatprep.subr.bf16.mxu0 %v3006
    %3939 = vmatpush1.bf16.msra.mxu0 %v3005
    %3940 = vmatprep.subr.bf16.mxu0 %v3014
    %3941 = vmatpush1.bf16.msra.mxu0 %v3013
    %3942 = vmatprep.subr.bf16.mxu0 %v3022
    %3943 = vmatpush1.bf16.msra.mxu0 %v3021
    %3944 = vmatprep.subr.bf16.mxu0 %v3030
    %3945 = vmatpush1.bf16.msra.mxu0 %v3029
    %3946 = vmatprep.subr.bf16.mxu0 %v3038
    %3947 = vmatpush1.bf16.msra.mxu0 %v3037
    %3948 = vmatprep.subr.bf16.mxu0 %v3046
    %3949 = vmatpush1.bf16.msra.mxu0 %v3045
    %3950 = vmatprep.subr.bf16.mxu0 %v3054
    %3951 = vmatpush1.bf16.msra.mxu0 %v3053
    %3952 = vmatprep.subr.bf16.mxu0 %v3062
    %3953 = vmatpush1.bf16.msra.mxu0 %v3061
    %3954 = vmatprep.subr.bf16.mxu0 %v3070
    %3955 = vmatpush1.bf16.msra.mxu0 %v3069
    %3956 = vmatprep.subr.bf16.mxu0 %v3078
    %3957 = vmatpush1.bf16.msra.mxu0 %v3077
    %3958 = vmatprep.subr.bf16.mxu0 %v3086
    %3959 = vmatpush1.bf16.msra.mxu0 %v3085
    %3960 = vmatprep.subr.bf16.mxu0 %v3094
    %3961 = vmatpush1.bf16.msra.mxu0 %v3093
    %3962 = vmatprep.subr.bf16.mxu0 %v3102
    %3963 = vmatpush1.bf16.msra.mxu0 %v3101
    %3964 = vmatprep.subr.bf16.mxu0 %v3110
    %3965 = vmatpush1.bf16.msra.mxu0 %v3109
    %3966 = vmatprep.subr.bf16.mxu0 %v3118
    %3967 = vmatpush1.bf16.msra.mxu0 %v3117
    %3968 = vmatprep.mubr.bf16.mxu0 %v774
    %3969 = vmatmul.mubr.bf16.gmra.mrb[0].mxu0 %v773
    %v3970 = vpop.f32.mrb[0].mxu0
    %v3971 = vadd.f32 %v3928, %v3970
    %v3972 = vpop.f32.mrb[0].mxu0
    %v3973 = vadd.f32 %v3930, %v3972
    %v3974 = vpop.f32.mrb[0].mxu0
    %v3975 = vadd.f32 %v3932, %v3974
    %v3976 = vpop.f32.mrb[0].mxu0
    %v3977 = vadd.f32 %v3934, %v3976
    %3978 = vdwg.mxu0
    %3979 = vmatprep.subr.bf16.mxu0 %v3126
    %3980 = vmatpush1.bf16.msra.mxu0 %v3125
    %3981 = vmatprep.subr.bf16.mxu0 %v3134
    %3982 = vmatpush1.bf16.msra.mxu0 %v3133
    %3983 = vmatprep.subr.bf16.mxu0 %v3142
    %3984 = vmatpush1.bf16.msra.mxu0 %v3141
    %3985 = vmatprep.subr.bf16.mxu0 %v3150
    %3986 = vmatpush1.bf16.msra.mxu0 %v3149
    %3987 = vmatprep.subr.bf16.mxu0 %v3158
    %3988 = vmatpush1.bf16.msra.mxu0 %v3157
    %3989 = vmatprep.subr.bf16.mxu0 %v3166
    %3990 = vmatpush1.bf16.msra.mxu0 %v3165
    %3991 = vmatprep.subr.bf16.mxu0 %v3174
    %3992 = vmatpush1.bf16.msra.mxu0 %v3173
    %3993 = vmatprep.subr.bf16.mxu0 %v3182
    %3994 = vmatpush1.bf16.msra.mxu0 %v3181
    %3995 = vmatprep.subr.bf16.mxu0 %v3190
    %3996 = vmatpush1.bf16.msra.mxu0 %v3189
    %3997 = vmatprep.subr.bf16.mxu0 %v3198
    %3998 = vmatpush1.bf16.msra.mxu0 %v3197
    %3999 = vmatprep.subr.bf16.mxu0 %v3206
    %4000 = vmatpush1.bf16.msra.mxu0 %v3205
    %4001 = vmatprep.subr.bf16.mxu0 %v3214
    %4002 = vmatpush1.bf16.msra.mxu0 %v3213
    %4003 = vmatprep.subr.bf16.mxu0 %v3222
    %4004 = vmatpush1.bf16.msra.mxu0 %v3221
    %4005 = vmatprep.subr.bf16.mxu0 %v3230
    %4006 = vmatpush1.bf16.msra.mxu0 %v3229
    %4007 = vmatprep.subr.bf16.mxu0 %v3238
    %4008 = vmatpush1.bf16.msra.mxu0 %v3237
    %4009 = vmatprep.subr.bf16.mxu0 %v3246
    %4010 = vmatpush1.bf16.msra.mxu0 %v3245
    %4011 = vmatprep.mubr.bf16.mxu0 %v776
    %4012 = vmatmul.mubr.bf16.gmra.mrb[0].mxu0 %v775
    %v4013 = vpop.f32.mrb[0].mxu0
    %v4014 = vadd.f32 %v3971, %v4013
    %v4015 = vpop.f32.mrb[0].mxu0
    %v4016 = vadd.f32 %v3973, %v4015
    %v4017 = vpop.f32.mrb[0].mxu0
    %v4018 = vadd.f32 %v3975, %v4017
    %v4019 = vpop.f32.mrb[0].mxu0
    %v4020 = vadd.f32 %v3977, %v4019
    %4021 = vdwg.mxu0
    %4022 = vmatprep.subr.bf16.mxu0 %v3254
    %4023 = vmatpush1.bf16.msra.mxu0 %v3253
    %4024 = vmatprep.subr.bf16.mxu0 %v3262
    %4025 = vmatpush1.bf16.msra.mxu0 %v3261
    %4026 = vmatprep.subr.bf16.mxu0 %v3270
    %4027 = vmatpush1.bf16.msra.mxu0 %v3269
    %4028 = vmatprep.subr.bf16.mxu0 %v3278
    %4029 = vmatpush1.bf16.msra.mxu0 %v3277
    %4030 = vmatprep.subr.bf16.mxu0 %v3286
    %4031 = vmatpush1.bf16.msra.mxu0 %v3285
    %4032 = vmatprep.subr.bf16.mxu0 %v3294
    %4033 = vmatpush1.bf16.msra.mxu0 %v3293
    %4034 = vmatprep.subr.bf16.mxu0 %v3302
    %4035 = vmatpush1.bf16.msra.mxu0 %v3301
    %4036 = vmatprep.subr.bf16.mxu0 %v3310
    %4037 = vmatpush1.bf16.msra.mxu0 %v3309
    %4038 = vmatprep.subr.bf16.mxu0 %v3318
    %4039 = vmatpush1.bf16.msra.mxu0 %v3317
    %4040 = vmatprep.subr.bf16.mxu0 %v3326
    %4041 = vmatpush1.bf16.msra.mxu0 %v3325
    %4042 = vmatprep.subr.bf16.mxu0 %v3334
    %4043 = vmatpush1.bf16.msra.mxu0 %v3333
    %4044 = vmatprep.subr.bf16.mxu0 %v3342
    %4045 = vmatpush1.bf16.msra.mxu0 %v3341
    %4046 = vmatprep.subr.bf16.mxu0 %v3350
    %4047 = vmatpush1.bf16.msra.mxu0 %v3349
    %4048 = vmatprep.subr.bf16.mxu0 %v3358
    %4049 = vmatpush1.bf16.msra.mxu0 %v3357
    %4050 = vmatprep.subr.bf16.mxu0 %v3366
    %4051 = vmatpush1.bf16.msra.mxu0 %v3365
    %4052 = vmatprep.subr.bf16.mxu0 %v3374
    %4053 = vmatpush1.bf16.msra.mxu0 %v3373
    %4054 = vmatprep.mubr.bf16.mxu0 %v778
    %4055 = vmatmul.mubr.bf16.gmra.mrb[0].mxu0 %v777
    %v4056 = vpop.f32.mrb[0].mxu0
    %v4057 = vadd.f32 %v4014, %v4056
    %v4058 = vpop.f32.mrb[0].mxu0
    %v4059 = vadd.f32 %v4016, %v4058
    %v4060 = vpop.f32.mrb[0].mxu0
    %v4061 = vadd.f32 %v4018, %v4060
    %v4062 = vpop.f32.mrb[0].mxu0
    %v4063 = vadd.f32 %v4020, %v4062
    %4064 = vdwg.mxu0
    %4065 = vmatprep.subr.bf16.mxu0 %v2872
    %4066 = vmatpush1.bf16.msra.mxu0 %v2871
    %4067 = vmatprep.subr.bf16.mxu0 %v2880
    %4068 = vmatpush1.bf16.msra.mxu0 %v2879
    %4069 = vmatprep.subr.bf16.mxu0 %v2888
    %4070 = vmatpush1.bf16.msra.mxu0 %v2887
    %4071 = vmatprep.subr.bf16.mxu0 %v2896
    %4072 = vmatpush1.bf16.msra.mxu0 %v2895
    %4073 = vmatprep.subr.bf16.mxu0 %v2904
    %4074 = vmatpush1.bf16.msra.mxu0 %v2903
    %4075 = vmatprep.subr.bf16.mxu0 %v2912
    %4076 = vmatpush1.bf16.msra.mxu0 %v2911
    %4077 = vmatprep.subr.bf16.mxu0 %v2920
    %4078 = vmatpush1.bf16.msra.mxu0 %v2919
    %4079 = vmatprep.subr.bf16.mxu0 %v2928
    %4080 = vmatpush1.bf16.msra.mxu0 %v2927
    %4081 = vmatprep.subr.bf16.mxu0 %v2936
    %4082 = vmatpush1.bf16.msra.mxu0 %v2935
    %4083 = vmatprep.subr.bf16.mxu0 %v2944
    %4084 = vmatpush1.bf16.msra.mxu0 %v2943
    %4085 = vmatprep.subr.bf16.mxu0 %v2952
    %4086 = vmatpush1.bf16.msra.mxu0 %v2951
    %4087 = vmatprep.subr.bf16.mxu0 %v2960
    %4088 = vmatpush1.bf16.msra.mxu0 %v2959
    %4089 = vmatprep.subr.bf16.mxu0 %v2968
    %4090 = vmatpush1.bf16.msra.mxu0 %v2967
    %4091 = vmatprep.subr.bf16.mxu0 %v2976
    %4092 = vmatpush1.bf16.msra.mxu0 %v2975
    %4093 = vmatprep.subr.bf16.mxu0 %v2984
    %4094 = vmatpush1.bf16.msra.mxu0 %v2983
    %4095 = vmatprep.subr.bf16.mxu0 %v2992
    %4096 = vmatpush1.bf16.msra.mxu0 %v2991
    %4097 = vmatprep.mubr.bf16.mxu0 %v772
    %4098 = vmatmul.mubr.bf16.gmra.mrb[0].mxu0 %v771
    %v4099 = vpop.f32.mrb[0].mxu0
    %v4100 = vadd.f32 %v1304, %v4099
    %v4101 = vpop.f32.mrb[0].mxu0
    %v4102 = vadd.f32 %v1308, %v4101
    %v4103 = vpop.f32.mrb[0].mxu0
    %v4104 = vadd.f32 %v1304, %v4103
    %v4105 = vpop.f32.mrb[0].mxu0
    %v4106 = vadd.f32 %v1308, %v4105
    %4107 = vdwg.mxu0
    %4108 = vmatprep.subr.bf16.mxu0 %v3000
    %4109 = vmatpush1.bf16.msra.mxu0 %v2999
    %4110 = vmatprep.subr.bf16.mxu0 %v3008
    %4111 = vmatpush1.bf16.msra.mxu0 %v3007
    %4112 = vmatprep.subr.bf16.mxu0 %v3016
    %4113 = vmatpush1.bf16.msra.mxu0 %v3015
    %4114 = vmatprep.subr.bf16.mxu0 %v3024
    %4115 = vmatpush1.bf16.msra.mxu0 %v3023
    %4116 = vmatprep.subr.bf16.mxu0 %v3032
    %4117 = vmatpush1.bf16.msra.mxu0 %v3031
    %4118 = vmatprep.subr.bf16.mxu0 %v3040
    %4119 = vmatpush1.bf16.msra.mxu0 %v3039
    %4120 = vmatprep.subr.bf16.mxu0 %v3048
    %4121 = vmatpush1.bf16.msra.mxu0 %v3047
    %4122 = vmatprep.subr.bf16.mxu0 %v3056
    %4123 = vmatpush1.bf16.msra.mxu0 %v3055
    %4124 = vmatprep.subr.bf16.mxu0 %v3064
    %4125 = vmatpush1.bf16.msra.mxu0 %v3063
    %4126 = vmatprep.subr.bf16.mxu0 %v3072
    %4127 = vmatpush1.bf16.msra.mxu0 %v3071
    %4128 = vmatprep.subr.bf16.mxu0 %v3080
    %4129 = vmatpush1.bf16.msra.mxu0 %v3079
    %4130 = vmatprep.subr.bf16.mxu0 %v3088
    %4131 = vmatpush1.bf16.msra.mxu0 %v3087
    %4132 = vmatprep.subr.bf16.mxu0 %v3096
    %4133 = vmatpush1.bf16.msra.mxu0 %v3095
    %4134 = vmatprep.subr.bf16.mxu0 %v3104
    %4135 = vmatpush1.bf16.msra.mxu0 %v3103
    %4136 = vmatprep.subr.bf16.mxu0 %v3112
    %4137 = vmatpush1.bf16.msra.mxu0 %v3111
    %4138 = vmatprep.subr.bf16.mxu0 %v3120
    %4139 = vmatpush1.bf16.msra.mxu0 %v3119
    %4140 = vmatprep.mubr.bf16.mxu0 %v774
    %4141 = vmatmul.mubr.bf16.gmra.mrb[0].mxu0 %v773
    %v4142 = vpop.f32.mrb[0].mxu0
    %v4143 = vadd.f32 %v4100, %v4142
    %v4144 = vpop.f32.mrb[0].mxu0
    %v4145 = vadd.f32 %v4102, %v4144
    %v4146 = vpop.f32.mrb[0].mxu0
    %v4147 = vadd.f32 %v4104, %v4146
    %v4148 = vpop.f32.mrb[0].mxu0
    %v4149 = vadd.f32 %v4106, %v4148
    %4150 = vdwg.mxu0
    %4151 = vmatprep.subr.bf16.mxu0 %v3128
    %4152 = vmatpush1.bf16.msra.mxu0 %v3127
    %4153 = vmatprep.subr.bf16.mxu0 %v3136
    %4154 = vmatpush1.bf16.msra.mxu0 %v3135
    %4155 = vmatprep.subr.bf16.mxu0 %v3144
    %4156 = vmatpush1.bf16.msra.mxu0 %v3143
    %4157 = vmatprep.subr.bf16.mxu0 %v3152
    %4158 = vmatpush1.bf16.msra.mxu0 %v3151
    %4159 = vmatprep.subr.bf16.mxu0 %v3160
    %4160 = vmatpush1.bf16.msra.mxu0 %v3159
    %4161 = vmatprep.subr.bf16.mxu0 %v3168
    %4162 = vmatpush1.bf16.msra.mxu0 %v3167
    %4163 = vmatprep.subr.bf16.mxu0 %v3176
    %4164 = vmatpush1.bf16.msra.mxu0 %v3175
    %4165 = vmatprep.subr.bf16.mxu0 %v3184
    %4166 = vmatpush1.bf16.msra.mxu0 %v3183
    %4167 = vmatprep.subr.bf16.mxu0 %v3192
    %4168 = vmatpush1.bf16.msra.mxu0 %v3191
    %4169 = vmatprep.subr.bf16.mxu0 %v3200
    %4170 = vmatpush1.bf16.msra.mxu0 %v3199
    %4171 = vmatprep.subr.bf16.mxu0 %v3208
    %4172 = vmatpush1.bf16.msra.mxu0 %v3207
    %4173 = vmatprep.subr.bf16.mxu0 %v3216
    %4174 = vmatpush1.bf16.msra.mxu0 %v3215
    %4175 = vmatprep.subr.bf16.mxu0 %v3224
    %4176 = vmatpush1.bf16.msra.mxu0 %v3223
    %4177 = vmatprep.subr.bf16.mxu0 %v3232
    %4178 = vmatpush1.bf16.msra.mxu0 %v3231
    %4179 = vmatprep.subr.bf16.mxu0 %v3240
    %4180 = vmatpush1.bf16.msra.mxu0 %v3239
    %4181 = vmatprep.subr.bf16.mxu0 %v3248
    %4182 = vmatpush1.bf16.msra.mxu0 %v3247
    %4183 = vmatprep.mubr.bf16.mxu0 %v776
    %4184 = vmatmul.mubr.bf16.gmra.mrb[0].mxu0 %v775
    %v4185 = vpop.f32.mrb[0].mxu0
    %v4186 = vadd.f32 %v4143, %v4185
    %v4187 = vpop.f32.mrb[0].mxu0
    %v4188 = vadd.f32 %v4145, %v4187
    %v4189 = vpop.f32.mrb[0].mxu0
    %v4190 = vadd.f32 %v4147, %v4189
    %v4191 = vpop.f32.mrb[0].mxu0
    %v4192 = vadd.f32 %v4149, %v4191
    %4193 = vdwg.mxu0
    %4194 = vmatprep.subr.bf16.mxu0 %v3256
    %4195 = vmatpush1.bf16.msra.mxu0 %v3255
    %4196 = vmatprep.subr.bf16.mxu0 %v3264
    %4197 = vmatpush1.bf16.msra.mxu0 %v3263
    %4198 = vmatprep.subr.bf16.mxu0 %v3272
    %4199 = vmatpush1.bf16.msra.mxu0 %v3271
    %4200 = vmatprep.subr.bf16.mxu0 %v3280
    %4201 = vmatpush1.bf16.msra.mxu0 %v3279
    %4202 = vmatprep.subr.bf16.mxu0 %v3288
    %4203 = vmatpush1.bf16.msra.mxu0 %v3287
    %4204 = vmatprep.subr.bf16.mxu0 %v3296
    %4205 = vmatpush1.bf16.msra.mxu0 %v3295
    %4206 = vmatprep.subr.bf16.mxu0 %v3304
    %4207 = vmatpush1.bf16.msra.mxu0 %v3303
    %4208 = vmatprep.subr.bf16.mxu0 %v3312
    %4209 = vmatpush1.bf16.msra.mxu0 %v3311
    %4210 = vmatprep.subr.bf16.mxu0 %v3320
    %4211 = vmatpush1.bf16.msra.mxu0 %v3319
    %4212 = vmatprep.subr.bf16.mxu0 %v3328
    %4213 = vmatpush1.bf16.msra.mxu0 %v3327
    %4214 = vmatprep.subr.bf16.mxu0 %v3336
    %4215 = vmatpush1.bf16.msra.mxu0 %v3335
    %4216 = vmatprep.subr.bf16.mxu0 %v3344
    %4217 = vmatpush1.bf16.msra.mxu0 %v3343
    %4218 = vmatprep.subr.bf16.mxu0 %v3352
    %4219 = vmatpush1.bf16.msra.mxu0 %v3351
    %4220 = vmatprep.subr.bf16.mxu0 %v3360
    %4221 = vmatpush1.bf16.msra.mxu0 %v3359
    %4222 = vmatprep.subr.bf16.mxu0 %v3368
    %4223 = vmatpush1.bf16.msra.mxu0 %v3367
    %4224 = vmatprep.subr.bf16.mxu0 %v3376
    %4225 = vmatpush1.bf16.msra.mxu0 %v3375
    %4226 = vmatprep.mubr.bf16.mxu0 %v778
    %4227 = vmatmul.mubr.bf16.gmra.mrb[0].mxu0 %v777
    %v4228 = vpop.f32.mrb[0].mxu0
    %v4229 = vadd.f32 %v4186, %v4228
    %v4230 = vpop.f32.mrb[0].mxu0
    %v4231 = vadd.f32 %v4188, %v4230
    %v4232 = vpop.f32.mrb[0].mxu0
    %v4233 = vadd.f32 %v4190, %v4232
    %v4234 = vpop.f32.mrb[0].mxu0
    %v4235 = vadd.f32 %v4192, %v4234
    %4236 = vdwg.mxu0
    %4237 = vmatprep.subr.bf16.mxu0 %v2874
    %4238 = vmatpush1.bf16.msra.mxu0 %v2873
    %4239 = vmatprep.subr.bf16.mxu0 %v2882
    %4240 = vmatpush1.bf16.msra.mxu0 %v2881
    %4241 = vmatprep.subr.bf16.mxu0 %v2890
    %4242 = vmatpush1.bf16.msra.mxu0 %v2889
    %4243 = vmatprep.subr.bf16.mxu0 %v2898
    %4244 = vmatpush1.bf16.msra.mxu0 %v2897
    %4245 = vmatprep.subr.bf16.mxu0 %v2906
    %4246 = vmatpush1.bf16.msra.mxu0 %v2905
    %4247 = vmatprep.subr.bf16.mxu0 %v2914
    %4248 = vmatpush1.bf16.msra.mxu0 %v2913
    %4249 = vmatprep.subr.bf16.mxu0 %v2922
    %4250 = vmatpush1.bf16.msra.mxu0 %v2921
    %4251 = vmatprep.subr.bf16.mxu0 %v2930
    %4252 = vmatpush1.bf16.msra.mxu0 %v2929
    %4253 = vmatprep.subr.bf16.mxu0 %v2938
    %4254 = vmatpush1.bf16.msra.mxu0 %v2937
    %4255 = vmatprep.subr.bf16.mxu0 %v2946
    %4256 = vmatpush1.bf16.msra.mxu0 %v2945
    %4257 = vmatprep.subr.bf16.mxu0 %v2954
    %4258 = vmatpush1.bf16.msra.mxu0 %v2953
    %4259 = vmatprep.subr.bf16.mxu0 %v2962
    %4260 = vmatpush1.bf16.msra.mxu0 %v2961
    %4261 = vmatprep.subr.bf16.mxu0 %v2970
    %4262 = vmatpush1.bf16.msra.mxu0 %v2969
    %4263 = vmatprep.subr.bf16.mxu0 %v2978
    %4264 = vmatpush1.bf16.msra.mxu0 %v2977
    %4265 = vmatprep.subr.bf16.mxu0 %v2986
    %4266 = vmatpush1.bf16.msra.mxu0 %v2985
    %4267 = vmatprep.subr.bf16.mxu0 %v2994
    %4268 = vmatpush1.bf16.msra.mxu0 %v2993
    %4269 = vmatprep.mubr.bf16.mxu0 %v772
    %4270 = vmatmul.mubr.bf16.gmra.mrb[0].mxu0 %v771
    %v4271 = vpop.f32.mrb[0].mxu0
    %v4272 = vadd.f32 %v1312, %v4271
    %v4273 = vpop.f32.mrb[0].mxu0
    %v4274 = vadd.f32 %v1316, %v4273
    %v4275 = vpop.f32.mrb[0].mxu0
    %v4276 = vadd.f32 %v1312, %v4275
    %v4277 = vpop.f32.mrb[0].mxu0
    %v4278 = vadd.f32 %v1316, %v4277
    %4279 = vdwg.mxu0
    %4280 = vmatprep.subr.bf16.mxu0 %v3002
    %4281 = vmatpush1.bf16.msra.mxu0 %v3001
    %4282 = vmatprep.subr.bf16.mxu0 %v3010
    %4283 = vmatpush1.bf16.msra.mxu0 %v3009
    %4284 = vmatprep.subr.bf16.mxu0 %v3018
    %4285 = vmatpush1.bf16.msra.mxu0 %v3017
    %4286 = vmatprep.subr.bf16.mxu0 %v3026
    %4287 = vmatpush1.bf16.msra.mxu0 %v3025
    %4288 = vmatprep.subr.bf16.mxu0 %v3034
    %4289 = vmatpush1.bf16.msra.mxu0 %v3033
    %4290 = vmatprep.subr.bf16.mxu0 %v3042
    %4291 = vmatpush1.bf16.msra.mxu0 %v3041
    %4292 = vmatprep.subr.bf16.mxu0 %v3050
    %4293 = vmatpush1.bf16.msra.mxu0 %v3049
    %4294 = vmatprep.subr.bf16.mxu0 %v3058
    %4295 = vmatpush1.bf16.msra.mxu0 %v3057
    %4296 = vmatprep.subr.bf16.mxu0 %v3066
    %4297 = vmatpush1.bf16.msra.mxu0 %v3065
    %4298 = vmatprep.subr.bf16.mxu0 %v3074
    %4299 = vmatpush1.bf16.msra.mxu0 %v3073
    %4300 = vmatprep.subr.bf16.mxu0 %v3082
    %4301 = vmatpush1.bf16.msra.mxu0 %v3081
    %4302 = vmatprep.subr.bf16.mxu0 %v3090
    %4303 = vmatpush1.bf16.msra.mxu0 %v3089
    %4304 = vmatprep.subr.bf16.mxu0 %v3098
    %4305 = vmatpush1.bf16.msra.mxu0 %v3097
    %4306 = vmatprep.subr.bf16.mxu0 %v3106
    %4307 = vmatpush1.bf16.msra.mxu0 %v3105
    %4308 = vmatprep.subr.bf16.mxu0 %v3114
    %4309 = vmatpush1.bf16.msra.mxu0 %v3113
    %4310 = vmatprep.subr.bf16.mxu0 %v3122
    %4311 = vmatpush1.bf16.msra.mxu0 %v3121
    %4312 = vmatprep.mubr.bf16.mxu0 %v774
    %4313 = vmatmul.mubr.bf16.gmra.mrb[0].mxu0 %v773
    %v4314 = vpop.f32.mrb[0].mxu0
    %v4315 = vadd.f32 %v4272, %v4314
    %v4316 = vpop.f32.mrb[0].mxu0
    %v4317 = vadd.f32 %v4274, %v4316
    %v4318 = vpop.f32.mrb[0].mxu0
    %v4319 = vadd.f32 %v4276, %v4318
    %v4320 = vpop.f32.mrb[0].mxu0
    %v4321 = vadd.f32 %v4278, %v4320
    %4322 = vdwg.mxu0
    %4323 = vmatprep.subr.bf16.mxu0 %v3130
    %4324 = vmatpush1.bf16.msra.mxu0 %v3129
    %4325 = vmatprep.subr.bf16.mxu0 %v3138
    %4326 = vmatpush1.bf16.msra.mxu0 %v3137
    %4327 = vmatprep.subr.bf16.mxu0 %v3146
    %4328 = vmatpush1.bf16.msra.mxu0 %v3145
    %4329 = vmatprep.subr.bf16.mxu0 %v3154
    %4330 = vmatpush1.bf16.msra.mxu0 %v3153
    %4331 = vmatprep.subr.bf16.mxu0 %v3162
    %4332 = vmatpush1.bf16.msra.mxu0 %v3161
    %4333 = vmatprep.subr.bf16.mxu0 %v3170
    %4334 = vmatpush1.bf16.msra.mxu0 %v3169
    %4335 = vmatprep.subr.bf16.mxu0 %v3178
    %4336 = vmatpush1.bf16.msra.mxu0 %v3177
    %4337 = vmatprep.subr.bf16.mxu0 %v3186
    %4338 = vmatpush1.bf16.msra.mxu0 %v3185
    %4339 = vmatprep.subr.bf16.mxu0 %v3194
    %4340 = vmatpush1.bf16.msra.mxu0 %v3193
    %4341 = vmatprep.subr.bf16.mxu0 %v3202
    %4342 = vmatpush1.bf16.msra.mxu0 %v3201
    %4343 = vmatprep.subr.bf16.mxu0 %v3210
    %4344 = vmatpush1.bf16.msra.mxu0 %v3209
    %4345 = vmatprep.subr.bf16.mxu0 %v3218
    %4346 = vmatpush1.bf16.msra.mxu0 %v3217
    %4347 = vmatprep.subr.bf16.mxu0 %v3226
    %4348 = vmatpush1.bf16.msra.mxu0 %v3225
    %4349 = vmatprep.subr.bf16.mxu0 %v3234
    %4350 = vmatpush1.bf16.msra.mxu0 %v3233
    %4351 = vmatprep.subr.bf16.mxu0 %v3242
    %4352 = vmatpush1.bf16.msra.mxu0 %v3241
    %4353 = vmatprep.subr.bf16.mxu0 %v3250
    %4354 = vmatpush1.bf16.msra.mxu0 %v3249
    %4355 = vmatprep.mubr.bf16.mxu0 %v776
    %4356 = vmatmul.mubr.bf16.gmra.mrb[0].mxu0 %v775
    %v4357 = vpop.f32.mrb[0].mxu0
    %v4358 = vadd.f32 %v4315, %v4357
    %v4359 = vpop.f32.mrb[0].mxu0
    %v4360 = vadd.f32 %v4317, %v4359
    %v4361 = vpop.f32.mrb[0].mxu0
    %v4362 = vadd.f32 %v4319, %v4361
    %v4363 = vpop.f32.mrb[0].mxu0
    %v4364 = vadd.f32 %v4321, %v4363
    %4365 = vdwg.mxu0
    %4366 = vmatprep.subr.bf16.mxu0 %v3258
    %4367 = vmatpush1.bf16.msra.mxu0 %v3257
    %4368 = vmatprep.subr.bf16.mxu0 %v3266
    %4369 = vmatpush1.bf16.msra.mxu0 %v3265
    %4370 = vmatprep.subr.bf16.mxu0 %v3274
    %4371 = vmatpush1.bf16.msra.mxu0 %v3273
    %4372 = vmatprep.subr.bf16.mxu0 %v3282
    %4373 = vmatpush1.bf16.msra.mxu0 %v3281
    %4374 = vmatprep.subr.bf16.mxu0 %v3290
    %4375 = vmatpush1.bf16.msra.mxu0 %v3289
    %4376 = vmatprep.subr.bf16.mxu0 %v3298
    %4377 = vmatpush1.bf16.msra.mxu0 %v3297
    %4378 = vmatprep.subr.bf16.mxu0 %v3306
    %4379 = vmatpush1.bf16.msra.mxu0 %v3305
    %4380 = vmatprep.subr.bf16.mxu0 %v3314
    %4381 = vmatpush1.bf16.msra.mxu0 %v3313
    %4382 = vmatprep.subr.bf16.mxu0 %v3322
    %4383 = vmatpush1.bf16.msra.mxu0 %v3321
    %4384 = vmatprep.subr.bf16.mxu0 %v3330
    %4385 = vmatpush1.bf16.msra.mxu0 %v3329
    %4386 = vmatprep.subr.bf16.mxu0 %v3338
    %4387 = vmatpush1.bf16.msra.mxu0 %v3337
    %4388 = vmatprep.subr.bf16.mxu0 %v3346
    %4389 = vmatpush1.bf16.msra.mxu0 %v3345
    %4390 = vmatprep.subr.bf16.mxu0 %v3354
    %4391 = vmatpush1.bf16.msra.mxu0 %v3353
    %4392 = vmatprep.subr.bf16.mxu0 %v3362
    %4393 = vmatpush1.bf16.msra.mxu0 %v3361
    %4394 = vmatprep.subr.bf16.mxu0 %v3370
    %4395 = vmatpush1.bf16.msra.mxu0 %v3369
    %4396 = vmatprep.subr.bf16.mxu0 %v3378
    %4397 = vmatpush1.bf16.msra.mxu0 %v3377
    %4398 = vmatprep.mubr.bf16.mxu0 %v778
    %4399 = vmatmul.mubr.bf16.gmra.mrb[0].mxu0 %v777
    %v4400 = vpop.f32.mrb[0].mxu0
    %v4401 = vadd.f32 %v4358, %v4400
    %v4402 = vpop.f32.mrb[0].mxu0
    %v4403 = vadd.f32 %v4360, %v4402
    %v4404 = vpop.f32.mrb[0].mxu0
    %v4405 = vadd.f32 %v4362, %v4404
    %v4406 = vpop.f32.mrb[0].mxu0
    %v4407 = vadd.f32 %v4364, %v4406
    %4408 = vdwg.mxu0
    %4409 = vmatprep.subr.bf16.mxu0 %v2876
    %4410 = vmatpush1.bf16.msra.mxu0 %v2875
    %4411 = vmatprep.subr.bf16.mxu0 %v2884
    %4412 = vmatpush1.bf16.msra.mxu0 %v2883
    %4413 = vmatprep.subr.bf16.mxu0 %v2892
    %4414 = vmatpush1.bf16.msra.mxu0 %v2891
    %4415 = vmatprep.subr.bf16.mxu0 %v2900
    %4416 = vmatpush1.bf16.msra.mxu0 %v2899
    %4417 = vmatprep.subr.bf16.mxu0 %v2908
    %4418 = vmatpush1.bf16.msra.mxu0 %v2907
    %4419 = vmatprep.subr.bf16.mxu0 %v2916
    %4420 = vmatpush1.bf16.msra.mxu0 %v2915
    %4421 = vmatprep.subr.bf16.mxu0 %v2924
    %4422 = vmatpush1.bf16.msra.mxu0 %v2923
    %4423 = vmatprep.subr.bf16.mxu0 %v2932
    %4424 = vmatpush1.bf16.msra.mxu0 %v2931
    %4425 = vmatprep.subr.bf16.mxu0 %v2940
    %4426 = vmatpush1.bf16.msra.mxu0 %v2939
    %4427 = vmatprep.subr.bf16.mxu0 %v2948
    %4428 = vmatpush1.bf16.msra.mxu0 %v2947
    %4429 = vmatprep.subr.bf16.mxu0 %v2956
    %4430 = vmatpush1.bf16.msra.mxu0 %v2955
    %4431 = vmatprep.subr.bf16.mxu0 %v2964
    %4432 = vmatpush1.bf16.msra.mxu0 %v2963
    %4433 = vmatprep.subr.bf16.mxu0 %v2972
    %4434 = vmatpush1.bf16.msra.mxu0 %v2971
    %4435 = vmatprep.subr.bf16.mxu0 %v2980
    %4436 = vmatpush1.bf16.msra.mxu0 %v2979
    %4437 = vmatprep.subr.bf16.mxu0 %v2988
    %4438 = vmatpush1.bf16.msra.mxu0 %v2987
    %4439 = vmatprep.subr.bf16.mxu0 %v2996
    %4440 = vmatpush1.bf16.msra.mxu0 %v2995
    %4441 = vmatprep.mubr.bf16.mxu0 %v772
    %4442 = vmatmul.mubr.bf16.gmra.mrb[0].mxu0 %v771
    %v4443 = vpop.f32.mrb[0].mxu0
    %v4444 = vadd.f32 %v1320, %v4443
    %v4445 = vpop.f32.mrb[0].mxu0
    %v4446 = vadd.f32 %v1324, %v4445
    %v4447 = vpop.f32.mrb[0].mxu0
    %v4448 = vadd.f32 %v1320, %v4447
    %v4449 = vpop.f32.mrb[0].mxu0
    %v4450 = vadd.f32 %v1324, %v4449
    %4451 = vdwg.mxu0
    %4452 = vmatprep.subr.bf16.mxu0 %v3004
    %4453 = vmatpush1.bf16.msra.mxu0 %v3003
    %4454 = vmatprep.subr.bf16.mxu0 %v3012
    %4455 = vmatpush1.bf16.msra.mxu0 %v3011
    %4456 = vmatprep.subr.bf16.mxu0 %v3020
    %4457 = vmatpush1.bf16.msra.mxu0 %v3019
    %4458 = vmatprep.subr.bf16.mxu0 %v3028
    %4459 = vmatpush1.bf16.msra.mxu0 %v3027
    %4460 = vmatprep.subr.bf16.mxu0 %v3036
    %4461 = vmatpush1.bf16.msra.mxu0 %v3035
    %4462 = vmatprep.subr.bf16.mxu0 %v3044
    %4463 = vmatpush1.bf16.msra.mxu0 %v3043
    %4464 = vmatprep.subr.bf16.mxu0 %v3052
    %4465 = vmatpush1.bf16.msra.mxu0 %v3051
    %4466 = vmatprep.subr.bf16.mxu0 %v3060
    %4467 = vmatpush1.bf16.msra.mxu0 %v3059
    %4468 = vmatprep.subr.bf16.mxu0 %v3068
    %4469 = vmatpush1.bf16.msra.mxu0 %v3067
    %4470 = vmatprep.subr.bf16.mxu0 %v3076
    %4471 = vmatpush1.bf16.msra.mxu0 %v3075
    %4472 = vmatprep.subr.bf16.mxu0 %v3084
    %4473 = vmatpush1.bf16.msra.mxu0 %v3083
    %4474 = vmatprep.subr.bf16.mxu0 %v3092
    %4475 = vmatpush1.bf16.msra.mxu0 %v3091
    %4476 = vmatprep.subr.bf16.mxu0 %v3100
    %4477 = vmatpush1.bf16.msra.mxu0 %v3099
    %4478 = vmatprep.subr.bf16.mxu0 %v3108
    %4479 = vmatpush1.bf16.msra.mxu0 %v3107
    %4480 = vmatprep.subr.bf16.mxu0 %v3116
    %4481 = vmatpush1.bf16.msra.mxu0 %v3115
    %4482 = vmatprep.subr.bf16.mxu0 %v3124
    %4483 = vmatpush1.bf16.msra.mxu0 %v3123
    %4484 = vmatprep.mubr.bf16.mxu0 %v774
    %4485 = vmatmul.mubr.bf16.gmra.mrb[0].mxu0 %v773
    %v4486 = vpop.f32.mrb[0].mxu0
    %v4487 = vadd.f32 %v4444, %v4486
    %v4488 = vpop.f32.mrb[0].mxu0
    %v4489 = vadd.f32 %v4446, %v4488
    %v4490 = vpop.f32.mrb[0].mxu0
    %v4491 = vadd.f32 %v4448, %v4490
    %v4492 = vpop.f32.mrb[0].mxu0
    %v4493 = vadd.f32 %v4450, %v4492
    %4494 = vdwg.mxu0
    %4495 = vmatprep.subr.bf16.mxu0 %v3132
    %4496 = vmatpush1.bf16.msra.mxu0 %v3131
    %4497 = vmatprep.subr.bf16.mxu0 %v3140
    %4498 = vmatpush1.bf16.msra.mxu0 %v3139
    %4499 = vmatprep.subr.bf16.mxu0 %v3148
    %4500 = vmatpush1.bf16.msra.mxu0 %v3147
    %4501 = vmatprep.subr.bf16.mxu0 %v3156
    %4502 = vmatpush1.bf16.msra.mxu0 %v3155
    %4503 = vmatprep.subr.bf16.mxu0 %v3164
    %4504 = vmatpush1.bf16.msra.mxu0 %v3163
    %4505 = vmatprep.subr.bf16.mxu0 %v3172
    %4506 = vmatpush1.bf16.msra.mxu0 %v3171
    %4507 = vmatprep.subr.bf16.mxu0 %v3180
    %4508 = vmatpush1.bf16.msra.mxu0 %v3179
    %4509 = vmatprep.subr.bf16.mxu0 %v3188
    %4510 = vmatpush1.bf16.msra.mxu0 %v3187
    %4511 = vmatprep.subr.bf16.mxu0 %v3196
    %4512 = vmatpush1.bf16.msra.mxu0 %v3195
    %4513 = vmatprep.subr.bf16.mxu0 %v3204
    %4514 = vmatpush1.bf16.msra.mxu0 %v3203
    %4515 = vmatprep.subr.bf16.mxu0 %v3212
    %4516 = vmatpush1.bf16.msra.mxu0 %v3211
    %4517 = vmatprep.subr.bf16.mxu0 %v3220
    %4518 = vmatpush1.bf16.msra.mxu0 %v3219
    %4519 = vmatprep.subr.bf16.mxu0 %v3228
    %4520 = vmatpush1.bf16.msra.mxu0 %v3227
    %4521 = vmatprep.subr.bf16.mxu0 %v3236
    %4522 = vmatpush1.bf16.msra.mxu0 %v3235
    %4523 = vmatprep.subr.bf16.mxu0 %v3244
    %4524 = vmatpush1.bf16.msra.mxu0 %v3243
    %4525 = vmatprep.subr.bf16.mxu0 %v3252
    %4526 = vmatpush1.bf16.msra.mxu0 %v3251
    %4527 = vmatprep.mubr.bf16.mxu0 %v776
    %4528 = vmatmul.mubr.bf16.gmra.mrb[0].mxu0 %v775
    %v4529 = vpop.f32.mrb[0].mxu0
    %v4530 = vadd.f32 %v4487, %v4529
    %v4531 = vpop.f32.mrb[0].mxu0
    %v4532 = vadd.f32 %v4489, %v4531
    %v4533 = vpop.f32.mrb[0].mxu0
    %v4534 = vadd.f32 %v4491, %v4533
    %v4535 = vpop.f32.mrb[0].mxu0
    %v4536 = vadd.f32 %v4493, %v4535
    %4537 = vdwg.mxu0
    %4538 = vmatprep.subr.bf16.mxu0 %v3260
    %4539 = vmatpush1.bf16.msra.mxu0 %v3259
    %4540 = vmatprep.subr.bf16.mxu0 %v3268
    %4541 = vmatpush1.bf16.msra.mxu0 %v3267
    %4542 = vmatprep.subr.bf16.mxu0 %v3276
    %4543 = vmatpush1.bf16.msra.mxu0 %v3275
    %4544 = vmatprep.subr.bf16.mxu0 %v3284
    %4545 = vmatpush1.bf16.msra.mxu0 %v3283
    %4546 = vmatprep.subr.bf16.mxu0 %v3292
    %4547 = vmatpush1.bf16.msra.mxu0 %v3291
    %4548 = vmatprep.subr.bf16.mxu0 %v3300
    %4549 = vmatpush1.bf16.msra.mxu0 %v3299
    %4550 = vmatprep.subr.bf16.mxu0 %v3308
    %4551 = vmatpush1.bf16.msra.mxu0 %v3307
    %4552 = vmatprep.subr.bf16.mxu0 %v3316
    %4553 = vmatpush1.bf16.msra.mxu0 %v3315
    %4554 = vmatprep.subr.bf16.mxu0 %v3324
    %4555 = vmatpush1.bf16.msra.mxu0 %v3323
    %4556 = vmatprep.subr.bf16.mxu0 %v3332
    %4557 = vmatpush1.bf16.msra.mxu0 %v3331
    %4558 = vmatprep.subr.bf16.mxu0 %v3340
    %4559 = vmatpush1.bf16.msra.mxu0 %v3339
    %4560 = vmatprep.subr.bf16.mxu0 %v3348
    %4561 = vmatpush1.bf16.msra.mxu0 %v3347
    %4562 = vmatprep.subr.bf16.mxu0 %v3356
    %4563 = vmatpush1.bf16.msra.mxu0 %v3355
    %4564 = vmatprep.subr.bf16.mxu0 %v3364
    %4565 = vmatpush1.bf16.msra.mxu0 %v3363
    %4566 = vmatprep.subr.bf16.mxu0 %v3372
    %4567 = vmatpush1.bf16.msra.mxu0 %v3371
    %4568 = vmatprep.subr.bf16.mxu0 %v3380
    %4569 = vmatpush1.bf16.msra.mxu0 %v3379
    %4570 = vmatprep.mubr.bf16.mxu0 %v778
    %4571 = vmatmul.mubr.bf16.gmra.mrb[0].mxu0 %v777
    %v4572 = vpop.f32.mrb[0].mxu0
    %v4573 = vadd.f32 %v4530, %v4572
    %v4574 = vpop.f32.mrb[0].mxu0
    %v4575 = vadd.f32 %v4532, %v4574
    %v4576 = vpop.f32.mrb[0].mxu0
    %v4577 = vadd.f32 %v4534, %v4576
    %v4578 = vpop.f32.mrb[0].mxu0
    %v4579 = vadd.f32 %v4536, %v4578
    %4580 = vdwg.mxu0
    %vm4581 = vcmp.gt.f32.partialorder %v4057, 0.0
    %vm4582 = vcmp.gt.f32.partialorder %v4059, 0.0
    %vm4583 = vcmp.gt.f32.partialorder %v4229, 0.0
    %vm4584 = vcmp.gt.f32.partialorder %v4231, 0.0
    %vm4585 = vcmp.gt.f32.partialorder %v4401, 0.0
    %vm4586 = vcmp.gt.f32.partialorder %v4403, 0.0
    %vm4587 = vcmp.gt.f32.partialorder %v4573, 0.0
    %vm4588 = vcmp.gt.f32.partialorder %v4575, 0.0
    %vm4589 = vcmp.gt.f32.partialorder %v4061, 0.0
    %vm4590 = vcmp.gt.f32.partialorder %v4063, 0.0
    %vm4591 = vcmp.gt.f32.partialorder %v4233, 0.0
    %vm4592 = vcmp.gt.f32.partialorder %v4235, 0.0
    %vm4593 = vcmp.gt.f32.partialorder %v4405, 0.0
    %vm4594 = vcmp.gt.f32.partialorder %v4407, 0.0
    %vm4595 = vcmp.gt.f32.partialorder %v4577, 0.0
    %vm4596 = vcmp.gt.f32.partialorder %v4579, 0.0
    %v4597 = vmul.f32 %v4057, 0.01
    %v4598 = vmul.f32 %v4059, 0.01
    %v4599 = vmul.f32 %v4229, 0.01
    %v4600 = vmul.f32 %v4231, 0.01
    %v4601 = vmul.f32 %v4401, 0.01
    %v4602 = vmul.f32 %v4403, 0.01
    %v4603 = vmul.f32 %v4573, 0.01
    %v4604 = vmul.f32 %v4575, 0.01
    %v4605 = vmul.f32 %v4061, 0.01
    %v4606 = vmul.f32 %v4063, 0.01
    %v4607 = vmul.f32 %v4233, 0.01
    %v4608 = vmul.f32 %v4235, 0.01
    %v4609 = vmul.f32 %v4405, 0.01
    %v4610 = vmul.f32 %v4407, 0.01
    %v4611 = vmul.f32 %v4577, 0.01
    %v4612 = vmul.f32 %v4579, 0.01
    %v4613 = vsel %vm4581, %v4057, %v4597
    %v4614 = vsel %vm4582, %v4059, %v4598
    %v4615 = vsel %vm4583, %v4229, %v4599
    %v4616 = vsel %vm4584, %v4231, %v4600
    %v4617 = vsel %vm4585, %v4401, %v4601
    %v4618 = vsel %vm4586, %v4403, %v4602
    %v4619 = vsel %vm4587, %v4573, %v4603
    %v4620 = vsel %vm4588, %v4575, %v4604
    %v4621 = vsel %vm4589, %v4061, %v4605
    %v4622 = vsel %vm4590, %v4063, %v4606
    %v4623 = vsel %vm4591, %v4233, %v4607
    %v4624 = vsel %vm4592, %v4235, %v4608
    %v4625 = vsel %vm4593, %v4405, %v4609
    %v4626 = vsel %vm4594, %v4407, %v4610
    %v4627 = vsel %vm4595, %v4577, %v4611
    %v4628 = vsel %vm4596, %v4579, %v4612
    %v4629 = vpack.c.bf16 %v4621, %v4613
    %v4630 = vpack.c.bf16 %v4622, %v4614
    %v4631 = vpack.c.bf16 %v4623, %v4615
    %v4632 = vpack.c.bf16 %v4624, %v4616
    %v4633 = vpack.c.bf16 %v4625, %v4617
    %v4634 = vpack.c.bf16 %v4626, %v4618
    %v4635 = vpack.c.bf16 %v4627, %v4619
    %v4636 = vpack.c.bf16 %v4628, %v4620
    %v4637 = vld [vmem:[#allocation11] sm:$0xf]
    %v4638 = vld [vmem:[#allocation11 + $0x4] sm:$0xf]
    %v4639 = vld [vmem:[#allocation11 + $0x8] sm:$0xf]
    %v4640 = vld [vmem:[#allocation11 + $0xc] sm:$0xf]
    %v4641 = vld [vmem:[#allocation11 + $0x10] sm:$0xf]
    %v4642 = vld [vmem:[#allocation11 + $0x14] sm:$0xf]
    %v4643 = vld [vmem:[#allocation11 + $0x18] sm:$0xf]
    %v4644 = vld [vmem:[#allocation11 + $0x1c] sm:$0xf]
    %v4645 = vld [vmem:[#allocation11 + $0x20] sm:$0xf]
    %v4646 = vld [vmem:[#allocation11 + $0x24] sm:$0xf]
    %v4647 = vld [vmem:[#allocation11 + $0x28] sm:$0xf]
    %v4648 = vld [vmem:[#allocation11 + $0x2c] sm:$0xf]
    %v4649 = vld [vmem:[#allocation11 + $0x30] sm:$0xf]
    %v4650 = vld [vmem:[#allocation11 + $0x34] sm:$0xf]
    %v4651 = vld [vmem:[#allocation11 + $0x38] sm:$0xf]
    %v4652 = vld [vmem:[#allocation11 + $0x3c] sm:$0xf]
    %v4653 = vld [vmem:[#allocation11 + $0x40] sm:$0xf]
    %v4654 = vld [vmem:[#allocation11 + $0x44] sm:$0xf]
    %v4655 = vld [vmem:[#allocation11 + $0x48] sm:$0xf]
    %v4656 = vld [vmem:[#allocation11 + $0x4c] sm:$0xf]
    %v4657 = vld [vmem:[#allocation11 + $0x50] sm:$0xf]
    %v4658 = vld [vmem:[#allocation11 + $0x54] sm:$0xf]
    %v4659 = vld [vmem:[#allocation11 + $0x58] sm:$0xf]
    %v4660 = vld [vmem:[#allocation11 + $0x5c] sm:$0xf]
    %v4661 = vld [vmem:[#allocation11 + $0x60] sm:$0xf]
    %v4662 = vld [vmem:[#allocation11 + $0x64] sm:$0xf]
    %v4663 = vld [vmem:[#allocation11 + $0x68] sm:$0xf]
    %v4664 = vld [vmem:[#allocation11 + $0x6c] sm:$0xf]
    %v4665 = vld [vmem:[#allocation11 + $0x70] sm:$0xf]
    %v4666 = vld [vmem:[#allocation11 + $0x74] sm:$0xf]
    %v4667 = vld [vmem:[#allocation11 + $0x78] sm:$0xf]
    %v4668 = vld [vmem:[#allocation11 + $0x7c] sm:$0xf]
    %v4669 = vld [vmem:[#allocation11 + $0x80] sm:$0xf]
    %v4670 = vld [vmem:[#allocation11 + $0x84] sm:$0xf]
    %v4671 = vld [vmem:[#allocation11 + $0x88] sm:$0xf]
    %v4672 = vld [vmem:[#allocation11 + $0x8c] sm:$0xf]
    %v4673 = vld [vmem:[#allocation11 + $0x90] sm:$0xf]
    %v4674 = vld [vmem:[#allocation11 + $0x94] sm:$0xf]
    %v4675 = vld [vmem:[#allocation11 + $0x98] sm:$0xf]
    %v4676 = vld [vmem:[#allocation11 + $0x9c] sm:$0xf]
    %v4677 = vld [vmem:[#allocation11 + $0xa0] sm:$0xf]
    %v4678 = vld [vmem:[#allocation11 + $0xa4] sm:$0xf]
    %v4679 = vld [vmem:[#allocation11 + $0xa8] sm:$0xf]
    %v4680 = vld [vmem:[#allocation11 + $0xac] sm:$0xf]
    %v4681 = vld [vmem:[#allocation11 + $0xb0] sm:$0xf]
    %v4682 = vld [vmem:[#allocation11 + $0xb4] sm:$0xf]
    %v4683 = vld [vmem:[#allocation11 + $0xb8] sm:$0xf]
    %v4684 = vld [vmem:[#allocation11 + $0xbc] sm:$0xf]
    %v4685 = vld [vmem:[#allocation11 + $0xc0] sm:$0xf]
    %v4686 = vld [vmem:[#allocation11 + $0xc4] sm:$0xf]
    %v4687 = vld [vmem:[#allocation11 + $0xc8] sm:$0xf]
    %v4688 = vld [vmem:[#allocation11 + $0xcc] sm:$0xf]
    %v4689 = vld [vmem:[#allocation11 + $0xd0] sm:$0xf]
    %v4690 = vld [vmem:[#allocation11 + $0xd4] sm:$0xf]
    %v4691 = vld [vmem:[#allocation11 + $0xd8] sm:$0xf]
    %v4692 = vld [vmem:[#allocation11 + $0xdc] sm:$0xf]
    %v4693 = vld [vmem:[#allocation11 + $0xe0] sm:$0xf]
    %v4694 = vld [vmem:[#allocation11 + $0xe4] sm:$0xf]
    %v4695 = vld [vmem:[#allocation11 + $0xe8] sm:$0xf]
    %v4696 = vld [vmem:[#allocation11 + $0xec] sm:$0xf]
    %v4697 = vld [vmem:[#allocation11 + $0xf0] sm:$0xf]
    %v4698 = vld [vmem:[#allocation11 + $0xf4] sm:$0xf]
    %v4699 = vld [vmem:[#allocation11 + $0xf8] sm:$0xf]
    %v4700 = vld [vmem:[#allocation11 + $0xfc] sm:$0xf]
    %v4701 = vld [vmem:[#allocation11 + $0x100] sm:$0xf]
    %v4702 = vld [vmem:[#allocation11 + $0x104] sm:$0xf]
    %v4703 = vld [vmem:[#allocation11 + $0x108] sm:$0xf]
    %v4704 = vld [vmem:[#allocation11 + $0x10c] sm:$0xf]
    %v4705 = vld [vmem:[#allocation11 + $0x110] sm:$0xf]
    %v4706 = vld [vmem:[#allocation11 + $0x114] sm:$0xf]
    %v4707 = vld [vmem:[#allocation11 + $0x118] sm:$0xf]
    %v4708 = vld [vmem:[#allocation11 + $0x11c] sm:$0xf]
    %v4709 = vld [vmem:[#allocation11 + $0x120] sm:$0xf]
    %v4710 = vld [vmem:[#allocation11 + $0x124] sm:$0xf]
    %v4711 = vld [vmem:[#allocation11 + $0x128] sm:$0xf]
    %v4712 = vld [vmem:[#allocation11 + $0x12c] sm:$0xf]
    %v4713 = vld [vmem:[#allocation11 + $0x130] sm:$0xf]
    %v4714 = vld [vmem:[#allocation11 + $0x134] sm:$0xf]
    %v4715 = vld [vmem:[#allocation11 + $0x138] sm:$0xf]
    %v4716 = vld [vmem:[#allocation11 + $0x13c] sm:$0xf]
    %v4717 = vld [vmem:[#allocation11 + $0x140] sm:$0xf]
    %v4718 = vld [vmem:[#allocation11 + $0x144] sm:$0xf]
    %v4719 = vld [vmem:[#allocation11 + $0x148] sm:$0xf]
    %v4720 = vld [vmem:[#allocation11 + $0x14c] sm:$0xf]
    %v4721 = vld [vmem:[#allocation11 + $0x150] sm:$0xf]
    %v4722 = vld [vmem:[#allocation11 + $0x154] sm:$0xf]
    %v4723 = vld [vmem:[#allocation11 + $0x158] sm:$0xf]
    %v4724 = vld [vmem:[#allocation11 + $0x15c] sm:$0xf]
    %v4725 = vld [vmem:[#allocation11 + $0x160] sm:$0xf]
    %v4726 = vld [vmem:[#allocation11 + $0x164] sm:$0xf]
    %v4727 = vld [vmem:[#allocation11 + $0x168] sm:$0xf]
    %v4728 = vld [vmem:[#allocation11 + $0x16c] sm:$0xf]
    %v4729 = vld [vmem:[#allocation11 + $0x170] sm:$0xf]
    %v4730 = vld [vmem:[#allocation11 + $0x174] sm:$0xf]
    %v4731 = vld [vmem:[#allocation11 + $0x178] sm:$0xf]
    %v4732 = vld [vmem:[#allocation11 + $0x17c] sm:$0xf]
    %v4733 = vld [vmem:[#allocation11 + $0x180] sm:$0xf]
    %v4734 = vld [vmem:[#allocation11 + $0x184] sm:$0xf]
    %v4735 = vld [vmem:[#allocation11 + $0x188] sm:$0xf]
    %v4736 = vld [vmem:[#allocation11 + $0x18c] sm:$0xf]
    %v4737 = vld [vmem:[#allocation11 + $0x190] sm:$0xf]
    %v4738 = vld [vmem:[#allocation11 + $0x194] sm:$0xf]
    %v4739 = vld [vmem:[#allocation11 + $0x198] sm:$0xf]
    %v4740 = vld [vmem:[#allocation11 + $0x19c] sm:$0xf]
    %v4741 = vld [vmem:[#allocation11 + $0x1a0] sm:$0xf]
    %v4742 = vld [vmem:[#allocation11 + $0x1a4] sm:$0xf]
    %v4743 = vld [vmem:[#allocation11 + $0x1a8] sm:$0xf]
    %v4744 = vld [vmem:[#allocation11 + $0x1ac] sm:$0xf]
    %v4745 = vld [vmem:[#allocation11 + $0x1b0] sm:$0xf]
    %v4746 = vld [vmem:[#allocation11 + $0x1b4] sm:$0xf]
    %v4747 = vld [vmem:[#allocation11 + $0x1b8] sm:$0xf]
    %v4748 = vld [vmem:[#allocation11 + $0x1bc] sm:$0xf]
    %v4749 = vld [vmem:[#allocation11 + $0x1c0] sm:$0xf]
    %v4750 = vld [vmem:[#allocation11 + $0x1c4] sm:$0xf]
    %v4751 = vld [vmem:[#allocation11 + $0x1c8] sm:$0xf]
    %v4752 = vld [vmem:[#allocation11 + $0x1cc] sm:$0xf]
    %v4753 = vld [vmem:[#allocation11 + $0x1d0] sm:$0xf]
    %v4754 = vld [vmem:[#allocation11 + $0x1d4] sm:$0xf]
    %v4755 = vld [vmem:[#allocation11 + $0x1d8] sm:$0xf]
    %v4756 = vld [vmem:[#allocation11 + $0x1dc] sm:$0xf]
    %v4757 = vld [vmem:[#allocation11 + $0x1e0] sm:$0xf]
    %v4758 = vld [vmem:[#allocation11 + $0x1e4] sm:$0xf]
    %v4759 = vld [vmem:[#allocation11 + $0x1e8] sm:$0xf]
    %v4760 = vld [vmem:[#allocation11 + $0x1ec] sm:$0xf]
    %v4761 = vld [vmem:[#allocation11 + $0x1f0] sm:$0xf]
    %v4762 = vld [vmem:[#allocation11 + $0x1f4] sm:$0xf]
    %v4763 = vld [vmem:[#allocation11 + $0x1f8] sm:$0xf]
    %v4764 = vld [vmem:[#allocation11 + $0x1fc] sm:$0xf]
    %v4765 = vld [vmem:[#allocation13] sm:$0x1]
    %v4767 = vlaneseq
    %v4768 = vshrl.u32 %v4767, 7
    %v4769 = vsub.s32 0, %v4768
    %v4770 = vrot.slane %v4765, %v4769
    %v4900 = vunpack.c.l.b16 %v4637
    %v4901 = vunpack.c.l.b16 %v4638
    %v4902 = vunpack.c.l.b16 %v4639
    %v4903 = vunpack.c.l.b16 %v4640
    %v4904 = vunpack.c.l.b16 %v4641
    %v4905 = vunpack.c.l.b16 %v4642
    %v4906 = vunpack.c.l.b16 %v4643
    %v4907 = vunpack.c.l.b16 %v4644
    %v4908 = vunpack.c.l.b16 %v4645
    %v4909 = vunpack.c.l.b16 %v4646
    %v4910 = vunpack.c.l.b16 %v4647
    %v4911 = vunpack.c.l.b16 %v4648
    %v4912 = vunpack.c.l.b16 %v4649
    %v4913 = vunpack.c.l.b16 %v4650
    %v4914 = vunpack.c.l.b16 %v4651
    %v4915 = vunpack.c.l.b16 %v4652
    %v4916 = vunpack.c.l.b16 %v4653
    %v4917 = vunpack.c.l.b16 %v4654
    %v4918 = vunpack.c.l.b16 %v4655
    %v4919 = vunpack.c.l.b16 %v4656
    %v4920 = vunpack.c.l.b16 %v4657
    %v4921 = vunpack.c.l.b16 %v4658
    %v4922 = vunpack.c.l.b16 %v4659
    %v4923 = vunpack.c.l.b16 %v4660
    %v4924 = vunpack.c.l.b16 %v4661
    %v4925 = vunpack.c.l.b16 %v4662
    %v4926 = vunpack.c.l.b16 %v4663
    %v4927 = vunpack.c.l.b16 %v4664
    %v4928 = vunpack.c.l.b16 %v4665
    %v4929 = vunpack.c.l.b16 %v4666
    %v4930 = vunpack.c.l.b16 %v4667
    %v4931 = vunpack.c.l.b16 %v4668
    %v4932 = vunpack.c.l.b16 %v4669
    %v4933 = vunpack.c.l.b16 %v4670
    %v4934 = vunpack.c.l.b16 %v4671
    %v4935 = vunpack.c.l.b16 %v4672
    %v4936 = vunpack.c.l.b16 %v4673
    %v4937 = vunpack.c.l.b16 %v4674
    %v4938 = vunpack.c.l.b16 %v4675
    %v4939 = vunpack.c.l.b16 %v4676
    %v4940 = vunpack.c.l.b16 %v4677
    %v4941 = vunpack.c.l.b16 %v4678
    %v4942 = vunpack.c.l.b16 %v4679
    %v4943 = vunpack.c.l.b16 %v4680
    %v4944 = vunpack.c.l.b16 %v4681
    %v4945 = vunpack.c.l.b16 %v4682
    %v4946 = vunpack.c.l.b16 %v4683
    %v4947 = vunpack.c.l.b16 %v4684
    %v4948 = vunpack.c.l.b16 %v4685
    %v4949 = vunpack.c.l.b16 %v4686
    %v4950 = vunpack.c.l.b16 %v4687
    %v4951 = vunpack.c.l.b16 %v4688
    %v4952 = vunpack.c.l.b16 %v4689
    %v4953 = vunpack.c.l.b16 %v4690
    %v4954 = vunpack.c.l.b16 %v4691
    %v4955 = vunpack.c.l.b16 %v4692
    %v4956 = vunpack.c.l.b16 %v4693
    %v4957 = vunpack.c.l.b16 %v4694
    %v4958 = vunpack.c.l.b16 %v4695
    %v4959 = vunpack.c.l.b16 %v4696
    %v4960 = vunpack.c.l.b16 %v4697
    %v4961 = vunpack.c.l.b16 %v4698
    %v4962 = vunpack.c.l.b16 %v4699
    %v4963 = vunpack.c.l.b16 %v4700
    %v4964 = vunpack.c.l.b16 %v4701
    %v4965 = vunpack.c.l.b16 %v4702
    %v4966 = vunpack.c.l.b16 %v4703
    %v4967 = vunpack.c.l.b16 %v4704
    %v4968 = vunpack.c.l.b16 %v4705
    %v4969 = vunpack.c.l.b16 %v4706
    %v4970 = vunpack.c.l.b16 %v4707
    %v4971 = vunpack.c.l.b16 %v4708
    %v4972 = vunpack.c.l.b16 %v4709
    %v4973 = vunpack.c.l.b16 %v4710
    %v4974 = vunpack.c.l.b16 %v4711
    %v4975 = vunpack.c.l.b16 %v4712
    %v4976 = vunpack.c.l.b16 %v4713
    %v4977 = vunpack.c.l.b16 %v4714
    %v4978 = vunpack.c.l.b16 %v4715
    %v4979 = vunpack.c.l.b16 %v4716
    %v4980 = vunpack.c.l.b16 %v4717
    %v4981 = vunpack.c.l.b16 %v4718
    %v4982 = vunpack.c.l.b16 %v4719
    %v4983 = vunpack.c.l.b16 %v4720
    %v4984 = vunpack.c.l.b16 %v4721
    %v4985 = vunpack.c.l.b16 %v4722
    %v4986 = vunpack.c.l.b16 %v4723
    %v4987 = vunpack.c.l.b16 %v4724
    %v4988 = vunpack.c.l.b16 %v4725
    %v4989 = vunpack.c.l.b16 %v4726
    %v4990 = vunpack.c.l.b16 %v4727
    %v4991 = vunpack.c.l.b16 %v4728
    %v4992 = vunpack.c.l.b16 %v4729
    %v4993 = vunpack.c.l.b16 %v4730
    %v4994 = vunpack.c.l.b16 %v4731
    %v4995 = vunpack.c.l.b16 %v4732
    %v4996 = vunpack.c.l.b16 %v4733
    %v4997 = vunpack.c.l.b16 %v4734
    %v4998 = vunpack.c.l.b16 %v4735
    %v4999 = vunpack.c.l.b16 %v4736
    %v5000 = vunpack.c.l.b16 %v4737
    %v5001 = vunpack.c.l.b16 %v4738
    %v5002 = vunpack.c.l.b16 %v4739
    %v5003 = vunpack.c.l.b16 %v4740
    %v5004 = vunpack.c.l.b16 %v4741
    %v5005 = vunpack.c.l.b16 %v4742
    %v5006 = vunpack.c.l.b16 %v4743
    %v5007 = vunpack.c.l.b16 %v4744
    %v5008 = vunpack.c.l.b16 %v4745
    %v5009 = vunpack.c.l.b16 %v4746
    %v5010 = vunpack.c.l.b16 %v4747
    %v5011 = vunpack.c.l.b16 %v4748
    %v5012 = vunpack.c.l.b16 %v4749
    %v5013 = vunpack.c.l.b16 %v4750
    %v5014 = vunpack.c.l.b16 %v4751
    %v5015 = vunpack.c.l.b16 %v4752
    %v5016 = vunpack.c.l.b16 %v4753
    %v5017 = vunpack.c.l.b16 %v4754
    %v5018 = vunpack.c.l.b16 %v4755
    %v5019 = vunpack.c.l.b16 %v4756
    %v5020 = vunpack.c.l.b16 %v4757
    %v5021 = vunpack.c.l.b16 %v4758
    %v5022 = vunpack.c.l.b16 %v4759
    %v5023 = vunpack.c.l.b16 %v4760
    %v5024 = vunpack.c.l.b16 %v4761
    %v5025 = vunpack.c.l.b16 %v4762
    %v5026 = vunpack.c.l.b16 %v4763
    %v5027 = vunpack.c.l.b16 %v4764
    %v5028 = vpack.c.b16 %v4901, %v4900
    %v5029 = vpack.c.b16 %v4903, %v4902
    %v5030 = vpack.c.b16 %v4905, %v4904
    %v5031 = vpack.c.b16 %v4907, %v4906
    %v5032 = vpack.c.b16 %v4909, %v4908
    %v5033 = vpack.c.b16 %v4911, %v4910
    %v5034 = vpack.c.b16 %v4913, %v4912
    %v5035 = vpack.c.b16 %v4915, %v4914
    %v5036 = vpack.c.b16 %v4917, %v4916
    %v5037 = vpack.c.b16 %v4919, %v4918
    %v5038 = vpack.c.b16 %v4921, %v4920
    %v5039 = vpack.c.b16 %v4923, %v4922
    %v5040 = vpack.c.b16 %v4925, %v4924
    %v5041 = vpack.c.b16 %v4927, %v4926
    %v5042 = vpack.c.b16 %v4929, %v4928
    %v5043 = vpack.c.b16 %v4931, %v4930
    %v5044 = vpack.c.b16 %v4933, %v4932
    %v5045 = vpack.c.b16 %v4935, %v4934
    %v5046 = vpack.c.b16 %v4937, %v4936
    %v5047 = vpack.c.b16 %v4939, %v4938
    %v5048 = vpack.c.b16 %v4941, %v4940
    %v5049 = vpack.c.b16 %v4943, %v4942
    %v5050 = vpack.c.b16 %v4945, %v4944
    %v5051 = vpack.c.b16 %v4947, %v4946
    %v5052 = vpack.c.b16 %v4949, %v4948
    %v5053 = vpack.c.b16 %v4951, %v4950
    %v5054 = vpack.c.b16 %v4953, %v4952
    %v5055 = vpack.c.b16 %v4955, %v4954
    %v5056 = vpack.c.b16 %v4957, %v4956
    %v5057 = vpack.c.b16 %v4959, %v4958
    %v5058 = vpack.c.b16 %v4961, %v4960
    %v5059 = vpack.c.b16 %v4963, %v4962
    %v5060 = vpack.c.b16 %v4965, %v4964
    %v5061 = vpack.c.b16 %v4967, %v4966
    %v5062 = vpack.c.b16 %v4969, %v4968
    %v5063 = vpack.c.b16 %v4971, %v4970
    %v5064 = vpack.c.b16 %v4973, %v4972
    %v5065 = vpack.c.b16 %v4975, %v4974
    %v5066 = vpack.c.b16 %v4977, %v4976
    %v5067 = vpack.c.b16 %v4979, %v4978
    %v5068 = vpack.c.b16 %v4981, %v4980
    %v5069 = vpack.c.b16 %v4983, %v4982
    %v5070 = vpack.c.b16 %v4985, %v4984
    %v5071 = vpack.c.b16 %v4987, %v4986
    %v5072 = vpack.c.b16 %v4989, %v4988
    %v5073 = vpack.c.b16 %v4991, %v4990
    %v5074 = vpack.c.b16 %v4993, %v4992
    %v5075 = vpack.c.b16 %v4995, %v4994
    %v5076 = vpack.c.b16 %v4997, %v4996
    %v5077 = vpack.c.b16 %v4999, %v4998
    %v5078 = vpack.c.b16 %v5001, %v5000
    %v5079 = vpack.c.b16 %v5003, %v5002
    %v5080 = vpack.c.b16 %v5005, %v5004
    %v5081 = vpack.c.b16 %v5007, %v5006
    %v5082 = vpack.c.b16 %v5009, %v5008
    %v5083 = vpack.c.b16 %v5011, %v5010
    %v5084 = vpack.c.b16 %v5013, %v5012
    %v5085 = vpack.c.b16 %v5015, %v5014
    %v5086 = vpack.c.b16 %v5017, %v5016
    %v5087 = vpack.c.b16 %v5019, %v5018
    %v5088 = vpack.c.b16 %v5021, %v5020
    %v5089 = vpack.c.b16 %v5023, %v5022
    %v5090 = vpack.c.b16 %v5025, %v5024
    %v5091 = vpack.c.b16 %v5027, %v5026
    %5156 = vmatprep.subr.bf16.mxu0 0
    %5157 = vmatpush1.bf16.msra.mxu0 %v5028
    %5158 = vmatprep.subr.bf16.mxu0 0
    %5159 = vmatpush1.bf16.msra.mxu0 %v5029
    %5160 = vmatprep.subr.bf16.mxu0 0
    %5161 = vmatpush1.bf16.msra.mxu0 %v5030
    %5162 = vmatprep.subr.bf16.mxu0 0
    %5163 = vmatpush1.bf16.msra.mxu0 %v5031
    %5164 = vmatprep.subr.bf16.mxu0 0
    %5165 = vmatpush1.bf16.msra.mxu0 %v5032
    %5166 = vmatprep.subr.bf16.mxu0 0
    %5167 = vmatpush1.bf16.msra.mxu0 %v5033
    %5168 = vmatprep.subr.bf16.mxu0 0
    %5169 = vmatpush1.bf16.msra.mxu0 %v5034
    %5170 = vmatprep.subr.bf16.mxu0 0
    %5171 = vmatpush1.bf16.msra.mxu0 %v5035
    %5172 = vmatprep.subr.bf16.mxu0 0
    %5173 = vmatpush1.bf16.msra.mxu0 %v5036
    %5174 = vmatprep.subr.bf16.mxu0 0
    %5175 = vmatpush1.bf16.msra.mxu0 %v5037
    %5176 = vmatprep.subr.bf16.mxu0 0
    %5177 = vmatpush1.bf16.msra.mxu0 %v5038
    %5178 = vmatprep.subr.bf16.mxu0 0
    %5179 = vmatpush1.bf16.msra.mxu0 %v5039
    %5180 = vmatprep.subr.bf16.mxu0 0
    %5181 = vmatpush1.bf16.msra.mxu0 %v5040
    %5182 = vmatprep.subr.bf16.mxu0 0
    %5183 = vmatpush1.bf16.msra.mxu0 %v5041
    %5184 = vmatprep.subr.bf16.mxu0 0
    %5185 = vmatpush1.bf16.msra.mxu0 %v5042
    %5186 = vmatprep.subr.bf16.mxu0 0
    %5187 = vmatpush1.bf16.msra.mxu0 %v5043
    %5188 = vmatprep.mubr.bf16.mxu0 %v4630
    %5189 = vmatmul.mubr.bf16.gmra.mrb[0].mxu0 %v4629
    %v5190 = vpop.f32.mrb[0].mxu0
    %v5191 = vadd.f32 %v4770, %v5190
    %v5192 = vpop.f32.mrb[0].mxu0
    %v5193 = vpop.f32.mrb[0].mxu0
    %v5194 = vadd.f32 %v4770, %v5193
    %v5195 = vpop.f32.mrb[0].mxu0
    %5196 = vdwg.mxu0
    %5197 = vmatprep.subr.bf16.mxu0 0
    %5198 = vmatpush1.bf16.msra.mxu0 %v5044
    %5199 = vmatprep.subr.bf16.mxu0 0
    %5200 = vmatpush1.bf16.msra.mxu0 %v5045
    %5201 = vmatprep.subr.bf16.mxu0 0
    %5202 = vmatpush1.bf16.msra.mxu0 %v5046
    %5203 = vmatprep.subr.bf16.mxu0 0
    %5204 = vmatpush1.bf16.msra.mxu0 %v5047
    %5205 = vmatprep.subr.bf16.mxu0 0
    %5206 = vmatpush1.bf16.msra.mxu0 %v5048
    %5207 = vmatprep.subr.bf16.mxu0 0
    %5208 = vmatpush1.bf16.msra.mxu0 %v5049
    %5209 = vmatprep.subr.bf16.mxu0 0
    %5210 = vmatpush1.bf16.msra.mxu0 %v5050
    %5211 = vmatprep.subr.bf16.mxu0 0
    %5212 = vmatpush1.bf16.msra.mxu0 %v5051
    %5213 = vmatprep.subr.bf16.mxu0 0
    %5214 = vmatpush1.bf16.msra.mxu0 %v5052
    %5215 = vmatprep.subr.bf16.mxu0 0
    %5216 = vmatpush1.bf16.msra.mxu0 %v5053
    %5217 = vmatprep.subr.bf16.mxu0 0
    %5218 = vmatpush1.bf16.msra.mxu0 %v5054
    %5219 = vmatprep.subr.bf16.mxu0 0
    %5220 = vmatpush1.bf16.msra.mxu0 %v5055
    %5221 = vmatprep.subr.bf16.mxu0 0
    %5222 = vmatpush1.bf16.msra.mxu0 %v5056
    %5223 = vmatprep.subr.bf16.mxu0 0
    %5224 = vmatpush1.bf16.msra.mxu0 %v5057
    %5225 = vmatprep.subr.bf16.mxu0 0
    %5226 = vmatpush1.bf16.msra.mxu0 %v5058
    %5227 = vmatprep.subr.bf16.mxu0 0
    %5228 = vmatpush1.bf16.msra.mxu0 %v5059
    %5229 = vmatprep.mubr.bf16.mxu0 %v4632
    %5230 = vmatmul.mubr.bf16.gmra.mrb[0].mxu0 %v4631
    %v5231 = vpop.f32.mrb[0].mxu0
    %v5232 = vadd.f32 %v5191, %v5231
    %v5233 = vpop.f32.mrb[0].mxu0
    %v5234 = vpop.f32.mrb[0].mxu0
    %v5235 = vadd.f32 %v5194, %v5234
    %v5236 = vpop.f32.mrb[0].mxu0
    %5237 = vdwg.mxu0
    %5238 = vmatprep.subr.bf16.mxu0 0
    %5239 = vmatpush1.bf16.msra.mxu0 %v5060
    %5240 = vmatprep.subr.bf16.mxu0 0
    %5241 = vmatpush1.bf16.msra.mxu0 %v5061
    %5242 = vmatprep.subr.bf16.mxu0 0
    %5243 = vmatpush1.bf16.msra.mxu0 %v5062
    %5244 = vmatprep.subr.bf16.mxu0 0
    %5245 = vmatpush1.bf16.msra.mxu0 %v5063
    %5246 = vmatprep.subr.bf16.mxu0 0
    %5247 = vmatpush1.bf16.msra.mxu0 %v5064
    %5248 = vmatprep.subr.bf16.mxu0 0
    %5249 = vmatpush1.bf16.msra.mxu0 %v5065
    %5250 = vmatprep.subr.bf16.mxu0 0
    %5251 = vmatpush1.bf16.msra.mxu0 %v5066
    %5252 = vmatprep.subr.bf16.mxu0 0
    %5253 = vmatpush1.bf16.msra.mxu0 %v5067
    %5254 = vmatprep.subr.bf16.mxu0 0
    %5255 = vmatpush1.bf16.msra.mxu0 %v5068
    %5256 = vmatprep.subr.bf16.mxu0 0
    %5257 = vmatpush1.bf16.msra.mxu0 %v5069
    %5258 = vmatprep.subr.bf16.mxu0 0
    %5259 = vmatpush1.bf16.msra.mxu0 %v5070
    %5260 = vmatprep.subr.bf16.mxu0 0
    %5261 = vmatpush1.bf16.msra.mxu0 %v5071
    %5262 = vmatprep.subr.bf16.mxu0 0
    %5263 = vmatpush1.bf16.msra.mxu0 %v5072
    %5264 = vmatprep.subr.bf16.mxu0 0
    %5265 = vmatpush1.bf16.msra.mxu0 %v5073
    %5266 = vmatprep.subr.bf16.mxu0 0
    %5267 = vmatpush1.bf16.msra.mxu0 %v5074
    %5268 = vmatprep.subr.bf16.mxu0 0
    %5269 = vmatpush1.bf16.msra.mxu0 %v5075
    %5270 = vmatprep.mubr.bf16.mxu0 %v4634
    %5271 = vmatmul.mubr.bf16.gmra.mrb[0].mxu0 %v4633
    %v5272 = vpop.f32.mrb[0].mxu0
    %v5273 = vadd.f32 %v5232, %v5272
    %v5274 = vpop.f32.mrb[0].mxu0
    %v5275 = vpop.f32.mrb[0].mxu0
    %v5276 = vadd.f32 %v5235, %v5275
    %v5277 = vpop.f32.mrb[0].mxu0
    %5278 = vdwg.mxu0
    %5279 = vmatprep.subr.bf16.mxu0 0
    %5280 = vmatpush1.bf16.msra.mxu0 %v5076
    %5281 = vmatprep.subr.bf16.mxu0 0
    %5282 = vmatpush1.bf16.msra.mxu0 %v5077
    %5283 = vmatprep.subr.bf16.mxu0 0
    %5284 = vmatpush1.bf16.msra.mxu0 %v5078
    %5285 = vmatprep.subr.bf16.mxu0 0
    %5286 = vmatpush1.bf16.msra.mxu0 %v5079
    %5287 = vmatprep.subr.bf16.mxu0 0
    %5288 = vmatpush1.bf16.msra.mxu0 %v5080
    %5289 = vmatprep.subr.bf16.mxu0 0
    %5290 = vmatpush1.bf16.msra.mxu0 %v5081
    %5291 = vmatprep.subr.bf16.mxu0 0
    %5292 = vmatpush1.bf16.msra.mxu0 %v5082
    %5293 = vmatprep.subr.bf16.mxu0 0
    %5294 = vmatpush1.bf16.msra.mxu0 %v5083
    %5295 = vmatprep.subr.bf16.mxu0 0
    %5296 = vmatpush1.bf16.msra.mxu0 %v5084
    %5297 = vmatprep.subr.bf16.mxu0 0
    %5298 = vmatpush1.bf16.msra.mxu0 %v5085
    %5299 = vmatprep.subr.bf16.mxu0 0
    %5300 = vmatpush1.bf16.msra.mxu0 %v5086
    %5301 = vmatprep.subr.bf16.mxu0 0
    %5302 = vmatpush1.bf16.msra.mxu0 %v5087
    %5303 = vmatprep.subr.bf16.mxu0 0
    %5304 = vmatpush1.bf16.msra.mxu0 %v5088
    %5305 = vmatprep.subr.bf16.mxu0 0
    %5306 = vmatpush1.bf16.msra.mxu0 %v5089
    %5307 = vmatprep.subr.bf16.mxu0 0
    %5308 = vmatpush1.bf16.msra.mxu0 %v5090
    %5309 = vmatprep.subr.bf16.mxu0 0
    %5310 = vmatpush1.bf16.msra.mxu0 %v5091
    %5311 = vmatprep.mubr.bf16.mxu0 %v4636
    %5312 = vmatmul.mubr.bf16.gmra.mrb[0].mxu0 %v4635
    %v5313 = vpop.f32.mrb[0].mxu0
    %v5314 = vadd.f32 %v5273, %v5313
    %v5315 = vpop.f32.mrb[0].mxu0
    %v5316 = vpop.f32.mrb[0].mxu0
    %v5317 = vadd.f32 %v5276, %v5316
    %v5318 = vpop.f32.mrb[0].mxu0
    %5319 = vdwg.mxu0
    %5320 = vst [vmem:[#allocation14] sm:$0xff] %v5314
    %5321 = vst [vmem:[#allocation14 + $0x8] sm:$0xff] %v5317
    // Predicated region
    $region58: #{tpu_custom_call.1} parent=1 // pred_check
      _
    $region59: #{tpu_custom_call.1} parent=1 // pred_check_branch
      %5323 = sbr.rel (0) target = $region61
    $region60: #{tpu_custom_call.1} parent=1 // pred_region
      %s5325 = ssub.s32 256, 256
      %5326 = vsyncadd [#allocation4], %s5325
      %s5327 = sshll.u32 [#allocation14], 4
      %s5328 = int_to_ptr.vmem [resolvable:$true] %s5327
      %5333 = dma.vmem_to_hbm [thread:$0]  %s5328, 256, %s7, [#allocation4], 128, 128, 8
    $region61: #{tpu_custom_call.1} parent=1 // pred_fallthru
      _
    // Predicated region
    $region62: #{tpu_custom_call.1} parent=1 // pred_check
      _
    $region63: #{tpu_custom_call.1} parent=1 // pred_check_branch
      %5335 = sbr.rel (0) target = $region65
    $region64: #{tpu_custom_call.1} parent=1 // pred_region
      %5336 = dma.done [#allocation4], 256
    $region65: #{tpu_custom_call.1} parent=1 // pred_fallthru
      _
    %5337 = vsyncpa [#allocation3], 1
    %5338 = vsyncpa [#allocation6], 1
    %5339 = vsyncpa [#allocation9], 1
    %5340 = vsyncpa [#allocation12], 1
    %5341 = vsyncpa [#allocation4], 1

// kernel: tpu_custom_call.1
$region0: #{tpu_custom_call.1}
  #allocation0 [shape = 'u32[]', space=smem, size = 0x4, offset = 0x4, fixed_abs, tag = 'smem constant byte address 0x4 - core index']
  #allocation1 [shape = 'u32[144,128]{1,0:T(1,128)}', space=vmem, size = 0x12000, scoped, tag = 'internal scratch']
  %s0 = inlined_call_operand.hbm [shape: bf16[16,128], index: 0, kind: input, shape index: {}]
  %s1 = inlined_call_operand.hbm [shape: bf16[128,1024], index: 1, kind: input, shape index: {}]
  %s2 = inlined_call_operand.hbm [shape: f32[1,1024], index: 2, kind: input, shape index: {}]
  %s3 = inlined_call_operand.hbm [shape: bf16[1024,1024], index: 3, kind: input, shape index: {}]
  %s4 = inlined_call_operand.hbm [shape: f32[1,1024], index: 4, kind: input, shape index: {}]
  %s5 = inlined_call_operand.hbm [shape: bf16[1024,128], index: 5, kind: input, shape index: {}]
  %s6 = inlined_call_operand.hbm [shape: f32[1,128], index: 6, kind: input, shape index: {}]
  %s7 = inlined_call_operand.hbm [shape: f32[16,128], index: 7, kind: output, shape index: {}]
  %s8 = sld [smem:[#allocation0]]
  $region66: #{tpu_custom_call.1} parent=0
    _
  %s10 = ssub.s32 1, %s8
  %s11 = scalar_select 0, %s10, %s8
  $region1: #{tpu_custom_call.1} parent=0
    #allocation2 [shape = 'u8[4096]{0}', space=vmem, size = 0x1000, scoped, tag = 'input window, operand 0, single buffered']
    #allocation3 [shape = 's32[1]{0}', space=sflag, size = 0x4, scoped, tag = 'scoped memory for tpu_custom_call.1']
    #allocation4 [shape = 's32[1]{0}', space=sflag, size = 0x4, scoped, tag = 'scoped memory for tpu_custom_call.1']
    #allocation5 [shape = 'u8[262144]{0}', space=vmem, size = 0x40000, scoped, tag = 'input window, operand 1, single buffered']
    #allocation6 [shape = 's32[1]{0}', space=sflag, size = 0x4, scoped, tag = 'scoped memory for tpu_custom_call.1']
    #allocation7 [shape = 'u8[4096]{0}', space=vmem, size = 0x1000, scoped, tag = 'input window, operand 2, single buffered']
    #allocation8 [shape = 'u8[2097152]{0}', space=vmem, size = 0x200000, scoped, tag = 'input window, operand 3, single buffered']
    #allocation9 [shape = 's32[1]{0}', space=sflag, size = 0x4, scoped, tag = 'scoped memory for tpu_custom_call.1']
    #allocation10 [shape = 'u8[4096]{0}', space=vmem, size = 0x1000, scoped, tag = 'input window, operand 4, single buffered']
    #allocation11 [shape = 'u8[262144]{0}', space=vmem, size = 0x40000, scoped, tag = 'input window, operand 5, single buffered']
    #allocation12 [shape = 's32[1]{0}', space=sflag, size = 0x4, scoped, tag = 'scoped memory for tpu_custom_call.1']
    #allocation13 [shape = 'u8[512]{0}', space=vmem, size = 0x400, scoped, tag = 'input window, operand 6, single buffered']
    #allocation14 [shape = 'u8[8192]{0}', space=vmem, size = 0x2000, scoped, tag = 'output window, operand 0, single buffered']
    %12 = vsyncpa [#allocation3], 0
    %13 = vsyncpa [#allocation6], 0
    %14 = vsyncpa [#allocation9], 0
    %15 = vsyncpa [#allocation12], 0
    %16 = vsyncpa [#allocation4], 0
    // Predicated region
    $region2: #{tpu_custom_call.1} parent=1 // pred_check
      _
    $region3: #{tpu_custom_call.1} parent=1 // pred_check_branch
      %18 = sbr.rel (0) target = $region5
    $region4: #{tpu_custom_call.1} parent=1 // pred_region
      %s20 = ssub.s32 128, 128
      %21 = vsyncadd [#allocation3], %s20
      %s22 = sshll.u32 [#allocation2], 4
      %s23 = int_to_ptr.vmem [resolvable:$true] %s22
      %28 = dma.hbm_to_vmem [thread:$0]  %s0, 128, %s23, [#allocation3], 64, 64, 4
    $region5: #{tpu_custom_call.1} parent=1 // pred_fallthru
      _
    // Predicated region
    $region6: #{tpu_custom_call.1} parent=1 // pred_check
      _
    $region7: #{tpu_custom_call.1} parent=1 // pred_check_branch
      %30 = sbr.rel (0) target = $region9
    $region8: #{tpu_custom_call.1} parent=1 // pred_region
      %s32 = ssub.s32 8192, 8192
      %33 = vsyncadd [#allocation6], %s32
      %s34 = sshll.u32 [#allocation5], 4
      %s35 = int_to_ptr.vmem [resolvable:$true] %s34
      %40 = dma.hbm_to_vmem [thread:$0]  %s1, 8192, %s35, [#allocation6], 512, 512, 32
    $region9: #{tpu_custom_call.1} parent=1 // pred_fallthru
      _
    // Predicated region
    $region10: #{tpu_custom_call.1} parent=1 // pred_check
      _
    $region11: #{tpu_custom_call.1} parent=1 // pred_check_branch
      %42 = sbr.rel (0) target = $region13
    $region12: #{tpu_custom_call.1} parent=1 // pred_region
      %s44 = ssub.s32 128, 128
      %45 = vsyncadd [#allocation6], %s44
      %s47 = sshll.u32 [#allocation7], 4
      %s48 = int_to_ptr.vmem [resolvable:$true] %s47
      %50 = dma.hbm_to_vmem [thread:$0]  %s2, 128, %s48, [#allocation6]
    $region13: #{tpu_custom_call.1} parent=1 // pred_fallthru
      _
    // Predicated region
    $region14: #{tpu_custom_call.1} parent=1 // pred_check
      _
    $region15: #{tpu_custom_call.1} parent=1 // pred_check_branch
      %52 = sbr.rel (0) target = $region17
    $region16: #{tpu_custom_call.1} parent=1 // pred_region
      %s54 = ssub.s32 65536, 65536
      %55 = vsyncadd [#allocation9], %s54
      %s56 = sshll.u32 [#allocation8], 4
      %s57 = int_to_ptr.vmem [resolvable:$true] %s56
      %62 = dma.hbm_to_vmem [thread:$0]  %s3, 65536, %s57, [#allocation9], 512, 512, 32
    $region17: #{tpu_custom_call.1} parent=1 // pred_fallthru
      _
    // Predicated region
    $region18: #{tpu_custom_call.1} parent=1 // pred_check
      _
    $region19: #{tpu_custom_call.1} parent=1 // pred_check_branch
      %64 = sbr.rel (0) target = $region21
    $region20: #{tpu_custom_call.1} parent=1 // pred_region
      %s66 = ssub.s32 128, 128
      %67 = vsyncadd [#allocation9], %s66
      %s69 = sshll.u32 [#allocation10], 4
      %s70 = int_to_ptr.vmem [resolvable:$true] %s69
      %72 = dma.hbm_to_vmem [thread:$0]  %s4, 128, %s70, [#allocation9]
    $region21: #{tpu_custom_call.1} parent=1 // pred_fallthru
      _
    // Predicated region
    $region22: #{tpu_custom_call.1} parent=1 // pred_check
      _
    $region23: #{tpu_custom_call.1} parent=1 // pred_check_branch
      %74 = sbr.rel (0) target = $region25
    $region24: #{tpu_custom_call.1} parent=1 // pred_region
      %s76 = ssub.s32 8192, 8192
      %77 = vsyncadd [#allocation12], %s76
      %s78 = sshll.u32 [#allocation11], 4
      %s79 = int_to_ptr.vmem [resolvable:$true] %s78
      %84 = dma.hbm_to_vmem [thread:$0]  %s5, 8192, %s79, [#allocation12], 64, 64, 4
    $region25: #{tpu_custom_call.1} parent=1 // pred_fallthru
      _
    // Predicated region
    $region26: #{tpu_custom_call.1} parent=1 // pred_check
      _
    $region27: #{tpu_custom_call.1} parent=1 // pred_check_branch
      %86 = sbr.rel (0) target = $region29
    $region28: #{tpu_custom_call.1} parent=1 // pred_region
      %s88 = ssub.s32 16, 16
      %89 = vsyncadd [#allocation12], %s88
      %s91 = sshll.u32 [#allocation13], 4
      %s92 = int_to_ptr.vmem [resolvable:$true] %s91
      %94 = dma.hbm_to_vmem [thread:$0]  %s6, 16, %s92, [#allocation12]
    $region29: #{tpu_custom_call.1} parent=1 // pred_fallthru
      _
    // Predicated region
    $region30: #{tpu_custom_call.1} parent=1 // pred_check
      _
    $region31: #{tpu_custom_call.1} parent=1 // pred_check_branch
      %96 = sbr.rel (0) target = $region33
    $region32: #{tpu_custom_call.1} parent=1 // pred_region
      %97 = dma.done [#allocation3], 128
    $region33: #{tpu_custom_call.1} parent=1 // pred_fallthru
      _
    // Predicated region
    $region34: #{tpu_custom_call.1} parent=1 // pred_check
      _
    $region35: #{tpu_custom_call.1} parent=1 // pred_check_branch
      %99 = sbr.rel (0) target = $region37
    $region36: #{tpu_custom_call.1} parent=1 // pred_region
      %100 = dma.done [#allocation6], 8192
    $region37: #{tpu_custom_call.1} parent=1 // pred_fallthru
      _
    // Predicated region
    $region38: #{tpu_custom_call.1} parent=1 // pred_check
      _
    $region39: #{tpu_custom_call.1} parent=1 // pred_check_branch
      %102 = sbr.rel (0) target = $region41
    $region40: #{tpu_custom_call.1} parent=1 // pred_region
      %103 = dma.done [#allocation6], 128
    $region41: #{tpu_custom_call.1} parent=1 // pred_fallthru
      _
    // Predicated region
    $region42: #{tpu_custom_call.1} parent=1 // pred_check
      _
    $region43: #{tpu_custom_call.1} parent=1 // pred_check_branch
      %105 = sbr.rel (0) target = $region45
    $region44: #{tpu_custom_call.1} parent=1 // pred_region
      %106 = dma.done [#allocation9], 65536
    $region45: #{tpu_custom_call.1} parent=1 // pred_fallthru
      _
    // Predicated region
    $region46: #{tpu_custom_call.1} parent=1 // pred_check
      _
    $region47: #{tpu_custom_call.1} parent=1 // pred_check_branch
      %108 = sbr.rel (0) target = $region49
    $region48: #{tpu_custom_call.1} parent=1 // pred_region
      %109 = dma.done [#allocation9], 128
    $region49: #{tpu_custom_call.1} parent=1 // pred_fallthru
      _
    // Predicated region
    $region50: #{tpu_custom_call.1} parent=1 // pred_check
      _
    $region51: #{tpu_custom_call.1} parent=1 // pred_check_branch
      %111 = sbr.rel (0) target = $region53
    $region52: #{tpu_custom_call.1} parent=1 // pred_region
      %112 = dma.done [#allocation12], 8192
    $region53: #{tpu_custom_call.1} parent=1 // pred_fallthru
      _
    // Predicated region
    $region54: #{tpu_custom_call.1} parent=1 // pred_check
      _
    $region55: #{tpu_custom_call.1} parent=1 // pred_check_branch
      %114 = sbr.rel (0) target = $region57
    $region56: #{tpu_custom_call.1} parent=1 // pred_region
      %115 = dma.done [#allocation12], 16
    $region57: #{tpu_custom_call.1} parent=1 // pred_fallthru
      _
    %v117 = vld [vmem:[#allocation2] sm:$0xf]
    %v118 = vld [vmem:[#allocation2 + $0x4] sm:$0xf]
    %v119 = vld [vmem:[#allocation5] sm:$0xff]
    %v120 = vld [vmem:[#allocation5 + $0x8] sm:$0xff]
    %v121 = vld [vmem:[#allocation5 + $0x10] sm:$0xff]
    %v122 = vld [vmem:[#allocation5 + $0x18] sm:$0xff]
    %v123 = vld [vmem:[#allocation5 + $0x20] sm:$0xff]
    %v124 = vld [vmem:[#allocation5 + $0x28] sm:$0xff]
    %v125 = vld [vmem:[#allocation5 + $0x30] sm:$0xff]
    %v126 = vld [vmem:[#allocation5 + $0x38] sm:$0xff]
    %v127 = vld [vmem:[#allocation5 + $0x40] sm:$0xff]
    %v128 = vld [vmem:[#allocation5 + $0x48] sm:$0xff]
    %v129 = vld [vmem:[#allocation5 + $0x50] sm:$0xff]
    %v130 = vld [vmem:[#allocation5 + $0x58] sm:$0xff]
    %v131 = vld [vmem:[#allocation5 + $0x60] sm:$0xff]
    %v132 = vld [vmem:[#allocation5 + $0x68] sm:$0xff]
    %v133 = vld [vmem:[#allocation5 + $0x70] sm:$0xff]
    %v134 = vld [vmem:[#allocation5 + $0x78] sm:$0xff]
    %v135 = vld [vmem:[#allocation5 + $0x80] sm:$0xff]
    %v136 = vld [vmem:[#allocation5 + $0x88] sm:$0xff]
    %v137 = vld [vmem:[#allocation5 + $0x90] sm:$0xff]
    %v138 = vld [vmem:[#allocation5 + $0x98] sm:$0xff]
    %v139 = vld [vmem:[#allocation5 + $0xa0] sm:$0xff]
    %v140 = vld [vmem:[#allocation5 + $0xa8] sm:$0xff]
    %v141 = vld [vmem:[#allocation5 + $0xb0] sm:$0xff]
    %v142 = vld [vmem:[#allocation5 + $0xb8] sm:$0xff]
    %v143 = vld [vmem:[#allocation5 + $0xc0] sm:$0xff]
    %v144 = vld [vmem:[#allocation5 + $0xc8] sm:$0xff]
    %v145 = vld [vmem:[#allocation5 + $0xd0] sm:$0xff]
    %v146 = vld [vmem:[#allocation5 + $0xd8] sm:$0xff]
    %v147 = vld [vmem:[#allocation5 + $0xe0] sm:$0xff]
    %v148 = vld [vmem:[#allocation5 + $0xe8] sm:$0xff]
    %v149 = vld [vmem:[#allocation5 + $0xf0] sm:$0xff]
    %v150 = vld [vmem:[#allocation5 + $0xf8] sm:$0xff]
    %v151 = vld [vmem:[#allocation5 + $0x100] sm:$0xff]
    %v152 = vld [vmem:[#allocation5 + $0x108] sm:$0xff]
    %v153 = vld [vmem:[#allocation5 + $0x110] sm:$0xff]
    %v154 = vld [vmem:[#allocation5 + $0x118] sm:$0xff]
    %v155 = vld [vmem:[#allocation5 + $0x120] sm:$0xff]
    %v156 = vld [vmem:[#allocation5 + $0x128] sm:$0xff]
    %v157 = vld [vmem:[#allocation5 + $0x130] sm:$0xff]
    %v158 = vld [vmem:[#allocation5 + $0x138] sm:$0xff]
    %v159 = vld [vmem:[#allocation5 + $0x140] sm:$0xff]
    %v160 = vld [vmem:[#allocation5 + $0x148] sm:$0xff]
    %v161 = vld [vmem:[#allocation5 + $0x150] sm:$0xff]
    %v162 = vld [vmem:[#allocation5 + $0x158] sm:$0xff]
    %v163 = vld [vmem:[#allocation5 + $0x160] sm:$0xff]
    %v164 = vld [vmem:[#allocation5 + $0x168] sm:$0xff]
    %v165 = vld [vmem:[#allocation5 + $0x170] sm:$0xff]
    %v166 = vld [vmem:[#allocation5 + $0x178] sm:$0xff]
    %v167 = vld [vmem:[#allocation5 + $0x180] sm:$0xff]
    %v168 = vld [vmem:[#allocation5 + $0x188] sm:$0xff]
    %v169 = vld [vmem:[#allocation5 + $0x190] sm:$0xff]
    %v170 = vld [vmem:[#allocation5 + $0x198] sm:$0xff]
    %v171 = vld [vmem:[#allocation5 + $0x1a0] sm:$0xff]
    %v172 = vld [vmem:[#allocation5 + $0x1a8] sm:$0xff]
    %v173 = vld [vmem:[#allocation5 + $0x1b0] sm:$0xff]
    %v174 = vld [vmem:[#allocation5 + $0x1b8] sm:$0xff]
    %v175 = vld [vmem:[#allocation5 + $0x1c0] sm:$0xff]
    %v176 = vld [vmem:[#allocation5 + $0x1c8] sm:$0xff]
    %v177 = vld [vmem:[#allocation5 + $0x1d0] sm:$0xff]
    %v178 = vld [vmem:[#allocation5 + $0x1d8] sm:$0xff]
    %v179 = vld [vmem:[#allocation5 + $0x1e0] sm:$0xff]
    %v180 = vld [vmem:[#allocation5 + $0x1e8] sm:$0xff]
    %v181 = vld [vmem:[#allocation5 + $0x1f0] sm:$0xff]
    %v182 = vld [vmem:[#allocation5 + $0x1f8] sm:$0xff]
    %v183 = vld [vmem:[#allocation7] sm:$0xff]
    %v185 = vlaneseq
    %v186 = vshrl.u32 %v185, 7
    %v187 = vsub.s32 0, %v186
    %v188 = vrot.slane %v183, %v187
    %v189 = vlaneseq
    %v190 = vshrl.u32 %v189, 7
    %v191 = vsub.s32 1, %v190
    %v192 = vrot.slane %v183, %v191
    %v193 = vlaneseq
    %v194 = vshrl.u32 %v193, 7
    %v195 = vsub.s32 2, %v194
    %v196 = vrot.slane %v183, %v195
    %v197 = vlaneseq
    %v198 = vshrl.u32 %v197, 7
    %v199 = vsub.s32 3, %v198
    %v200 = vrot.slane %v183, %v199
    %v201 = vlaneseq
    %v202 = vshrl.u32 %v201, 7
    %v203 = vsub.s32 4, %v202
    %v204 = vrot.slane %v183, %v203
    %v205 = vlaneseq
    %v206 = vshrl.u32 %v205, 7
    %v207 = vsub.s32 5, %v206
    %v208 = vrot.slane %v183, %v207
    %v209 = vlaneseq
    %v210 = vshrl.u32 %v209, 7
    %v211 = vsub.s32 6, %v210
    %v212 = vrot.slane %v183, %v211
    %v213 = vlaneseq
    %v214 = vshrl.u32 %v213, 7
    %v215 = vsub.s32 7, %v214
    %v216 = vrot.slane %v183, %v215
    %v227 = vunpack.c.l.b16 %v117
    %v228 = vunpack.c.l.b16 %v118
    %v229 = vpack.c.b16 %v228, %v227
    %v295 = vunpack.c.l.b16 %v119
    %v296 = vunpack.c.h.b16 %v119
    %v297 = vunpack.c.l.b16 %v120
    %v298 = vunpack.c.h.b16 %v120
    %v299 = vunpack.c.l.b16 %v121
    %v300 = vunpack.c.h.b16 %v121
    %v301 = vunpack.c.l.b16 %v122
    %v302 = vunpack.c.h.b16 %v122
    %v303 = vunpack.c.l.b16 %v123
    %v304 = vunpack.c.h.b16 %v123
    %v305 = vunpack.c.l.b16 %v124
    %v306 = vunpack.c.h.b16 %v124
    %v307 = vunpack.c.l.b16 %v125
    %v308 = vunpack.c.h.b16 %v125
    %v309 = vunpack.c.l.b16 %v126
    %v310 = vunpack.c.h.b16 %v126
    %v311 = vunpack.c.l.b16 %v127
    %v312 = vunpack.c.h.b16 %v127
    %v313 = vunpack.c.l.b16 %v128
    %v314 = vunpack.c.h.b16 %v128
    %v315 = vunpack.c.l.b16 %v129
    %v316 = vunpack.c.h.b16 %v129
    %v317 = vunpack.c.l.b16 %v130
    %v318 = vunpack.c.h.b16 %v130
    %v319 = vunpack.c.l.b16 %v131
    %v320 = vunpack.c.h.b16 %v131
    %v321 = vunpack.c.l.b16 %v132
    %v322 = vunpack.c.h.b16 %v132
    %v323 = vunpack.c.l.b16 %v133
    %v324 = vunpack.c.h.b16 %v133
    %v325 = vunpack.c.l.b16 %v134
    %v326 = vunpack.c.h.b16 %v134
    %v327 = vunpack.c.l.b16 %v135
    %v328 = vunpack.c.h.b16 %v135
    %v329 = vunpack.c.l.b16 %v136
    %v330 = vunpack.c.h.b16 %v136
    %v331 = vunpack.c.l.b16 %v137
    %v332 = vunpack.c.h.b16 %v137
    %v333 = vunpack.c.l.b16 %v138
    %v334 = vunpack.c.h.b16 %v138
    %v335 = vunpack.c.l.b16 %v139
    %v336 = vunpack.c.h.b16 %v139
    %v337 = vunpack.c.l.b16 %v140
    %v338 = vunpack.c.h.b16 %v140
    %v339 = vunpack.c.l.b16 %v141
    %v340 = vunpack.c.h.b16 %v141
    %v341 = vunpack.c.l.b16 %v142
    %v342 = vunpack.c.h.b16 %v142
    %v343 = vunpack.c.l.b16 %v143
    %v344 = vunpack.c.h.b16 %v143
    %v345 = vunpack.c.l.b16 %v144
    %v346 = vunpack.c.h.b16 %v144
    %v347 = vunpack.c.l.b16 %v145
    %v348 = vunpack.c.h.b16 %v145
    %v349 = vunpack.c.l.b16 %v146
    %v350 = vunpack.c.h.b16 %v146
    %v351 = vunpack.c.l.b16 %v147
    %v352 = vunpack.c.h.b16 %v147
    %v353 = vunpack.c.l.b16 %v148
    %v354 = vunpack.c.h.b16 %v148
    %v355 = vunpack.c.l.b16 %v149
    %v356 = vunpack.c.h.b16 %v149
    %v357 = vunpack.c.l.b16 %v150
    %v358 = vunpack.c.h.b16 %v150
    %v359 = vunpack.c.l.b16 %v151
    %v360 = vunpack.c.h.b16 %v151
    %v361 = vunpack.c.l.b16 %v152
    %v362 = vunpack.c.h.b16 %v152
    %v363 = vunpack.c.l.b16 %v153
    %v364 = vunpack.c.h.b16 %v153
    %v365 = vunpack.c.l.b16 %v154
    %v366 = vunpack.c.h.b16 %v154
    %v367 = vunpack.c.l.b16 %v155
    %v368 = vunpack.c.h.b16 %v155
    %v369 = vunpack.c.l.b16 %v156
    %v370 = vunpack.c.h.b16 %v156
    %v371 = vunpack.c.l.b16 %v157
    %v372 = vunpack.c.h.b16 %v157
    %v373 = vunpack.c.l.b16 %v158
    %v374 = vunpack.c.h.b16 %v158
    %v375 = vunpack.c.l.b16 %v159
    %v376 = vunpack.c.h.b16 %v159
    %v377 = vunpack.c.l.b16 %v160
    %v378 = vunpack.c.h.b16 %v160
    %v379 = vunpack.c.l.b16 %v161
    %v380 = vunpack.c.h.b16 %v161
    %v381 = vunpack.c.l.b16 %v162
    %v382 = vunpack.c.h.b16 %v162
    %v383 = vunpack.c.l.b16 %v163
    %v384 = vunpack.c.h.b16 %v163
    %v385 = vunpack.c.l.b16 %v164
    %v386 = vunpack.c.h.b16 %v164
    %v387 = vunpack.c.l.b16 %v165
    %v388 = vunpack.c.h.b16 %v165
    %v389 = vunpack.c.l.b16 %v166
    %v390 = vunpack.c.h.b16 %v166
    %v391 = vunpack.c.l.b16 %v167
    %v392 = vunpack.c.h.b16 %v167
    %v393 = vunpack.c.l.b16 %v168
    %v394 = vunpack.c.h.b16 %v168
    %v395 = vunpack.c.l.b16 %v169
    %v396 = vunpack.c.h.b16 %v169
    %v397 = vunpack.c.l.b16 %v170
    %v398 = vunpack.c.h.b16 %v170
    %v399 = vunpack.c.l.b16 %v171
    %v400 = vunpack.c.h.b16 %v171
    %v401 = vunpack.c.l.b16 %v172
    %v402 = vunpack.c.h.b16 %v172
    %v403 = vunpack.c.l.b16 %v173
    %v404 = vunpack.c.h.b16 %v173
    %v405 = vunpack.c.l.b16 %v174
    %v406 = vunpack.c.h.b16 %v174
    %v407 = vunpack.c.l.b16 %v175
    %v408 = vunpack.c.h.b16 %v175
    %v409 = vunpack.c.l.b16 %v176
    %v410 = vunpack.c.h.b16 %v176
    %v411 = vunpack.c.l.b16 %v177
    %v412 = vunpack.c.h.b16 %v177
    %v413 = vunpack.c.l.b16 %v178
    %v414 = vunpack.c.h.b16 %v178
    %v415 = vunpack.c.l.b16 %v179
    %v416 = vunpack.c.h.b16 %v179
    %v417 = vunpack.c.l.b16 %v180
    %v418 = vunpack.c.h.b16 %v180
    %v419 = vunpack.c.l.b16 %v181
    %v420 = vunpack.c.h.b16 %v181
    %v421 = vunpack.c.l.b16 %v182
    %v422 = vunpack.c.h.b16 %v182
    %v423 = vpack.c.b16 %v303, %v295
    %v424 = vpack.c.b16 %v304, %v296
    %v425 = vpack.c.b16 %v305, %v297
    %v426 = vpack.c.b16 %v306, %v298
    %v427 = vpack.c.b16 %v307, %v299
    %v428 = vpack.c.b16 %v308, %v300
    %v429 = vpack.c.b16 %v309, %v301
    %v430 = vpack.c.b16 %v310, %v302
    %v431 = vpack.c.b16 %v319, %v311
    %v432 = vpack.c.b16 %v320, %v312
    %v433 = vpack.c.b16 %v321, %v313
    %v434 = vpack.c.b16 %v322, %v314
    %v435 = vpack.c.b16 %v323, %v315
    %v436 = vpack.c.b16 %v324, %v316
    %v437 = vpack.c.b16 %v325, %v317
    %v438 = vpack.c.b16 %v326, %v318
    %v439 = vpack.c.b16 %v335, %v327
    %v440 = vpack.c.b16 %v336, %v328
    %v441 = vpack.c.b16 %v337, %v329
    %v442 = vpack.c.b16 %v338, %v330
    %v443 = vpack.c.b16 %v339, %v331
    %v444 = vpack.c.b16 %v340, %v332
    %v445 = vpack.c.b16 %v341, %v333
    %v446 = vpack.c.b16 %v342, %v334
    %v447 = vpack.c.b16 %v351, %v343
    %v448 = vpack.c.b16 %v352, %v344
    %v449 = vpack.c.b16 %v353, %v345
    %v450 = vpack.c.b16 %v354, %v346
    %v451 = vpack.c.b16 %v355, %v347
    %v452 = vpack.c.b16 %v356, %v348
    %v453 = vpack.c.b16 %v357, %v349
    %v454 = vpack.c.b16 %v358, %v350
    %v455 = vpack.c.b16 %v367, %v359
    %v456 = vpack.c.b16 %v368, %v360
    %v457 = vpack.c.b16 %v369, %v361
    %v458 = vpack.c.b16 %v370, %v362
    %v459 = vpack.c.b16 %v371, %v363
    %v460 = vpack.c.b16 %v372, %v364
    %v461 = vpack.c.b16 %v373, %v365
    %v462 = vpack.c.b16 %v374, %v366
    %v463 = vpack.c.b16 %v383, %v375
    %v464 = vpack.c.b16 %v384, %v376
    %v465 = vpack.c.b16 %v385, %v377
    %v466 = vpack.c.b16 %v386, %v378
    %v467 = vpack.c.b16 %v387, %v379
    %v468 = vpack.c.b16 %v388, %v380
    %v469 = vpack.c.b16 %v389, %v381
    %v470 = vpack.c.b16 %v390, %v382
    %v471 = vpack.c.b16 %v399, %v391
    %v472 = vpack.c.b16 %v400, %v392
    %v473 = vpack.c.b16 %v401, %v393
    %v474 = vpack.c.b16 %v402, %v394
    %v475 = vpack.c.b16 %v403, %v395
    %v476 = vpack.c.b16 %v404, %v396
    %v477 = vpack.c.b16 %v405, %v397
    %v478 = vpack.c.b16 %v406, %v398
    %v479 = vpack.c.b16 %v415, %v407
    %v480 = vpack.c.b16 %v416, %v408
    %v481 = vpack.c.b16 %v417, %v409
    %v482 = vpack.c.b16 %v418, %v410
    %v483 = vpack.c.b16 %v419, %v411
    %v484 = vpack.c.b16 %v420, %v412
    %v485 = vpack.c.b16 %v421, %v413
    %v486 = vpack.c.b16 %v422, %v414
    %551 = vmatprep.subr.bf16.mxu0 %v424
    %552 = vmatpush1.bf16.msra.mxu0 %v423
    %553 = vmatprep.subr.bf16.mxu0 %v432
    %554 = vmatpush1.bf16.msra.mxu0 %v431
    %555 = vmatprep.subr.bf16.mxu0 %v440
    %556 = vmatpush1.bf16.msra.mxu0 %v439
    %557 = vmatprep.subr.bf16.mxu0 %v448
    %558 = vmatpush1.bf16.msra.mxu0 %v447
    %559 = vmatprep.subr.bf16.mxu0 %v456
    %560 = vmatpush1.bf16.msra.mxu0 %v455
    %561 = vmatprep.subr.bf16.mxu0 %v464
    %562 = vmatpush1.bf16.msra.mxu0 %v463
    %563 = vmatprep.subr.bf16.mxu0 %v472
    %564 = vmatpush1.bf16.msra.mxu0 %v471
    %565 = vmatprep.subr.bf16.mxu0 %v480
    %566 = vmatpush1.bf16.msra.mxu0 %v479
    %567 = vmatprep.subr.bf16.mxu0 0
    %568 = vmatpush1.bf16.msra.mxu0 0
    %569 = vmatprep.subr.bf16.mxu0 0
    %570 = vmatpush1.bf16.msra.mxu0 0
    %571 = vmatprep.subr.bf16.mxu0 0
    %572 = vmatpush1.bf16.msra.mxu0 0
    %573 = vmatprep.subr.bf16.mxu0 0
    %574 = vmatpush1.bf16.msra.mxu0 0
    %575 = vmatprep.subr.bf16.mxu0 0
    %576 = vmatpush1.bf16.msra.mxu0 0
    %577 = vmatprep.subr.bf16.mxu0 0
    %578 = vmatpush1.bf16.msra.mxu0 0
    %579 = vmatprep.subr.bf16.mxu0 0
    %580 = vmatpush1.bf16.msra.mxu0 0
    %581 = vmatprep.subr.bf16.mxu0 0
    %582 = vmatpush1.bf16.msra.mxu0 0
    %583 = vmatprep.mubr.bf16.mxu0 0
    %584 = vmatmul.mubr.bf16.gmra.mrb[0].mxu0 %v229
    %v585 = vpop.f32.mrb[0].mxu0
    %v586 = vadd.f32 %v188, %v585
    %v587 = vpop.f32.mrb[0].mxu0
    %v588 = vadd.f32 %v192, %v587
    %v589 = vpop.f32.mrb[0].mxu0
    %v590 = vadd.f32 %v188, %v589
    %v591 = vpop.f32.mrb[0].mxu0
    %v592 = vadd.f32 %v192, %v591
    %593 = vdwg.mxu0
    %594 = vmatprep.subr.bf16.mxu0 %v426
    %595 = vmatpush1.bf16.msra.mxu0 %v425
    %596 = vmatprep.subr.bf16.mxu0 %v434
    %597 = vmatpush1.bf16.msra.mxu0 %v433
    %598 = vmatprep.subr.bf16.mxu0 %v442
    %599 = vmatpush1.bf16.msra.mxu0 %v441
    %600 = vmatprep.subr.bf16.mxu0 %v450
    %601 = vmatpush1.bf16.msra.mxu0 %v449
    %602 = vmatprep.subr.bf16.mxu0 %v458
    %603 = vmatpush1.bf16.msra.mxu0 %v457
    %604 = vmatprep.subr.bf16.mxu0 %v466
    %605 = vmatpush1.bf16.msra.mxu0 %v465
    %606 = vmatprep.subr.bf16.mxu0 %v474
    %607 = vmatpush1.bf16.msra.mxu0 %v473
    %608 = vmatprep.subr.bf16.mxu0 %v482
    %609 = vmatpush1.bf16.msra.mxu0 %v481
    %610 = vmatprep.subr.bf16.mxu0 0
    %611 = vmatpush1.bf16.msra.mxu0 0
    %612 = vmatprep.subr.bf16.mxu0 0
    %613 = vmatpush1.bf16.msra.mxu0 0
    %614 = vmatprep.subr.bf16.mxu0 0
    %615 = vmatpush1.bf16.msra.mxu0 0
    %616 = vmatprep.subr.bf16.mxu0 0
    %617 = vmatpush1.bf16.msra.mxu0 0
    %618 = vmatprep.subr.bf16.mxu0 0
    %619 = vmatpush1.bf16.msra.mxu0 0
    %620 = vmatprep.subr.bf16.mxu0 0
    %621 = vmatpush1.bf16.msra.mxu0 0
    %622 = vmatprep.subr.bf16.mxu0 0
    %623 = vmatpush1.bf16.msra.mxu0 0
    %624 = vmatprep.subr.bf16.mxu0 0
    %625 = vmatpush1.bf16.msra.mxu0 0
    %626 = vmatprep.mubr.bf16.mxu0 0
    %627 = vmatmul.mubr.bf16.gmra.mrb[0].mxu0 %v229
    %v628 = vpop.f32.mrb[0].mxu0
    %v629 = vadd.f32 %v196, %v628
    %v630 = vpop.f32.mrb[0].mxu0
    %v631 = vadd.f32 %v200, %v630
    %v632 = vpop.f32.mrb[0].mxu0
    %v633 = vadd.f32 %v196, %v632
    %v634 = vpop.f32.mrb[0].mxu0
    %v635 = vadd.f32 %v200, %v634
    %636 = vdwg.mxu0
    %637 = vmatprep.subr.bf16.mxu0 %v428
    %638 = vmatpush1.bf16.msra.mxu0 %v427
    %639 = vmatprep.subr.bf16.mxu0 %v436
    %640 = vmatpush1.bf16.msra.mxu0 %v435
    %641 = vmatprep.subr.bf16.mxu0 %v444
    %642 = vmatpush1.bf16.msra.mxu0 %v443
    %643 = vmatprep.subr.bf16.mxu0 %v452
    %644 = vmatpush1.bf16.msra.mxu0 %v451
    %645 = vmatprep.subr.bf16.mxu0 %v460
    %646 = vmatpush1.bf16.msra.mxu0 %v459
    %647 = vmatprep.subr.bf16.mxu0 %v468
    %648 = vmatpush1.bf16.msra.mxu0 %v467
    %649 = vmatprep.subr.bf16.mxu0 %v476
    %650 = vmatpush1.bf16.msra.mxu0 %v475
    %651 = vmatprep.subr.bf16.mxu0 %v484
    %652 = vmatpush1.bf16.msra.mxu0 %v483
    %653 = vmatprep.subr.bf16.mxu0 0
    %654 = vmatpush1.bf16.msra.mxu0 0
    %655 = vmatprep.subr.bf16.mxu0 0
    %656 = vmatpush1.bf16.msra.mxu0 0
    %657 = vmatprep.subr.bf16.mxu0 0
    %658 = vmatpush1.bf16.msra.mxu0 0
    %659 = vmatprep.subr.bf16.mxu0 0
    %660 = vmatpush1.bf16.msra.mxu0 0
    %661 = vmatprep.subr.bf16.mxu0 0
    %662 = vmatpush1.bf16.msra.mxu0 0
    %663 = vmatprep.subr.bf16.mxu0 0
    %664 = vmatpush1.bf16.msra.mxu0 0
    %665 = vmatprep.subr.bf16.mxu0 0
    %666 = vmatpush1.bf16.msra.mxu0 0
    %667 = vmatprep.subr.bf16.mxu0 0
    %668 = vmatpush1.bf16.msra.mxu0 0
    %669 = vmatprep.mubr.bf16.mxu0 0
    %670 = vmatmul.mubr.bf16.gmra.mrb[0].mxu0 %v229
    %v671 = vpop.f32.mrb[0].mxu0
    %v672 = vadd.f32 %v204, %v671
    %v673 = vpop.f32.mrb[0].mxu0
    %v674 = vadd.f32 %v208, %v673
    %v675 = vpop.f32.mrb[0].mxu0
    %v676 = vadd.f32 %v204, %v675
    %v677 = vpop.f32.mrb[0].mxu0
    %v678 = vadd.f32 %v208, %v677
    %679 = vdwg.mxu0
    %680 = vmatprep.subr.bf16.mxu0 %v430
    %681 = vmatpush1.bf16.msra.mxu0 %v429
    %682 = vmatprep.subr.bf16.mxu0 %v438
    %683 = vmatpush1.bf16.msra.mxu0 %v437
    %684 = vmatprep.subr.bf16.mxu0 %v446
    %685 = vmatpush1.bf16.msra.mxu0 %v445
    %686 = vmatprep.subr.bf16.mxu0 %v454
    %687 = vmatpush1.bf16.msra.mxu0 %v453
    %688 = vmatprep.subr.bf16.mxu0 %v462
    %689 = vmatpush1.bf16.msra.mxu0 %v461
    %690 = vmatprep.subr.bf16.mxu0 %v470
    %691 = vmatpush1.bf16.msra.mxu0 %v469
    %692 = vmatprep.subr.bf16.mxu0 %v478
    %693 = vmatpush1.bf16.msra.mxu0 %v477
    %694 = vmatprep.subr.bf16.mxu0 %v486
    %695 = vmatpush1.bf16.msra.mxu0 %v485
    %696 = vmatprep.subr.bf16.mxu0 0
    %697 = vmatpush1.bf16.msra.mxu0 0
    %698 = vmatprep.subr.bf16.mxu0 0
    %699 = vmatpush1.bf16.msra.mxu0 0
    %700 = vmatprep.subr.bf16.mxu0 0
    %701 = vmatpush1.bf16.msra.mxu0 0
    %702 = vmatprep.subr.bf16.mxu0 0
    %703 = vmatpush1.bf16.msra.mxu0 0
    %704 = vmatprep.subr.bf16.mxu0 0
    %705 = vmatpush1.bf16.msra.mxu0 0
    %706 = vmatprep.subr.bf16.mxu0 0
    %707 = vmatpush1.bf16.msra.mxu0 0
    %708 = vmatprep.subr.bf16.mxu0 0
    %709 = vmatpush1.bf16.msra.mxu0 0
    %710 = vmatprep.subr.bf16.mxu0 0
    %711 = vmatpush1.bf16.msra.mxu0 0
    %712 = vmatprep.mubr.bf16.mxu0 0
    %713 = vmatmul.mubr.bf16.gmra.mrb[0].mxu0 %v229
    %v714 = vpop.f32.mrb[0].mxu0
    %v715 = vadd.f32 %v212, %v714
    %v716 = vpop.f32.mrb[0].mxu0
    %v717 = vadd.f32 %v216, %v716
    %v718 = vpop.f32.mrb[0].mxu0
    %v719 = vadd.f32 %v212, %v718
    %v720 = vpop.f32.mrb[0].mxu0
    %v721 = vadd.f32 %v216, %v720
    %722 = vdwg.mxu0
    %vm723 = vcmp.gt.f32.partialorder %v586, 0.0
    %vm724 = vcmp.gt.f32.partialorder %v588, 0.0
    %vm725 = vcmp.gt.f32.partialorder %v629, 0.0
    %vm726 = vcmp.gt.f32.partialorder %v631, 0.0
    %vm727 = vcmp.gt.f32.partialorder %v672, 0.0
    %vm728 = vcmp.gt.f32.partialorder %v674, 0.0
    %vm729 = vcmp.gt.f32.partialorder %v715, 0.0
    %vm730 = vcmp.gt.f32.partialorder %v717, 0.0
    %vm731 = vcmp.gt.f32.partialorder %v590, 0.0
    %vm732 = vcmp.gt.f32.partialorder %v592, 0.0
    %vm733 = vcmp.gt.f32.partialorder %v633, 0.0
    %vm734 = vcmp.gt.f32.partialorder %v635, 0.0
    %vm735 = vcmp.gt.f32.partialorder %v676, 0.0
    %vm736 = vcmp.gt.f32.partialorder %v678, 0.0
    %vm737 = vcmp.gt.f32.partialorder %v719, 0.0
    %vm738 = vcmp.gt.f32.partialorder %v721, 0.0
    %v739 = vmul.f32 %v586, 0.01
    %v740 = vmul.f32 %v588, 0.01
    %v741 = vmul.f32 %v629, 0.01
    %v742 = vmul.f32 %v631, 0.01
    %v743 = vmul.f32 %v672, 0.01
    %v744 = vmul.f32 %v674, 0.01
    %v745 = vmul.f32 %v715, 0.01
    %v746 = vmul.f32 %v717, 0.01
    %v747 = vmul.f32 %v590, 0.01
    %v748 = vmul.f32 %v592, 0.01
    %v749 = vmul.f32 %v633, 0.01
    %v750 = vmul.f32 %v635, 0.01
    %v751 = vmul.f32 %v676, 0.01
    %v752 = vmul.f32 %v678, 0.01
    %v753 = vmul.f32 %v719, 0.01
    %v754 = vmul.f32 %v721, 0.01
    %v755 = vsel %vm723, %v586, %v739
    %v756 = vsel %vm724, %v588, %v740
    %v757 = vsel %vm725, %v629, %v741
    %v758 = vsel %vm726, %v631, %v742
    %v759 = vsel %vm727, %v672, %v743
    %v760 = vsel %vm728, %v674, %v744
    %v761 = vsel %vm729, %v715, %v745
    %v762 = vsel %vm730, %v717, %v746
    %v763 = vsel %vm731, %v590, %v747
    %v764 = vsel %vm732, %v592, %v748
    %v765 = vsel %vm733, %v633, %v749
    %v766 = vsel %vm734, %v635, %v750
    %v767 = vsel %vm735, %v676, %v751
    %v768 = vsel %vm736, %v678, %v752
    %v769 = vsel %vm737, %v719, %v753
    %v770 = vsel %vm738, %v721, %v754
    %v771 = vpack.c.bf16 %v763, %v755
    %v772 = vpack.c.bf16 %v764, %v756
    %v773 = vpack.c.bf16 %v765, %v757
    %v774 = vpack.c.bf16 %v766, %v758
    %v775 = vpack.c.bf16 %v767, %v759
    %v776 = vpack.c.bf16 %v768, %v760
    %v777 = vpack.c.bf16 %v769, %v761
    %v778 = vpack.c.bf16 %v770, %v762
    %v779 = vld [vmem:[#allocation8] sm:$0xff]
    %v780 = vld [vmem:[#allocation8 + $0x8] sm:$0xff]
    %v781 = vld [vmem:[#allocation8 + $0x10] sm:$0xff]
    %v782 = vld [vmem:[#allocation8 + $0x18] sm:$0xff]
    %v783 = vld [vmem:[#allocation8 + $0x20] sm:$0xff]
    %v784 = vld [vmem:[#allocation8 + $0x28] sm:$0xff]
    %v785 = vld [vmem:[#allocation8 + $0x30] sm:$0xff]
    %v786 = vld [vmem:[#allocation8 + $0x38] sm:$0xff]
    %v787 = vld [vmem:[#allocation8 + $0x40] sm:$0xff]
    %v788 = vld [vmem:[#allocation8 + $0x48] sm:$0xff]
    %v789 = vld [vmem:[#allocation8 + $0x50] sm:$0xff]
    %v790 = vld [vmem:[#allocation8 + $0x58] sm:$0xff]
    %v791 = vld [vmem:[#allocation8 + $0x60] sm:$0xff]
    %v792 = vld [vmem:[#allocation8 + $0x68] sm:$0xff]
    %v793 = vld [vmem:[#allocation8 + $0x70] sm:$0xff]
    %v794 = vld [vmem:[#allocation8 + $0x78] sm:$0xff]
    %v795 = vld [vmem:[#allocation8 + $0x80] sm:$0xff]
    %v796 = vld [vmem:[#allocation8 + $0x88] sm:$0xff]
    %v797 = vld [vmem:[#allocation8 + $0x90] sm:$0xff]
    %v798 = vld [vmem:[#allocation8 + $0x98] sm:$0xff]
    %v799 = vld [vmem:[#allocation8 + $0xa0] sm:$0xff]
    %v800 = vld [vmem:[#allocation8 + $0xa8] sm:$0xff]
    %v801 = vld [vmem:[#allocation8 + $0xb0] sm:$0xff]
    %v802 = vld [vmem:[#allocation8 + $0xb8] sm:$0xff]
    %v803 = vld [vmem:[#allocation8 + $0xc0] sm:$0xff]
    %v804 = vld [vmem:[#allocation8 + $0xc8] sm:$0xff]
    %v805 = vld [vmem:[#allocation8 + $0xd0] sm:$0xff]
    %v806 = vld [vmem:[#allocation8 + $0xd8] sm:$0xff]
    %v807 = vld [vmem:[#allocation8 + $0xe0] sm:$0xff]
    %v808 = vld [vmem:[#allocation8 + $0xe8] sm:$0xff]
    %v809 = vld [vmem:[#allocation8 + $0xf0] sm:$0xff]
    %v810 = vld [vmem:[#allocation8 + $0xf8] sm:$0xff]
    %v811 = vld [vmem:[#allocation8 + $0x100] sm:$0xff]
    %v812 = vld [vmem:[#allocation8 + $0x108] sm:$0xff]
    %v813 = vld [vmem:[#allocation8 + $0x110] sm:$0xff]
    %v814 = vld [vmem:[#allocation8 + $0x118] sm:$0xff]
    %v815 = vld [vmem:[#allocation8 + $0x120] sm:$0xff]
    %v816 = vld [vmem:[#allocation8 + $0x128] sm:$0xff]
    %v817 = vld [vmem:[#allocation8 + $0x130] sm:$0xff]
    %v818 = vld [vmem:[#allocation8 + $0x138] sm:$0xff]
    %v819 = vld [vmem:[#allocation8 + $0x140] sm:$0xff]
    %v820 = vld [vmem:[#allocation8 + $0x148] sm:$0xff]
    %v821 = vld [vmem:[#allocation8 + $0x150] sm:$0xff]
    %v822 = vld [vmem:[#allocation8 + $0x158] sm:$0xff]
    %v823 = vld [vmem:[#allocation8 + $0x160] sm:$0xff]
    %v824 = vld [vmem:[#allocation8 + $0x168] sm:$0xff]
    %v825 = vld [vmem:[#allocation8 + $0x170] sm:$0xff]
    %v826 = vld [vmem:[#allocation8 + $0x178] sm:$0xff]
    %v827 = vld [vmem:[#allocation8 + $0x180] sm:$0xff]
    %v828 = vld [vmem:[#allocation8 + $0x188] sm:$0xff]
    %v829 = vld [vmem:[#allocation8 + $0x190] sm:$0xff]
    %v830 = vld [vmem:[#allocation8 + $0x198] sm:$0xff]
    %v831 = vld [vmem:[#allocation8 + $0x1a0] sm:$0xff]
    %v832 = vld [vmem:[#allocation8 + $0x1a8] sm:$0xff]
    %v833 = vld [vmem:[#allocation8 + $0x1b0] sm:$0xff]
    %v834 = vld [vmem:[#allocation8 + $0x1b8] sm:$0xff]
    %v835 = vld [vmem:[#allocation8 + $0x1c0] sm:$0xff]
    %v836 = vld [vmem:[#allocation8 + $0x1c8] sm:$0xff]
    %v837 = vld [vmem:[#allocation8 + $0x1d0] sm:$0xff]
    %v838 = vld [vmem:[#allocation8 + $0x1d8] sm:$0xff]
    %v839 = vld [vmem:[#allocation8 + $0x1e0] sm:$0xff]
    %v840 = vld [vmem:[#allocation8 + $0x1e8] sm:$0xff]
    %v841 = vld [vmem:[#allocation8 + $0x1f0] sm:$0xff]
    %v842 = vld [vmem:[#allocation8 + $0x1f8] sm:$0xff]
    %v843 = vld [vmem:[#allocation8 + $0x200] sm:$0xff]
    %v844 = vld [vmem:[#allocation8 + $0x208] sm:$0xff]
    %v845 = vld [vmem:[#allocation8 + $0x210] sm:$0xff]
    %v846 = vld [vmem:[#allocation8 + $0x218] sm:$0xff]
    %v847 = vld [vmem:[#allocation8 + $0x220] sm:$0xff]
    %v848 = vld [vmem:[#allocation8 + $0x228] sm:$0xff]
    %v849 = vld [vmem:[#allocation8 + $0x230] sm:$0xff]
    %v850 = vld [vmem:[#allocation8 + $0x238] sm:$0xff]
    %v851 = vld [vmem:[#allocation8 + $0x240] sm:$0xff]
    %v852 = vld [vmem:[#allocation8 + $0x248] sm:$0xff]
    %v853 = vld [vmem:[#allocation8 + $0x250] sm:$0xff]
    %v854 = vld [vmem:[#allocation8 + $0x258] sm:$0xff]
    %v855 = vld [vmem:[#allocation8 + $0x260] sm:$0xff]
    %v856 = vld [vmem:[#allocation8 + $0x268] sm:$0xff]
    %v857 = vld [vmem:[#allocation8 + $0x270] sm:$0xff]
    %v858 = vld [vmem:[#allocation8 + $0x278] sm:$0xff]
    %v859 = vld [vmem:[#allocation8 + $0x280] sm:$0xff]
    %v860 = vld [vmem:[#allocation8 + $0x288] sm:$0xff]
    %v861 = vld [vmem:[#allocation8 + $0x290] sm:$0xff]
    %v862 = vld [vmem:[#allocation8 + $0x298] sm:$0xff]
    %v863 = vld [vmem:[#allocation8 + $0x2a0] sm:$0xff]
    %v864 = vld [vmem:[#allocation8 + $0x2a8] sm:$0xff]
    %v865 = vld [vmem:[#allocation8 + $0x2b0] sm:$0xff]
    %v866 = vld [vmem:[#allocation8 + $0x2b8] sm:$0xff]
    %v867 = vld [vmem:[#allocation8 + $0x2c0] sm:$0xff]
    %v868 = vld [vmem:[#allocation8 + $0x2c8] sm:$0xff]
    %v869 = vld [vmem:[#allocation8 + $0x2d0] sm:$0xff]
    %v870 = vld [vmem:[#allocation8 + $0x2d8] sm:$0xff]
    %v871 = vld [vmem:[#allocation8 + $0x2e0] sm:$0xff]
    %v872 = vld [vmem:[#allocation8 + $0x2e8] sm:$0xff]
    %v873 = vld [vmem:[#allocation8 + $0x2f0] sm:$0xff]
    %v874 = vld [vmem:[#allocation8 + $0x2f8] sm:$0xff]
    %v875 = vld [vmem:[#allocation8 + $0x300] sm:$0xff]
    %v876 = vld [vmem:[#allocation8 + $0x308] sm:$0xff]
    %v877 = vld [vmem:[#allocation8 + $0x310] sm:$0xff]
    %v878 = vld [vmem:[#allocation8 + $0x318] sm:$0xff]
    %v879 = vld [vmem:[#allocation8 + $0x320] sm:$0xff]
    %v880 = vld [vmem:[#allocation8 + $0x328] sm:$0xff]
    %v881 = vld [vmem:[#allocation8 + $0x330] sm:$0xff]
    %v882 = vld [vmem:[#allocation8 + $0x338] sm:$0xff]
    %v883 = vld [vmem:[#allocation8 + $0x340] sm:$0xff]
    %v884 = vld [vmem:[#allocation8 + $0x348] sm:$0xff]
    %v885 = vld [vmem:[#allocation8 + $0x350] sm:$0xff]
    %v886 = vld [vmem:[#allocation8 + $0x358] sm:$0xff]
    %v887 = vld [vmem:[#allocation8 + $0x360] sm:$0xff]
    %v888 = vld [vmem:[#allocation8 + $0x368] sm:$0xff]
    %v889 = vld [vmem:[#allocation8 + $0x370] sm:$0xff]
    %v890 = vld [vmem:[#allocation8 + $0x378] sm:$0xff]
    %v891 = vld [vmem:[#allocation8 + $0x380] sm:$0xff]
    %v892 = vld [vmem:[#allocation8 + $0x388] sm:$0xff]
    %v893 = vld [vmem:[#allocation8 + $0x390] sm:$0xff]
    %v894 = vld [vmem:[#allocation8 + $0x398] sm:$0xff]
    %v895 = vld [vmem:[#allocation8 + $0x3a0] sm:$0xff]
    %v896 = vld [vmem:[#allocation8 + $0x3a8] sm:$0xff]
    %v897 = vld [vmem:[#allocation8 + $0x3b0] sm:$0xff]
    %v898 = vld [vmem:[#allocation8 + $0x3b8] sm:$0xff]
    %v899 = vld [vmem:[#allocation8 + $0x3c0] sm:$0xff]
    %v900 = vld [vmem:[#allocation8 + $0x3c8] sm:$0xff]
    %v901 = vld [vmem:[#allocation8 + $0x3d0] sm:$0xff]
    %v902 = vld [vmem:[#allocation8 + $0x3d8] sm:$0xff]
    %v903 = vld [vmem:[#allocation8 + $0x3e0] sm:$0xff]
    %v904 = vld [vmem:[#allocation8 + $0x3e8] sm:$0xff]
    %v905 = vld [vmem:[#allocation8 + $0x3f0] sm:$0xff]
    %v906 = vld [vmem:[#allocation8 + $0x3f8] sm:$0xff]
    %v907 = vld [vmem:[#allocation8 + $0x400] sm:$0xff]
    %v908 = vld [vmem:[#allocation8 + $0x408] sm:$0xff]
    %v909 = vld [vmem:[#allocation8 + $0x410] sm:$0xff]
    %v910 = vld [vmem:[#allocation8 + $0x418] sm:$0xff]
    %v911 = vld [vmem:[#allocation8 + $0x420] sm:$0xff]
    %v912 = vld [vmem:[#allocation8 + $0x428] sm:$0xff]
    %v913 = vld [vmem:[#allocation8 + $0x430] sm:$0xff]
    %v914 = vld [vmem:[#allocation8 + $0x438] sm:$0xff]
    %v915 = vld [vmem:[#allocation8 + $0x440] sm:$0xff]
    %v916 = vld [vmem:[#allocation8 + $0x448] sm:$0xff]
    %v917 = vld [vmem:[#allocation8 + $0x450] sm:$0xff]
    %v918 = vld [vmem:[#allocation8 + $0x458] sm:$0xff]
    %v919 = vld [vmem:[#allocation8 + $0x460] sm:$0xff]
    %v920 = vld [vmem:[#allocation8 + $0x468] sm:$0xff]
    %v921 = vld [vmem:[#allocation8 + $0x470] sm:$0xff]
    %v922 = vld [vmem:[#allocation8 + $0x478] sm:$0xff]
    %v923 = vld [vmem:[#allocation8 + $0x480] sm:$0xff]
    %v924 = vld [vmem:[#allocation8 + $0x488] sm:$0xff]
    %v925 = vld [vmem:[#allocation8 + $0x490] sm:$0xff]
    %v926 = vld [vmem:[#allocation8 + $0x498] sm:$0xff]
    %v927 = vld [vmem:[#allocation8 + $0x4a0] sm:$0xff]
    %v928 = vld [vmem:[#allocation8 + $0x4a8] sm:$0xff]
    %v929 = vld [vmem:[#allocation8 + $0x4b0] sm:$0xff]
    %v930 = vld [vmem:[#allocation8 + $0x4b8] sm:$0xff]
    %v931 = vld [vmem:[#allocation8 + $0x4c0] sm:$0xff]
    %v932 = vld [vmem:[#allocation8 + $0x4c8] sm:$0xff]
    %v933 = vld [vmem:[#allocation8 + $0x4d0] sm:$0xff]
    %v934 = vld [vmem:[#allocation8 + $0x4d8] sm:$0xff]
    %v935 = vld [vmem:[#allocation8 + $0x4e0] sm:$0xff]
    %v936 = vld [vmem:[#allocation8 + $0x4e8] sm:$0xff]
    %v937 = vld [vmem:[#allocation8 + $0x4f0] sm:$0xff]
    %v938 = vld [vmem:[#allocation8 + $0x4f8] sm:$0xff]
    %v939 = vld [vmem:[#allocation8 + $0x500] sm:$0xff]
    %v940 = vld [vmem:[#allocation8 + $0x508] sm:$0xff]
    %v941 = vld [vmem:[#allocation8 + $0x510] sm:$0xff]
    %v942 = vld [vmem:[#allocation8 + $0x518] sm:$0xff]
    %v943 = vld [vmem:[#allocation8 + $0x520] sm:$0xff]
    %v944 = vld [vmem:[#allocation8 + $0x528] sm:$0xff]
    %v945 = vld [vmem:[#allocation8 + $0x530] sm:$0xff]
    %v946 = vld [vmem:[#allocation8 + $0x538] sm:$0xff]
    %v947 = vld [vmem:[#allocation8 + $0x540] sm:$0xff]
    %v948 = vld [vmem:[#allocation8 + $0x548] sm:$0xff]
    %v949 = vld [vmem:[#allocation8 + $0x550] sm:$0xff]
    %v950 = vld [vmem:[#allocation8 + $0x558] sm:$0xff]
    %v951 = vld [vmem:[#allocation8 + $0x560] sm:$0xff]
    %v952 = vld [vmem:[#allocation8 + $0x568] sm:$0xff]
    %v953 = vld [vmem:[#allocation8 + $0x570] sm:$0xff]
    %v954 = vld [vmem:[#allocation8 + $0x578] sm:$0xff]
    %v955 = vld [vmem:[#allocation8 + $0x580] sm:$0xff]
    %v956 = vld [vmem:[#allocation8 + $0x588] sm:$0xff]
    %v957 = vld [vmem:[#allocation8 + $0x590] sm:$0xff]
    %v958 = vld [vmem:[#allocation8 + $0x598] sm:$0xff]
    %v959 = vld [vmem:[#allocation8 + $0x5a0] sm:$0xff]
    %v960 = vld [vmem:[#allocation8 + $0x5a8] sm:$0xff]
    %v961 = vld [vmem:[#allocation8 + $0x5b0] sm:$0xff]
    %v962 = vld [vmem:[#allocation8 + $0x5b8] sm:$0xff]
    %v963 = vld [vmem:[#allocation8 + $0x5c0] sm:$0xff]
    %v964 = vld [vmem:[#allocation8 + $0x5c8] sm:$0xff]
    %v965 = vld [vmem:[#allocation8 + $0x5d0] sm:$0xff]
    %v966 = vld [vmem:[#allocation8 + $0x5d8] sm:$0xff]
    %v967 = vld [vmem:[#allocation8 + $0x5e0] sm:$0xff]
    %v968 = vld [vmem:[#allocation8 + $0x5e8] sm:$0xff]
    %v969 = vld [vmem:[#allocation8 + $0x5f0] sm:$0xff]
    %v970 = vld [vmem:[#allocation8 + $0x5f8] sm:$0xff]
    %v971 = vld [vmem:[#allocation8 + $0x600] sm:$0xff]
    %v972 = vld [vmem:[#allocation8 + $0x608] sm:$0xff]
    %v973 = vld [vmem:[#allocation8 + $0x610] sm:$0xff]
    %v974 = vld [vmem:[#allocation8 + $0x618] sm:$0xff]
    %v975 = vld [vmem:[#allocation8 + $0x620] sm:$0xff]
    %v976 = vld [vmem:[#allocation8 + $0x628] sm:$0xff]
    %v977 = vld [vmem:[#allocation8 + $0x630] sm:$0xff]
    %v978 = vld [vmem:[#allocation8 + $0x638] sm:$0xff]
    %v979 = vld [vmem:[#allocation8 + $0x640] sm:$0xff]
    %v980 = vld [vmem:[#allocation8 + $0x648] sm:$0xff]
    %v981 = vld [vmem:[#allocation8 + $0x650] sm:$0xff]
    %v982 = vld [vmem:[#allocation8 + $0x658] sm:$0xff]
    %v983 = vld [vmem:[#allocation8 + $0x660] sm:$0xff]
    %v984 = vld [vmem:[#allocation8 + $0x668] sm:$0xff]
    %v985 = vld [vmem:[#allocation8 + $0x670] sm:$0xff]
    %v986 = vld [vmem:[#allocation8 + $0x678] sm:$0xff]
    %v987 = vld [vmem:[#allocation8 + $0x680] sm:$0xff]
    %v988 = vld [vmem:[#allocation8 + $0x688] sm:$0xff]
    %v989 = vld [vmem:[#allocation8 + $0x690] sm:$0xff]
    %v990 = vld [vmem:[#allocation8 + $0x698] sm:$0xff]
    %v991 = vld [vmem:[#allocation8 + $0x6a0] sm:$0xff]
    %v992 = vld [vmem:[#allocation8 + $0x6a8] sm:$0xff]
    %v993 = vld [vmem:[#allocation8 + $0x6b0] sm:$0xff]
    %v994 = vld [vmem:[#allocation8 + $0x6b8] sm:$0xff]
    %v995 = vld [vmem:[#allocation8 + $0x6c0] sm:$0xff]
    %v996 = vld [vmem:[#allocation8 + $0x6c8] sm:$0xff]
    %v997 = vld [vmem:[#allocation8 + $0x6d0] sm:$0xff]
    %v998 = vld [vmem:[#allocation8 + $0x6d8] sm:$0xff]
    %v999 = vld [vmem:[#allocation8 + $0x6e0] sm:$0xff]
    %v1000 = vld [vmem:[#allocation8 + $0x6e8] sm:$0xff]
    %v1001 = vld [vmem:[#allocation8 + $0x6f0] sm:$0xff]
    %v1002 = vld [vmem:[#allocation8 + $0x6f8] sm:$0xff]
    %v1003 = vld [vmem:[#allocation8 + $0x700] sm:$0xff]
    %v1004 = vld [vmem:[#allocation8 + $0x708] sm:$0xff]
    %v1005 = vld [vmem:[#allocation8 + $0x710] sm:$0xff]
    %v1006 = vld [vmem:[#allocation8 + $0x718] sm:$0xff]
    %v1007 = vld [vmem:[#allocation8 + $0x720] sm:$0xff]
    %v1008 = vld [vmem:[#allocation8 + $0x728] sm:$0xff]
    %v1009 = vld [vmem:[#allocation8 + $0x730] sm:$0xff]
    %v1010 = vld [vmem:[#allocation8 + $0x738] sm:$0xff]
    %v1011 = vld [vmem:[#allocation8 + $0x740] sm:$0xff]
    %v1012 = vld [vmem:[#allocation8 + $0x748] sm:$0xff]
    %v1013 = vld [vmem:[#allocation8 + $0x750] sm:$0xff]
    %v1014 = vld [vmem:[#allocation8 + $0x758] sm:$0xff]
    %v1015 = vld [vmem:[#allocation8 + $0x760] sm:$0xff]
    %v1016 = vld [vmem:[#allocation8 + $0x768] sm:$0xff]
    %v1017 = vld [vmem:[#allocation8 + $0x770] sm:$0xff]
    %v1018 = vld [vmem:[#allocation8 + $0x778] sm:$0xff]
    %v1019 = vld [vmem:[#allocation8 + $0x780] sm:$0xff]
    %v1020 = vld [vmem:[#allocation8 + $0x788] sm:$0xff]
    %v1021 = vld [vmem:[#allocation8 + $0x790] sm:$0xff]
    %v1022 = vld [vmem:[#allocation8 + $0x798] sm:$0xff]
    %v1023 = vld [vmem:[#allocation8 + $0x7a0] sm:$0xff]
    %v1024 = vld [vmem:[#allocation8 + $0x7a8] sm:$0xff]
    %v1025 = vld [vmem:[#allocation8 + $0x7b0] sm:$0xff]
    %v1026 = vld [vmem:[#allocation8 + $0x7b8] sm:$0xff]
    %v1027 = vld [vmem:[#allocation8 + $0x7c0] sm:$0xff]
    %v1028 = vld [vmem:[#allocation8 + $0x7c8] sm:$0xff]
    %v1029 = vld [vmem:[#allocation8 + $0x7d0] sm:$0xff]
    %v1030 = vld [vmem:[#allocation8 + $0x7d8] sm:$0xff]
    %v1031 = vld [vmem:[#allocation8 + $0x7e0] sm:$0xff]
    %v1032 = vld [vmem:[#allocation8 + $0x7e8] sm:$0xff]
    %v1033 = vld [vmem:[#allocation8 + $0x7f0] sm:$0xff]
    %v1034 = vld [vmem:[#allocation8 + $0x7f8] sm:$0xff]
    %v1035 = vld [vmem:[#allocation8 + $0x800] sm:$0xff]
    %v1036 = vld [vmem:[#allocation8 + $0x808] sm:$0xff]
    %v1037 = vld [vmem:[#allocation8 + $0x810] sm:$0xff]
    %v1038 = vld [vmem:[#allocation8 + $0x818] sm:$0xff]
    %v1039 = vld [vmem:[#allocation8 + $0x820] sm:$0xff]
    %v1040 = vld [vmem:[#allocation8 + $0x828] sm:$0xff]
    %v1041 = vld [vmem:[#allocation8 + $0x830] sm:$0xff]
    %v1042 = vld [vmem:[#allocation8 + $0x838] sm:$0xff]
    %v1043 = vld [vmem:[#allocation8 + $0x840] sm:$0xff]
    %v1044 = vld [vmem:[#allocation8 + $0x848] sm:$0xff]
    %v1045 = vld [vmem:[#allocation8 + $0x850] sm:$0xff]
    %v1046 = vld [vmem:[#allocation8 + $0x858] sm:$0xff]
    %v1047 = vld [vmem:[#allocation8 + $0x860] sm:$0xff]
    %v1048 = vld [vmem:[#allocation8 + $0x868] sm:$0xff]
    %v1049 = vld [vmem:[#allocation8 + $0x870] sm:$0xff]
    %v1050 = vld [vmem:[#allocation8 + $0x878] sm:$0xff]
    %v1051 = vld [vmem:[#allocation8 + $0x880] sm:$0xff]
    %v1052 = vld [vmem:[#allocation8 + $0x888] sm:$0xff]
    %v1053 = vld [vmem:[#allocation8 + $0x890] sm:$0xff]
    %v1054 = vld [vmem:[#allocation8 + $0x898] sm:$0xff]
    %v1055 = vld [vmem:[#allocation8 + $0x8a0] sm:$0xff]
    %v1056 = vld [vmem:[#allocation8 + $0x8a8] sm:$0xff]
    %v1057 = vld [vmem:[#allocation8 + $0x8b0] sm:$0xff]
    %v1058 = vld [vmem:[#allocation8 + $0x8b8] sm:$0xff]
    %v1059 = vld [vmem:[#allocation8 + $0x8c0] sm:$0xff]
    %v1060 = vld [vmem:[#allocation8 + $0x8c8] sm:$0xff]
    %v1061 = vld [vmem:[#allocation8 + $0x8d0] sm:$0xff]
    %v1062 = vld [vmem:[#allocation8 + $0x8d8] sm:$0xff]
    %v1063 = vld [vmem:[#allocation8 + $0x8e0] sm:$0xff]
    %v1064 = vld [vmem:[#allocation8 + $0x8e8] sm:$0xff]
    %v1065 = vld [vmem:[#allocation8 + $0x8f0] sm:$0xff]
    %v1066 = vld [vmem:[#allocation8 + $0x8f8] sm:$0xff]
    %v1067 = vld [vmem:[#allocation8 + $0x900] sm:$0xff]
    %v1068 = vld [vmem:[#allocation8 + $0x908] sm:$0xff]
    %v1069 = vld [vmem:[#allocation8 + $0x910] sm:$0xff]
    %v1070 = vld [vmem:[#allocation8 + $0x918] sm:$0xff]
    %v1071 = vld [vmem:[#allocation8 + $0x920] sm:$0xff]
    %v1072 = vld [vmem:[#allocation8 + $0x928] sm:$0xff]
    %v1073 = vld [vmem:[#allocation8 + $0x930] sm:$0xff]
    %v1074 = vld [vmem:[#allocation8 + $0x938] sm:$0xff]
    %v1075 = vld [vmem:[#allocation8 + $0x940] sm:$0xff]
    %v1076 = vld [vmem:[#allocation8 + $0x948] sm:$0xff]
    %v1077 = vld [vmem:[#allocation8 + $0x950] sm:$0xff]
    %v1078 = vld [vmem:[#allocation8 + $0x958] sm:$0xff]
    %v1079 = vld [vmem:[#allocation8 + $0x960] sm:$0xff]
    %v1080 = vld [vmem:[#allocation8 + $0x968] sm:$0xff]
    %v1081 = vld [vmem:[#allocation8 + $0x970] sm:$0xff]
    %v1082 = vld [vmem:[#allocation8 + $0x978] sm:$0xff]
    %v1083 = vld [vmem:[#allocation8 + $0x980] sm:$0xff]
    %v1084 = vld [vmem:[#allocation8 + $0x988] sm:$0xff]
    %v1085 = vld [vmem:[#allocation8 + $0x990] sm:$0xff]
    %v1086 = vld [vmem:[#allocation8 + $0x998] sm:$0xff]
    %v1087 = vld [vmem:[#allocation8 + $0x9a0] sm:$0xff]
    %v1088 = vld [vmem:[#allocation8 + $0x9a8] sm:$0xff]
    %v1089 = vld [vmem:[#allocation8 + $0x9b0] sm:$0xff]
    %v1090 = vld [vmem:[#allocation8 + $0x9b8] sm:$0xff]
    %v1091 = vld [vmem:[#allocation8 + $0x9c0] sm:$0xff]
    %v1092 = vld [vmem:[#allocation8 + $0x9c8] sm:$0xff]
    %v1093 = vld [vmem:[#allocation8 + $0x9d0] sm:$0xff]
    %v1094 = vld [vmem:[#allocation8 + $0x9d8] sm:$0xff]
    %v1095 = vld [vmem:[#allocation8 + $0x9e0] sm:$0xff]
    %v1096 = vld [vmem:[#allocation8 + $0x9e8] sm:$0xff]
    %v1097 = vld [vmem:[#allocation8 + $0x9f0] sm:$0xff]
    %v1098 = vld [vmem:[#allocation8 + $0x9f8] sm:$0xff]
    %v1099 = vld [vmem:[#allocation8 + $0xa00] sm:$0xff]
    %v1100 = vld [vmem:[#allocation8 + $0xa08] sm:$0xff]
    %v1101 = vld [vmem:[#allocation8 + $0xa10] sm:$0xff]
    %v1102 = vld [vmem:[#allocation8 + $0xa18] sm:$0xff]
    %v1103 = vld [vmem:[#allocation8 + $0xa20] sm:$0xff]
    %v1104 = vld [vmem:[#allocation8 + $0xa28] sm:$0xff]
    %v1105 = vld [vmem:[#allocation8 + $0xa30] sm:$0xff]
    %v1106 = vld [vmem:[#allocation8 + $0xa38] sm:$0xff]
    %v1107 = vld [vmem:[#allocation8 + $0xa40] sm:$0xff]
    %v1108 = vld [vmem:[#allocation8 + $0xa48] sm:$0xff]
    %v1109 = vld [vmem:[#allocation8 + $0xa50] sm:$0xff]
    %v1110 = vld [vmem:[#allocation8 + $0xa58] sm:$0xff]
    %v1111 = vld [vmem:[#allocation8 + $0xa60] sm:$0xff]
    %v1112 = vld [vmem:[#allocation8 + $0xa68] sm:$0xff]
    %v1113 = vld [vmem:[#allocation8 + $0xa70] sm:$0xff]
    %v1114 = vld [vmem:[#allocation8 + $0xa78] sm:$0xff]
    %v1115 = vld [vmem:[#allocation8 + $0xa80] sm:$0xff]
    %v1116 = vld [vmem:[#allocation8 + $0xa88] sm:$0xff]
    %v1117 = vld [vmem:[#allocation8 + $0xa90] sm:$0xff]
    %v1118 = vld [vmem:[#allocation8 + $0xa98] sm:$0xff]
    %v1119 = vld [vmem:[#allocation8 + $0xaa0] sm:$0xff]
    %v1120 = vld [vmem:[#allocation8 + $0xaa8] sm:$0xff]
    %v1121 = vld [vmem:[#allocation8 + $0xab0] sm:$0xff]
    %v1122 = vld [vmem:[#allocation8 + $0xab8] sm:$0xff]
    %v1123 = vld [vmem:[#allocation8 + $0xac0] sm:$0xff]
    %v1124 = vld [vmem:[#allocation8 + $0xac8] sm:$0xff]
    %v1125 = vld [vmem:[#allocation8 + $0xad0] sm:$0xff]
    %v1126 = vld [vmem:[#allocation8 + $0xad8] sm:$0xff]
    %v1127 = vld [vmem:[#allocation8 + $0xae0] sm:$0xff]
    %v1128 = vld [vmem:[#allocation8 + $0xae8] sm:$0xff]
    %v1129 = vld [vmem:[#allocation8 + $0xaf0] sm:$0xff]
    %v1130 = vld [vmem:[#allocation8 + $0xaf8] sm:$0xff]
    %v1131 = vld [vmem:[#allocation8 + $0xb00] sm:$0xff]
    %v1132 = vld [vmem:[#allocation8 + $0xb08] sm:$0xff]
    %v1133 = vld [vmem:[#allocation8 + $0xb10] sm:$0xff]
    %v1134 = vld [vmem:[#allocation8 + $0xb18] sm:$0xff]
    %v1135 = vld [vmem:[#allocation8 + $0xb20] sm:$0xff]
    %v1136 = vld [vmem:[#allocation8 + $0xb28] sm:$0xff]
    %v1137 = vld [vmem:[#allocation8 + $0xb30] sm:$0xff]
    %v1138 = vld [vmem:[#allocation8 + $0xb38] sm:$0xff]
    %v1139 = vld [vmem:[#allocation8 + $0xb40] sm:$0xff]
    %v1140 = vld [vmem:[#allocation8 + $0xb48] sm:$0xff]
    %v1141 = vld [vmem:[#allocation8 + $0xb50] sm:$0xff]
    %v1142 = vld [vmem:[#allocation8 + $0xb58] sm:$0xff]
    %v1143 = vld [vmem:[#allocation8 + $0xb60] sm:$0xff]
    %v1144 = vld [vmem:[#allocation8 + $0xb68] sm:$0xff]
    %v1145 = vld [vmem:[#allocation8 + $0xb70] sm:$0xff]
    %v1146 = vld [vmem:[#allocation8 + $0xb78] sm:$0xff]
    %v1147 = vld [vmem:[#allocation8 + $0xb80] sm:$0xff]
    %v1148 = vld [vmem:[#allocation8 + $0xb88] sm:$0xff]
    %v1149 = vld [vmem:[#allocation8 + $0xb90] sm:$0xff]
    %v1150 = vld [vmem:[#allocation8 + $0xb98] sm:$0xff]
    %v1151 = vld [vmem:[#allocation8 + $0xba0] sm:$0xff]
    %v1152 = vld [vmem:[#allocation8 + $0xba8] sm:$0xff]
    %v1153 = vld [vmem:[#allocation8 + $0xbb0] sm:$0xff]
    %v1154 = vld [vmem:[#allocation8 + $0xbb8] sm:$0xff]
    %v1155 = vld [vmem:[#allocation8 + $0xbc0] sm:$0xff]
    %v1156 = vld [vmem:[#allocation8 + $0xbc8] sm:$0xff]
    %v1157 = vld [vmem:[#allocation8 + $0xbd0] sm:$0xff]
    %v1158 = vld [vmem:[#allocation8 + $0xbd8] sm:$0xff]
    %v1159 = vld [vmem:[#allocation8 + $0xbe0] sm:$0xff]
    %v1160 = vld [vmem:[#allocation8 + $0xbe8] sm:$0xff]
    %v1161 = vld [vmem:[#allocation8 + $0xbf0] sm:$0xff]
    %v1162 = vld [vmem:[#allocation8 + $0xbf8] sm:$0xff]
    %v1163 = vld [vmem:[#allocation8 + $0xc00] sm:$0xff]
    %v1164 = vld [vmem:[#allocation8 + $0xc08] sm:$0xff]
    %v1165 = vld [vmem:[#allocation8 + $0xc10] sm:$0xff]
    %v1166 = vld [vmem:[#allocation8 + $0xc18] sm:$0xff]
    %v1167 = vld [vmem:[#allocation8 + $0xc20] sm:$0xff]
    %v1168 = vld [vmem:[#allocation8 + $0xc28] sm:$0xff]
    %v1169 = vld [vmem:[#allocation8 + $0xc30] sm:$0xff]
    %v1170 = vld [vmem:[#allocation8 + $0xc38] sm:$0xff]
    %v1171 = vld [vmem:[#allocation8 + $0xc40] sm:$0xff]
    %v1172 = vld [vmem:[#allocation8 + $0xc48] sm:$0xff]
    %v1173 = vld [vmem:[#allocation8 + $0xc50] sm:$0xff]
    %v1174 = vld [vmem:[#allocation8 + $0xc58] sm:$0xff]
    %v1175 = vld [vmem:[#allocation8 + $0xc60] sm:$0xff]
    %v1176 = vld [vmem:[#allocation8 + $0xc68] sm:$0xff]
    %v1177 = vld [vmem:[#allocation8 + $0xc70] sm:$0xff]
    %v1178 = vld [vmem:[#allocation8 + $0xc78] sm:$0xff]
    %v1179 = vld [vmem:[#allocation8 + $0xc80] sm:$0xff]
    %v1180 = vld [vmem:[#allocation8 + $0xc88] sm:$0xff]
    %v1181 = vld [vmem:[#allocation8 + $0xc90] sm:$0xff]
    %v1182 = vld [vmem:[#allocation8 + $0xc98] sm:$0xff]
    %v1183 = vld [vmem:[#allocation8 + $0xca0] sm:$0xff]
    %v1184 = vld [vmem:[#allocation8 + $0xca8] sm:$0xff]
    %v1185 = vld [vmem:[#allocation8 + $0xcb0] sm:$0xff]
    %v1186 = vld [vmem:[#allocation8 + $0xcb8] sm:$0xff]
    %v1187 = vld [vmem:[#allocation8 + $0xcc0] sm:$0xff]
    %v1188 = vld [vmem:[#allocation8 + $0xcc8] sm:$0xff]
    %v1189 = vld [vmem:[#allocation8 + $0xcd0] sm:$0xff]
    %v1190 = vld [vmem:[#allocation8 + $0xcd8] sm:$0xff]
    %v1191 = vld [vmem:[#allocation8 + $0xce0] sm:$0xff]
    %v1192 = vld [vmem:[#allocation8 + $0xce8] sm:$0xff]
    %v1193 = vld [vmem:[#allocation8 + $0xcf0] sm:$0xff]
    %v1194 = vld [vmem:[#allocation8 + $0xcf8] sm:$0xff]
    %v1195 = vld [vmem:[#allocation8 + $0xd00] sm:$0xff]
    %v1196 = vld [vmem:[#allocation8 + $0xd08] sm:$0xff]
    %v1197 = vld [vmem:[#allocation8 + $0xd10] sm:$0xff]
    %v1198 = vld [vmem:[#allocation8 + $0xd18] sm:$0xff]
    %v1199 = vld [vmem:[#allocation8 + $0xd20] sm:$0xff]
    %v1200 = vld [vmem:[#allocation8 + $0xd28] sm:$0xff]
    %v1201 = vld [vmem:[#allocation8 + $0xd30] sm:$0xff]
    %v1202 = vld [vmem:[#allocation8 + $0xd38] sm:$0xff]
    %v1203 = vld [vmem:[#allocation8 + $0xd40] sm:$0xff]
    %v1204 = vld [vmem:[#allocation8 + $0xd48] sm:$0xff]
    %v1205 = vld [vmem:[#allocation8 + $0xd50] sm:$0xff]
    %v1206 = vld [vmem:[#allocation8 + $0xd58] sm:$0xff]
    %v1207 = vld [vmem:[#allocation8 + $0xd60] sm:$0xff]
    %v1208 = vld [vmem:[#allocation8 + $0xd68] sm:$0xff]
    %v1209 = vld [vmem:[#allocation8 + $0xd70] sm:$0xff]
    %v1210 = vld [vmem:[#allocation8 + $0xd78] sm:$0xff]
    %v1211 = vld [vmem:[#allocation8 + $0xd80] sm:$0xff]
    %v1212 = vld [vmem:[#allocation8 + $0xd88] sm:$0xff]
    %v1213 = vld [vmem:[#allocation8 + $0xd90] sm:$0xff]
    %v1214 = vld [vmem:[#allocation8 + $0xd98] sm:$0xff]
    %v1215 = vld [vmem:[#allocation8 + $0xda0] sm:$0xff]
    %v1216 = vld [vmem:[#allocation8 + $0xda8] sm:$0xff]
    %v1217 = vld [vmem:[#allocation8 + $0xdb0] sm:$0xff]
    %v1218 = vld [vmem:[#allocation8 + $0xdb8] sm:$0xff]
    %v1219 = vld [vmem:[#allocation8 + $0xdc0] sm:$0xff]
    %v1220 = vld [vmem:[#allocation8 + $0xdc8] sm:$0xff]
    %v1221 = vld [vmem:[#allocation8 + $0xdd0] sm:$0xff]
    %v1222 = vld [vmem:[#allocation8 + $0xdd8] sm:$0xff]
    %v1223 = vld [vmem:[#allocation8 + $0xde0] sm:$0xff]
    %v1224 = vld [vmem:[#allocation8 + $0xde8] sm:$0xff]
    %v1225 = vld [vmem:[#allocation8 + $0xdf0] sm:$0xff]
    %v1226 = vld [vmem:[#allocation8 + $0xdf8] sm:$0xff]
    %v1227 = vld [vmem:[#allocation8 + $0xe00] sm:$0xff]
    %v1228 = vld [vmem:[#allocation8 + $0xe08] sm:$0xff]
    %v1229 = vld [vmem:[#allocation8 + $0xe10] sm:$0xff]
    %v1230 = vld [vmem:[#allocation8 + $0xe18] sm:$0xff]
    %v1231 = vld [vmem:[#allocation8 + $0xe20] sm:$0xff]
    %v1232 = vld [vmem:[#allocation8 + $0xe28] sm:$0xff]
    %v1233 = vld [vmem:[#allocation8 + $0xe30] sm:$0xff]
    %v1234 = vld [vmem:[#allocation8 + $0xe38] sm:$0xff]
    %v1235 = vld [vmem:[#allocation8 + $0xe40] sm:$0xff]
    %v1236 = vld [vmem:[#allocation8 + $0xe48] sm:$0xff]
    %v1237 = vld [vmem:[#allocation8 + $0xe50] sm:$0xff]
    %v1238 = vld [vmem:[#allocation8 + $0xe58] sm:$0xff]
    %v1239 = vld [vmem:[#allocation8 + $0xe60] sm:$0xff]
    %v1240 = vld [vmem:[#allocation8 + $0xe68] sm:$0xff]
    %v1241 = vld [vmem:[#allocation8 + $0xe70] sm:$0xff]
    %v1242 = vld [vmem:[#allocation8 + $0xe78] sm:$0xff]
    %v1243 = vld [vmem:[#allocation8 + $0xe80] sm:$0xff]
    %v1244 = vld [vmem:[#allocation8 + $0xe88] sm:$0xff]
    %v1245 = vld [vmem:[#allocation8 + $0xe90] sm:$0xff]
    %v1246 = vld [vmem:[#allocation8 + $0xe98] sm:$0xff]
    %v1247 = vld [vmem:[#allocation8 + $0xea0] sm:$0xff]
    %v1248 = vld [vmem:[#allocation8 + $0xea8] sm:$0xff]
    %v1249 = vld [vmem:[#allocation8 + $0xeb0] sm:$0xff]
    %v1250 = vld [vmem:[#allocation8 + $0xeb8] sm:$0xff]
    %v1251 = vld [vmem:[#allocation8 + $0xec0] sm:$0xff]
    %v1252 = vld [vmem:[#allocation8 + $0xec8] sm:$0xff]
    %v1253 = vld [vmem:[#allocation8 + $0xed0] sm:$0xff]
    %v1254 = vld [vmem:[#allocation8 + $0xed8] sm:$0xff]
    %v1255 = vld [vmem:[#allocation8 + $0xee0] sm:$0xff]
    %v1256 = vld [vmem:[#allocation8 + $0xee8] sm:$0xff]
    %v1257 = vld [vmem:[#allocation8 + $0xef0] sm:$0xff]
    %v1258 = vld [vmem:[#allocation8 + $0xef8] sm:$0xff]
    %v1259 = vld [vmem:[#allocation8 + $0xf00] sm:$0xff]
    %v1260 = vld [vmem:[#allocation8 + $0xf08] sm:$0xff]
    %v1261 = vld [vmem:[#allocation8 + $0xf10] sm:$0xff]
    %v1262 = vld [vmem:[#allocation8 + $0xf18] sm:$0xff]
    %v1263 = vld [vmem:[#allocation8 + $0xf20] sm:$0xff]
    %v1264 = vld [vmem:[#allocation8 + $0xf28] sm:$0xff]
    %v1265 = vld [vmem:[#allocation8 + $0xf30] sm:$0xff]
    %v1266 = vld [vmem:[#allocation8 + $0xf38] sm:$0xff]
    %v1267 = vld [vmem:[#allocation8 + $0xf40] sm:$0xff]
    %v1268 = vld [vmem:[#allocation8 + $0xf48] sm:$0xff]
    %v1269 = vld [vmem:[#allocation8 + $0xf50] sm:$0xff]
    %v1270 = vld [vmem:[#allocation8 + $0xf58] sm:$0xff]
    %v1271 = vld [vmem:[#allocation8 + $0xf60] sm:$0xff]
    %v1272 = vld [vmem:[#allocation8 + $0xf68] sm:$0xff]
    %v1273 = vld [vmem:[#allocation8 + $0xf70] sm:$0xff]
    %v1274 = vld [vmem:[#allocation8 + $0xf78] sm:$0xff]
    %v1275 = vld [vmem:[#allocation8 + $0xf80] sm:$0xff]
    %v1276 = vld [vmem:[#allocation8 + $0xf88] sm:$0xff]
    %v1277 = vld [vmem:[#allocation8 + $0xf90] sm:$0xff]
    %v1278 = vld [vmem:[#allocation8 + $0xf98] sm:$0xff]
    %v1279 = vld [vmem:[#allocation8 + $0xfa0] sm:$0xff]
    %v1280 = vld [vmem:[#allocation8 + $0xfa8] sm:$0xff]
    %v1281 = vld [vmem:[#allocation8 + $0xfb0] sm:$0xff]
    %v1282 = vld [vmem:[#allocation8 + $0xfb8] sm:$0xff]
    %v1283 = vld [vmem:[#allocation8 + $0xfc0] sm:$0xff]
    %v1284 = vld [vmem:[#allocation8 + $0xfc8] sm:$0xff]
    %v1285 = vld [vmem:[#allocation8 + $0xfd0] sm:$0xff]
    %v1286 = vld [vmem:[#allocation8 + $0xfd8] sm:$0xff]
    %v1287 = vld [vmem:[#allocation8 + $0xfe0] sm:$0xff]
    %v1288 = vld [vmem:[#allocation8 + $0xfe8] sm:$0xff]
    %v1289 = vld [vmem:[#allocation8 + $0xff0] sm:$0xff]
    %v1290 = vld [vmem:[#allocation8 + $0xff8] sm:$0xff]
    %v1291 = vld [vmem:[#allocation10] sm:$0xff]
    %v1293 = vlaneseq
    %v1294 = vshrl.u32 %v1293, 7
    %v1295 = vsub.s32 0, %v1294
    %v1296 = vrot.slane %v1291, %v1295
    %v1297 = vlaneseq
    %v1298 = vshrl.u32 %v1297, 7
    %v1299 = vsub.s32 1, %v1298
    %v1300 = vrot.slane %v1291, %v1299
    %v1301 = vlaneseq
    %v1302 = vshrl.u32 %v1301, 7
    %v1303 = vsub.s32 2, %v1302
    %v1304 = vrot.slane %v1291, %v1303
    %v1305 = vlaneseq
    %v1306 = vshrl.u32 %v1305, 7
    %v1307 = vsub.s32 3, %v1306
    %v1308 = vrot.slane %v1291, %v1307
    %v1309 = vlaneseq
    %v1310 = vshrl.u32 %v1309, 7
    %v1311 = vsub.s32 4, %v1310
    %v1312 = vrot.slane %v1291, %v1311
    %v1313 = vlaneseq
    %v1314 = vshrl.u32 %v1313, 7
    %v1315 = vsub.s32 5, %v1314
    %v1316 = vrot.slane %v1291, %v1315
    %v1317 = vlaneseq
    %v1318 = vshrl.u32 %v1317, 7
    %v1319 = vsub.s32 6, %v1318
    %v1320 = vrot.slane %v1291, %v1319
    %v1321 = vlaneseq
    %v1322 = vshrl.u32 %v1321, 7
    %v1323 = vsub.s32 7, %v1322
    %v1324 = vrot.slane %v1291, %v1323
    %v1845 = vunpack.c.l.b16 %v779
    %v1846 = vunpack.c.h.b16 %v779
    %v1847 = vunpack.c.l.b16 %v780
    %v1848 = vunpack.c.h.b16 %v780
    %v1849 = vunpack.c.l.b16 %v781
    %v1850 = vunpack.c.h.b16 %v781
    %v1851 = vunpack.c.l.b16 %v782
    %v1852 = vunpack.c.h.b16 %v782
    %v1853 = vunpack.c.l.b16 %v783
    %v1854 = vunpack.c.h.b16 %v783
    %v1855 = vunpack.c.l.b16 %v784
    %v1856 = vunpack.c.h.b16 %v784
    %v1857 = vunpack.c.l.b16 %v785
    %v1858 = vunpack.c.h.b16 %v785
    %v1859 = vunpack.c.l.b16 %v786
    %v1860 = vunpack.c.h.b16 %v786
    %v1861 = vunpack.c.l.b16 %v787
    %v1862 = vunpack.c.h.b16 %v787
    %v1863 = vunpack.c.l.b16 %v788
    %v1864 = vunpack.c.h.b16 %v788
    %v1865 = vunpack.c.l.b16 %v789
    %v1866 = vunpack.c.h.b16 %v789
    %v1867 = vunpack.c.l.b16 %v790
    %v1868 = vunpack.c.h.b16 %v790
    %v1869 = vunpack.c.l.b16 %v791
    %v1870 = vunpack.c.h.b16 %v791
    %v1871 = vunpack.c.l.b16 %v792
    %v1872 = vunpack.c.h.b16 %v792
    %v1873 = vunpack.c.l.b16 %v793
    %v1874 = vunpack.c.h.b16 %v793
    %v1875 = vunpack.c.l.b16 %v794
    %v1876 = vunpack.c.h.b16 %v794
    %v1877 = vunpack.c.l.b16 %v795
    %v1878 = vunpack.c.h.b16 %v795
    %v1879 = vunpack.c.l.b16 %v796
    %v1880 = vunpack.c.h.b16 %v796
    %v1881 = vunpack.c.l.b16 %v797
    %v1882 = vunpack.c.h.b16 %v797
    %v1883 = vunpack.c.l.b16 %v798
    %v1884 = vunpack.c.h.b16 %v798
    %v1885 = vunpack.c.l.b16 %v799
    %v1886 = vunpack.c.h.b16 %v799
    %v1887 = vunpack.c.l.b16 %v800
    %v1888 = vunpack.c.h.b16 %v800
    %v1889 = vunpack.c.l.b16 %v801
    %v1890 = vunpack.c.h.b16 %v801
    %v1891 = vunpack.c.l.b16 %v802
    %v1892 = vunpack.c.h.b16 %v802
    %v1893 = vunpack.c.l.b16 %v803
    %v1894 = vunpack.c.h.b16 %v803
    %v1895 = vunpack.c.l.b16 %v804
    %v1896 = vunpack.c.h.b16 %v804
    %v1897 = vunpack.c.l.b16 %v805
    %v1898 = vunpack.c.h.b16 %v805
    %v1899 = vunpack.c.l.b16 %v806
    %v1900 = vunpack.c.h.b16 %v806
    %v1901 = vunpack.c.l.b16 %v807
    %v1902 = vunpack.c.h.b16 %v807
    %v1903 = vunpack.c.l.b16 %v808
    %v1904 = vunpack.c.h.b16 %v808
    %v1905 = vunpack.c.l.b16 %v809
    %v1906 = vunpack.c.h.b16 %v809
    %v1907 = vunpack.c.l.b16 %v810
    %v1908 = vunpack.c.h.b16 %v810
    %v1909 = vunpack.c.l.b16 %v811
    %v1910 = vunpack.c.h.b16 %v811
    %v1911 = vunpack.c.l.b16 %v812
    %v1912 = vunpack.c.h.b16 %v812
    %v1913 = vunpack.c.l.b16 %v813
    %v1914 = vunpack.c.h.b16 %v813
    %v1915 = vunpack.c.l.b16 %v814
    %v1916 = vunpack.c.h.b16 %v814
    %v1917 = vunpack.c.l.b16 %v815
    %v1918 = vunpack.c.h.b16 %v815
    %v1919 = vunpack.c.l.b16 %v816
    %v1920 = vunpack.c.h.b16 %v816
    %v1921 = vunpack.c.l.b16 %v817
    %v1922 = vunpack.c.h.b16 %v817
    %v1923 = vunpack.c.l.b16 %v818
    %v1924 = vunpack.c.h.b16 %v818
    %v1925 = vunpack.c.l.b16 %v819
    %v1926 = vunpack.c.h.b16 %v819
    %v1927 = vunpack.c.l.b16 %v820
    %v1928 = vunpack.c.h.b16 %v820
    %v1929 = vunpack.c.l.b16 %v821
    %v1930 = vunpack.c.h.b16 %v821
    %v1931 = vunpack.c.l.b16 %v822
    %v1932 = vunpack.c.h.b16 %v822
    %v1933 = vunpack.c.l.b16 %v823
    %v1934 = vunpack.c.h.b16 %v823
    %v1935 = vunpack.c.l.b16 %v824
    %v1936 = vunpack.c.h.b16 %v824
    %v1937 = vunpack.c.l.b16 %v825
    %v1938 = vunpack.c.h.b16 %v825
    %v1939 = vunpack.c.l.b16 %v826
    %v1940 = vunpack.c.h.b16 %v826
    %v1941 = vunpack.c.l.b16 %v827
    %v1942 = vunpack.c.h.b16 %v827
    %v1943 = vunpack.c.l.b16 %v828
    %v1944 = vunpack.c.h.b16 %v828
    %v1945 = vunpack.c.l.b16 %v829
    %v1946 = vunpack.c.h.b16 %v829
    %v1947 = vunpack.c.l.b16 %v830
    %v1948 = vunpack.c.h.b16 %v830
    %v1949 = vunpack.c.l.b16 %v831
    %v1950 = vunpack.c.h.b16 %v831
    %v1951 = vunpack.c.l.b16 %v832
    %v1952 = vunpack.c.h.b16 %v832
    %v1953 = vunpack.c.l.b16 %v833
    %v1954 = vunpack.c.h.b16 %v833
    %v1955 = vunpack.c.l.b16 %v834
    %v1956 = vunpack.c.h.b16 %v834
    %v1957 = vunpack.c.l.b16 %v835
    %v1958 = vunpack.c.h.b16 %v835
    %v1959 = vunpack.c.l.b16 %v836
    %v1960 = vunpack.c.h.b16 %v836
    %v1961 = vunpack.c.l.b16 %v837
    %v1962 = vunpack.c.h.b16 %v837
    %v1963 = vunpack.c.l.b16 %v838
    %v1964 = vunpack.c.h.b16 %v838
    %v1965 = vunpack.c.l.b16 %v839
    %v1966 = vunpack.c.h.b16 %v839
    %v1967 = vunpack.c.l.b16 %v840
    %v1968 = vunpack.c.h.b16 %v840
    %v1969 = vunpack.c.l.b16 %v841
    %v1970 = vunpack.c.h.b16 %v841
    %v1971 = vunpack.c.l.b16 %v842
    %v1972 = vunpack.c.h.b16 %v842
    %v1973 = vunpack.c.l.b16 %v843
    %v1974 = vunpack.c.h.b16 %v843
    %v1975 = vunpack.c.l.b16 %v844
    %v1976 = vunpack.c.h.b16 %v844
    %v1977 = vunpack.c.l.b16 %v845
    %v1978 = vunpack.c.h.b16 %v845
    %v1979 = vunpack.c.l.b16 %v846
    %v1980 = vunpack.c.h.b16 %v846
    %v1981 = vunpack.c.l.b16 %v847
    %v1982 = vunpack.c.h.b16 %v847
    %v1983 = vunpack.c.l.b16 %v848
    %v1984 = vunpack.c.h.b16 %v848
    %v1985 = vunpack.c.l.b16 %v849
    %v1986 = vunpack.c.h.b16 %v849
    %v1987 = vunpack.c.l.b16 %v850
    %v1988 = vunpack.c.h.b16 %v850
    %v1989 = vunpack.c.l.b16 %v851
    %v1990 = vunpack.c.h.b16 %v851
    %v1991 = vunpack.c.l.b16 %v852
    %v1992 = vunpack.c.h.b16 %v852
    %v1993 = vunpack.c.l.b16 %v853
    %v1994 = vunpack.c.h.b16 %v853
    %v1995 = vunpack.c.l.b16 %v854
    %v1996 = vunpack.c.h.b16 %v854
    %v1997 = vunpack.c.l.b16 %v855
    %v1998 = vunpack.c.h.b16 %v855
    %v1999 = vunpack.c.l.b16 %v856
    %v2000 = vunpack.c.h.b16 %v856
    %v2001 = vunpack.c.l.b16 %v857
    %v2002 = vunpack.c.h.b16 %v857
    %v2003 = vunpack.c.l.b16 %v858
    %v2004 = vunpack.c.h.b16 %v858
    %v2005 = vunpack.c.l.b16 %v859
    %v2006 = vunpack.c.h.b16 %v859
    %v2007 = vunpack.c.l.b16 %v860
    %v2008 = vunpack.c.h.b16 %v860
    %v2009 = vunpack.c.l.b16 %v861
    %v2010 = vunpack.c.h.b16 %v861
    %v2011 = vunpack.c.l.b16 %v862
    %v2012 = vunpack.c.h.b16 %v862
    %v2013 = vunpack.c.l.b16 %v863
    %v2014 = vunpack.c.h.b16 %v863
    %v2015 = vunpack.c.l.b16 %v864
    %v2016 = vunpack.c.h.b16 %v864
    %v2017 = vunpack.c.l.b16 %v865
    %v2018 = vunpack.c.h.b16 %v865
    %v2019 = vunpack.c.l.b16 %v866
    %v2020 = vunpack.c.h.b16 %v866
    %v2021 = vunpack.c.l.b16 %v867
    %v2022 = vunpack.c.h.b16 %v867
    %v2023 = vunpack.c.l.b16 %v868
    %v2024 = vunpack.c.h.b16 %v868
    %v2025 = vunpack.c.l.b16 %v869
    %v2026 = vunpack.c.h.b16 %v869
    %v2027 = vunpack.c.l.b16 %v870
    %v2028 = vunpack.c.h.b16 %v870
    %v2029 = vunpack.c.l.b16 %v871
    %v2030 = vunpack.c.h.b16 %v871
    %v2031 = vunpack.c.l.b16 %v872
    %v2032 = vunpack.c.h.b16 %v872
    %v2033 = vunpack.c.l.b16 %v873
    %v2034 = vunpack.c.h.b16 %v873
    %v2035 = vunpack.c.l.b16 %v874
    %v2036 = vunpack.c.h.b16 %v874
    %v2037 = vunpack.c.l.b16 %v875
    %v2038 = vunpack.c.h.b16 %v875
    %v2039 = vunpack.c.l.b16 %v876
    %v2040 = vunpack.c.h.b16 %v876
    %v2041 = vunpack.c.l.b16 %v877
    %v2042 = vunpack.c.h.b16 %v877
    %v2043 = vunpack.c.l.b16 %v878
    %v2044 = vunpack.c.h.b16 %v878
    %v2045 = vunpack.c.l.b16 %v879
    %v2046 = vunpack.c.h.b16 %v879
    %v2047 = vunpack.c.l.b16 %v880
    %v2048 = vunpack.c.h.b16 %v880
    %v2049 = vunpack.c.l.b16 %v881
    %v2050 = vunpack.c.h.b16 %v881
    %v2051 = vunpack.c.l.b16 %v882
    %v2052 = vunpack.c.h.b16 %v882
    %v2053 = vunpack.c.l.b16 %v883
    %v2054 = vunpack.c.h.b16 %v883
    %v2055 = vunpack.c.l.b16 %v884
    %v2056 = vunpack.c.h.b16 %v884
    %v2057 = vunpack.c.l.b16 %v885
    %v2058 = vunpack.c.h.b16 %v885
    %v2059 = vunpack.c.l.b16 %v886
    %v2060 = vunpack.c.h.b16 %v886
    %v2061 = vunpack.c.l.b16 %v887
    %v2062 = vunpack.c.h.b16 %v887
    %v2063 = vunpack.c.l.b16 %v888
    %v2064 = vunpack.c.h.b16 %v888
    %v2065 = vunpack.c.l.b16 %v889
    %v2066 = vunpack.c.h.b16 %v889
    %v2067 = vunpack.c.l.b16 %v890
    %v2068 = vunpack.c.h.b16 %v890
    %v2069 = vunpack.c.l.b16 %v891
    %v2070 = vunpack.c.h.b16 %v891
    %v2071 = vunpack.c.l.b16 %v892
    %v2072 = vunpack.c.h.b16 %v892
    %v2073 = vunpack.c.l.b16 %v893
    %v2074 = vunpack.c.h.b16 %v893
    %v2075 = vunpack.c.l.b16 %v894
    %v2076 = vunpack.c.h.b16 %v894
    %v2077 = vunpack.c.l.b16 %v895
    %v2078 = vunpack.c.h.b16 %v895
    %v2079 = vunpack.c.l.b16 %v896
    %v2080 = vunpack.c.h.b16 %v896
    %v2081 = vunpack.c.l.b16 %v897
    %v2082 = vunpack.c.h.b16 %v897
    %v2083 = vunpack.c.l.b16 %v898
    %v2084 = vunpack.c.h.b16 %v898
    %v2085 = vunpack.c.l.b16 %v899
    %v2086 = vunpack.c.h.b16 %v899
    %v2087 = vunpack.c.l.b16 %v900
    %v2088 = vunpack.c.h.b16 %v900
    %v2089 = vunpack.c.l.b16 %v901
    %v2090 = vunpack.c.h.b16 %v901
    %v2091 = vunpack.c.l.b16 %v902
    %v2092 = vunpack.c.h.b16 %v902
    %v2093 = vunpack.c.l.b16 %v903
    %v2094 = vunpack.c.h.b16 %v903
    %v2095 = vunpack.c.l.b16 %v904
    %v2096 = vunpack.c.h.b16 %v904
    %v2097 = vunpack.c.l.b16 %v905
    %v2098 = vunpack.c.h.b16 %v905
    %v2099 = vunpack.c.l.b16 %v906
    %v2100 = vunpack.c.h.b16 %v906
    %v2101 = vunpack.c.l.b16 %v907
    %v2102 = vunpack.c.h.b16 %v907
    %v2103 = vunpack.c.l.b16 %v908
    %v2104 = vunpack.c.h.b16 %v908
    %v2105 = vunpack.c.l.b16 %v909
    %v2106 = vunpack.c.h.b16 %v909
    %v2107 = vunpack.c.l.b16 %v910
    %v2108 = vunpack.c.h.b16 %v910
    %v2109 = vunpack.c.l.b16 %v911
    %v2110 = vunpack.c.h.b16 %v911
    %v2111 = vunpack.c.l.b16 %v912
    %v2112 = vunpack.c.h.b16 %v912
    %v2113 = vunpack.c.l.b16 %v913
    %v2114 = vunpack.c.h.b16 %v913
    %v2115 = vunpack.c.l.b16 %v914
    %v2116 = vunpack.c.h.b16 %v914
    %v2117 = vunpack.c.l.b16 %v915
    %v2118 = vunpack.c.h.b16 %v915
    %v2119 = vunpack.c.l.b16 %v916
    %v2120 = vunpack.c.h.b16 %v916
    %v2121 = vunpack.c.l.b16 %v917
    %v2122 = vunpack.c.h.b16 %v917
    %v2123 = vunpack.c.l.b16 %v918
    %v2124 = vunpack.c.h.b16 %v918
    %v2125 = vunpack.c.l.b16 %v919
    %v2126 = vunpack.c.h.b16 %v919
    %v2127 = vunpack.c.l.b16 %v920
    %v2128 = vunpack.c.h.b16 %v920
    %v2129 = vunpack.c.l.b16 %v921
    %v2130 = vunpack.c.h.b16 %v921
    %v2131 = vunpack.c.l.b16 %v922
    %v2132 = vunpack.c.h.b16 %v922
    %v2133 = vunpack.c.l.b16 %v923
    %v2134 = vunpack.c.h.b16 %v923
    %v2135 = vunpack.c.l.b16 %v924
    %v2136 = vunpack.c.h.b16 %v924
    %v2137 = vunpack.c.l.b16 %v925
    %v2138 = vunpack.c.h.b16 %v925
    %v2139 = vunpack.c.l.b16 %v926
    %v2140 = vunpack.c.h.b16 %v926
    %v2141 = vunpack.c.l.b16 %v927
    %v2142 = vunpack.c.h.b16 %v927
    %v2143 = vunpack.c.l.b16 %v928
    %v2144 = vunpack.c.h.b16 %v928
    %v2145 = vunpack.c.l.b16 %v929
    %v2146 = vunpack.c.h.b16 %v929
    %v2147 = vunpack.c.l.b16 %v930
    %v2148 = vunpack.c.h.b16 %v930
    %v2149 = vunpack.c.l.b16 %v931
    %v2150 = vunpack.c.h.b16 %v931
    %v2151 = vunpack.c.l.b16 %v932
    %v2152 = vunpack.c.h.b16 %v932
    %v2153 = vunpack.c.l.b16 %v933
    %v2154 = vunpack.c.h.b16 %v933
    %v2155 = vunpack.c.l.b16 %v934
    %v2156 = vunpack.c.h.b16 %v934
    %v2157 = vunpack.c.l.b16 %v935
    %v2158 = vunpack.c.h.b16 %v935
    %v2159 = vunpack.c.l.b16 %v936
    %v2160 = vunpack.c.h.b16 %v936
    %v2161 = vunpack.c.l.b16 %v937
    %v2162 = vunpack.c.h.b16 %v937
    %v2163 = vunpack.c.l.b16 %v938
    %v2164 = vunpack.c.h.b16 %v938
    %v2165 = vunpack.c.l.b16 %v939
    %v2166 = vunpack.c.h.b16 %v939
    %v2167 = vunpack.c.l.b16 %v940
    %v2168 = vunpack.c.h.b16 %v940
    %v2169 = vunpack.c.l.b16 %v941
    %v2170 = vunpack.c.h.b16 %v941
    %v2171 = vunpack.c.l.b16 %v942
    %v2172 = vunpack.c.h.b16 %v942
    %v2173 = vunpack.c.l.b16 %v943
    %v2174 = vunpack.c.h.b16 %v943
    %v2175 = vunpack.c.l.b16 %v944
    %v2176 = vunpack.c.h.b16 %v944
    %v2177 = vunpack.c.l.b16 %v945
    %v2178 = vunpack.c.h.b16 %v945
    %v2179 = vunpack.c.l.b16 %v946
    %v2180 = vunpack.c.h.b16 %v946
    %v2181 = vunpack.c.l.b16 %v947
    %v2182 = vunpack.c.h.b16 %v947
    %v2183 = vunpack.c.l.b16 %v948
    %v2184 = vunpack.c.h.b16 %v948
    %v2185 = vunpack.c.l.b16 %v949
    %v2186 = vunpack.c.h.b16 %v949
    %v2187 = vunpack.c.l.b16 %v950
    %v2188 = vunpack.c.h.b16 %v950
    %v2189 = vunpack.c.l.b16 %v951
    %v2190 = vunpack.c.h.b16 %v951
    %v2191 = vunpack.c.l.b16 %v952
    %v2192 = vunpack.c.h.b16 %v952
    %v2193 = vunpack.c.l.b16 %v953
    %v2194 = vunpack.c.h.b16 %v953
    %v2195 = vunpack.c.l.b16 %v954
    %v2196 = vunpack.c.h.b16 %v954
    %v2197 = vunpack.c.l.b16 %v955
    %v2198 = vunpack.c.h.b16 %v955
    %v2199 = vunpack.c.l.b16 %v956
    %v2200 = vunpack.c.h.b16 %v956
    %v2201 = vunpack.c.l.b16 %v957
    %v2202 = vunpack.c.h.b16 %v957
    %v2203 = vunpack.c.l.b16 %v958
    %v2204 = vunpack.c.h.b16 %v958
    %v2205 = vunpack.c.l.b16 %v959
    %v2206 = vunpack.c.h.b16 %v959
    %v2207 = vunpack.c.l.b16 %v960
    %v2208 = vunpack.c.h.b16 %v960
    %v2209 = vunpack.c.l.b16 %v961
    %v2210 = vunpack.c.h.b16 %v961
    %v2211 = vunpack.c.l.b16 %v962
    %v2212 = vunpack.c.h.b16 %v962
    %v2213 = vunpack.c.l.b16 %v963
    %v2214 = vunpack.c.h.b16 %v963
    %v2215 = vunpack.c.l.b16 %v964
    %v2216 = vunpack.c.h.b16 %v964
    %v2217 = vunpack.c.l.b16 %v965
    %v2218 = vunpack.c.h.b16 %v965
    %v2219 = vunpack.c.l.b16 %v966
    %v2220 = vunpack.c.h.b16 %v966
    %v2221 = vunpack.c.l.b16 %v967
    %v2222 = vunpack.c.h.b16 %v967
    %v2223 = vunpack.c.l.b16 %v968
    %v2224 = vunpack.c.h.b16 %v968
    %v2225 = vunpack.c.l.b16 %v969
    %v2226 = vunpack.c.h.b16 %v969
    %v2227 = vunpack.c.l.b16 %v970
    %v2228 = vunpack.c.h.b16 %v970
    %v2229 = vunpack.c.l.b16 %v971
    %v2230 = vunpack.c.h.b16 %v971
    %v2231 = vunpack.c.l.b16 %v972
    %v2232 = vunpack.c.h.b16 %v972
    %v2233 = vunpack.c.l.b16 %v973
    %v2234 = vunpack.c.h.b16 %v973
    %v2235 = vunpack.c.l.b16 %v974
    %v2236 = vunpack.c.h.b16 %v974
    %v2237 = vunpack.c.l.b16 %v975
    %v2238 = vunpack.c.h.b16 %v975
    %v2239 = vunpack.c.l.b16 %v976
    %v2240 = vunpack.c.h.b16 %v976
    %v2241 = vunpack.c.l.b16 %v977
    %v2242 = vunpack.c.h.b16 %v977
    %v2243 = vunpack.c.l.b16 %v978
    %v2244 = vunpack.c.h.b16 %v978
    %v2245 = vunpack.c.l.b16 %v979
    %v2246 = vunpack.c.h.b16 %v979
    %v2247 = vunpack.c.l.b16 %v980
    %v2248 = vunpack.c.h.b16 %v980
    %v2249 = vunpack.c.l.b16 %v981
    %v2250 = vunpack.c.h.b16 %v981
    %v2251 = vunpack.c.l.b16 %v982
    %v2252 = vunpack.c.h.b16 %v982
    %v2253 = vunpack.c.l.b16 %v983
    %v2254 = vunpack.c.h.b16 %v983
    %v2255 = vunpack.c.l.b16 %v984
    %v2256 = vunpack.c.h.b16 %v984
    %v2257 = vunpack.c.l.b16 %v985
    %v2258 = vunpack.c.h.b16 %v985
    %v2259 = vunpack.c.l.b16 %v986
    %v2260 = vunpack.c.h.b16 %v986
    %v2261 = vunpack.c.l.b16 %v987
    %v2262 = vunpack.c.h.b16 %v987
    %v2263 = vunpack.c.l.b16 %v988
    %v2264 = vunpack.c.h.b16 %v988
    %v2265 = vunpack.c.l.b16 %v989
    %v2266 = vunpack.c.h.b16 %v989
    %v2267 = vunpack.c.l.b16 %v990
    %v2268 = vunpack.c.h.b16 %v990
    %v2269 = vunpack.c.l.b16 %v991
    %v2270 = vunpack.c.h.b16 %v991
    %v2271 = vunpack.c.l.b16 %v992
    %v2272 = vunpack.c.h.b16 %v992
    %v2273 = vunpack.c.l.b16 %v993
    %v2274 = vunpack.c.h.b16 %v993
    %v2275 = vunpack.c.l.b16 %v994
    %v2276 = vunpack.c.h.b16 %v994
    %v2277 = vunpack.c.l.b16 %v995
    %v2278 = vunpack.c.h.b16 %v995
    %v2279 = vunpack.c.l.b16 %v996
    %v2280 = vunpack.c.h.b16 %v996
    %v2281 = vunpack.c.l.b16 %v997
    %v2282 = vunpack.c.h.b16 %v997
    %v2283 = vunpack.c.l.b16 %v998
    %v2284 = vunpack.c.h.b16 %v998
    %v2285 = vunpack.c.l.b16 %v999
    %v2286 = vunpack.c.h.b16 %v999
    %v2287 = vunpack.c.l.b16 %v1000
    %v2288 = vunpack.c.h.b16 %v1000
    %v2289 = vunpack.c.l.b16 %v1001
    %v2290 = vunpack.c.h.b16 %v1001
    %v2291 = vunpack.c.l.b16 %v1002
    %v2292 = vunpack.c.h.b16 %v1002
    %v2293 = vunpack.c.l.b16 %v1003
    %v2294 = vunpack.c.h.b16 %v1003
    %v2295 = vunpack.c.l.b16 %v1004
    %v2296 = vunpack.c.h.b16 %v1004
    %v2297 = vunpack.c.l.b16 %v1005
    %v2298 = vunpack.c.h.b16 %v1005
    %v2299 = vunpack.c.l.b16 %v1006
    %v2300 = vunpack.c.h.b16 %v1006
    %v2301 = vunpack.c.l.b16 %v1007
    %v2302 = vunpack.c.h.b16 %v1007
    %v2303 = vunpack.c.l.b16 %v1008
    %v2304 = vunpack.c.h.b16 %v1008
    %v2305 = vunpack.c.l.b16 %v1009
    %v2306 = vunpack.c.h.b16 %v1009
    %v2307 = vunpack.c.l.b16 %v1010
    %v2308 = vunpack.c.h.b16 %v1010
    %v2309 = vunpack.c.l.b16 %v1011
    %v2310 = vunpack.c.h.b16 %v1011
    %v2311 = vunpack.c.l.b16 %v1012
    %v2312 = vunpack.c.h.b16 %v1012
    %v2313 = vunpack.c.l.b16 %v1013
    %v2314 = vunpack.c.h.b16 %v1013
    %v2315 = vunpack.c.l.b16 %v1014
    %v2316 = vunpack.c.h.b16 %v1014
    %v2317 = vunpack.c.l.b16 %v1015
    %v2318 = vunpack.c.h.b16 %v1015
    %v2319 = vunpack.c.l.b16 %v1016
    %v2320 = vunpack.c.h.b16 %v1016
    %v2321 = vunpack.c.l.b16 %v1017
    %v2322 = vunpack.c.h.b16 %v1017
    %v2323 = vunpack.c.l.b16 %v1018
    %v2324 = vunpack.c.h.b16 %v1018
    %v2325 = vunpack.c.l.b16 %v1019
    %v2326 = vunpack.c.h.b16 %v1019
    %v2327 = vunpack.c.l.b16 %v1020
    %v2328 = vunpack.c.h.b16 %v1020
    %v2329 = vunpack.c.l.b16 %v1021
    %v2330 = vunpack.c.h.b16 %v1021
    %v2331 = vunpack.c.l.b16 %v1022
    %v2332 = vunpack.c.h.b16 %v1022
    %v2333 = vunpack.c.l.b16 %v1023
    %v2334 = vunpack.c.h.b16 %v1023
    %v2335 = vunpack.c.l.b16 %v1024
    %v2336 = vunpack.c.h.b16 %v1024
    %v2337 = vunpack.c.l.b16 %v1025
    %v2338 = vunpack.c.h.b16 %v1025
    %v2339 = vunpack.c.l.b16 %v1026
    %v2340 = vunpack.c.h.b16 %v1026
    %v2341 = vunpack.c.l.b16 %v1027
    %v2342 = vunpack.c.h.b16 %v1027
    %v2343 = vunpack.c.l.b16 %v1028
    %v2344 = vunpack.c.h.b16 %v1028
    %v2345 = vunpack.c.l.b16 %v1029
    %v2346 = vunpack.c.h.b16 %v1029
    %v2347 = vunpack.c.l.b16 %v1030
    %v2348 = vunpack.c.h.b16 %v1030
    %v2349 = vunpack.c.l.b16 %v1031
    %v2350 = vunpack.c.h.b16 %v1031
    %v2351 = vunpack.c.l.b16 %v1032
    %v2352 = vunpack.c.h.b16 %v1032
    %v2353 = vunpack.c.l.b16 %v1033
    %v2354 = vunpack.c.h.b16 %v1033
    %v2355 = vunpack.c.l.b16 %v1034
    %v2356 = vunpack.c.h.b16 %v1034
    %v2357 = vunpack.c.l.b16 %v1035
    %v2358 = vunpack.c.h.b16 %v1035
    %v2359 = vunpack.c.l.b16 %v1036
    %v2360 = vunpack.c.h.b16 %v1036
    %v2361 = vunpack.c.l.b16 %v1037
    %v2362 = vunpack.c.h.b16 %v1037
    %v2363 = vunpack.c.l.b16 %v1038
    %v2364 = vunpack.c.h.b16 %v1038
    %v2365 = vunpack.c.l.b16 %v1039
    %v2366 = vunpack.c.h.b16 %v1039
    %v2367 = vunpack.c.l.b16 %v1040
    %v2368 = vunpack.c.h.b16 %v1040
    %v2369 = vunpack.c.l.b16 %v1041
    %v2370 = vunpack.c.h.b16 %v1041
    %v2371 = vunpack.c.l.b16 %v1042
    %v2372 = vunpack.c.h.b16 %v1042
    %v2373 = vunpack.c.l.b16 %v1043
    %v2374 = vunpack.c.h.b16 %v1043
    %v2375 = vunpack.c.l.b16 %v1044
    %v2376 = vunpack.c.h.b16 %v1044
    %v2377 = vunpack.c.l.b16 %v1045
    %v2378 = vunpack.c.h.b16 %v1045
    %v2379 = vunpack.c.l.b16 %v1046
    %v2380 = vunpack.c.h.b16 %v1046
    %v2381 = vunpack.c.l.b16 %v1047
    %v2382 = vunpack.c.h.b16 %v1047
    %v2383 = vunpack.c.l.b16 %v1048
    %v2384 = vunpack.c.h.b16 %v1048
    %v2385 = vunpack.c.l.b16 %v1049
    %v2386 = vunpack.c.h.b16 %v1049
    %v2387 = vunpack.c.l.b16 %v1050
    %v2388 = vunpack.c.h.b16 %v1050
    %v2389 = vunpack.c.l.b16 %v1051
    %v2390 = vunpack.c.h.b16 %v1051
    %v2391 = vunpack.c.l.b16 %v1052
    %v2392 = vunpack.c.h.b16 %v1052
    %v2393 = vunpack.c.l.b16 %v1053
    %v2394 = vunpack.c.h.b16 %v1053
    %v2395 = vunpack.c.l.b16 %v1054
    %v2396 = vunpack.c.h.b16 %v1054
    %v2397 = vunpack.c.l.b16 %v1055
    %v2398 = vunpack.c.h.b16 %v1055
    %v2399 = vunpack.c.l.b16 %v1056
    %v2400 = vunpack.c.h.b16 %v1056
    %v2401 = vunpack.c.l.b16 %v1057
    %v2402 = vunpack.c.h.b16 %v1057
    %v2403 = vunpack.c.l.b16 %v1058
    %v2404 = vunpack.c.h.b16 %v1058
    %v2405 = vunpack.c.l.b16 %v1059
    %v2406 = vunpack.c.h.b16 %v1059
    %v2407 = vunpack.c.l.b16 %v1060
    %v2408 = vunpack.c.h.b16 %v1060
    %v2409 = vunpack.c.l.b16 %v1061
    %v2410 = vunpack.c.h.b16 %v1061
    %v2411 = vunpack.c.l.b16 %v1062
    %v2412 = vunpack.c.h.b16 %v1062
    %v2413 = vunpack.c.l.b16 %v1063
    %v2414 = vunpack.c.h.b16 %v1063
    %v2415 = vunpack.c.l.b16 %v1064
    %v2416 = vunpack.c.h.b16 %v1064
    %v2417 = vunpack.c.l.b16 %v1065
    %v2418 = vunpack.c.h.b16 %v1065
    %v2419 = vunpack.c.l.b16 %v1066
    %v2420 = vunpack.c.h.b16 %v1066
    %v2421 = vunpack.c.l.b16 %v1067
    %v2422 = vunpack.c.h.b16 %v1067
    %v2423 = vunpack.c.l.b16 %v1068
    %v2424 = vunpack.c.h.b16 %v1068
    %v2425 = vunpack.c.l.b16 %v1069
    %v2426 = vunpack.c.h.b16 %v1069
    %v2427 = vunpack.c.l.b16 %v1070
    %v2428 = vunpack.c.h.b16 %v1070
    %v2429 = vunpack.c.l.b16 %v1071
    %v2430 = vunpack.c.h.b16 %v1071
    %v2431 = vunpack.c.l.b16 %v1072
    %v2432 = vunpack.c.h.b16 %v1072
    %v2433 = vunpack.c.l.b16 %v1073
    %v2434 = vunpack.c.h.b16 %v1073
    %v2435 = vunpack.c.l.b16 %v1074
    %v2436 = vunpack.c.h.b16 %v1074
    %v2437 = vunpack.c.l.b16 %v1075
    %v2438 = vunpack.c.h.b16 %v1075
    %v2439 = vunpack.c.l.b16 %v1076
    %v2440 = vunpack.c.h.b16 %v1076
    %v2441 = vunpack.c.l.b16 %v1077
    %v2442 = vunpack.c.h.b16 %v1077
    %v2443 = vunpack.c.l.b16 %v1078
    %v2444 = vunpack.c.h.b16 %v1078
    %v2445 = vunpack.c.l.b16 %v1079
    %v2446 = vunpack.c.h.b16 %v1079
    %v2447 = vunpack.c.l.b16 %v1080
    %v2448 = vunpack.c.h.b16 %v1080
    %v2449 = vunpack.c.l.b16 %v1081
    %v2450 = vunpack.c.h.b16 %v1081
    %v2451 = vunpack.c.l.b16 %v1082
    %v2452 = vunpack.c.h.b16 %v1082
    %v2453 = vunpack.c.l.b16 %v1083
    %v2454 = vunpack.c.h.b16 %v1083
    %v2455 = vunpack.c.l.b16 %v1084
    %v2456 = vunpack.c.h.b16 %v1084
    %v2457 = vunpack.c.l.b16 %v1085
    %v2458 = vunpack.c.h.b16 %v1085
    %v2459 = vunpack.c.l.b16 %v1086
    %v2460 = vunpack.c.h.b16 %v1086
    %v2461 = vunpack.c.l.b16 %v1087
    %v2462 = vunpack.c.h.b16 %v1087
    %v2463 = vunpack.c.l.b16 %v1088
    %v2464 = vunpack.c.h.b16 %v1088
    %v2465 = vunpack.c.l.b16 %v1089
    %v2466 = vunpack.c.h.b16 %v1089
    %v2467 = vunpack.c.l.b16 %v1090
    %v2468 = vunpack.c.h.b16 %v1090
    %v2469 = vunpack.c.l.b16 %v1091
    %v2470 = vunpack.c.h.b16 %v1091
    %v2471 = vunpack.c.l.b16 %v1092
    %v2472 = vunpack.c.h.b16 %v1092
    %v2473 = vunpack.c.l.b16 %v1093
    %v2474 = vunpack.c.h.b16 %v1093
    %v2475 = vunpack.c.l.b16 %v1094
    %v2476 = vunpack.c.h.b16 %v1094
    %v2477 = vunpack.c.l.b16 %v1095
    %v2478 = vunpack.c.h.b16 %v1095
    %v2479 = vunpack.c.l.b16 %v1096
    %v2480 = vunpack.c.h.b16 %v1096
    %v2481 = vunpack.c.l.b16 %v1097
    %v2482 = vunpack.c.h.b16 %v1097
    %v2483 = vunpack.c.l.b16 %v1098
    %v2484 = vunpack.c.h.b16 %v1098
    %v2485 = vunpack.c.l.b16 %v1099
    %v2486 = vunpack.c.h.b16 %v1099
    %v2487 = vunpack.c.l.b16 %v1100
    %v2488 = vunpack.c.h.b16 %v1100
    %v2489 = vunpack.c.l.b16 %v1101
    %v2490 = vunpack.c.h.b16 %v1101
    %v2491 = vunpack.c.l.b16 %v1102
    %v2492 = vunpack.c.h.b16 %v1102
    %v2493 = vunpack.c.l.b16 %v1103
    %v2494 = vunpack.c.h.b16 %v1103
    %v2495 = vunpack.c.l.b16 %v1104
    %v2496 = vunpack.c.h.b16 %v1104
    %v2497 = vunpack.c.l.b16 %v1105
    %v2498 = vunpack.c.h.b16 %v1105
    %v2499 = vunpack.c.l.b16 %v1106
    %v2500 = vunpack.c.h.b16 %v1106
    %v2501 = vunpack.c.l.b16 %v1107
    %v2502 = vunpack.c.h.b16 %v1107
    %v2503 = vunpack.c.l.b16 %v1108
    %v2504 = vunpack.c.h.b16 %v1108
    %v2505 = vunpack.c.l.b16 %v1109
    %v2506 = vunpack.c.h.b16 %v1109
    %v2507 = vunpack.c.l.b16 %v1110
    %v2508 = vunpack.c.h.b16 %v1110
    %v2509 = vunpack.c.l.b16 %v1111
    %v2510 = vunpack.c.h.b16 %v1111
    %v2511 = vunpack.c.l.b16 %v1112
    %v2512 = vunpack.c.h.b16 %v1112
    %v2513 = vunpack.c.l.b16 %v1113
    %v2514 = vunpack.c.h.b16 %v1113
    %v2515 = vunpack.c.l.b16 %v1114
    %v2516 = vunpack.c.h.b16 %v1114
    %v2517 = vunpack.c.l.b16 %v1115
    %v2518 = vunpack.c.h.b16 %v1115
    %v2519 = vunpack.c.l.b16 %v1116
    %v2520 = vunpack.c.h.b16 %v1116
    %v2521 = vunpack.c.l.b16 %v1117
    %v2522 = vunpack.c.h.b16 %v1117
    %v2523 = vunpack.c.l.b16 %v1118
    %v2524 = vunpack.c.h.b16 %v1118
    %v2525 = vunpack.c.l.b16 %v1119
    %v2526 = vunpack.c.h.b16 %v1119
    %v2527 = vunpack.c.l.b16 %v1120
    %v2528 = vunpack.c.h.b16 %v1120
    %v2529 = vunpack.c.l.b16 %v1121
    %v2530 = vunpack.c.h.b16 %v1121
    %v2531 = vunpack.c.l.b16 %v1122
    %v2532 = vunpack.c.h.b16 %v1122
    %v2533 = vunpack.c.l.b16 %v1123
    %v2534 = vunpack.c.h.b16 %v1123
    %v2535 = vunpack.c.l.b16 %v1124
    %v2536 = vunpack.c.h.b16 %v1124
    %v2537 = vunpack.c.l.b16 %v1125
    %v2538 = vunpack.c.h.b16 %v1125
    %v2539 = vunpack.c.l.b16 %v1126
    %v2540 = vunpack.c.h.b16 %v1126
    %v2541 = vunpack.c.l.b16 %v1127
    %v2542 = vunpack.c.h.b16 %v1127
    %v2543 = vunpack.c.l.b16 %v1128
    %v2544 = vunpack.c.h.b16 %v1128
    %v2545 = vunpack.c.l.b16 %v1129
    %v2546 = vunpack.c.h.b16 %v1129
    %v2547 = vunpack.c.l.b16 %v1130
    %v2548 = vunpack.c.h.b16 %v1130
    %v2549 = vunpack.c.l.b16 %v1131
    %v2550 = vunpack.c.h.b16 %v1131
    %v2551 = vunpack.c.l.b16 %v1132
    %v2552 = vunpack.c.h.b16 %v1132
    %v2553 = vunpack.c.l.b16 %v1133
    %v2554 = vunpack.c.h.b16 %v1133
    %v2555 = vunpack.c.l.b16 %v1134
    %v2556 = vunpack.c.h.b16 %v1134
    %v2557 = vunpack.c.l.b16 %v1135
    %v2558 = vunpack.c.h.b16 %v1135
    %v2559 = vunpack.c.l.b16 %v1136
    %v2560 = vunpack.c.h.b16 %v1136
    %v2561 = vunpack.c.l.b16 %v1137
    %v2562 = vunpack.c.h.b16 %v1137
    %v2563 = vunpack.c.l.b16 %v1138
    %v2564 = vunpack.c.h.b16 %v1138
    %v2565 = vunpack.c.l.b16 %v1139
    %v2566 = vunpack.c.h.b16 %v1139
    %v2567 = vunpack.c.l.b16 %v1140
    %v2568 = vunpack.c.h.b16 %v1140
    %v2569 = vunpack.c.l.b16 %v1141
    %v2570 = vunpack.c.h.b16 %v1141
    %v2571 = vunpack.c.l.b16 %v1142
    %v2572 = vunpack.c.h.b16 %v1142
    %v2573 = vunpack.c.l.b16 %v1143
    %v2574 = vunpack.c.h.b16 %v1143
    %v2575 = vunpack.c.l.b16 %v1144
    %v2576 = vunpack.c.h.b16 %v1144
    %v2577 = vunpack.c.l.b16 %v1145
    %v2578 = vunpack.c.h.b16 %v1145
    %v2579 = vunpack.c.l.b16 %v1146
    %v2580 = vunpack.c.h.b16 %v1146
    %v2581 = vunpack.c.l.b16 %v1147
    %v2582 = vunpack.c.h.b16 %v1147
    %v2583 = vunpack.c.l.b16 %v1148
    %v2584 = vunpack.c.h.b16 %v1148
    %v2585 = vunpack.c.l.b16 %v1149
    %v2586 = vunpack.c.h.b16 %v1149
    %v2587 = vunpack.c.l.b16 %v1150
    %v2588 = vunpack.c.h.b16 %v1150
    %v2589 = vunpack.c.l.b16 %v1151
    %v2590 = vunpack.c.h.b16 %v1151
    %v2591 = vunpack.c.l.b16 %v1152
    %v2592 = vunpack.c.h.b16 %v1152
    %v2593 = vunpack.c.l.b16 %v1153
    %v2594 = vunpack.c.h.b16 %v1153
    %v2595 = vunpack.c.l.b16 %v1154
    %v2596 = vunpack.c.h.b16 %v1154
    %v2597 = vunpack.c.l.b16 %v1155
    %v2598 = vunpack.c.h.b16 %v1155
    %v2599 = vunpack.c.l.b16 %v1156
    %v2600 = vunpack.c.h.b16 %v1156
    %v2601 = vunpack.c.l.b16 %v1157
    %v2602 = vunpack.c.h.b16 %v1157
    %v2603 = vunpack.c.l.b16 %v1158
    %v2604 = vunpack.c.h.b16 %v1158
    %v2605 = vunpack.c.l.b16 %v1159
    %v2606 = vunpack.c.h.b16 %v1159
    %v2607 = vunpack.c.l.b16 %v1160
    %v2608 = vunpack.c.h.b16 %v1160
    %v2609 = vunpack.c.l.b16 %v1161
    %v2610 = vunpack.c.h.b16 %v1161
    %v2611 = vunpack.c.l.b16 %v1162
    %v2612 = vunpack.c.h.b16 %v1162
    %v2613 = vunpack.c.l.b16 %v1163
    %v2614 = vunpack.c.h.b16 %v1163
    %v2615 = vunpack.c.l.b16 %v1164
    %v2616 = vunpack.c.h.b16 %v1164
    %v2617 = vunpack.c.l.b16 %v1165
    %v2618 = vunpack.c.h.b16 %v1165
    %v2619 = vunpack.c.l.b16 %v1166
    %v2620 = vunpack.c.h.b16 %v1166
    %v2621 = vunpack.c.l.b16 %v1167
    %v2622 = vunpack.c.h.b16 %v1167
    %v2623 = vunpack.c.l.b16 %v1168
    %v2624 = vunpack.c.h.b16 %v1168
    %v2625 = vunpack.c.l.b16 %v1169
    %v2626 = vunpack.c.h.b16 %v1169
    %v2627 = vunpack.c.l.b16 %v1170
    %v2628 = vunpack.c.h.b16 %v1170
    %v2629 = vunpack.c.l.b16 %v1171
    %v2630 = vunpack.c.h.b16 %v1171
    %v2631 = vunpack.c.l.b16 %v1172
    %v2632 = vunpack.c.h.b16 %v1172
    %v2633 = vunpack.c.l.b16 %v1173
    %v2634 = vunpack.c.h.b16 %v1173
    %v2635 = vunpack.c.l.b16 %v1174
    %v2636 = vunpack.c.h.b16 %v1174
    %v2637 = vunpack.c.l.b16 %v1175
    %v2638 = vunpack.c.h.b16 %v1175
    %v2639 = vunpack.c.l.b16 %v1176
    %v2640 = vunpack.c.h.b16 %v1176
    %v2641 = vunpack.c.l.b16 %v1177
    %v2642 = vunpack.c.h.b16 %v1177
    %v2643 = vunpack.c.l.b16 %v1178
    %v2644 = vunpack.c.h.b16 %v1178
    %v2645 = vunpack.c.l.b16 %v1179
    %v2646 = vunpack.c.h.b16 %v1179
    %v2647 = vunpack.c.l.b16 %v1180
    %v2648 = vunpack.c.h.b16 %v1180
    %v2649 = vunpack.c.l.b16 %v1181
    %v2650 = vunpack.c.h.b16 %v1181
    %v2651 = vunpack.c.l.b16 %v1182
    %v2652 = vunpack.c.h.b16 %v1182
    %v2653 = vunpack.c.l.b16 %v1183
    %v2654 = vunpack.c.h.b16 %v1183
    %v2655 = vunpack.c.l.b16 %v1184
    %v2656 = vunpack.c.h.b16 %v1184
    %v2657 = vunpack.c.l.b16 %v1185
    %v2658 = vunpack.c.h.b16 %v1185
    %v2659 = vunpack.c.l.b16 %v1186
    %v2660 = vunpack.c.h.b16 %v1186
    %v2661 = vunpack.c.l.b16 %v1187
    %v2662 = vunpack.c.h.b16 %v1187
    %v2663 = vunpack.c.l.b16 %v1188
    %v2664 = vunpack.c.h.b16 %v1188
    %v2665 = vunpack.c.l.b16 %v1189
    %v2666 = vunpack.c.h.b16 %v1189
    %v2667 = vunpack.c.l.b16 %v1190
    %v2668 = vunpack.c.h.b16 %v1190
    %v2669 = vunpack.c.l.b16 %v1191
    %v2670 = vunpack.c.h.b16 %v1191
    %v2671 = vunpack.c.l.b16 %v1192
    %v2672 = vunpack.c.h.b16 %v1192
    %v2673 = vunpack.c.l.b16 %v1193
    %v2674 = vunpack.c.h.b16 %v1193
    %v2675 = vunpack.c.l.b16 %v1194
    %v2676 = vunpack.c.h.b16 %v1194
    %v2677 = vunpack.c.l.b16 %v1195
    %v2678 = vunpack.c.h.b16 %v1195
    %v2679 = vunpack.c.l.b16 %v1196
    %v2680 = vunpack.c.h.b16 %v1196
    %v2681 = vunpack.c.l.b16 %v1197
    %v2682 = vunpack.c.h.b16 %v1197
    %v2683 = vunpack.c.l.b16 %v1198
    %v2684 = vunpack.c.h.b16 %v1198
    %v2685 = vunpack.c.l.b16 %v1199
    %v2686 = vunpack.c.h.b16 %v1199
    %v2687 = vunpack.c.l.b16 %v1200
    %v2688 = vunpack.c.h.b16 %v1200
    %v2689 = vunpack.c.l.b16 %v1201
    %v2690 = vunpack.c.h.b16 %v1201
    %v2691 = vunpack.c.l.b16 %v1202
    %v2692 = vunpack.c.h.b16 %v1202
    %v2693 = vunpack.c.l.b16 %v1203
    %v2694 = vunpack.c.h.b16 %v1203
    %v2695 = vunpack.c.l.b16 %v1204
    %v2696 = vunpack.c.h.b16 %v1204
    %v2697 = vunpack.c.l.b16 %v1205
    %v2698 = vunpack.c.h.b16 %v1205
    %v2699 = vunpack.c.l.b16 %v1206
    %v2700 = vunpack.c.h.b16 %v1206
    %v2701 = vunpack.c.l.b16 %v1207
    %v2702 = vunpack.c.h.b16 %v1207
    %v2703 = vunpack.c.l.b16 %v1208
    %v2704 = vunpack.c.h.b16 %v1208
    %v2705 = vunpack.c.l.b16 %v1209
    %v2706 = vunpack.c.h.b16 %v1209
    %v2707 = vunpack.c.l.b16 %v1210
    %v2708 = vunpack.c.h.b16 %v1210
    %v2709 = vunpack.c.l.b16 %v1211
    %v2710 = vunpack.c.h.b16 %v1211
    %v2711 = vunpack.c.l.b16 %v1212
    %v2712 = vunpack.c.h.b16 %v1212
    %v2713 = vunpack.c.l.b16 %v1213
    %v2714 = vunpack.c.h.b16 %v1213
    %v2715 = vunpack.c.l.b16 %v1214
    %v2716 = vunpack.c.h.b16 %v1214
    %v2717 = vunpack.c.l.b16 %v1215
    %v2718 = vunpack.c.h.b16 %v1215
    %v2719 = vunpack.c.l.b16 %v1216
    %v2720 = vunpack.c.h.b16 %v1216
    %v2721 = vunpack.c.l.b16 %v1217
    %v2722 = vunpack.c.h.b16 %v1217
    %v2723 = vunpack.c.l.b16 %v1218
    %v2724 = vunpack.c.h.b16 %v1218
    %v2725 = vunpack.c.l.b16 %v1219
    %v2726 = vunpack.c.h.b16 %v1219
    %v2727 = vunpack.c.l.b16 %v1220
    %v2728 = vunpack.c.h.b16 %v1220
    %v2729 = vunpack.c.l.b16 %v1221
    %v2730 = vunpack.c.h.b16 %v1221
    %v2731 = vunpack.c.l.b16 %v1222
    %v2732 = vunpack.c.h.b16 %v1222
    %v2733 = vunpack.c.l.b16 %v1223
    %v2734 = vunpack.c.h.b16 %v1223
    %v2735 = vunpack.c.l.b16 %v1224
    %v2736 = vunpack.c.h.b16 %v1224
    %v2737 = vunpack.c.l.b16 %v1225
    %v2738 = vunpack.c.h.b16 %v1225
    %v2739 = vunpack.c.l.b16 %v1226
    %v2740 = vunpack.c.h.b16 %v1226
    %v2741 = vunpack.c.l.b16 %v1227
    %v2742 = vunpack.c.h.b16 %v1227
    %v2743 = vunpack.c.l.b16 %v1228
    %v2744 = vunpack.c.h.b16 %v1228
    %v2745 = vunpack.c.l.b16 %v1229
    %v2746 = vunpack.c.h.b16 %v1229
    %v2747 = vunpack.c.l.b16 %v1230
    %v2748 = vunpack.c.h.b16 %v1230
    %v2749 = vunpack.c.l.b16 %v1231
    %v2750 = vunpack.c.h.b16 %v1231
    %v2751 = vunpack.c.l.b16 %v1232
    %v2752 = vunpack.c.h.b16 %v1232
    %v2753 = vunpack.c.l.b16 %v1233
    %v2754 = vunpack.c.h.b16 %v1233
    %v2755 = vunpack.c.l.b16 %v1234
    %v2756 = vunpack.c.h.b16 %v1234
    %v2757 = vunpack.c.l.b16 %v1235
    %v2758 = vunpack.c.h.b16 %v1235
    %v2759 = vunpack.c.l.b16 %v1236
    %v2760 = vunpack.c.h.b16 %v1236
    %v2761 = vunpack.c.l.b16 %v1237
    %v2762 = vunpack.c.h.b16 %v1237
    %v2763 = vunpack.c.l.b16 %v1238
    %v2764 = vunpack.c.h.b16 %v1238
    %v2765 = vunpack.c.l.b16 %v1239
    %v2766 = vunpack.c.h.b16 %v1239
    %v2767 = vunpack.c.l.b16 %v1240
    %v2768 = vunpack.c.h.b16 %v1240
    %v2769 = vunpack.c.l.b16 %v1241
    %v2770 = vunpack.c.h.b16 %v1241
    %v2771 = vunpack.c.l.b16 %v1242
    %v2772 = vunpack.c.h.b16 %v1242
    %v2773 = vunpack.c.l.b16 %v1243
    %v2774 = vunpack.c.h.b16 %v1243
    %v2775 = vunpack.c.l.b16 %v1244
    %v2776 = vunpack.c.h.b16 %v1244
    %v2777 = vunpack.c.l.b16 %v1245
    %v2778 = vunpack.c.h.b16 %v1245
    %v2779 = vunpack.c.l.b16 %v1246
    %v2780 = vunpack.c.h.b16 %v1246
    %v2781 = vunpack.c.l.b16 %v1247
    %v2782 = vunpack.c.h.b16 %v1247
    %v2783 = vunpack.c.l.b16 %v1248
    %v2784 = vunpack.c.h.b16 %v1248
    %v2785 = vunpack.c.l.b16 %v1249
    %v2786 = vunpack.c.h.b16 %v1249
    %v2787 = vunpack.c.l.b16 %v1250
    %v2788 = vunpack.c.h.b16 %v1250
    %v2789 = vunpack.c.l.b16 %v1251
    %v2790 = vunpack.c.h.b16 %v1251
    %v2791 = vunpack.c.l.b16 %v1252
    %v2792 = vunpack.c.h.b16 %v1252
    %v2793 = vunpack.c.l.b16 %v1253
    %v2794 = vunpack.c.h.b16 %v1253
    %v2795 = vunpack.c.l.b16 %v1254
    %v2796 = vunpack.c.h.b16 %v1254
    %v2797 = vunpack.c.l.b16 %v1255
    %v2798 = vunpack.c.h.b16 %v1255
    %v2799 = vunpack.c.l.b16 %v1256
    %v2800 = vunpack.c.h.b16 %v1256
    %v2801 = vunpack.c.l.b16 %v1257
    %v2802 = vunpack.c.h.b16 %v1257
    %v2803 = vunpack.c.l.b16 %v1258
    %v2804 = vunpack.c.h.b16 %v1258
    %v2805 = vunpack.c.l.b16 %v1259
    %v2806 = vunpack.c.h.b16 %v1259
    %v2807 = vunpack.c.l.b16 %v1260
    %v2808 = vunpack.c.h.b16 %v1260
    %v2809 = vunpack.c.l.b16 %v1261
    %v2810 = vunpack.c.h.b16 %v1261
    %v2811 = vunpack.c.l.b16 %v1262
    %v2812 = vunpack.c.h.b16 %v1262
    %v2813 = vunpack.c.l.b16 %v1263
    %v2814 = vunpack.c.h.b16 %v1263
    %v2815 = vunpack.c.l.b16 %v1264
    %v2816 = vunpack.c.h.b16 %v1264
    %v2817 = vunpack.c.l.b16 %v1265
    %v2818 = vunpack.c.h.b16 %v1265
    %v2819 = vunpack.c.l.b16 %v1266
    %v2820 = vunpack.c.h.b16 %v1266
    %v2821 = vunpack.c.l.b16 %v1267
    %v2822 = vunpack.c.h.b16 %v1267
    %v2823 = vunpack.c.l.b16 %v1268
    %v2824 = vunpack.c.h.b16 %v1268
    %v2825 = vunpack.c.l.b16 %v1269
    %v2826 = vunpack.c.h.b16 %v1269
    %v2827 = vunpack.c.l.b16 %v1270
    %v2828 = vunpack.c.h.b16 %v1270
    %v2829 = vunpack.c.l.b16 %v1271
    %v2830 = vunpack.c.h.b16 %v1271
    %v2831 = vunpack.c.l.b16 %v1272
    %v2832 = vunpack.c.h.b16 %v1272
    %v2833 = vunpack.c.l.b16 %v1273
    %v2834 = vunpack.c.h.b16 %v1273
    %v2835 = vunpack.c.l.b16 %v1274
    %v2836 = vunpack.c.h.b16 %v1274
    %v2837 = vunpack.c.l.b16 %v1275
    %v2838 = vunpack.c.h.b16 %v1275
    %v2839 = vunpack.c.l.b16 %v1276
    %v2840 = vunpack.c.h.b16 %v1276
    %v2841 = vunpack.c.l.b16 %v1277
    %v2842 = vunpack.c.h.b16 %v1277
    %v2843 = vunpack.c.l.b16 %v1278
    %v2844 = vunpack.c.h.b16 %v1278
    %v2845 = vunpack.c.l.b16 %v1279
    %v2846 = vunpack.c.h.b16 %v1279
    %v2847 = vunpack.c.l.b16 %v1280
    %v2848 = vunpack.c.h.b16 %v1280
    %v2849 = vunpack.c.l.b16 %v1281
    %v2850 = vunpack.c.h.b16 %v1281
    %v2851 = vunpack.c.l.b16 %v1282
    %v2852 = vunpack.c.h.b16 %v1282
    %v2853 = vunpack.c.l.b16 %v1283
    %v2854 = vunpack.c.h.b16 %v1283
    %v2855 = vunpack.c.l.b16 %v1284
    %v2856 = vunpack.c.h.b16 %v1284
    %v2857 = vunpack.c.l.b16 %v1285
    %v2858 = vunpack.c.h.b16 %v1285
    %v2859 = vunpack.c.l.b16 %v1286
    %v2860 = vunpack.c.h.b16 %v1286
    %v2861 = vunpack.c.l.b16 %v1287
    %v2862 = vunpack.c.h.b16 %v1287
    %v2863 = vunpack.c.l.b16 %v1288
    %v2864 = vunpack.c.h.b16 %v1288
    %v2865 = vunpack.c.l.b16 %v1289
    %v2866 = vunpack.c.h.b16 %v1289
    %v2867 = vunpack.c.l.b16 %v1290
    %v2868 = vunpack.c.h.b16 %v1290
    %v2869 = vpack.c.b16 %v1853, %v1845
    %v2870 = vpack.c.b16 %v1854, %v1846
    %v2871 = vpack.c.b16 %v1855, %v1847
    %v2872 = vpack.c.b16 %v1856, %v1848
    %v2873 = vpack.c.b16 %v1857, %v1849
    %v2874 = vpack.c.b16 %v1858, %v1850
    %v2875 = vpack.c.b16 %v1859, %v1851
    %v2876 = vpack.c.b16 %v1860, %v1852
    %v2877 = vpack.c.b16 %v1869, %v1861
    %v2878 = vpack.c.b16 %v1870, %v1862
    %v2879 = vpack.c.b16 %v1871, %v1863
    %v2880 = vpack.c.b16 %v1872, %v1864
    %v2881 = vpack.c.b16 %v1873, %v1865
    %v2882 = vpack.c.b16 %v1874, %v1866
    %v2883 = vpack.c.b16 %v1875, %v1867
    %v2884 = vpack.c.b16 %v1876, %v1868
    %v2885 = vpack.c.b16 %v1885, %v1877
    %v2886 = vpack.c.b16 %v1886, %v1878
    %v2887 = vpack.c.b16 %v1887, %v1879
    %v2888 = vpack.c.b16 %v1888, %v1880
    %v2889 = vpack.c.b16 %v1889, %v1881
    %v2890 = vpack.c.b16 %v1890, %v1882
    %v2891 = vpack.c.b16 %v1891, %v1883
    %v2892 = vpack.c.b16 %v1892, %v1884
    %v2893 = vpack.c.b16 %v1901, %v1893
    %v2894 = vpack.c.b16 %v1902, %v1894
    %v2895 = vpack.c.b16 %v1903, %v1895
    %v2896 = vpack.c.b16 %v1904, %v1896
    %v2897 = vpack.c.b16 %v1905, %v1897
    %v2898 = vpack.c.b16 %v1906, %v1898
    %v2899 = vpack.c.b16 %v1907, %v1899
    %v2900 = vpack.c.b16 %v1908, %v1900
    %v2901 = vpack.c.b16 %v1917, %v1909
    %v2902 = vpack.c.b16 %v1918, %v1910
    %v2903 = vpack.c.b16 %v1919, %v1911
    %v2904 = vpack.c.b16 %v1920, %v1912
    %v2905 = vpack.c.b16 %v1921, %v1913
    %v2906 = vpack.c.b16 %v1922, %v1914
    %v2907 = vpack.c.b16 %v1923, %v1915
    %v2908 = vpack.c.b16 %v1924, %v1916
    %v2909 = vpack.c.b16 %v1933, %v1925
    %v2910 = vpack.c.b16 %v1934, %v1926
    %v2911 = vpack.c.b16 %v1935, %v1927
    %v2912 = vpack.c.b16 %v1936, %v1928
    %v2913 = vpack.c.b16 %v1937, %v1929
    %v2914 = vpack.c.b16 %v1938, %v1930
    %v2915 = vpack.c.b16 %v1939, %v1931
    %v2916 = vpack.c.b16 %v1940, %v1932
    %v2917 = vpack.c.b16 %v1949, %v1941
    %v2918 = vpack.c.b16 %v1950, %v1942
    %v2919 = vpack.c.b16 %v1951, %v1943
    %v2920 = vpack.c.b16 %v1952, %v1944
    %v2921 = vpack.c.b16 %v1953, %v1945
    %v2922 = vpack.c.b16 %v1954, %v1946
    %v2923 = vpack.c.b16 %v1955, %v1947
    %v2924 = vpack.c.b16 %v1956, %v1948
    %v2925 = vpack.c.b16 %v1965, %v1957
    %v2926 = vpack.c.b16 %v1966, %v1958
    %v2927 = vpack.c.b16 %v1967, %v1959
    %v2928 = vpack.c.b16 %v1968, %v1960
    %v2929 = vpack.c.b16 %v1969, %v1961
    %v2930 = vpack.c.b16 %v1970, %v1962
    %v2931 = vpack.c.b16 %v1971, %v1963
    %v2932 = vpack.c.b16 %v1972, %v1964
    %v2933 = vpack.c.b16 %v1981, %v1973
    %v2934 = vpack.c.b16 %v1982, %v1974
    %v2935 = vpack.c.b16 %v1983, %v1975
    %v2936 = vpack.c.b16 %v1984, %v1976
    %v2937 = vpack.c.b16 %v1985, %v1977
    %v2938 = vpack.c.b16 %v1986, %v1978
    %v2939 = vpack.c.b16 %v1987, %v1979
    %v2940 = vpack.c.b16 %v1988, %v1980
    %v2941 = vpack.c.b16 %v1997, %v1989
    %v2942 = vpack.c.b16 %v1998, %v1990
    %v2943 = vpack.c.b16 %v1999, %v1991
    %v2944 = vpack.c.b16 %v2000, %v1992
    %v2945 = vpack.c.b16 %v2001, %v1993
    %v2946 = vpack.c.b16 %v2002, %v1994
    %v2947 = vpack.c.b16 %v2003, %v1995
    %v2948 = vpack.c.b16 %v2004, %v1996
    %v2949 = vpack.c.b16 %v2013, %v2005
    %v2950 = vpack.c.b16 %v2014, %v2006
    %v2951 = vpack.c.b16 %v2015, %v2007
    %v2952 = vpack.c.b16 %v2016, %v2008
    %v2953 = vpack.c.b16 %v2017, %v2009
    %v2954 = vpack.c.b16 %v2018, %v2010
    %v2955 = vpack.c.b16 %v2019, %v2011
    %v2956 = vpack.c.b16 %v2020, %v2012
    %v2957 = vpack.c.b16 %v2029, %v2021
    %v2958 = vpack.c.b16 %v2030, %v2022
    %v2959 = vpack.c.b16 %v2031, %v2023
    %v2960 = vpack.c.b16 %v2032, %v2024
    %v2961 = vpack.c.b16 %v2033, %v2025
    %v2962 = vpack.c.b16 %v2034, %v2026
    %v2963 = vpack.c.b16 %v2035, %v2027
    %v2964 = vpack.c.b16 %v2036, %v2028
    %v2965 = vpack.c.b16 %v2045, %v2037
    %v2966 = vpack.c.b16 %v2046, %v2038
    %v2967 = vpack.c.b16 %v2047, %v2039
    %v2968 = vpack.c.b16 %v2048, %v2040
    %v2969 = vpack.c.b16 %v2049, %v2041
    %v2970 = vpack.c.b16 %v2050, %v2042
    %v2971 = vpack.c.b16 %v2051, %v2043
    %v2972 = vpack.c.b16 %v2052, %v2044
    %v2973 = vpack.c.b16 %v2061, %v2053
    %v2974 = vpack.c.b16 %v2062, %v2054
    %v2975 = vpack.c.b16 %v2063, %v2055
    %v2976 = vpack.c.b16 %v2064, %v2056
    %v2977 = vpack.c.b16 %v2065, %v2057
    %v2978 = vpack.c.b16 %v2066, %v2058
    %v2979 = vpack.c.b16 %v2067, %v2059
    %v2980 = vpack.c.b16 %v2068, %v2060
    %v2981 = vpack.c.b16 %v2077, %v2069
    %v2982 = vpack.c.b16 %v2078, %v2070
    %v2983 = vpack.c.b16 %v2079, %v2071
    %v2984 = vpack.c.b16 %v2080, %v2072
    %v2985 = vpack.c.b16 %v2081, %v2073
    %v2986 = vpack.c.b16 %v2082, %v2074
    %v2987 = vpack.c.b16 %v2083, %v2075
    %v2988 = vpack.c.b16 %v2084, %v2076
    %v2989 = vpack.c.b16 %v2093, %v2085
    %v2990 = vpack.c.b16 %v2094, %v2086
    %v2991 = vpack.c.b16 %v2095, %v2087
    %v2992 = vpack.c.b16 %v2096, %v2088
    %v2993 = vpack.c.b16 %v2097, %v2089
    %v2994 = vpack.c.b16 %v2098, %v2090
    %v2995 = vpack.c.b16 %v2099, %v2091
    %v2996 = vpack.c.b16 %v2100, %v2092
    %v2997 = vpack.c.b16 %v2109, %v2101
    %v2998 = vpack.c.b16 %v2110, %v2102
    %v2999 = vpack.c.b16 %v2111, %v2103
    %v3000 = vpack.c.b16 %v2112, %v2104
    %v3001 = vpack.c.b16 %v2113, %v2105
    %v3002 = vpack.c.b16 %v2114, %v2106
    %v3003 = vpack.c.b16 %v2115, %v2107
    %v3004 = vpack.c.b16 %v2116, %v2108
    %v3005 = vpack.c.b16 %v2125, %v2117
    %v3006 = vpack.c.b16 %v2126, %v2118
    %v3007 = vpack.c.b16 %v2127, %v2119
    %v3008 = vpack.c.b16 %v2128, %v2120
    %v3009 = vpack.c.b16 %v2129, %v2121
    %v3010 = vpack.c.b16 %v2130, %v2122
    %v3011 = vpack.c.b16 %v2131, %v2123
    %v3012 = vpack.c.b16 %v2132, %v2124
    %v3013 = vpack.c.b16 %v2141, %v2133
    %v3014 = vpack.c.b16 %v2142, %v2134
    %v3015 = vpack.c.b16 %v2143, %v2135
    %v3016 = vpack.c.b16 %v2144, %v2136
    %v3017 = vpack.c.b16 %v2145, %v2137
    %v3018 = vpack.c.b16 %v2146, %v2138
    %v3019 = vpack.c.b16 %v2147, %v2139
    %v3020 = vpack.c.b16 %v2148, %v2140
    %v3021 = vpack.c.b16 %v2157, %v2149
    %v3022 = vpack.c.b16 %v2158, %v2150
    %v3023 = vpack.c.b16 %v2159, %v2151
    %v3024 = vpack.c.b16 %v2160, %v2152
    %v3025 = vpack.c.b16 %v2161, %v2153
    %v3026 = vpack.c.b16 %v2162, %v2154
    %v3027 = vpack.c.b16 %v2163, %v2155
    %v3028 = vpack.c.b16 %v2164, %v2156
    %v3029 = vpack.c.b16 %v2173, %v2165
    %v3030 = vpack.c.b16 %v2174, %v2166
    %v3031 = vpack.c.b16 %v2175, %v2167
    %v3032 = vpack.c.b16 %v2176, %v2168
    %v3033 = vpack.c.b16 %v2177, %v2169
    %v3034 = vpack.c.b16 %v2178, %v2170
    %v3035 = vpack.c.b16 %v2179, %v2171
    %v3036 = vpack.c.b16 %v2180, %v2172
    %v3037 = vpack.c.b16 %v2189, %v2181
    %v3038 = vpack.c.b16 %v2190, %v2182
    %v3039 = vpack.c.b16 %v2191, %v2183
    %v3040 = vpack.c.b16 %v2192, %v2184
    %v3041 = vpack.c.b16 %v2193, %v2185
    %v3042 = vpack.c.b16 %v2194, %v2186
    %v3043 = vpack.c.b16 %v2195, %v2187
    %v3044 = vpack.c.b16 %v2196, %v2188
    %v3045 = vpack.c.b16 %v2205, %v2197
    %v3046 = vpack.c.b16 %v2206, %v2198
    %v3047 = vpack.c.b16 %v2207, %v2199
    %v3048 = vpack.c.b16 %v2208, %v2200
    %v3049 = vpack.c.b16 %v2209, %v2201
    %v3050 = vpack.c.b16 %v2210, %v2202
    %v3051 = vpack.c.b16 %v2211, %v2203
    %v3052 = vpack.c.b16 %v2212, %v2204
    %v3053 = vpack.c.b16 %v2221, %v2213
    %v3054 = vpack.c.b16 %v2222, %v2214
    %v3055 = vpack.c.b16 %v2223, %v2215
    %v3056 = vpack.c.b16 %v2224, %v2216
    %v3057 = vpack.c.b16 %v2225, %v2217
    %v3058 = vpack.c.b16 %v2226, %v2218
    %v3059 = vpack.c.b16 %v2227, %v2219
    %v3060 = vpack.c.b16 %v2228, %v2220
    %v3061 = vpack.c.b16 %v2237, %v2229
    %v3062 = vpack.c.b16 %v2238, %v2230
    %v3063 = vpack.c.b16 %v2239, %v2231
    %v3064 = vpack.c.b16 %v2240, %v2232
    %v3065 = vpack.c.b16 %v2241, %v2233
    %v3066 = vpack.c.b16 %v2242, %v2234
    %v3067 = vpack.c.b16 %v2243, %v2235
    %v3068 = vpack.c.b16 %v2244, %v2236
    %v3069 = vpack.c.b16 %v2253, %v2245
    %v3070 = vpack.c.b16 %v2254, %v2246
    %v3071 = vpack.c.b16 %v2255, %v2247
    %v3072 = vpack.c.b16 %v2256, %v2248
    %v3073 = vpack.c.b16 %v2257, %v2249
    %v3074 = vpack.c.b16 %v2258, %v2250
    %v3075 = vpack.c.b16 %v2259, %v2251
    %v3076 = vpack.c.b16 %v2260, %v2252
    %v3077 = vpack.c.b16 %v2269, %v2261
    %v3078 = vpack.c.b16 %v2270, %v2262
    %v3079 = vpack.c.b16 %v2271, %v2263
    %v3080 = vpack.c.b16 %v2272, %v2264
    %v3081 = vpack.c.b16 %v2273, %v2265
    %v3082 = vpack.c.b16 %v2274, %v2266
    %v3083 = vpack.c.b16 %v2275, %v2267
    %v3084 = vpack.c.b16 %v2276, %v2268
    %v3085 = vpack.c.b16 %v2285, %v2277
    %v3086 = vpack.c.b16 %v2286, %v2278
    %v3087 = vpack.c.b16 %v2287, %v2279
    %v3088 = vpack.c.b16 %v2288, %v2280
    %v3089 = vpack.c.b16 %v2289, %v2281
    %v3090 = vpack.c.b16 %v2290, %v2282
    %v3091 = vpack.c.b16 %v2291, %v2283
    %v3092 = vpack.c.b16 %v2292, %v2284
    %v3093 = vpack.c.b16 %v2301, %v2293
    %v3094 = vpack.c.b16 %v2302, %v2294
    %v3095 = vpack.c.b16 %v2303, %v2295
    %v3096 = vpack.c.b16 %v2304, %v2296
    %v3097 = vpack.c.b16 %v2305, %v2297
    %v3098 = vpack.c.b16 %v2306, %v2298
    %v3099 = vpack.c.b16 %v2307, %v2299
    %v3100 = vpack.c.b16 %v2308, %v2300
    %v3101 = vpack.c.b16 %v2317, %v2309
    %v3102 = vpack.c.b16 %v2318, %v2310
    %v3103 = vpack.c.b16 %v2319, %v2311
    %v3104 = vpack.c.b16 %v2320, %v2312
    %v3105 = vpack.c.b16 %v2321, %v2313
    %v3106 = vpack.c.b16 %v2322, %v2314
    %v3107 = vpack.c.b16 %v2323, %v2315
    %v3108 = vpack.c.b16 %v2324, %v2316
    %v3109 = vpack.c.b16 %v2333, %v2325
    %v3110 = vpack.c.b16 %v2334, %v2326
    %v3111 = vpack.c.b16 %v2335, %v2327
    %v3112 = vpack.c.b16 %v2336, %v2328
    %v3113 = vpack.c.b16 %v2337, %v2329
    %v3114 = vpack.c.b16 %v2338, %v2330
    %v3115 = vpack.c.b16 %v2339, %v2331
    %v3116 = vpack.c.b16 %v2340, %v2332
    %v3117 = vpack.c.b16 %v2349, %v2341
    %v3118 = vpack.c.b16 %v2350, %v2342
    %v3119 = vpack.c.b16 %v2351, %v2343
    %v3120 = vpack.c.b16 %v2352, %v2344
    %v3121 = vpack.c.b16 %v2353, %v2345
    %v3122 = vpack.c.b16 %v2354, %v2346
    %v3123 = vpack.c.b16 %v2355, %v2347
    %v3124 = vpack.c.b16 %v2356, %v2348
    %v3125 = vpack.c.b16 %v2365, %v2357
    %v3126 = vpack.c.b16 %v2366, %v2358
    %v3127 = vpack.c.b16 %v2367, %v2359
    %v3128 = vpack.c.b16 %v2368, %v2360
    %v3129 = vpack.c.b16 %v2369, %v2361
    %v3130 = vpack.c.b16 %v2370, %v2362
    %v3131 = vpack.c.b16 %v2371, %v2363
    %v3132 = vpack.c.b16 %v2372, %v2364
    %v3133 = vpack.c.b16 %v2381, %v2373
    %v3134 = vpack.c.b16 %v2382, %v2374
    %v3135 = vpack.c.b16 %v2383, %v2375
    %v3136 = vpack.c.b16 %v2384, %v2376
    %v3137 = vpack.c.b16 %v2385, %v2377
    %v3138 = vpack.c.b16 %v2386, %v2378
    %v3139 = vpack.c.b16 %v2387, %v2379
    %v3140 = vpack.c.b16 %v2388, %v2380
    %v3141 = vpack.c.b16 %v2397, %v2389
    %v3142 = vpack.c.b16 %v2398, %v2390
    %v3143 = vpack.c.b16 %v2399, %v2391
    %v3144 = vpack.c.b16 %v2400, %v2392
    %v3145 = vpack.c.b16 %v2401, %v2393
    %v3146 = vpack.c.b16 %v2402, %v2394
    %v3147 = vpack.c.b16 %v2403, %v2395
    %v3148 = vpack.c.b16 %v2404, %v2396
    %v3149 = vpack.c.b16 %v2413, %v2405
    %v3150 = vpack.c.b16 %v2414, %v2406
    %v3151 = vpack.c.b16 %v2415, %v2407
    %v3152 = vpack.c.b16 %v2416, %v2408
    %v3153 = vpack.c.b16 %v2417, %v2409
    %v3154 = vpack.c.b16 %v2418, %v2410
    %v3155 = vpack.c.b16 %v2419, %v2411
    %v3156 = vpack.c.b16 %v2420, %v2412
    %v3157 = vpack.c.b16 %v2429, %v2421
    %v3158 = vpack.c.b16 %v2430, %v2422
    %v3159 = vpack.c.b16 %v2431, %v2423
    %v3160 = vpack.c.b16 %v2432, %v2424
    %v3161 = vpack.c.b16 %v2433, %v2425
    %v3162 = vpack.c.b16 %v2434, %v2426
    %v3163 = vpack.c.b16 %v2435, %v2427
    %v3164 = vpack.c.b16 %v2436, %v2428
    %v3165 = vpack.c.b16 %v2445, %v2437
    %v3166 = vpack.c.b16 %v2446, %v2438
    %v3167 = vpack.c.b16 %v2447, %v2439
    %v3168 = vpack.c.b16 %v2448, %v2440
    %v3169 = vpack.c.b16 %v2449, %v2441
    %v3170 = vpack.c.b16 %v2450, %v2442
    %v3171 = vpack.c.b16 %v2451, %v2443
    %v3172 = vpack.c.b16 %v2452, %v2444
    %v3173 = vpack.c.b16 %v2461, %v2453
    %v3174 = vpack.c.b16 %v2462, %v2454
    %v3175 = vpack.c.b16 %v2463, %v2455
    %v3176 = vpack.c.b16 %v2464, %v2456
    %v3177 = vpack.c.b16 %v2465, %v2457
    %v3178 = vpack.c.b16 %v2466, %v2458
    %v3179 = vpack.c.b16 %v2467, %v2459
    %v3180 = vpack.c.b16 %v2468, %v2460
    %v3181 = vpack.c.b16 %v2477, %v2469
    %v3182 = vpack.c.b16 %v2478, %v2470
    %v3183 = vpack.c.b16 %v2479, %v2471
    %v3184 = vpack.c.b16 %v2480, %v2472
    %v3185 = vpack.c.b16 %v2481, %v2473
    %v3186 = vpack.c.b16 %v2482, %v2474
    %v3187 = vpack.c.b16 %v2483, %v2475
    %v3188 = vpack.c.b16 %v2484, %v2476
    %v3189 = vpack.c.b16 %v2493, %v2485
    %v3190 = vpack.c.b16 %v2494, %v2486
    %v3191 = vpack.c.b16 %v2495, %v2487
    %v3192 = vpack.c.b16 %v2496, %v2488
    %v3193 = vpack.c.b16 %v2497, %v2489
    %v3194 = vpack.c.b16 %v2498, %v2490
    %v3195 = vpack.c.b16 %v2499, %v2491
    %v3196 = vpack.c.b16 %v2500, %v2492
    %v3197 = vpack.c.b16 %v2509, %v2501
    %v3198 = vpack.c.b16 %v2510, %v2502
    %v3199 = vpack.c.b16 %v2511, %v2503
    %v3200 = vpack.c.b16 %v2512, %v2504
    %v3201 = vpack.c.b16 %v2513, %v2505
    %v3202 = vpack.c.b16 %v2514, %v2506
    %v3203 = vpack.c.b16 %v2515, %v2507
    %v3204 = vpack.c.b16 %v2516, %v2508
    %v3205 = vpack.c.b16 %v2525, %v2517
    %v3206 = vpack.c.b16 %v2526, %v2518
    %v3207 = vpack.c.b16 %v2527, %v2519
    %v3208 = vpack.c.b16 %v2528, %v2520
    %v3209 = vpack.c.b16 %v2529, %v2521
    %v3210 = vpack.c.b16 %v2530, %v2522
    %v3211 = vpack.c.b16 %v2531, %v2523
    %v3212 = vpack.c.b16 %v2532, %v2524
    %v3213 = vpack.c.b16 %v2541, %v2533
    %v3214 = vpack.c.b16 %v2542, %v2534
    %v3215 = vpack.c.b16 %v2543, %v2535
    %v3216 = vpack.c.b16 %v2544, %v2536
    %v3217 = vpack.c.b16 %v2545, %v2537
    %v3218 = vpack.c.b16 %v2546, %v2538
    %v3219 = vpack.c.b16 %v2547, %v2539
    %v3220 = vpack.c.b16 %v2548, %v2540
    %v3221 = vpack.c.b16 %v2557, %v2549
    %v3222 = vpack.c.b16 %v2558, %v2550
    %v3223 = vpack.c.b16 %v2559, %v2551
    %v3224 = vpack.c.b16 %v2560, %v2552
    %v3225 = vpack.c.b16 %v2561, %v2553
    %v3226 = vpack.c.b16 %v2562, %v2554
    %v3227 = vpack.c.b16 %v2563, %v2555
    %v3228 = vpack.c.b16 %v2564, %v2556
    %v3229 = vpack.c.b16 %v2573, %v2565
    %v3230 = vpack.c.b16 %v2574, %v2566
    %v3231 = vpack.c.b16 %v2575, %v2567
    %v3232 = vpack.c.b16 %v2576, %v2568
    %v3233 = vpack.c.b16 %v2577, %v2569
    %v3234 = vpack.c.b16 %v2578, %v2570
    %v3235 = vpack.c.b16 %v2579, %v2571
    %v3236 = vpack.c.b16 %v2580, %v2572
    %v3237 = vpack.c.b16 %v2589, %v2581
    %v3238 = vpack.c.b16 %v2590, %v2582
    %v3239 = vpack.c.b16 %v2591, %v2583
    %v3240 = vpack.c.b16 %v2592, %v2584
    %v3241 = vpack.c.b16 %v2593, %v2585
    %v3242 = vpack.c.b16 %v2594, %v2586
    %v3243 = vpack.c.b16 %v2595, %v2587
    %v3244 = vpack.c.b16 %v2596, %v2588
    %v3245 = vpack.c.b16 %v2605, %v2597
    %v3246 = vpack.c.b16 %v2606, %v2598
    %v3247 = vpack.c.b16 %v2607, %v2599
    %v3248 = vpack.c.b16 %v2608, %v2600
    %v3249 = vpack.c.b16 %v2609, %v2601
    %v3250 = vpack.c.b16 %v2610, %v2602
    %v3251 = vpack.c.b16 %v2611, %v2603
    %v3252 = vpack.c.b16 %v2612, %v2604
    %v3253 = vpack.c.b16 %v2621, %v2613
    %v3254 = vpack.c.b16 %v2622, %v2614
    %v3255 = vpack.c.b16 %v2623, %v2615
    %v3256 = vpack.c.b16 %v2624, %v2616
    %v3257 = vpack.c.b16 %v2625, %v2617
    %v3258 = vpack.c.b16 %v2626, %v2618
    %v3259 = vpack.c.b16 %v2627, %v2619
    %v3260 = vpack.c.b16 %v2628, %v2620
    %v3261 = vpack.c.b16 %v2637, %v2629
    %v3262 = vpack.c.b16 %v2638, %v2630
    %v3263 = vpack.c.b16 %v2639, %v2631
    %v3264 = vpack.c.b16 %v2640, %v2632
    %v3265 = vpack.c.b16 %v2641, %v2633
    %v3266 = vpack.c.b16 %v2642, %v2634
    %v3267 = vpack.c.b16 %v2643, %v2635
    %v3268 = vpack.c.b16 %v2644, %v2636
    %v3269 = vpack.c.b16 %v2653, %v2645
    %v3270 = vpack.c.b16 %v2654, %v2646
    %v3271 = vpack.c.b16 %v2655, %v2647
    %v3272 = vpack.c.b16 %v2656, %v2648
    %v3273 = vpack.c.b16 %v2657, %v2649
    %v3274 = vpack.c.b16 %v2658, %v2650
    %v3275 = vpack.c.b16 %v2659, %v2651
    %v3276 = vpack.c.b16 %v2660, %v2652
    %v3277 = vpack.c.b16 %v2669, %v2661
    %v3278 = vpack.c.b16 %v2670, %v2662
    %v3279 = vpack.c.b16 %v2671, %v2663
    %v3280 = vpack.c.b16 %v2672, %v2664
    %v3281 = vpack.c.b16 %v2673, %v2665
    %v3282 = vpack.c.b16 %v2674, %v2666
    %v3283 = vpack.c.b16 %v2675, %v2667
    %v3284 = vpack.c.b16 %v2676, %v2668
    %v3285 = vpack.c.b16 %v2685, %v2677
    %v3286 = vpack.c.b16 %v2686, %v2678
    %v3287 = vpack.c.b16 %v2687, %v2679
    %v3288 = vpack.c.b16 %v2688, %v2680
    %v3289 = vpack.c.b16 %v2689, %v2681
    %v3290 = vpack.c.b16 %v2690, %v2682
    %v3291 = vpack.c.b16 %v2691, %v2683
    %v3292 = vpack.c.b16 %v2692, %v2684
    %v3293 = vpack.c.b16 %v2701, %v2693
    %v3294 = vpack.c.b16 %v2702, %v2694
    %v3295 = vpack.c.b16 %v2703, %v2695
    %v3296 = vpack.c.b16 %v2704, %v2696
    %v3297 = vpack.c.b16 %v2705, %v2697
    %v3298 = vpack.c.b16 %v2706, %v2698
    %v3299 = vpack.c.b16 %v2707, %v2699
    %v3300 = vpack.c.b16 %v2708, %v2700
    %v3301 = vpack.c.b16 %v2717, %v2709
    %v3302 = vpack.c.b16 %v2718, %v2710
    %v3303 = vpack.c.b16 %v2719, %v2711
    %v3304 = vpack.c.b16 %v2720, %v2712
    %v3305 = vpack.c.b16 %v2721, %v2713
    %v3306 = vpack.c.b16 %v2722, %v2714
    %v3307 = vpack.c.b16 %v2723, %v2715
    %v3308 = vpack.c.b16 %v2724, %v2716
    %v3309 = vpack.c.b16 %v2733, %v2725
    %v3310 = vpack.c.b16 %v2734, %v2726
    %v3311 = vpack.c.b16 %v2735, %v2727
    %v3312 = vpack.c.b16 %v2736, %v2728
    %v3313 = vpack.c.b16 %v2737, %v2729
    %v3314 = vpack.c.b16 %v2738, %v2730
    %v3315 = vpack.c.b16 %v2739, %v2731
    %v3316 = vpack.c.b16 %v2740, %v2732
    %v3317 = vpack.c.b16 %v2749, %v2741
    %v3318 = vpack.c.b16 %v2750, %v2742
    %v3319 = vpack.c.b16 %v2751, %v2743
    %v3320 = vpack.c.b16 %v2752, %v2744
    %v3321 = vpack.c.b16 %v2753, %v2745
    %v3322 = vpack.c.b16 %v2754, %v2746
    %v3323 = vpack.c.b16 %v2755, %v2747
    %v3324 = vpack.c.b16 %v2756, %v2748
    %v3325 = vpack.c.b16 %v2765, %v2757
    %v3326 = vpack.c.b16 %v2766, %v2758
    %v3327 = vpack.c.b16 %v2767, %v2759
    %v3328 = vpack.c.b16 %v2768, %v2760
    %v3329 = vpack.c.b16 %v2769, %v2761
    %v3330 = vpack.c.b16 %v2770, %v2762
    %v3331 = vpack.c.b16 %v2771, %v2763
    %v3332 = vpack.c.b16 %v2772, %v2764
    %v3333 = vpack.c.b16 %v2781, %v2773
    %v3334 = vpack.c.b16 %v2782, %v2774
    %v3335 = vpack.c.b16 %v2783, %v2775
    %v3336 = vpack.c.b16 %v2784, %v2776
    %v3337 = vpack.c.b16 %v2785, %v2777
    %v3338 = vpack.c.b16 %v2786, %v2778
    %v3339 = vpack.c.b16 %v2787, %v2779
    %v3340 = vpack.c.b16 %v2788, %v2780
    %v3341 = vpack.c.b16 %v2797, %v2789
    %v3342 = vpack.c.b16 %v2798, %v2790
    %v3343 = vpack.c.b16 %v2799, %v2791
    %v3344 = vpack.c.b16 %v2800, %v2792
    %v3345 = vpack.c.b16 %v2801, %v2793
    %v3346 = vpack.c.b16 %v2802, %v2794
    %v3347 = vpack.c.b16 %v2803, %v2795
    %v3348 = vpack.c.b16 %v2804, %v2796
    %v3349 = vpack.c.b16 %v2813, %v2805
    %v3350 = vpack.c.b16 %v2814, %v2806
    %v3351 = vpack.c.b16 %v2815, %v2807
    %v3352 = vpack.c.b16 %v2816, %v2808
    %v3353 = vpack.c.b16 %v2817, %v2809
    %v3354 = vpack.c.b16 %v2818, %v2810
    %v3355 = vpack.c.b16 %v2819, %v2811
    %v3356 = vpack.c.b16 %v2820, %v2812
    %v3357 = vpack.c.b16 %v2829, %v2821
    %v3358 = vpack.c.b16 %v2830, %v2822
    %v3359 = vpack.c.b16 %v2831, %v2823
    %v3360 = vpack.c.b16 %v2832, %v2824
    %v3361 = vpack.c.b16 %v2833, %v2825
    %v3362 = vpack.c.b16 %v2834, %v2826
    %v3363 = vpack.c.b16 %v2835, %v2827
    %v3364 = vpack.c.b16 %v2836, %v2828
    %v3365 = vpack.c.b16 %v2845, %v2837
    %v3366 = vpack.c.b16 %v2846, %v2838
    %v3367 = vpack.c.b16 %v2847, %v2839
    %v3368 = vpack.c.b16 %v2848, %v2840
    %v3369 = vpack.c.b16 %v2849, %v2841
    %v3370 = vpack.c.b16 %v2850, %v2842
    %v3371 = vpack.c.b16 %v2851, %v2843
    %v3372 = vpack.c.b16 %v2852, %v2844
    %v3373 = vpack.c.b16 %v2861, %v2853
    %v3374 = vpack.c.b16 %v2862, %v2854
    %v3375 = vpack.c.b16 %v2863, %v2855
    %v3376 = vpack.c.b16 %v2864, %v2856
    %v3377 = vpack.c.b16 %v2865, %v2857
    %v3378 = vpack.c.b16 %v2866, %v2858
    %v3379 = vpack.c.b16 %v2867, %v2859
    %v3380 = vpack.c.b16 %v2868, %v2860
    %3893 = vmatprep.subr.bf16.mxu0 %v2870
    %3894 = vmatpush1.bf16.msra.mxu0 %v2869
    %3895 = vmatprep.subr.bf16.mxu0 %v2878
    %3896 = vmatpush1.bf16.msra.mxu0 %v2877
    %3897 = vmatprep.subr.bf16.mxu0 %v2886
    %3898 = vmatpush1.bf16.msra.mxu0 %v2885
    %3899 = vmatprep.subr.bf16.mxu0 %v2894
    %3900 = vmatpush1.bf16.msra.mxu0 %v2893
    %3901 = vmatprep.subr.bf16.mxu0 %v2902
    %3902 = vmatpush1.bf16.msra.mxu0 %v2901
    %3903 = vmatprep.subr.bf16.mxu0 %v2910
    %3904 = vmatpush1.bf16.msra.mxu0 %v2909
    %3905 = vmatprep.subr.bf16.mxu0 %v2918
    %3906 = vmatpush1.bf16.msra.mxu0 %v2917
    %3907 = vmatprep.subr.bf16.mxu0 %v2926
    %3908 = vmatpush1.bf16.msra.mxu0 %v2925
    %3909 = vmatprep.subr.bf16.mxu0 %v2934
    %3910 = vmatpush1.bf16.msra.mxu0 %v2933
    %3911 = vmatprep.subr.bf16.mxu0 %v2942
    %3912 = vmatpush1.bf16.msra.mxu0 %v2941
    %3913 = vmatprep.subr.bf16.mxu0 %v2950
    %3914 = vmatpush1.bf16.msra.mxu0 %v2949
    %3915 = vmatprep.subr.bf16.mxu0 %v2958
    %3916 = vmatpush1.bf16.msra.mxu0 %v2957
    %3917 = vmatprep.subr.bf16.mxu0 %v2966
    %3918 = vmatpush1.bf16.msra.mxu0 %v2965
    %3919 = vmatprep.subr.bf16.mxu0 %v2974
    %3920 = vmatpush1.bf16.msra.mxu0 %v2973
    %3921 = vmatprep.subr.bf16.mxu0 %v2982
    %3922 = vmatpush1.bf16.msra.mxu0 %v2981
    %3923 = vmatprep.subr.bf16.mxu0 %v2990
    %3924 = vmatpush1.bf16.msra.mxu0 %v2989
    %3925 = vmatprep.mubr.bf16.mxu0 %v772
    %3926 = vmatmul.mubr.bf16.gmra.mrb[0].mxu0 %v771
    %v3927 = vpop.f32.mrb[0].mxu0
    %v3928 = vadd.f32 %v1296, %v3927
    %v3929 = vpop.f32.mrb[0].mxu0
    %v3930 = vadd.f32 %v1300, %v3929
    %v3931 = vpop.f32.mrb[0].mxu0
    %v3932 = vadd.f32 %v1296, %v3931
    %v3933 = vpop.f32.mrb[0].mxu0
    %v3934 = vadd.f32 %v1300, %v3933
    %3935 = vdwg.mxu0
    %3936 = vmatprep.subr.bf16.mxu0 %v2998
    %3937 = vmatpush1.bf16.msra.mxu0 %v2997
    %3938 = vmatprep.subr.bf16.mxu0 %v3006
    %3939 = vmatpush1.bf16.msra.mxu0 %v3005
    %3940 = vmatprep.subr.bf16.mxu0 %v3014
    %3941 = vmatpush1.bf16.msra.mxu0 %v3013
    %3942 = vmatprep.subr.bf16.mxu0 %v3022
    %3943 = vmatpush1.bf16.msra.mxu0 %v3021
    %3944 = vmatprep.subr.bf16.mxu0 %v3030
    %3945 = vmatpush1.bf16.msra.mxu0 %v3029
    %3946 = vmatprep.subr.bf16.mxu0 %v3038
    %3947 = vmatpush1.bf16.msra.mxu0 %v3037
    %3948 = vmatprep.subr.bf16.mxu0 %v3046
    %3949 = vmatpush1.bf16.msra.mxu0 %v3045
    %3950 = vmatprep.subr.bf16.mxu0 %v3054
    %3951 = vmatpush1.bf16.msra.mxu0 %v3053
    %3952 = vmatprep.subr.bf16.mxu0 %v3062
    %3953 = vmatpush1.bf16.msra.mxu0 %v3061
    %3954 = vmatprep.subr.bf16.mxu0 %v3070
    %3955 = vmatpush1.bf16.msra.mxu0 %v3069
    %3956 = vmatprep.subr.bf16.mxu0 %v3078
    %3957 = vmatpush1.bf16.msra.mxu0 %v3077
    %3958 = vmatprep.subr.bf16.mxu0 %v3086
    %3959 = vmatpush1.bf16.msra.mxu0 %v3085
    %3960 = vmatprep.subr.bf16.mxu0 %v3094
    %3961 = vmatpush1.bf16.msra.mxu0 %v3093
    %3962 = vmatprep.subr.bf16.mxu0 %v3102
    %3963 = vmatpush1.bf16.msra.mxu0 %v3101
    %3964 = vmatprep.subr.bf16.mxu0 %v3110
    %3965 = vmatpush1.bf16.msra.mxu0 %v3109
    %3966 = vmatprep.subr.bf16.mxu0 %v3118
    %3967 = vmatpush1.bf16.msra.mxu0 %v3117
    %3968 = vmatprep.mubr.bf16.mxu0 %v774
    %3969 = vmatmul.mubr.bf16.gmra.mrb[0].mxu0 %v773
    %v3970 = vpop.f32.mrb[0].mxu0
    %v3971 = vadd.f32 %v3928, %v3970
    %v3972 = vpop.f32.mrb[0].mxu0
    %v3973 = vadd.f32 %v3930, %v3972
    %v3974 = vpop.f32.mrb[0].mxu0
    %v3975 = vadd.f32 %v3932, %v3974
    %v3976 = vpop.f32.mrb[0].mxu0
    %v3977 = vadd.f32 %v3934, %v3976
    %3978 = vdwg.mxu0
    %3979 = vmatprep.subr.bf16.mxu0 %v3126
    %3980 = vmatpush1.bf16.msra.mxu0 %v3125
    %3981 = vmatprep.subr.bf16.mxu0 %v3134
    %3982 = vmatpush1.bf16.msra.mxu0 %v3133
    %3983 = vmatprep.subr.bf16.mxu0 %v3142
    %3984 = vmatpush1.bf16.msra.mxu0 %v3141
    %3985 = vmatprep.subr.bf16.mxu0 %v3150
    %3986 = vmatpush1.bf16.msra.mxu0 %v3149
    %3987 = vmatprep.subr.bf16.mxu0 %v3158
    %3988 = vmatpush1.bf16.msra.mxu0 %v3157
    %3989 = vmatprep.subr.bf16.mxu0 %v3166
    %3990 = vmatpush1.bf16.msra.mxu0 %v3165
    %3991 = vmatprep.subr.bf16.mxu0 %v3174
    %3992 = vmatpush1.bf16.msra.mxu0 %v3173
    %3993 = vmatprep.subr.bf16.mxu0 %v3182
    %3994 = vmatpush1.bf16.msra.mxu0 %v3181
    %3995 = vmatprep.subr.bf16.mxu0 %v3190
    %3996 = vmatpush1.bf16.msra.mxu0 %v3189
    %3997 = vmatprep.subr.bf16.mxu0 %v3198
    %3998 = vmatpush1.bf16.msra.mxu0 %v3197
    %3999 = vmatprep.subr.bf16.mxu0 %v3206
    %4000 = vmatpush1.bf16.msra.mxu0 %v3205
    %4001 = vmatprep.subr.bf16.mxu0 %v3214
    %4002 = vmatpush1.bf16.msra.mxu0 %v3213
    %4003 = vmatprep.subr.bf16.mxu0 %v3222
    %4004 = vmatpush1.bf16.msra.mxu0 %v3221
    %4005 = vmatprep.subr.bf16.mxu0 %v3230
    %4006 = vmatpush1.bf16.msra.mxu0 %v3229
    %4007 = vmatprep.subr.bf16.mxu0 %v3238
    %4008 = vmatpush1.bf16.msra.mxu0 %v3237
    %4009 = vmatprep.subr.bf16.mxu0 %v3246
    %4010 = vmatpush1.bf16.msra.mxu0 %v3245
    %4011 = vmatprep.mubr.bf16.mxu0 %v776
    %4012 = vmatmul.mubr.bf16.gmra.mrb[0].mxu0 %v775
    %v4013 = vpop.f32.mrb[0].mxu0
    %v4014 = vadd.f32 %v3971, %v4013
    %v4015 = vpop.f32.mrb[0].mxu0
    %v4016 = vadd.f32 %v3973, %v4015
    %v4017 = vpop.f32.mrb[0].mxu0
    %v4018 = vadd.f32 %v3975, %v4017
    %v4019 = vpop.f32.mrb[0].mxu0
    %v4020 = vadd.f32 %v3977, %v4019
    %4021 = vdwg.mxu0
    %4022 = vmatprep.subr.bf16.mxu0 %v3254
    %4023 = vmatpush1.bf16.msra.mxu0 %v3253
    %4024 = vmatprep.subr.bf16.mxu0 %v3262
    %4025 = vmatpush1.bf16.msra.mxu0 %v3261
    %4026 = vmatprep.subr.bf16.mxu0 %v3270
    %4027 = vmatpush1.bf16.msra.mxu0 %v3269
    %4028 = vmatprep.subr.bf16.mxu0 %v3278
    %4029 = vmatpush1.bf16.msra.mxu0 %v3277
    %4030 = vmatprep.subr.bf16.mxu0 %v3286
    %4031 = vmatpush1.bf16.msra.mxu0 %v3285
    %4032 = vmatprep.subr.bf16.mxu0 %v3294
    %4033 = vmatpush1.bf16.msra.mxu0 %v3293
    %4034 = vmatprep.subr.bf16.mxu0 %v3302
    %4035 = vmatpush1.bf16.msra.mxu0 %v3301
    %4036 = vmatprep.subr.bf16.mxu0 %v3310
    %4037 = vmatpush1.bf16.msra.mxu0 %v3309
    %4038 = vmatprep.subr.bf16.mxu0 %v3318
    %4039 = vmatpush1.bf16.msra.mxu0 %v3317
    %4040 = vmatprep.subr.bf16.mxu0 %v3326
    %4041 = vmatpush1.bf16.msra.mxu0 %v3325
    %4042 = vmatprep.subr.bf16.mxu0 %v3334
    %4043 = vmatpush1.bf16.msra.mxu0 %v3333
    %4044 = vmatprep.subr.bf16.mxu0 %v3342
    %4045 = vmatpush1.bf16.msra.mxu0 %v3341
    %4046 = vmatprep.subr.bf16.mxu0 %v3350
    %4047 = vmatpush1.bf16.msra.mxu0 %v3349
    %4048 = vmatprep.subr.bf16.mxu0 %v3358
    %4049 = vmatpush1.bf16.msra.mxu0 %v3357
    %4050 = vmatprep.subr.bf16.mxu0 %v3366
    %4051 = vmatpush1.bf16.msra.mxu0 %v3365
    %4052 = vmatprep.subr.bf16.mxu0 %v3374
    %4053 = vmatpush1.bf16.msra.mxu0 %v3373
    %4054 = vmatprep.mubr.bf16.mxu0 %v778
    %4055 = vmatmul.mubr.bf16.gmra.mrb[0].mxu0 %v777
    %v4056 = vpop.f32.mrb[0].mxu0
    %v4057 = vadd.f32 %v4014, %v4056
    %v4058 = vpop.f32.mrb[0].mxu0
    %v4059 = vadd.f32 %v4016, %v4058
    %v4060 = vpop.f32.mrb[0].mxu0
    %v4061 = vadd.f32 %v4018, %v4060
    %v4062 = vpop.f32.mrb[0].mxu0
    %v4063 = vadd.f32 %v4020, %v4062
    %4064 = vdwg.mxu0
    %4065 = vmatprep.subr.bf16.mxu0 %v2872
    %4066 = vmatpush1.bf16.msra.mxu0 %v2871
    %4067 = vmatprep.subr.bf16.mxu0 %v2880
    %4068 = vmatpush1.bf16.msra.mxu0 %v2879
    %4069 = vmatprep.subr.bf16.mxu0 %v2888
    %4070 = vmatpush1.bf16.msra.mxu0 %v2887
    %4071 = vmatprep.subr.bf16.mxu0 %v2896
    %4072 = vmatpush1.bf16.msra.mxu0 %v2895
    %4073 = vmatprep.subr.bf16.mxu0 %v2904
    %4074 = vmatpush1.bf16.msra.mxu0 %v2903
    %4075 = vmatprep.subr.bf16.mxu0 %v2912
    %4076 = vmatpush1.bf16.msra.mxu0 %v2911
    %4077 = vmatprep.subr.bf16.mxu0 %v2920
    %4078 = vmatpush1.bf16.msra.mxu0 %v2919
    %4079 = vmatprep.subr.bf16.mxu0 %v2928
    %4080 = vmatpush1.bf16.msra.mxu0 %v2927
    %4081 = vmatprep.subr.bf16.mxu0 %v2936
    %4082 = vmatpush1.bf16.msra.mxu0 %v2935
    %4083 = vmatprep.subr.bf16.mxu0 %v2944
    %4084 = vmatpush1.bf16.msra.mxu0 %v2943
    %4085 = vmatprep.subr.bf16.mxu0 %v2952
    %4086 = vmatpush1.bf16.msra.mxu0 %v2951
    %4087 = vmatprep.subr.bf16.mxu0 %v2960
    %4088 = vmatpush1.bf16.msra.mxu0 %v2959
    %4089 = vmatprep.subr.bf16.mxu0 %v2968
    %4090 = vmatpush1.bf16.msra.mxu0 %v2967
    %4091 = vmatprep.subr.bf16.mxu0 %v2976
    %4092 = vmatpush1.bf16.msra.mxu0 %v2975
    %4093 = vmatprep.subr.bf16.mxu0 %v2984
    %4094 = vmatpush1.bf16.msra.mxu0 %v2983
    %4095 = vmatprep.subr.bf16.mxu0 %v2992
    %4096 = vmatpush1.bf16.msra.mxu0 %v2991
    %4097 = vmatprep.mubr.bf16.mxu0 %v772
    %4098 = vmatmul.mubr.bf16.gmra.mrb[0].mxu0 %v771
    %v4099 = vpop.f32.mrb[0].mxu0
    %v4100 = vadd.f32 %v1304, %v4099
    %v4101 = vpop.f32.mrb[0].mxu0
    %v4102 = vadd.f32 %v1308, %v4101
    %v4103 = vpop.f32.mrb[0].mxu0
    %v4104 = vadd.f32 %v1304, %v4103
    %v4105 = vpop.f32.mrb[0].mxu0
    %v4106 = vadd.f32 %v1308, %v4105
    %4107 = vdwg.mxu0
    %4108 = vmatprep.subr.bf16.mxu0 %v3000
    %4109 = vmatpush1.bf16.msra.mxu0 %v2999
    %4110 = vmatprep.subr.bf16.mxu0 %v3008
    %4111 = vmatpush1.bf16.msra.mxu0 %v3007
    %4112 = vmatprep.subr.bf16.mxu0 %v3016
    %4113 = vmatpush1.bf16.msra.mxu0 %v3015
    %4114 = vmatprep.subr.bf16.mxu0 %v3024
    %4115 = vmatpush1.bf16.msra.mxu0 %v3023
    %4116 = vmatprep.subr.bf16.mxu0 %v3032
    %4117 = vmatpush1.bf16.msra.mxu0 %v3031
    %4118 = vmatprep.subr.bf16.mxu0 %v3040
    %4119 = vmatpush1.bf16.msra.mxu0 %v3039
    %4120 = vmatprep.subr.bf16.mxu0 %v3048
    %4121 = vmatpush1.bf16.msra.mxu0 %v3047
    %4122 = vmatprep.subr.bf16.mxu0 %v3056
    %4123 = vmatpush1.bf16.msra.mxu0 %v3055
    %4124 = vmatprep.subr.bf16.mxu0 %v3064
    %4125 = vmatpush1.bf16.msra.mxu0 %v3063
    %4126 = vmatprep.subr.bf16.mxu0 %v3072
    %4127 = vmatpush1.bf16.msra.mxu0 %v3071
    %4128 = vmatprep.subr.bf16.mxu0 %v3080
    %4129 = vmatpush1.bf16.msra.mxu0 %v3079
    %4130 = vmatprep.subr.bf16.mxu0 %v3088
    %4131 = vmatpush1.bf16.msra.mxu0 %v3087
    %4132 = vmatprep.subr.bf16.mxu0 %v3096
    %4133 = vmatpush1.bf16.msra.mxu0 %v3095
    %4134 = vmatprep.subr.bf16.mxu0 %v3104
    %4135 = vmatpush1.bf16.msra.mxu0 %v3103
    %4136 = vmatprep.subr.bf16.mxu0 %v3112
    %4137 = vmatpush1.bf16.msra.mxu0 %v3111
    %4138 = vmatprep.subr.bf16.mxu0 %v3120
    %4139 = vmatpush1.bf16.msra.mxu0 %v3119
    %4140 = vmatprep.mubr.bf16.mxu0 %v774
    %4141 = vmatmul.mubr.bf16.gmra.mrb[0].mxu0 %v773
    %v4142 = vpop.f32.mrb[0].mxu0
    %v4143 = vadd.f32 %v4100, %v4142
    %v4144 = vpop.f32.mrb[0].mxu0
    %v4145 = vadd.f32 %v4102, %v4144
    %v4146 = vpop.f32.mrb[0].mxu0
    %v4147 = vadd.f32 %v4104, %v4146
    %v4148 = vpop.f32.mrb[0].mxu0
    %v4149 = vadd.f32 %v4106, %v4148
    %4150 = vdwg.mxu0
    %4151 = vmatprep.subr.bf16.mxu0 %v3128
    %4152 = vmatpush1.bf16.msra.mxu0 %v3127
    %4153 = vmatprep.subr.bf16.mxu0 %v3136
    %4154 = vmatpush1.bf16.msra.mxu0 %v3135
    %4155 = vmatprep.subr.bf16.mxu0 %v3144
    %4156 = vmatpush1.bf16.msra.mxu0 %v3143
    %4157 = vmatprep.subr.bf16.mxu0 %v3152
    %4158 = vmatpush1.bf16.msra.mxu0 %v3151
    %4159 = vmatprep.subr.bf16.mxu0 %v3160
    %4160 = vmatpush1.bf16.msra.mxu0 %v3159
    %4161 = vmatprep.subr.bf16.mxu0 %v3168
    %4162 = vmatpush1.bf16.msra.mxu0 %v3167
    %4163 = vmatprep.subr.bf16.mxu0 %v3176
    %4164 = vmatpush1.bf16.msra.mxu0 %v3175
    %4165 = vmatprep.subr.bf16.mxu0 %v3184
    %4166 = vmatpush1.bf16.msra.mxu0 %v3183
    %4167 = vmatprep.subr.bf16.mxu0 %v3192
    %4168 = vmatpush1.bf16.msra.mxu0 %v3191
    %4169 = vmatprep.subr.bf16.mxu0 %v3200
    %4170 = vmatpush1.bf16.msra.mxu0 %v3199
    %4171 = vmatprep.subr.bf16.mxu0 %v3208
    %4172 = vmatpush1.bf16.msra.mxu0 %v3207
    %4173 = vmatprep.subr.bf16.mxu0 %v3216
    %4174 = vmatpush1.bf16.msra.mxu0 %v3215
    %4175 = vmatprep.subr.bf16.mxu0 %v3224
    %4176 = vmatpush1.bf16.msra.mxu0 %v3223
    %4177 = vmatprep.subr.bf16.mxu0 %v3232
    %4178 = vmatpush1.bf16.msra.mxu0 %v3231
    %4179 = vmatprep.subr.bf16.mxu0 %v3240
    %4180 = vmatpush1.bf16.msra.mxu0 %v3239
    %4181 = vmatprep.subr.bf16.mxu0 %v3248
    %4182 = vmatpush1.bf16.msra.mxu0 %v3247
    %4183 = vmatprep.mubr.bf16.mxu0 %v776
    %4184 = vmatmul.mubr.bf16.gmra.mrb[0].mxu0 %v775
    %v4185 = vpop.f32.mrb[0].mxu0
    %v4186 = vadd.f32 %v4143, %v4185
    %v4187 = vpop.f32.mrb[0].mxu0
    %v4188 = vadd.f32 %v4145, %v4187
    %v4189 = vpop.f32.mrb[0].mxu0
    %v4190 = vadd.f32 %v4147, %v4189
    %v4191 = vpop.f32.mrb[0].mxu0
    %v4192 = vadd.f32 %v4149, %v4191
    %4193 = vdwg.mxu0
    %4194 = vmatprep.subr.bf16.mxu0 %v3256
    %4195 = vmatpush1.bf16.msra.mxu0 %v3255
    %4196 = vmatprep.subr.bf16.mxu0 %v3264
    %4197 = vmatpush1.bf16.msra.mxu0 %v3263
    %4198 = vmatprep.subr.bf16.mxu0 %v3272
    %4199 = vmatpush1.bf16.msra.mxu0 %v3271
    %4200 = vmatprep.subr.bf16.mxu0 %v3280
    %4201 = vmatpush1.bf16.msra.mxu0 %v3279
    %4202 = vmatprep.subr.bf16.mxu0 %v3288
    %4203 = vmatpush1.bf16.msra.mxu0 %v3287
    %4204 = vmatprep.subr.bf16.mxu0 %v3296
    %4205 = vmatpush1.bf16.msra.mxu0 %v3295
    %4206 = vmatprep.subr.bf16.mxu0 %v3304
    %4207 = vmatpush1.bf16.msra.mxu0 %v3303
    %4208 = vmatprep.subr.bf16.mxu0 %v3312
    %4209 = vmatpush1.bf16.msra.mxu0 %v3311
    %4210 = vmatprep.subr.bf16.mxu0 %v3320
    %4211 = vmatpush1.bf16.msra.mxu0 %v3319
    %4212 = vmatprep.subr.bf16.mxu0 %v3328
    %4213 = vmatpush1.bf16.msra.mxu0 %v3327
    %4214 = vmatprep.subr.bf16.mxu0 %v3336
    %4215 = vmatpush1.bf16.msra.mxu0 %v3335
    %4216 = vmatprep.subr.bf16.mxu0 %v3344
    %4217 = vmatpush1.bf16.msra.mxu0 %v3343
    %4218 = vmatprep.subr.bf16.mxu0 %v3352
    %4219 = vmatpush1.bf16.msra.mxu0 %v3351
    %4220 = vmatprep.subr.bf16.mxu0 %v3360
    %4221 = vmatpush1.bf16.msra.mxu0 %v3359
    %4222 = vmatprep.subr.bf16.mxu0 %v3368
    %4223 = vmatpush1.bf16.msra.mxu0 %v3367
    %4224 = vmatprep.subr.bf16.mxu0 %v3376
    %4225 = vmatpush1.bf16.msra.mxu0 %v3375
    %4226 = vmatprep.mubr.bf16.mxu0 %v778
    %4227 = vmatmul.mubr.bf16.gmra.mrb[0].mxu0 %v777
    %v4228 = vpop.f32.mrb[0].mxu0
    %v4229 = vadd.f32 %v4186, %v4228
    %v4230 = vpop.f32.mrb[0].mxu0
    %v4231 = vadd.f32 %v4188, %v4230
    %v4232 = vpop.f32.mrb[0].mxu0
    %v4233 = vadd.f32 %v4190, %v4232
    %v4234 = vpop.f32.mrb[0].mxu0
    %v4235 = vadd.f32 %v4192, %v4234
    %4236 = vdwg.mxu0
    %4237 = vmatprep.subr.bf16.mxu0 %v2874
    %4238 = vmatpush1.bf16.msra.mxu0 %v2873
    %4239 = vmatprep.subr.bf16.mxu0 %v2882
    %4240 = vmatpush1.bf16.msra.mxu0 %v2881
    %4241 = vmatprep.subr.bf16.mxu0 %v2890
    %4242 = vmatpush1.bf16.msra.mxu0 %v2889
    %4243 = vmatprep.subr.bf16.mxu0 %v2898
    %4244 = vmatpush1.bf16.msra.mxu0 %v2897
    %4245 = vmatprep.subr.bf16.mxu0 %v2906
    %4246 = vmatpush1.bf16.msra.mxu0 %v2905
    %4247 = vmatprep.subr.bf16.mxu0 %v2914
    %4248 = vmatpush1.bf16.msra.mxu0 %v2913
    %4249 = vmatprep.subr.bf16.mxu0 %v2922
    %4250 = vmatpush1.bf16.msra.mxu0 %v2921
    %4251 = vmatprep.subr.bf16.mxu0 %v2930
    %4252 = vmatpush1.bf16.msra.mxu0 %v2929
    %4253 = vmatprep.subr.bf16.mxu0 %v2938
    %4254 = vmatpush1.bf16.msra.mxu0 %v2937
    %4255 = vmatprep.subr.bf16.mxu0 %v2946
    %4256 = vmatpush1.bf16.msra.mxu0 %v2945
    %4257 = vmatprep.subr.bf16.mxu0 %v2954
    %4258 = vmatpush1.bf16.msra.mxu0 %v2953
    %4259 = vmatprep.subr.bf16.mxu0 %v2962
    %4260 = vmatpush1.bf16.msra.mxu0 %v2961
    %4261 = vmatprep.subr.bf16.mxu0 %v2970
    %4262 = vmatpush1.bf16.msra.mxu0 %v2969
    %4263 = vmatprep.subr.bf16.mxu0 %v2978
    %4264 = vmatpush1.bf16.msra.mxu0 %v2977
    %4265 = vmatprep.subr.bf16.mxu0 %v2986
    %4266 = vmatpush1.bf16.msra.mxu0 %v2985
    %4267 = vmatprep.subr.bf16.mxu0 %v2994
    %4268 = vmatpush1.bf16.msra.mxu0 %v2993
    %4269 = vmatprep.mubr.bf16.mxu0 %v772
    %4270 = vmatmul.mubr.bf16.gmra.mrb[0].mxu0 %v771
    %v4271 = vpop.f32.mrb[0].mxu0
    %v4272 = vadd.f32 %v1312, %v4271
    %v4273 = vpop.f32.mrb[0].mxu0
    %v4274 = vadd.f32 %v1316, %v4273
    %v4275 = vpop.f32.mrb[0].mxu0
    %v4276 = vadd.f32 %v1312, %v4275
    %v4277 = vpop.f32.mrb[0].mxu0
    %v4278 = vadd.f32 %v1316, %v4277
    %4279 = vdwg.mxu0
    %4280 = vmatprep.subr.bf16.mxu0 %v3002
    %4281 = vmatpush1.bf16.msra.mxu0 %v3001
    %4282 = vmatprep.subr.bf16.mxu0 %v3010
    %4283 = vmatpush1.bf16.msra.mxu0 %v3009
    %4284 = vmatprep.subr.bf16.mxu0 %v3018
    %4285 = vmatpush1.bf16.msra.mxu0 %v3017
    %4286 = vmatprep.subr.bf16.mxu0 %v3026
    %4287 = vmatpush1.bf16.msra.mxu0 %v3025
    %4288 = vmatprep.subr.bf16.mxu0 %v3034
    %4289 = vmatpush1.bf16.msra.mxu0 %v3033
    %4290 = vmatprep.subr.bf16.mxu0 %v3042
    %4291 = vmatpush1.bf16.msra.mxu0 %v3041
    %4292 = vmatprep.subr.bf16.mxu0 %v3050
    %4293 = vmatpush1.bf16.msra.mxu0 %v3049
    %4294 = vmatprep.subr.bf16.mxu0 %v3058
    %4295 = vmatpush1.bf16.msra.mxu0 %v3057
    %4296 = vmatprep.subr.bf16.mxu0 %v3066
    %4297 = vmatpush1.bf16.msra.mxu0 %v3065
    %4298 = vmatprep.subr.bf16.mxu0 %v3074
    %4299 = vmatpush1.bf16.msra.mxu0 %v3073
    %4300 = vmatprep.subr.bf16.mxu0 %v3082
    %4301 = vmatpush1.bf16.msra.mxu0 %v3081
    %4302 = vmatprep.subr.bf16.mxu0 %v3090
    %4303 = vmatpush1.bf16.msra.mxu0 %v3089
    %4304 = vmatprep.subr.bf16.mxu0 %v3098
    %4305 = vmatpush1.bf16.msra.mxu0 %v3097
    %4306 = vmatprep.subr.bf16.mxu0 %v3106
    %4307 = vmatpush1.bf16.msra.mxu0 %v3105
    %4308 = vmatprep.subr.bf16.mxu0 %v3114
    %4309 = vmatpush1.bf16.msra.mxu0 %v3113
    %4310 = vmatprep.subr.bf16.mxu0 %v3122
    %4311 = vmatpush1.bf16.msra.mxu0 %v3121
    %4312 = vmatprep.mubr.bf16.mxu0 %v774
    %4313 = vmatmul.mubr.bf16.gmra.mrb[0].mxu0 %v773
    %v4314 = vpop.f32.mrb[0].mxu0
    %v4315 = vadd.f32 %v4272, %v4314
    %v4316 = vpop.f32.mrb[0].mxu0
    %v4317 = vadd.f32 %v4274, %v4316
    %v4318 = vpop.f32.mrb[0].mxu0
    %v4319 = vadd.f32 %v4276, %v4318
    %v4320 = vpop.f32.mrb[0].mxu0
    %v4321 = vadd.f32 %v4278, %v4320
    %4322 = vdwg.mxu0
    %4323 = vmatprep.subr.bf16.mxu0 %v3130
    %4324 = vmatpush1.bf16.msra.mxu0 %v3129
    %4325 = vmatprep.subr.bf16.mxu0 %v3138
    %4326 = vmatpush1.bf16.msra.mxu0 %v3137
    %4327 = vmatprep.subr.bf16.mxu0 %v3146
    %4328 = vmatpush1.bf16.msra.mxu0 %v3145
    %4329 = vmatprep.subr.bf16.mxu0 %v3154
    %4330 = vmatpush1.bf16.msra.mxu0 %v3153
    %4331 = vmatprep.subr.bf16.mxu0 %v3162
    %4332 = vmatpush1.bf16.msra.mxu0 %v3161
    %4333 = vmatprep.subr.bf16.mxu0 %v3170
    %4334 = vmatpush1.bf16.msra.mxu0 %v3169
    %4335 = vmatprep.subr.bf16.mxu0 %v3178
    %4336 = vmatpush1.bf16.msra.mxu0 %v3177
    %4337 = vmatprep.subr.bf16.mxu0 %v3186
    %4338 = vmatpush1.bf16.msra.mxu0 %v3185
    %4339 = vmatprep.subr.bf16.mxu0 %v3194
    %4340 = vmatpush1.bf16.msra.mxu0 %v3193
    %4341 = vmatprep.subr.bf16.mxu0 %v3202
    %4342 = vmatpush1.bf16.msra.mxu0 %v3201
    %4343 = vmatprep.subr.bf16.mxu0 %v3210
    %4344 = vmatpush1.bf16.msra.mxu0 %v3209
    %4345 = vmatprep.subr.bf16.mxu0 %v3218
    %4346 = vmatpush1.bf16.msra.mxu0 %v3217
    %4347 = vmatprep.subr.bf16.mxu0 %v3226
    %4348 = vmatpush1.bf16.msra.mxu0 %v3225
    %4349 = vmatprep.subr.bf16.mxu0 %v3234
    %4350 = vmatpush1.bf16.msra.mxu0 %v3233
    %4351 = vmatprep.subr.bf16.mxu0 %v3242
    %4352 = vmatpush1.bf16.msra.mxu0 %v3241
    %4353 = vmatprep.subr.bf16.mxu0 %v3250
    %4354 = vmatpush1.bf16.msra.mxu0 %v3249
    %4355 = vmatprep.mubr.bf16.mxu0 %v776
    %4356 = vmatmul.mubr.bf16.gmra.mrb[0].mxu0 %v775
    %v4357 = vpop.f32.mrb[0].mxu0
    %v4358 = vadd.f32 %v4315, %v4357
    %v4359 = vpop.f32.mrb[0].mxu0
    %v4360 = vadd.f32 %v4317, %v4359
    %v4361 = vpop.f32.mrb[0].mxu0
    %v4362 = vadd.f32 %v4319, %v4361
    %v4363 = vpop.f32.mrb[0].mxu0
    %v4364 = vadd.f32 %v4321, %v4363
    %4365 = vdwg.mxu0
    %4366 = vmatprep.subr.bf16.mxu0 %v3258
    %4367 = vmatpush1.bf16.msra.mxu0 %v3257
    %4368 = vmatprep.subr.bf16.mxu0 %v3266
    %4369 = vmatpush1.bf16.msra.mxu0 %v3265
    %4370 = vmatprep.subr.bf16.mxu0 %v3274
    %4371 = vmatpush1.bf16.msra.mxu0 %v3273
    %4372 = vmatprep.subr.bf16.mxu0 %v3282
    %4373 = vmatpush1.bf16.msra.mxu0 %v3281
    %4374 = vmatprep.subr.bf16.mxu0 %v3290
    %4375 = vmatpush1.bf16.msra.mxu0 %v3289
    %4376 = vmatprep.subr.bf16.mxu0 %v3298
    %4377 = vmatpush1.bf16.msra.mxu0 %v3297
    %4378 = vmatprep.subr.bf16.mxu0 %v3306
    %4379 = vmatpush1.bf16.msra.mxu0 %v3305
    %4380 = vmatprep.subr.bf16.mxu0 %v3314
    %4381 = vmatpush1.bf16.msra.mxu0 %v3313
    %4382 = vmatprep.subr.bf16.mxu0 %v3322
    %4383 = vmatpush1.bf16.msra.mxu0 %v3321
    %4384 = vmatprep.subr.bf16.mxu0 %v3330
    %4385 = vmatpush1.bf16.msra.mxu0 %v3329
    %4386 = vmatprep.subr.bf16.mxu0 %v3338
    %4387 = vmatpush1.bf16.msra.mxu0 %v3337
    %4388 = vmatprep.subr.bf16.mxu0 %v3346
    %4389 = vmatpush1.bf16.msra.mxu0 %v3345
    %4390 = vmatprep.subr.bf16.mxu0 %v3354
    %4391 = vmatpush1.bf16.msra.mxu0 %v3353
    %4392 = vmatprep.subr.bf16.mxu0 %v3362
    %4393 = vmatpush1.bf16.msra.mxu0 %v3361
    %4394 = vmatprep.subr.bf16.mxu0 %v3370
    %4395 = vmatpush1.bf16.msra.mxu0 %v3369
    %4396 = vmatprep.subr.bf16.mxu0 %v3378
    %4397 = vmatpush1.bf16.msra.mxu0 %v3377
    %4398 = vmatprep.mubr.bf16.mxu0 %v778
    %4399 = vmatmul.mubr.bf16.gmra.mrb[0].mxu0 %v777
    %v4400 = vpop.f32.mrb[0].mxu0
    %v4401 = vadd.f32 %v4358, %v4400
    %v4402 = vpop.f32.mrb[0].mxu0
    %v4403 = vadd.f32 %v4360, %v4402
    %v4404 = vpop.f32.mrb[0].mxu0
    %v4405 = vadd.f32 %v4362, %v4404
    %v4406 = vpop.f32.mrb[0].mxu0
    %v4407 = vadd.f32 %v4364, %v4406
    %4408 = vdwg.mxu0
    %4409 = vmatprep.subr.bf16.mxu0 %v2876
    %4410 = vmatpush1.bf16.msra.mxu0 %v2875
    %4411 = vmatprep.subr.bf16.mxu0 %v2884
    %4412 = vmatpush1.bf16.msra.mxu0 %v2883
    %4413 = vmatprep.subr.bf16.mxu0 %v2892
    %4414 = vmatpush1.bf16.msra.mxu0 %v2891
    %4415 = vmatprep.subr.bf16.mxu0 %v2900
    %4416 = vmatpush1.bf16.msra.mxu0 %v2899
    %4417 = vmatprep.subr.bf16.mxu0 %v2908
    %4418 = vmatpush1.bf16.msra.mxu0 %v2907
    %4419 = vmatprep.subr.bf16.mxu0 %v2916
    %4420 = vmatpush1.bf16.msra.mxu0 %v2915
    %4421 = vmatprep.subr.bf16.mxu0 %v2924
    %4422 = vmatpush1.bf16.msra.mxu0 %v2923
    %4423 = vmatprep.subr.bf16.mxu0 %v2932
    %4424 = vmatpush1.bf16.msra.mxu0 %v2931
    %4425 = vmatprep.subr.bf16.mxu0 %v2940
    %4426 = vmatpush1.bf16.msra.mxu0 %v2939
    %4427 = vmatprep.subr.bf16.mxu0 %v2948
    %4428 = vmatpush1.bf16.msra.mxu0 %v2947
    %4429 = vmatprep.subr.bf16.mxu0 %v2956
    %4430 = vmatpush1.bf16.msra.mxu0 %v2955
    %4431 = vmatprep.subr.bf16.mxu0 %v2964
    %4432 = vmatpush1.bf16.msra.mxu0 %v2963
    %4433 = vmatprep.subr.bf16.mxu0 %v2972
    %4434 = vmatpush1.bf16.msra.mxu0 %v2971
    %4435 = vmatprep.subr.bf16.mxu0 %v2980
    %4436 = vmatpush1.bf16.msra.mxu0 %v2979
    %4437 = vmatprep.subr.bf16.mxu0 %v2988
    %4438 = vmatpush1.bf16.msra.mxu0 %v2987
    %4439 = vmatprep.subr.bf16.mxu0 %v2996
    %4440 = vmatpush1.bf16.msra.mxu0 %v2995
    %4441 = vmatprep.mubr.bf16.mxu0 %v772
    %4442 = vmatmul.mubr.bf16.gmra.mrb[0].mxu0 %v771
    %v4443 = vpop.f32.mrb[0].mxu0
    %v4444 = vadd.f32 %v1320, %v4443
    %v4445 = vpop.f32.mrb[0].mxu0
    %v4446 = vadd.f32 %v1324, %v4445
    %v4447 = vpop.f32.mrb[0].mxu0
    %v4448 = vadd.f32 %v1320, %v4447
    %v4449 = vpop.f32.mrb[0].mxu0
    %v4450 = vadd.f32 %v1324, %v4449
    %4451 = vdwg.mxu0
    %4452 = vmatprep.subr.bf16.mxu0 %v3004
    %4453 = vmatpush1.bf16.msra.mxu0 %v3003
    %4454 = vmatprep.subr.bf16.mxu0 %v3012
    %4455 = vmatpush1.bf16.msra.mxu0 %v3011
    %4456 = vmatprep.subr.bf16.mxu0 %v3020
    %4457 = vmatpush1.bf16.msra.mxu0 %v3019
    %4458 = vmatprep.subr.bf16.mxu0 %v3028
    %4459 = vmatpush1.bf16.msra.mxu0 %v3027
    %4460 = vmatprep.subr.bf16.mxu0 %v3036
    %4461 = vmatpush1.bf16.msra.mxu0 %v3035
    %4462 = vmatprep.subr.bf16.mxu0 %v3044
    %4463 = vmatpush1.bf16.msra.mxu0 %v3043
    %4464 = vmatprep.subr.bf16.mxu0 %v3052
    %4465 = vmatpush1.bf16.msra.mxu0 %v3051
    %4466 = vmatprep.subr.bf16.mxu0 %v3060
    %4467 = vmatpush1.bf16.msra.mxu0 %v3059
    %4468 = vmatprep.subr.bf16.mxu0 %v3068
    %4469 = vmatpush1.bf16.msra.mxu0 %v3067
    %4470 = vmatprep.subr.bf16.mxu0 %v3076
    %4471 = vmatpush1.bf16.msra.mxu0 %v3075
    %4472 = vmatprep.subr.bf16.mxu0 %v3084
    %4473 = vmatpush1.bf16.msra.mxu0 %v3083
    %4474 = vmatprep.subr.bf16.mxu0 %v3092
    %4475 = vmatpush1.bf16.msra.mxu0 %v3091
    %4476 = vmatprep.subr.bf16.mxu0 %v3100
    %4477 = vmatpush1.bf16.msra.mxu0 %v3099
    %4478 = vmatprep.subr.bf16.mxu0 %v3108
    %4479 = vmatpush1.bf16.msra.mxu0 %v3107
    %4480 = vmatprep.subr.bf16.mxu0 %v3116
    %4481 = vmatpush1.bf16.msra.mxu0 %v3115
    %4482 = vmatprep.subr.bf16.mxu0 %v3124
    %4483 = vmatpush1.bf16.msra.mxu0 %v3123
    %4484 = vmatprep.mubr.bf16.mxu0 %v774
    %4485 = vmatmul.mubr.bf16.gmra.mrb[0].mxu0 %v773
    %v4486 = vpop.f32.mrb[0].mxu0
    %v4487 = vadd.f32 %v4444, %v4486
    %v4488 = vpop.f32.mrb[0].mxu0
    %v4489 = vadd.f32 %v4446, %v4488
    %v4490 = vpop.f32.mrb[0].mxu0
    %v4491 = vadd.f32 %v4448, %v4490
    %v4492 = vpop.f32.mrb[0].mxu0
    %v4493 = vadd.f32 %v4450, %v4492
    %4494 = vdwg.mxu0
    %4495 = vmatprep.subr.bf16.mxu0 %v3132
    %4496 = vmatpush1.bf16.msra.mxu0 %v3131
    %4497 = vmatprep.subr.bf16.mxu0 %v3140
    %4498 = vmatpush1.bf16.msra.mxu0 %v3139
    %4499 = vmatprep.subr.bf16.mxu0 %v3148
    %4500 = vmatpush1.bf16.msra.mxu0 %v3147
    %4501 = vmatprep.subr.bf16.mxu0 %v3156
    %4502 = vmatpush1.bf16.msra.mxu0 %v3155
    %4503 = vmatprep.subr.bf16.mxu0 %v3164
    %4504 = vmatpush1.bf16.msra.mxu0 %v3163
    %4505 = vmatprep.subr.bf16.mxu0 %v3172
    %4506 = vmatpush1.bf16.msra.mxu0 %v3171
    %4507 = vmatprep.subr.bf16.mxu0 %v3180
    %4508 = vmatpush1.bf16.msra.mxu0 %v3179
    %4509 = vmatprep.subr.bf16.mxu0 %v3188
    %4510 = vmatpush1.bf16.msra.mxu0 %v3187
    %4511 = vmatprep.subr.bf16.mxu0 %v3196
    %4512 = vmatpush1.bf16.msra.mxu0 %v3195
    %4513 = vmatprep.subr.bf16.mxu0 %v3204
    %4514 = vmatpush1.bf16.msra.mxu0 %v3203
    %4515 = vmatprep.subr.bf16.mxu0 %v3212
    %4516 = vmatpush1.bf16.msra.mxu0 %v3211
    %4517 = vmatprep.subr.bf16.mxu0 %v3220
    %4518 = vmatpush1.bf16.msra.mxu0 %v3219
    %4519 = vmatprep.subr.bf16.mxu0 %v3228
    %4520 = vmatpush1.bf16.msra.mxu0 %v3227
    %4521 = vmatprep.subr.bf16.mxu0 %v3236
    %4522 = vmatpush1.bf16.msra.mxu0 %v3235
    %4523 = vmatprep.subr.bf16.mxu0 %v3244
    %4524 = vmatpush1.bf16.msra.mxu0 %v3243
    %4525 = vmatprep.subr.bf16.mxu0 %v3252
    %4526 = vmatpush1.bf16.msra.mxu0 %v3251
    %4527 = vmatprep.mubr.bf16.mxu0 %v776
    %4528 = vmatmul.mubr.bf16.gmra.mrb[0].mxu0 %v775
    %v4529 = vpop.f32.mrb[0].mxu0
    %v4530 = vadd.f32 %v4487, %v4529
    %v4531 = vpop.f32.mrb[0].mxu0
    %v4532 = vadd.f32 %v4489, %v4531
    %v4533 = vpop.f32.mrb[0].mxu0
    %v4534 = vadd.f32 %v4491, %v4533
    %v4535 = vpop.f32.mrb[0].mxu0
    %v4536 = vadd.f32 %v4493, %v4535
    %4537 = vdwg.mxu0
    %4538 = vmatprep.subr.bf16.mxu0 %v3260
    %4539 = vmatpush1.bf16.msra.mxu0 %v3259
    %4540 = vmatprep.subr.bf16.mxu0 %v3268
    %4541 = vmatpush1.bf16.msra.mxu0 %v3267
    %4542 = vmatprep.subr.bf16.mxu0 %v3276
    %4543 = vmatpush1.bf16.msra.mxu0 %v3275
    %4544 = vmatprep.subr.bf16.mxu0 %v3284
    %4545 = vmatpush1.bf16.msra.mxu0 %v3283
    %4546 = vmatprep.subr.bf16.mxu0 %v3292
    %4547 = vmatpush1.bf16.msra.mxu0 %v3291
    %4548 = vmatprep.subr.bf16.mxu0 %v3300
    %4549 = vmatpush1.bf16.msra.mxu0 %v3299
    %4550 = vmatprep.subr.bf16.mxu0 %v3308
    %4551 = vmatpush1.bf16.msra.mxu0 %v3307
    %4552 = vmatprep.subr.bf16.mxu0 %v3316
    %4553 = vmatpush1.bf16.msra.mxu0 %v3315
    %4554 = vmatprep.subr.bf16.mxu0 %v3324
    %4555 = vmatpush1.bf16.msra.mxu0 %v3323
    %4556 = vmatprep.subr.bf16.mxu0 %v3332
    %4557 = vmatpush1.bf16.msra.mxu0 %v3331
    %4558 = vmatprep.subr.bf16.mxu0 %v3340
    %4559 = vmatpush1.bf16.msra.mxu0 %v3339
    %4560 = vmatprep.subr.bf16.mxu0 %v3348
    %4561 = vmatpush1.bf16.msra.mxu0 %v3347
    %4562 = vmatprep.subr.bf16.mxu0 %v3356
    %4563 = vmatpush1.bf16.msra.mxu0 %v3355
    %4564 = vmatprep.subr.bf16.mxu0 %v3364
    %4565 = vmatpush1.bf16.msra.mxu0 %v3363
    %4566 = vmatprep.subr.bf16.mxu0 %v3372
    %4567 = vmatpush1.bf16.msra.mxu0 %v3371
    %4568 = vmatprep.subr.bf16.mxu0 %v3380
    %4569 = vmatpush1.bf16.msra.mxu0 %v3379
    %4570 = vmatprep.mubr.bf16.mxu0 %v778
    %4571 = vmatmul.mubr.bf16.gmra.mrb[0].mxu0 %v777
    %v4572 = vpop.f32.mrb[0].mxu0
    %v4573 = vadd.f32 %v4530, %v4572
    %v4574 = vpop.f32.mrb[0].mxu0
    %v4575 = vadd.f32 %v4532, %v4574
    %v4576 = vpop.f32.mrb[0].mxu0
    %v4577 = vadd.f32 %v4534, %v4576
    %v4578 = vpop.f32.mrb[0].mxu0
    %v4579 = vadd.f32 %v4536, %v4578
    %4580 = vdwg.mxu0
    %vm4581 = vcmp.gt.f32.partialorder %v4057, 0.0
    %vm4582 = vcmp.gt.f32.partialorder %v4059, 0.0
    %vm4583 = vcmp.gt.f32.partialorder %v4229, 0.0
    %vm4584 = vcmp.gt.f32.partialorder %v4231, 0.0
    %vm4585 = vcmp.gt.f32.partialorder %v4401, 0.0
    %vm4586 = vcmp.gt.f32.partialorder %v4403, 0.0
    %vm4587 = vcmp.gt.f32.partialorder %v4573, 0.0
    %vm4588 = vcmp.gt.f32.partialorder %v4575, 0.0
    %vm4589 = vcmp.gt.f32.partialorder %v4061, 0.0
    %vm4590 = vcmp.gt.f32.partialorder %v4063, 0.0
    %vm4591 = vcmp.gt.f32.partialorder %v4233, 0.0
    %vm4592 = vcmp.gt.f32.partialorder %v4235, 0.0
    %vm4593 = vcmp.gt.f32.partialorder %v4405, 0.0
    %vm4594 = vcmp.gt.f32.partialorder %v4407, 0.0
    %vm4595 = vcmp.gt.f32.partialorder %v4577, 0.0
    %vm4596 = vcmp.gt.f32.partialorder %v4579, 0.0
    %v4597 = vmul.f32 %v4057, 0.01
    %v4598 = vmul.f32 %v4059, 0.01
    %v4599 = vmul.f32 %v4229, 0.01
    %v4600 = vmul.f32 %v4231, 0.01
    %v4601 = vmul.f32 %v4401, 0.01
    %v4602 = vmul.f32 %v4403, 0.01
    %v4603 = vmul.f32 %v4573, 0.01
    %v4604 = vmul.f32 %v4575, 0.01
    %v4605 = vmul.f32 %v4061, 0.01
    %v4606 = vmul.f32 %v4063, 0.01
    %v4607 = vmul.f32 %v4233, 0.01
    %v4608 = vmul.f32 %v4235, 0.01
    %v4609 = vmul.f32 %v4405, 0.01
    %v4610 = vmul.f32 %v4407, 0.01
    %v4611 = vmul.f32 %v4577, 0.01
    %v4612 = vmul.f32 %v4579, 0.01
    %v4613 = vsel %vm4581, %v4057, %v4597
    %v4614 = vsel %vm4582, %v4059, %v4598
    %v4615 = vsel %vm4583, %v4229, %v4599
    %v4616 = vsel %vm4584, %v4231, %v4600
    %v4617 = vsel %vm4585, %v4401, %v4601
    %v4618 = vsel %vm4586, %v4403, %v4602
    %v4619 = vsel %vm4587, %v4573, %v4603
    %v4620 = vsel %vm4588, %v4575, %v4604
    %v4621 = vsel %vm4589, %v4061, %v4605
    %v4622 = vsel %vm4590, %v4063, %v4606
    %v4623 = vsel %vm4591, %v4233, %v4607
    %v4624 = vsel %vm4592, %v4235, %v4608
    %v4625 = vsel %vm4593, %v4405, %v4609
    %v4626 = vsel %vm4594, %v4407, %v4610
    %v4627 = vsel %vm4595, %v4577, %v4611
    %v4628 = vsel %vm4596, %v4579, %v4612
    %v4629 = vpack.c.bf16 %v4621, %v4613
    %v4630 = vpack.c.bf16 %v4622, %v4614
    %v4631 = vpack.c.bf16 %v4623, %v4615
    %v4632 = vpack.c.bf16 %v4624, %v4616
    %v4633 = vpack.c.bf16 %v4625, %v4617
    %v4634 = vpack.c.bf16 %v4626, %v4618
    %v4635 = vpack.c.bf16 %v4627, %v4619
    %v4636 = vpack.c.bf16 %v4628, %v4620
    %v4637 = vld [vmem:[#allocation11] sm:$0xf]
    %v4638 = vld [vmem:[#allocation11 + $0x4] sm:$0xf]
    %v4639 = vld [vmem:[#allocation11 + $0x8] sm:$0xf]
    %v4640 = vld [vmem:[#allocation11 + $0xc] sm:$0xf]
    %v4641 = vld [vmem:[#allocation11 + $0x10] sm:$0xf]
    %v4642 = vld [vmem:[#allocation11 + $0x14] sm:$0xf]
    %v4643 = vld [vmem:[#allocation11 + $0x18] sm:$0xf]
    %v4644 = vld [vmem:[#allocation11 + $0x1c] sm:$0xf]
    %v4645 = vld [vmem:[#allocation11 + $0x20] sm:$0xf]
    %v4646 = vld [vmem:[#allocation11 + $0x24] sm:$0xf]
    %v4647 = vld [vmem:[#allocation11 + $0x28] sm:$0xf]
    %v4648 = vld [vmem:[#allocation11 + $0x2c] sm:$0xf]
    %v4649 = vld [vmem:[#allocation11 + $0x30] sm:$0xf]
    %v4650 = vld [vmem:[#allocation11 + $0x34] sm:$0xf]
    %v4651 = vld [vmem:[#allocation11 + $0x38] sm:$0xf]
    %v4652 = vld [vmem:[#allocation11 + $0x3c] sm:$0xf]
    %v4653 = vld [vmem:[#allocation11 + $0x40] sm:$0xf]
    %v4654 = vld [vmem:[#allocation11 + $0x44] sm:$0xf]
    %v4655 = vld [vmem:[#allocation11 + $0x48] sm:$0xf]
    %v4656 = vld [vmem:[#allocation11 + $0x4c] sm:$0xf]
    %v4657 = vld [vmem:[#allocation11 + $0x50] sm:$0xf]
    %v4658 = vld [vmem:[#allocation11 + $0x54] sm:$0xf]
    %v4659 = vld [vmem:[#allocation11 + $0x58] sm:$0xf]
    %v4660 = vld [vmem:[#allocation11 + $0x5c] sm:$0xf]
    %v4661 = vld [vmem:[#allocation11 + $0x60] sm:$0xf]
    %v4662 = vld [vmem:[#allocation11 + $0x64] sm:$0xf]
    %v4663 = vld [vmem:[#allocation11 + $0x68] sm:$0xf]
    %v4664 = vld [vmem:[#allocation11 + $0x6c] sm:$0xf]
    %v4665 = vld [vmem:[#allocation11 + $0x70] sm:$0xf]
    %v4666 = vld [vmem:[#allocation11 + $0x74] sm:$0xf]
    %v4667 = vld [vmem:[#allocation11 + $0x78] sm:$0xf]
    %v4668 = vld [vmem:[#allocation11 + $0x7c] sm:$0xf]
    %v4669 = vld [vmem:[#allocation11 + $0x80] sm:$0xf]
    %v4670 = vld [vmem:[#allocation11 + $0x84] sm:$0xf]
    %v4671 = vld [vmem:[#allocation11 + $0x88] sm:$0xf]
    %v4672 = vld [vmem:[#allocation11 + $0x8c] sm:$0xf]
    %v4673 = vld [vmem:[#allocation11 + $0x90] sm:$0xf]
    %v4674 = vld [vmem:[#allocation11 + $0x94] sm:$0xf]
    %v4675 = vld [vmem:[#allocation11 + $0x98] sm:$0xf]
    %v4676 = vld [vmem:[#allocation11 + $0x9c] sm:$0xf]
    %v4677 = vld [vmem:[#allocation11 + $0xa0] sm:$0xf]
    %v4678 = vld [vmem:[#allocation11 + $0xa4] sm:$0xf]
    %v4679 = vld [vmem:[#allocation11 + $0xa8] sm:$0xf]
    %v4680 = vld [vmem:[#allocation11 + $0xac] sm:$0xf]
    %v4681 = vld [vmem:[#allocation11 + $0xb0] sm:$0xf]
    %v4682 = vld [vmem:[#allocation11 + $0xb4] sm:$0xf]
    %v4683 = vld [vmem:[#allocation11 + $0xb8] sm:$0xf]
    %v4684 = vld [vmem:[#allocation11 + $0xbc] sm:$0xf]
    %v4685 = vld [vmem:[#allocation11 + $0xc0] sm:$0xf]
    %v4686 = vld [vmem:[#allocation11 + $0xc4] sm:$0xf]
    %v4687 = vld [vmem:[#allocation11 + $0xc8] sm:$0xf]
    %v4688 = vld [vmem:[#allocation11 + $0xcc] sm:$0xf]
    %v4689 = vld [vmem:[#allocation11 + $0xd0] sm:$0xf]
    %v4690 = vld [vmem:[#allocation11 + $0xd4] sm:$0xf]
    %v4691 = vld [vmem:[#allocation11 + $0xd8] sm:$0xf]
    %v4692 = vld [vmem:[#allocation11 + $0xdc] sm:$0xf]
    %v4693 = vld [vmem:[#allocation11 + $0xe0] sm:$0xf]
    %v4694 = vld [vmem:[#allocation11 + $0xe4] sm:$0xf]
    %v4695 = vld [vmem:[#allocation11 + $0xe8] sm:$0xf]
    %v4696 = vld [vmem:[#allocation11 + $0xec] sm:$0xf]
    %v4697 = vld [vmem:[#allocation11 + $0xf0] sm:$0xf]
    %v4698 = vld [vmem:[#allocation11 + $0xf4] sm:$0xf]
    %v4699 = vld [vmem:[#allocation11 + $0xf8] sm:$0xf]
    %v4700 = vld [vmem:[#allocation11 + $0xfc] sm:$0xf]
    %v4701 = vld [vmem:[#allocation11 + $0x100] sm:$0xf]
    %v4702 = vld [vmem:[#allocation11 + $0x104] sm:$0xf]
    %v4703 = vld [vmem:[#allocation11 + $0x108] sm:$0xf]
    %v4704 = vld [vmem:[#allocation11 + $0x10c] sm:$0xf]
    %v4705 = vld [vmem:[#allocation11 + $0x110] sm:$0xf]
    %v4706 = vld [vmem:[#allocation11 + $0x114] sm:$0xf]
    %v4707 = vld [vmem:[#allocation11 + $0x118] sm:$0xf]
    %v4708 = vld [vmem:[#allocation11 + $0x11c] sm:$0xf]
    %v4709 = vld [vmem:[#allocation11 + $0x120] sm:$0xf]
    %v4710 = vld [vmem:[#allocation11 + $0x124] sm:$0xf]
    %v4711 = vld [vmem:[#allocation11 + $0x128] sm:$0xf]
    %v4712 = vld [vmem:[#allocation11 + $0x12c] sm:$0xf]
    %v4713 = vld [vmem:[#allocation11 + $0x130] sm:$0xf]
    %v4714 = vld [vmem:[#allocation11 + $0x134] sm:$0xf]
    %v4715 = vld [vmem:[#allocation11 + $0x138] sm:$0xf]
    %v4716 = vld [vmem:[#allocation11 + $0x13c] sm:$0xf]
    %v4717 = vld [vmem:[#allocation11 + $0x140] sm:$0xf]
    %v4718 = vld [vmem:[#allocation11 + $0x144] sm:$0xf]
    %v4719 = vld [vmem:[#allocation11 + $0x148] sm:$0xf]
    %v4720 = vld [vmem:[#allocation11 + $0x14c] sm:$0xf]
    %v4721 = vld [vmem:[#allocation11 + $0x150] sm:$0xf]
    %v4722 = vld [vmem:[#allocation11 + $0x154] sm:$0xf]
    %v4723 = vld [vmem:[#allocation11 + $0x158] sm:$0xf]
    %v4724 = vld [vmem:[#allocation11 + $0x15c] sm:$0xf]
    %v4725 = vld [vmem:[#allocation11 + $0x160] sm:$0xf]
    %v4726 = vld [vmem:[#allocation11 + $0x164] sm:$0xf]
    %v4727 = vld [vmem:[#allocation11 + $0x168] sm:$0xf]
    %v4728 = vld [vmem:[#allocation11 + $0x16c] sm:$0xf]
    %v4729 = vld [vmem:[#allocation11 + $0x170] sm:$0xf]
    %v4730 = vld [vmem:[#allocation11 + $0x174] sm:$0xf]
    %v4731 = vld [vmem:[#allocation11 + $0x178] sm:$0xf]
    %v4732 = vld [vmem:[#allocation11 + $0x17c] sm:$0xf]
    %v4733 = vld [vmem:[#allocation11 + $0x180] sm:$0xf]
    %v4734 = vld [vmem:[#allocation11 + $0x184] sm:$0xf]
    %v4735 = vld [vmem:[#allocation11 + $0x188] sm:$0xf]
    %v4736 = vld [vmem:[#allocation11 + $0x18c] sm:$0xf]
    %v4737 = vld [vmem:[#allocation11 + $0x190] sm:$0xf]
    %v4738 = vld [vmem:[#allocation11 + $0x194] sm:$0xf]
    %v4739 = vld [vmem:[#allocation11 + $0x198] sm:$0xf]
    %v4740 = vld [vmem:[#allocation11 + $0x19c] sm:$0xf]
    %v4741 = vld [vmem:[#allocation11 + $0x1a0] sm:$0xf]
    %v4742 = vld [vmem:[#allocation11 + $0x1a4] sm:$0xf]
    %v4743 = vld [vmem:[#allocation11 + $0x1a8] sm:$0xf]
    %v4744 = vld [vmem:[#allocation11 + $0x1ac] sm:$0xf]
    %v4745 = vld [vmem:[#allocation11 + $0x1b0] sm:$0xf]
    %v4746 = vld [vmem:[#allocation11 + $0x1b4] sm:$0xf]
    %v4747 = vld [vmem:[#allocation11 + $0x1b8] sm:$0xf]
    %v4748 = vld [vmem:[#allocation11 + $0x1bc] sm:$0xf]
    %v4749 = vld [vmem:[#allocation11 + $0x1c0] sm:$0xf]
    %v4750 = vld [vmem:[#allocation11 + $0x1c4] sm:$0xf]
    %v4751 = vld [vmem:[#allocation11 + $0x1c8] sm:$0xf]
    %v4752 = vld [vmem:[#allocation11 + $0x1cc] sm:$0xf]
    %v4753 = vld [vmem:[#allocation11 + $0x1d0] sm:$0xf]
    %v4754 = vld [vmem:[#allocation11 + $0x1d4] sm:$0xf]
    %v4755 = vld [vmem:[#allocation11 + $0x1d8] sm:$0xf]
    %v4756 = vld [vmem:[#allocation11 + $0x1dc] sm:$0xf]
    %v4757 = vld [vmem:[#allocation11 + $0x1e0] sm:$0xf]
    %v4758 = vld [vmem:[#allocation11 + $0x1e4] sm:$0xf]
    %v4759 = vld [vmem:[#allocation11 + $0x1e8] sm:$0xf]
    %v4760 = vld [vmem:[#allocation11 + $0x1ec] sm:$0xf]
    %v4761 = vld [vmem:[#allocation11 + $0x1f0] sm:$0xf]
    %v4762 = vld [vmem:[#allocation11 + $0x1f4] sm:$0xf]
    %v4763 = vld [vmem:[#allocation11 + $0x1f8] sm:$0xf]
    %v4764 = vld [vmem:[#allocation11 + $0x1fc] sm:$0xf]
    %v4765 = vld [vmem:[#allocation13] sm:$0x1]
    %v4767 = vlaneseq
    %v4768 = vshrl.u32 %v4767, 7
    %v4769 = vsub.s32 0, %v4768
    %v4770 = vrot.slane %v4765, %v4769
    %v4900 = vunpack.c.l.b16 %v4637
    %v4901 = vunpack.c.l.b16 %v4638
    %v4902 = vunpack.c.l.b16 %v4639
    %v4903 = vunpack.c.l.b16 %v4640
    %v4904 = vunpack.c.l.b16 %v4641
    %v4905 = vunpack.c.l.b16 %v4642
    %v4906 = vunpack.c.l.b16 %v4643
    %v4907 = vunpack.c.l.b16 %v4644
    %v4908 = vunpack.c.l.b16 %v4645
    %v4909 = vunpack.c.l.b16 %v4646
    %v4910 = vunpack.c.l.b16 %v4647
    %v4911 = vunpack.c.l.b16 %v4648
    %v4912 = vunpack.c.l.b16 %v4649
    %v4913 = vunpack.c.l.b16 %v4650
    %v4914 = vunpack.c.l.b16 %v4651
    %v4915 = vunpack.c.l.b16 %v4652
    %v4916 = vunpack.c.l.b16 %v4653
    %v4917 = vunpack.c.l.b16 %v4654
    %v4918 = vunpack.c.l.b16 %v4655
    %v4919 = vunpack.c.l.b16 %v4656
    %v4920 = vunpack.c.l.b16 %v4657
    %v4921 = vunpack.c.l.b16 %v4658
    %v4922 = vunpack.c.l.b16 %v4659
    %v4923 = vunpack.c.l.b16 %v4660
    %v4924 = vunpack.c.l.b16 %v4661
    %v4925 = vunpack.c.l.b16 %v4662
    %v4926 = vunpack.c.l.b16 %v4663
    %v4927 = vunpack.c.l.b16 %v4664
    %v4928 = vunpack.c.l.b16 %v4665
    %v4929 = vunpack.c.l.b16 %v4666
    %v4930 = vunpack.c.l.b16 %v4667
    %v4931 = vunpack.c.l.b16 %v4668
    %v4932 = vunpack.c.l.b16 %v4669
    %v4933 = vunpack.c.l.b16 %v4670
    %v4934 = vunpack.c.l.b16 %v4671
    %v4935 = vunpack.c.l.b16 %v4672
    %v4936 = vunpack.c.l.b16 %v4673
    %v4937 = vunpack.c.l.b16 %v4674
    %v4938 = vunpack.c.l.b16 %v4675
    %v4939 = vunpack.c.l.b16 %v4676
    %v4940 = vunpack.c.l.b16 %v4677
    %v4941 = vunpack.c.l.b16 %v4678
    %v4942 = vunpack.c.l.b16 %v4679
    %v4943 = vunpack.c.l.b16 %v4680
    %v4944 = vunpack.c.l.b16 %v4681
    %v4945 = vunpack.c.l.b16 %v4682
    %v4946 = vunpack.c.l.b16 %v4683
    %v4947 = vunpack.c.l.b16 %v4684
    %v4948 = vunpack.c.l.b16 %v4685
    %v4949 = vunpack.c.l.b16 %v4686
    %v4950 = vunpack.c.l.b16 %v4687
    %v4951 = vunpack.c.l.b16 %v4688
    %v4952 = vunpack.c.l.b16 %v4689
    %v4953 = vunpack.c.l.b16 %v4690
    %v4954 = vunpack.c.l.b16 %v4691
    %v4955 = vunpack.c.l.b16 %v4692
    %v4956 = vunpack.c.l.b16 %v4693
    %v4957 = vunpack.c.l.b16 %v4694
    %v4958 = vunpack.c.l.b16 %v4695
    %v4959 = vunpack.c.l.b16 %v4696
    %v4960 = vunpack.c.l.b16 %v4697
    %v4961 = vunpack.c.l.b16 %v4698
    %v4962 = vunpack.c.l.b16 %v4699
    %v4963 = vunpack.c.l.b16 %v4700
    %v4964 = vunpack.c.l.b16 %v4701
    %v4965 = vunpack.c.l.b16 %v4702
    %v4966 = vunpack.c.l.b16 %v4703
    %v4967 = vunpack.c.l.b16 %v4704
    %v4968 = vunpack.c.l.b16 %v4705
    %v4969 = vunpack.c.l.b16 %v4706
    %v4970 = vunpack.c.l.b16 %v4707
    %v4971 = vunpack.c.l.b16 %v4708
    %v4972 = vunpack.c.l.b16 %v4709
    %v4973 = vunpack.c.l.b16 %v4710
    %v4974 = vunpack.c.l.b16 %v4711
    %v4975 = vunpack.c.l.b16 %v4712
    %v4976 = vunpack.c.l.b16 %v4713
    %v4977 = vunpack.c.l.b16 %v4714
    %v4978 = vunpack.c.l.b16 %v4715
    %v4979 = vunpack.c.l.b16 %v4716
    %v4980 = vunpack.c.l.b16 %v4717
    %v4981 = vunpack.c.l.b16 %v4718
    %v4982 = vunpack.c.l.b16 %v4719
    %v4983 = vunpack.c.l.b16 %v4720
    %v4984 = vunpack.c.l.b16 %v4721
    %v4985 = vunpack.c.l.b16 %v4722
    %v4986 = vunpack.c.l.b16 %v4723
    %v4987 = vunpack.c.l.b16 %v4724
    %v4988 = vunpack.c.l.b16 %v4725
    %v4989 = vunpack.c.l.b16 %v4726
    %v4990 = vunpack.c.l.b16 %v4727
    %v4991 = vunpack.c.l.b16 %v4728
    %v4992 = vunpack.c.l.b16 %v4729
    %v4993 = vunpack.c.l.b16 %v4730
    %v4994 = vunpack.c.l.b16 %v4731
    %v4995 = vunpack.c.l.b16 %v4732
    %v4996 = vunpack.c.l.b16 %v4733
    %v4997 = vunpack.c.l.b16 %v4734
    %v4998 = vunpack.c.l.b16 %v4735
    %v4999 = vunpack.c.l.b16 %v4736
    %v5000 = vunpack.c.l.b16 %v4737
    %v5001 = vunpack.c.l.b16 %v4738
    %v5002 = vunpack.c.l.b16 %v4739
    %v5003 = vunpack.c.l.b16 %v4740
    %v5004 = vunpack.c.l.b16 %v4741
    %v5005 = vunpack.c.l.b16 %v4742
    %v5006 = vunpack.c.l.b16 %v4743
    %v5007 = vunpack.c.l.b16 %v4744
    %v5008 = vunpack.c.l.b16 %v4745
    %v5009 = vunpack.c.l.b16 %v4746
    %v5010 = vunpack.c.l.b16 %v4747
    %v5011 = vunpack.c.l.b16 %v4748
    %v5012 = vunpack.c.l.b16 %v4749
    %v5013 = vunpack.c.l.b16 %v4750
    %v5014 = vunpack.c.l.b16 %v4751
    %v5015 = vunpack.c.l.b16 %v4752
    %v5016 = vunpack.c.l.b16 %v4753
    %v5017 = vunpack.c.l.b16 %v4754
    %v5018 = vunpack.c.l.b16 %v4755
    %v5019 = vunpack.c.l.b16 %v4756
    %v5020 = vunpack.c.l.b16 %v4757
    %v5021 = vunpack.c.l.b16 %v4758
    %v5022 = vunpack.c.l.b16 %v4759
    %v5023 = vunpack.c.l.b16 %v4760
    %v5024 = vunpack.c.l.b16 %v4761
    %v5025 = vunpack.c.l.b16 %v4762
    %v5026 = vunpack.c.l.b16 %v4763
    %v5027 = vunpack.c.l.b16 %v4764
    %v5028 = vpack.c.b16 %v4901, %v4900
    %v5029 = vpack.c.b16 %v4903, %v4902
    %v5030 = vpack.c.b16 %v4905, %v4904
    %v5031 = vpack.c.b16 %v4907, %v4906
    %v5032 = vpack.c.b16 %v4909, %v4908
    %v5033 = vpack.c.b16 %v4911, %v4910
    %v5034 = vpack.c.b16 %v4913, %v4912
    %v5035 = vpack.c.b16 %v4915, %v4914
    %v5036 = vpack.c.b16 %v4917, %v4916
    %v5037 = vpack.c.b16 %v4919, %v4918
    %v5038 = vpack.c.b16 %v4921, %v4920
    %v5039 = vpack.c.b16 %v4923, %v4922
    %v5040 = vpack.c.b16 %v4925, %v4924
    %v5041 = vpack.c.b16 %v4927, %v4926
    %v5042 = vpack.c.b16 %v4929, %v4928
    %v5043 = vpack.c.b16 %v4931, %v4930
    %v5044 = vpack.c.b16 %v4933, %v4932
    %v5045 = vpack.c.b16 %v4935, %v4934
    %v5046 = vpack.c.b16 %v4937, %v4936
    %v5047 = vpack.c.b16 %v4939, %v4938
    %v5048 = vpack.c.b16 %v4941, %v4940
    %v5049 = vpack.c.b16 %v4943, %v4942
    %v5050 = vpack.c.b16 %v4945, %v4944
    %v5051 = vpack.c.b16 %v4947, %v4946
    %v5052 = vpack.c.b16 %v4949, %v4948
    %v5053 = vpack.c.b16 %v4951, %v4950
    %v5054 = vpack.c.b16 %v4953, %v4952
    %v5055 = vpack.c.b16 %v4955, %v4954
    %v5056 = vpack.c.b16 %v4957, %v4956
    %v5057 = vpack.c.b16 %v4959, %v4958
    %v5058 = vpack.c.b16 %v4961, %v4960
    %v5059 = vpack.c.b16 %v4963, %v4962
    %v5060 = vpack.c.b16 %v4965, %v4964
    %v5061 = vpack.c.b16 %v4967, %v4966
    %v5062 = vpack.c.b16 %v4969, %v4968
    %v5063 = vpack.c.b16 %v4971, %v4970
    %v5064 = vpack.c.b16 %v4973, %v4972
    %v5065 = vpack.c.b16 %v4975, %v4974
    %v5066 = vpack.c.b16 %v4977, %v4976
    %v5067 = vpack.c.b16 %v4979, %v4978
    %v5068 = vpack.c.b16 %v4981, %v4980
    %v5069 = vpack.c.b16 %v4983, %v4982
    %v5070 = vpack.c.b16 %v4985, %v4984
    %v5071 = vpack.c.b16 %v4987, %v4986
    %v5072 = vpack.c.b16 %v4989, %v4988
    %v5073 = vpack.c.b16 %v4991, %v4990
    %v5074 = vpack.c.b16 %v4993, %v4992
    %v5075 = vpack.c.b16 %v4995, %v4994
    %v5076 = vpack.c.b16 %v4997, %v4996
    %v5077 = vpack.c.b16 %v4999, %v4998
    %v5078 = vpack.c.b16 %v5001, %v5000
    %v5079 = vpack.c.b16 %v5003, %v5002
    %v5080 = vpack.c.b16 %v5005, %v5004
    %v5081 = vpack.c.b16 %v5007, %v5006
    %v5082 = vpack.c.b16 %v5009, %v5008
    %v5083 = vpack.c.b16 %v5011, %v5010
    %v5084 = vpack.c.b16 %v5013, %v5012
    %v5085 = vpack.c.b16 %v5015, %v5014
    %v5086 = vpack.c.b16 %v5017, %v5016
    %v5087 = vpack.c.b16 %v5019, %v5018
    %v5088 = vpack.c.b16 %v5021, %v5020
    %v5089 = vpack.c.b16 %v5023, %v5022
    %v5090 = vpack.c.b16 %v5025, %v5024
    %v5091 = vpack.c.b16 %v5027, %v5026
    %5156 = vmatprep.subr.bf16.mxu0 0
    %5157 = vmatpush1.bf16.msra.mxu0 %v5028
    %5158 = vmatprep.subr.bf16.mxu0 0
    %5159 = vmatpush1.bf16.msra.mxu0 %v5029
    %5160 = vmatprep.subr.bf16.mxu0 0
    %5161 = vmatpush1.bf16.msra.mxu0 %v5030
    %5162 = vmatprep.subr.bf16.mxu0 0
    %5163 = vmatpush1.bf16.msra.mxu0 %v5031
    %5164 = vmatprep.subr.bf16.mxu0 0
    %5165 = vmatpush1.bf16.msra.mxu0 %v5032
    %5166 = vmatprep.subr.bf16.mxu0 0
    %5167 = vmatpush1.bf16.msra.mxu0 %v5033
    %5168 = vmatprep.subr.bf16.mxu0 0
    %5169 = vmatpush1.bf16.msra.mxu0 %v5034
    %5170 = vmatprep.subr.bf16.mxu0 0
    %5171 = vmatpush1.bf16.msra.mxu0 %v5035
    %5172 = vmatprep.subr.bf16.mxu0 0
    %5173 = vmatpush1.bf16.msra.mxu0 %v5036
    %5174 = vmatprep.subr.bf16.mxu0 0
    %5175 = vmatpush1.bf16.msra.mxu0 %v5037
    %5176 = vmatprep.subr.bf16.mxu0 0
    %5177 = vmatpush1.bf16.msra.mxu0 %v5038
    %5178 = vmatprep.subr.bf16.mxu0 0
    %5179 = vmatpush1.bf16.msra.mxu0 %v5039
    %5180 = vmatprep.subr.bf16.mxu0 0
    %5181 = vmatpush1.bf16.msra.mxu0 %v5040
    %5182 = vmatprep.subr.bf16.mxu0 0
    %5183 = vmatpush1.bf16.msra.mxu0 %v5041
    %5184 = vmatprep.subr.bf16.mxu0 0
    %5185 = vmatpush1.bf16.msra.mxu0 %v5042
    %5186 = vmatprep.subr.bf16.mxu0 0
    %5187 = vmatpush1.bf16.msra.mxu0 %v5043
    %5188 = vmatprep.mubr.bf16.mxu0 %v4630
    %5189 = vmatmul.mubr.bf16.gmra.mrb[0].mxu0 %v4629
    %v5190 = vpop.f32.mrb[0].mxu0
    %v5191 = vadd.f32 %v4770, %v5190
    %v5192 = vpop.f32.mrb[0].mxu0
    %v5193 = vpop.f32.mrb[0].mxu0
    %v5194 = vadd.f32 %v4770, %v5193
    %v5195 = vpop.f32.mrb[0].mxu0
    %5196 = vdwg.mxu0
    %5197 = vmatprep.subr.bf16.mxu0 0
    %5198 = vmatpush1.bf16.msra.mxu0 %v5044
    %5199 = vmatprep.subr.bf16.mxu0 0
    %5200 = vmatpush1.bf16.msra.mxu0 %v5045
    %5201 = vmatprep.subr.bf16.mxu0 0
    %5202 = vmatpush1.bf16.msra.mxu0 %v5046
    %5203 = vmatprep.subr.bf16.mxu0 0
    %5204 = vmatpush1.bf16.msra.mxu0 %v5047
    %5205 = vmatprep.subr.bf16.mxu0 0
    %5206 = vmatpush1.bf16.msra.mxu0 %v5048
    %5207 = vmatprep.subr.bf16.mxu0 0
    %5208 = vmatpush1.bf16.msra.mxu0 %v5049
    %5209 = vmatprep.subr.bf16.mxu0 0
    %5210 = vmatpush1.bf16.msra.mxu0 %v5050
    %5211 = vmatprep.subr.bf16.mxu0 0
    %5212 = vmatpush1.bf16.msra.mxu0 %v5051
    %5213 = vmatprep.subr.bf16.mxu0 0
    %5214 = vmatpush1.bf16.msra.mxu0 %v5052
    %5215 = vmatprep.subr.bf16.mxu0 0
    %5216 = vmatpush1.bf16.msra.mxu0 %v5053
    %5217 = vmatprep.subr.bf16.mxu0 0
    %5218 = vmatpush1.bf16.msra.mxu0 %v5054
    %5219 = vmatprep.subr.bf16.mxu0 0
    %5220 = vmatpush1.bf16.msra.mxu0 %v5055
    %5221 = vmatprep.subr.bf16.mxu0 0
    %5222 = vmatpush1.bf16.msra.mxu0 %v5056
    %5223 = vmatprep.subr.bf16.mxu0 0
    %5224 = vmatpush1.bf16.msra.mxu0 %v5057
    %5225 = vmatprep.subr.bf16.mxu0 0
    %5226 = vmatpush1.bf16.msra.mxu0 %v5058
    %5227 = vmatprep.subr.bf16.mxu0 0
    %5228 = vmatpush1.bf16.msra.mxu0 %v5059
    %5229 = vmatprep.mubr.bf16.mxu0 %v4632
    %5230 = vmatmul.mubr.bf16.gmra.mrb[0].mxu0 %v4631
    %v5231 = vpop.f32.mrb[0].mxu0
    %v5232 = vadd.f32 %v5191, %v5231
    %v5233 = vpop.f32.mrb[0].mxu0
    %v5234 = vpop.f32.mrb[0].mxu0
    %v5235 = vadd.f32 %v5194, %v5234
    %v5236 = vpop.f32.mrb[0].mxu0
    %5237 = vdwg.mxu0
    %5238 = vmatprep.subr.bf16.mxu0 0
    %5239 = vmatpush1.bf16.msra.mxu0 %v5060
    %5240 = vmatprep.subr.bf16.mxu0 0
    %5241 = vmatpush1.bf16.msra.mxu0 %v5061
    %5242 = vmatprep.subr.bf16.mxu0 0
    %5243 = vmatpush1.bf16.msra.mxu0 %v5062
    %5244 = vmatprep.subr.bf16.mxu0 0
    %5245 = vmatpush1.bf16.msra.mxu0 %v5063
    %5246 = vmatprep.subr.bf16.mxu0 0
    %5247 = vmatpush1.bf16.msra.mxu0 %v5064
    %5248 = vmatprep.subr.bf16.mxu0 0
    %5249 = vmatpush1.bf16.msra.mxu0 %v5065
    %5250 = vmatprep.subr.bf16.mxu0 0
    %5251 = vmatpush1.bf16.msra.mxu0 %v5066
    %5252 = vmatprep.subr.bf16.mxu0 0
    %5253 = vmatpush1.bf16.msra.mxu0 %v5067
    %5254 = vmatprep.subr.bf16.mxu0 0
    %5255 = vmatpush1.bf16.msra.mxu0 %v5068
    %5256 = vmatprep.subr.bf16.mxu0 0
    %5257 = vmatpush1.bf16.msra.mxu0 %v5069
    %5258 = vmatprep.subr.bf16.mxu0 0
    %5259 = vmatpush1.bf16.msra.mxu0 %v5070
    %5260 = vmatprep.subr.bf16.mxu0 0
    %5261 = vmatpush1.bf16.msra.mxu0 %v5071
    %5262 = vmatprep.subr.bf16.mxu0 0
    %5263 = vmatpush1.bf16.msra.mxu0 %v5072
    %5264 = vmatprep.subr.bf16.mxu0 0
    %5265 = vmatpush1.bf16.msra.mxu0 %v5073
    %5266 = vmatprep.subr.bf16.mxu0 0
    %5267 = vmatpush1.bf16.msra.mxu0 %v5074
    %5268 = vmatprep.subr.bf16.mxu0 0
    %5269 = vmatpush1.bf16.msra.mxu0 %v5075
    %5270 = vmatprep.mubr.bf16.mxu0 %v4634
    %5271 = vmatmul.mubr.bf16.gmra.mrb[0].mxu0 %v4633
    %v5272 = vpop.f32.mrb[0].mxu0
    %v5273 = vadd.f32 %v5232, %v5272
    %v5274 = vpop.f32.mrb[0].mxu0
    %v5275 = vpop.f32.mrb[0].mxu0
    %v5276 = vadd.f32 %v5235, %v5275
    %v5277 = vpop.f32.mrb[0].mxu0
    %5278 = vdwg.mxu0
    %5279 = vmatprep.subr.bf16.mxu0 0
    %5280 = vmatpush1.bf16.msra.mxu0 %v5076
    %5281 = vmatprep.subr.bf16.mxu0 0
    %5282 = vmatpush1.bf16.msra.mxu0 %v5077
    %5283 = vmatprep.subr.bf16.mxu0 0
    %5284 = vmatpush1.bf16.msra.mxu0 %v5078
    %5285 = vmatprep.subr.bf16.mxu0 0
    %5286 = vmatpush1.bf16.msra.mxu0 %v5079
    %5287 = vmatprep.subr.bf16.mxu0 0
    %5288 = vmatpush1.bf16.msra.mxu0 %v5080
    %5289 = vmatprep.subr.bf16.mxu0 0
    %5290 = vmatpush1.bf16.msra.mxu0 %v5081
    %5291 = vmatprep.subr.bf16.mxu0 0
    %5292 = vmatpush1.bf16.msra.mxu0 %v5082
    %5293 = vmatprep.subr.bf16.mxu0 0
    %5294 = vmatpush1.bf16.msra.mxu0 %v5083
    %5295 = vmatprep.subr.bf16.mxu0 0
    %5296 = vmatpush1.bf16.msra.mxu0 %v5084
    %5297 = vmatprep.subr.bf16.mxu0 0
    %5298 = vmatpush1.bf16.msra.mxu0 %v5085
    %5299 = vmatprep.subr.bf16.mxu0 0
    %5300 = vmatpush1.bf16.msra.mxu0 %v5086
    %5301 = vmatprep.subr.bf16.mxu0 0
    %5302 = vmatpush1.bf16.msra.mxu0 %v5087
    %5303 = vmatprep.subr.bf16.mxu0 0
    %5304 = vmatpush1.bf16.msra.mxu0 %v5088
    %5305 = vmatprep.subr.bf16.mxu0 0
    %5306 = vmatpush1.bf16.msra.mxu0 %v5089
    %5307 = vmatprep.subr.bf16.mxu0 0
    %5308 = vmatpush1.bf16.msra.mxu0 %v5090
    %5309 = vmatprep.subr.bf16.mxu0 0
    %5310 = vmatpush1.bf16.msra.mxu0 %v5091
    %5311 = vmatprep.mubr.bf16.mxu0 %v4636
    %5312 = vmatmul.mubr.bf16.gmra.mrb[0].mxu0 %v4635
    %v5313 = vpop.f32.mrb[0].mxu0
    %v5314 = vadd.f32 %v5273, %v5313
    %v5315 = vpop.f32.mrb[0].mxu0
    %v5316 = vpop.f32.mrb[0].mxu0
    %v5317 = vadd.f32 %v5276, %v5316
    %v5318 = vpop.f32.mrb[0].mxu0
    %5319 = vdwg.mxu0
    %5320 = vst [vmem:[#allocation14] sm:$0xff] %v5314
    %5321 = vst [vmem:[#allocation14 + $0x8] sm:$0xff] %v5317
    // Predicated region
    $region58: #{tpu_custom_call.1} parent=1 // pred_check
      _
    $region59: #{tpu_custom_call.1} parent=1 // pred_check_branch
      %5323 = sbr.rel (0) target = $region61
    $region60: #{tpu_custom_call.1} parent=1 // pred_region
      %s5325 = ssub.s32 256, 256
      %5326 = vsyncadd [#allocation4], %s5325
      %s5327 = sshll.u32 [#allocation14], 4
      %s5328 = int_to_ptr.vmem [resolvable:$true] %s5327
      %5333 = dma.vmem_to_hbm [thread:$0]  %s5328, 256, %s7, [#allocation4], 128, 128, 8
    $region61: #{tpu_custom_call.1} parent=1 // pred_fallthru
      _
    // Predicated region
    $region62: #{tpu_custom_call.1} parent=1 // pred_check
      _
    $region63: #{tpu_custom_call.1} parent=1 // pred_check_branch
      %5335 = sbr.rel (0) target = $region65
    $region64: #{tpu_custom_call.1} parent=1 // pred_region
      %5336 = dma.done [#allocation4], 256
    $region65: #{tpu_custom_call.1} parent=1 // pred_fallthru
      _
    %5337 = vsyncpa [#allocation3], 1
    %5338 = vsyncpa [#allocation6], 1
    %5339 = vsyncpa [#allocation9], 1
    %5340 = vsyncpa [#allocation12], 1
    %5341 = vsyncpa [#allocation4], 1

</llo_original>
